<compile_context>
chip_gen: v7x
topology: tpu7x:2x2x1
jax: 0.10.0
libtpu: 0.0.40
codegen_flags: <defaults>
</compile_context>

<pallas_src>
import jax
import jax.numpy as jnp
import numpy as np
from jax import lax
from jax.experimental import pallas as pl
from jax.experimental.pallas import tpu as pltpu

KSIZE = 5
PAD = 2
COUT = 64
K_TOP = 128
EPS = 1e-5
TAPS_PER_CHUNK = 4      # conv2 K-chunk = TAPS_PER_CHUNK*64 columns; 2 on v5e, 4/8 on v6e/v7x
NEG = -1e30             # sentinel strictly below any ELU output (ELU > -1)


def _round_up(x, m):
    return (x + m - 1) // m * m


# --------------------------------------------------------------------------------------
# Fused kernel: conv1+BN+ELU -> conv2+BN+ELU -> channel max/argmax -> exact top-128.
# One batch element per grid step; all intermediates stay in VMEM.
# --------------------------------------------------------------------------------------
def ae10_fused_kernel(xp_ref, w1_ref, s1_ref, b1_ref, w2_ref, s2_ref, b2_ref,
                      zout_ref, vout_ref, iout_ref, h1pad_ref):
    # xp_ref   : (1, HW, K1P) bf16   conv1 im2col patches (built in the wrapper)
    # w1_ref   : (K1P, 64) bf16      im2col weights, row = (ky*5+kx)*Cin + c (zero padded)
    # s*_ref   : (1, 64)   f32       folded BN scale
    # b*_ref   : (1, 64)   f32       folded BN bias (absorbs conv bias)
    # w2_ref   : (K2P, 64) bf16
    # zout_ref : (1, 1, 128) f32     argmax channel ("z coord") at the top-k positions
    # vout_ref : (1, 1, 128) f32     top-k channel-max values (descending)
    # iout_ref : (1, 1, 128) i32     flat spatial indices (h*W + w) of the top-k
    # h1pad_ref: (Hp, Wp, 64) bf16   VMEM scratch holding the padded conv1 output
    Hp, Wp, _ = h1pad_ref.shape
    H, W = Hp - 2 * PAD, Wp - 2 * PAD
    HW = H * W
    TAPS = KSIZE * KSIZE

    def bn_elu(y, s_ref, b_ref):
        y = y * s_ref[...] + b_ref[...]
        # ELU(alpha=1); exp runs on the EUP slot (keep exp-1, expm1 lowering not guaranteed)
        return jnp.where(y > 0, y, jnp.exp(jnp.minimum(y, 0.0)) - 1.0)

    # ---- layer 1: conv(3 -> 64) + BN + ELU (one MXU matmul on prebuilt patches) --------
    h1 = bn_elu(jnp.dot(xp_ref[0], w1_ref[...], preferred_element_type=jnp.float32),
                s1_ref, b1_ref)                                                  # (HW,64) f32

    # ---- stash conv1 output (bf16) with a zero border == Conv2d(padding=2) ------------
    # Zero only the 4 border strips; interior is fully overwritten each grid step.
    h1pad_ref[0:PAD, :, :] = jnp.zeros((PAD, Wp, COUT), jnp.bfloat16)
    h1pad_ref[PAD + H:Hp, :, :] = jnp.zeros((PAD, Wp, COUT), jnp.bfloat16)
    h1pad_ref[:, 0:PAD, :] = jnp.zeros((Hp, PAD, COUT), jnp.bfloat16)
    h1pad_ref[:, PAD + W:Wp, :] = jnp.zeros((Hp, PAD, COUT), jnp.bfloat16)
    h1pad_ref[PAD:PAD + H, PAD:PAD + W, :] = (
        h1.astype(jnp.bfloat16).reshape(H, W, COUT))

    # ---- layer 2: conv(64 -> 64) + BN + ELU, K-chunked im2col accumulation ------------
    # Each chunk: a (HW, TAPS_PER_CHUNK*64) bf16 slab built from window reads of the bf16
    # scratch, one MXU matmul accumulated into an f32 (HW,64) accumulator.
    acc = jnp.zeros((HW, COUT), jnp.float32)
    for c0 in range(0, TAPS, TAPS_PER_CHUNK):
        taps = list(range(c0, min(c0 + TAPS_PER_CHUNK, TAPS)))
        slabs = [h1pad_ref[t // KSIZE:t // KSIZE + H,
                           t % KSIZE:t % KSIZE + W, :].reshape(HW, COUT)
                 for t in taps]
        slab = slabs[0] if len(slabs) == 1 else jnp.concatenate(slabs, axis=1)
        wrows = w2_ref[c0 * COUT:(c0 + len(taps)) * COUT, :]
        acc = acc + jnp.dot(slab, wrows, preferred_element_type=jnp.float32)
    v = bn_elu(acc, s2_ref, b2_ref)                                              # (HW,64) f32

    # ---- MaxPool3d over channels: max value + first-max channel ("z coord") -----------
    m = jnp.max(v, axis=1, keepdims=True)                                        # (HW,1)
    cidx = lax.broadcasted_iota(jnp.int32, (HW, COUT), 1)
    zc = jnp.min(jnp.where(v == m, cidx, COUT), axis=1, keepdims=True)           # (HW,1) i32

    # ---- exact top-128 by iterative extraction on a lane-dense (R,128) copy -----------
    # Replaces the old (HW,HW) rank matrix: O(K_TOP*HW) work, a few vregs of state,
    # exact values/indices and lowest-index-first tie-breaking.
    R = (HW + 127) // 128
    padn = R * 128 - HW
    if padn:
        m = jnp.concatenate([m, jnp.full((padn, 1), NEG, jnp.float32)], axis=0)
        zc = jnp.concatenate([zc, jnp.zeros((padn, 1), jnp.int32)], axis=0)
    m2 = m.reshape(R, 128)
    z2 = zc.reshape(R, 128)
    flat2 = (lax.broadcasted_iota(jnp.int32, (R, 128), 0) * 128
             + lax.broadcasted_iota(jnp.int32, (R, 128), 1))                     # flat index
    lane = lax.broadcasted_iota(jnp.int32, (1, K_TOP), 1)

    def extract(r, carry):
        mm, vals, zs, idxs = carry
        cur = jnp.max(jnp.max(mm, axis=0, keepdims=True), axis=1, keepdims=True)   # (1,1)
        is_max = mm == cur
        cand = jnp.where(is_max, flat2, HW)                      # lowest index wins ties
        sidx = jnp.min(jnp.min(cand, axis=0, keepdims=True), axis=1, keepdims=True)
        hit = flat2 == sidx                                      # exactly one position
        zsel = jnp.sum(jnp.sum(jnp.where(hit, z2, 0), axis=0, keepdims=True),
                       axis=1, keepdims=True)                    # (1,1) i32
        here = lane == r
        vals = jnp.where(here, cur, vals)
        zs = jnp.where(here, zsel.astype(jnp.float32), zs)
        idxs = jnp.where(here, sidx, idxs)
        mm = jnp.where(hit, NEG, mm)
        return mm, vals, zs, idxs

    _, vals, zs, idxs = lax.fori_loop(
        0, K_TOP, extract,
        (m2,
         jnp.zeros((1, K_TOP), jnp.float32),
         jnp.zeros((1, K_TOP), jnp.float32),
         jnp.zeros((1, K_TOP), jnp.int32)))

    vout_ref[...] = vals.reshape(1, 1, K_TOP)
    zout_ref[...] = zs.reshape(1, 1, K_TOP)
    iout_ref[...] = idxs.reshape(1, 1, K_TOP)


# --------------------------------------------------------------------------------------
# Wrapper
# --------------------------------------------------------------------------------------
def ae10_forward(x_nchw, params):
    # NCHW (PyTorch) -> NHWC; conv1 im2col (layout plumbing) done here in XLA, bf16-cast.
    x = jnp.transpose(x_nchw, (0, 2, 3, 1)).astype(jnp.float32)
    B, H, W, Cin = x.shape
    HW = H * W
    if HW < K_TOP:
        raise ValueError("H*W must be >= 128 for topk(128)")
    Hp, Wp = H + 2 * PAD, W + 2 * PAD
    k1p = params["w1"].shape[0]
    k2p = params["w2"].shape[0]

    xpad = jnp.pad(x, ((0, 0), (PAD, PAD), (PAD, PAD), (0, 0)))
    parts = [xpad[:, ky:ky + H, kx:kx + W, :].reshape(B, HW, Cin)
             for ky in range(KSIZE) for kx in range(KSIZE)]
    patches = jnp.concatenate(parts, axis=-1)                       # (B, HW, 25*Cin)
    patches = jnp.pad(patches, ((0, 0), (0, 0), (0, k1p - patches.shape[-1])))
    patches = patches.astype(jnp.bfloat16)                          # (B, HW, K1P)

    out_shape = (
        jax.ShapeDtypeStruct((B, 1, K_TOP), jnp.float32),   # reduced_z_coord
        jax.ShapeDtypeStruct((B, 1, K_TOP), jnp.float32),   # top_k values
        jax.ShapeDtypeStruct((B, 1, K_TOP), jnp.int32),     # top_k indices (torch: int64)
    )
    return pl.pallas_call(
        ae10_fused_kernel,
        out_shape=out_shape,
        grid_spec=pltpu.PrefetchScalarGridSpec(
            num_scalar_prefetch=0,
            grid=(B,),
            in_specs=[
                pl.BlockSpec((1, HW, k1p), lambda b: (b, 0, 0)),
                pl.BlockSpec((k1p, COUT), lambda b: (0, 0)),
                pl.BlockSpec((1, COUT), lambda b: (0, 0)),
                pl.BlockSpec((1, COUT), lambda b: (0, 0)),
                pl.BlockSpec((k2p, COUT), lambda b: (0, 0)),
                pl.BlockSpec((1, COUT), lambda b: (0, 0)),
                pl.BlockSpec((1, COUT), lambda b: (0, 0)),
            ],
            out_specs=[
                pl.BlockSpec((1, 1, K_TOP), lambda b: (b, 0, 0)),
                pl.BlockSpec((1, 1, K_TOP), lambda b: (b, 0, 0)),
                pl.BlockSpec((1, 1, K_TOP), lambda b: (b, 0, 0)),
            ],
            scratch_shapes=[pltpu.VMEM((Hp, Wp, COUT), jnp.bfloat16)],
        ),
        compiler_params=pltpu.CompilerParams(
            dimension_semantics=("parallel",),             # megacore: one batch element per core
            vmem_limit_bytes=40 * 1024 * 1024,             # <= ~48 MiB so v7x (64 MiB) also fits
        ),
    )(patches, params["w1"], params["s1"], params["b1"],
      params["w2"], params["s2"], params["b2"])


# --------------------------------------------------------------------------------------
# Deterministic synthetic parameters (eval-mode BN folded into per-channel scale/bias,
# conv weights reshaped to im2col matrices and cast to bf16).
# --------------------------------------------------------------------------------------
def _to_im2col_weight(w_oihw):
    # (Cout, Cin, 5, 5) -> (round_up(25*Cin, 128), Cout) bf16, row = (ky*5+kx)*Cin + c
    cout, cin = w_oihw.shape[0], w_oihw.shape[1]
    k = KSIZE * KSIZE * cin
    wm = jnp.transpose(w_oihw, (2, 3, 1, 0)).reshape(k, cout)
    wm = jnp.pad(wm, ((0, _round_up(k, 128) - k), (0, 0)))
    return wm.astype(jnp.bfloat16)


def _fold_bn(gamma, beta, mean, var, conv_bias):
    scale = gamma / jnp.sqrt(var + EPS)
    bias = scale * (conv_bias - mean) + beta
    return scale.reshape(1, -1), bias.reshape(1, -1)


def make_params(key):
    keys = jax.random.split(key, 12)

    def conv_w(k, cout, cin):
        fan_in = cin * KSIZE * KSIZE
        return jax.random.normal(k, (cout, cin, KSIZE, KSIZE), jnp.float32) / jnp.sqrt(fan_in)

    w1 = conv_w(keys[0], COUT, 3)
    cb1 = 0.1 * jax.random.normal(keys[1], (COUT,), jnp.float32)
    g1 = 1.0 + 0.1 * jax.random.normal(keys[2], (COUT,), jnp.float32)
    be1 = 0.1 * jax.random.normal(keys[3], (COUT,), jnp.float32)
    rm1 = 0.1 * jax.random.normal(keys[4], (COUT,), jnp.float32)
    rv1 = 1.0 + 0.1 * jnp.abs(jax.random.normal(keys[5], (COUT,), jnp.float32))

    w2 = conv_w(keys[6], COUT, COUT)
    cb2 = 0.1 * jax.random.normal(keys[7], (COUT,), jnp.float32)
    g2 = 1.0 + 0.1 * jax.random.normal(keys[8], (COUT,), jnp.float32)
    be2 = 0.1 * jax.random.normal(keys[9], (COUT,), jnp.float32)
    rm2 = 0.1 * jax.random.normal(keys[10], (COUT,), jnp.float32)
    rv2 = 1.0 + 0.1 * jnp.abs(jax.random.normal(keys[11], (COUT,), jnp.float32))

    s1, b1 = _fold_bn(g1, be1, rm1, rv1, cb1)
    s2, b2 = _fold_bn(g2, be2, rm2, rv2, cb2)
    return {
        "w1": _to_im2col_weight(w1), "s1": s1, "b1": b1,
        "w2": _to_im2col_weight(w2), "s2": s2, "b2": b2,
    }


# --------------------------------------------------------------------------------------
# Pure-JAX reference features (same bf16 im2col math) for the self-check.
# --------------------------------------------------------------------------------------
def _ref_features(x_nchw, params):
    x = jnp.transpose(x_nchw, (0, 2, 3, 1)).astype(jnp.float32)
    B, H, W, _ = x.shape
    HW = H * W

    def layer(xp, wmat, s, b, cin):
        parts = [xp[:, ky:ky + H, kx:kx + W, :].reshape(B, HW, cin)
                 for ky in range(KSIZE) for kx in range(KSIZE)]
        patch = jnp.concatenate(parts, axis=-1)
        patch = jnp.pad(patch, ((0, 0), (0, 0), (0, wmat.shape[0] - patch.shape[-1])))
        y = jnp.einsum("bpk,kc->bpc", patch.astype(jnp.bfloat16), wmat,
                       preferred_element_type=jnp.float32)
        y = y * s + b
        return jnp.where(y > 0, y, jnp.exp(jnp.minimum(y, 0.0)) - 1.0)

    xpad = jnp.pad(x, ((0, 0), (PAD, PAD), (PAD, PAD), (0, 0)))
    h1 = layer(xpad, params["w1"], params["s1"], params["b1"], x.shape[-1])
    h1 = h1.astype(jnp.bfloat16).astype(jnp.float32)   # kernel stores h1 as bf16 in scratch
    h1pad = jnp.pad(h1.reshape(B, H, W, COUT), ((0, 0), (PAD, PAD), (PAD, PAD), (0, 0)))
    h2 = layer(h1pad, params["w2"], params["s2"], params["b2"], COUT)
    return h2  # (B, HW, 64) f32


if __name__ == "__main__":
    B, Cin, H, W = 2, 3, 16, 16      # H*W = 256 >= 128 required by topk(128)
    key = jax.random.PRNGKey(0)
    kx_key, kp_key = jax.random.split(key)
    x = jax.random.normal(kx_key, (B, Cin, H, W), jnp.float32)
    params = make_params(kp_key)

    red_z, top_k, idx = ae10_forward(x, params)
    jax.block_until_ready((red_z, top_k, idx))

    # shape / dtype contract (idx is int32; torch returns int64)
    assert red_z.shape == (B, 1, K_TOP) and red_z.dtype == jnp.float32
    assert top_k.shape == (B, 1, K_TOP) and top_k.dtype == jnp.float32
    assert idx.shape == (B, 1, K_TOP) and idx.dtype == jnp.int32

    # numerical self-check against the pure-JAX reference (flip-robust, tolerance-aware)
    feats = np.asarray(_ref_features(x, params))            # (B, HW, 64)
    ref_m = feats.max(axis=-1)                              # (B, HW)
    ref_top = -np.sort(-ref_m, axis=-1)[:, :K_TOP]          # (B, 128), descending

    tk = np.asarray(top_k)[:, 0, :]
    rz = np.asarray(red_z)[:, 0, :]
    ix = np.asarray(idx)[:, 0, :]

    assert np.allclose(tk, ref_top, rtol=5e-3, atol=5e-3), "top-k values mismatch"
    for b in range(B):
        ib = ix[b]
        assert np.all((ib >= 0) & (ib < H * W)), "top-k index out of range"
        assert np.unique(ib).size == K_TOP, "top-k indices not unique"
        assert np.all(np.diff(tk[b]) <= 1e-6), "top-k values not descending"
        assert np.allclose(ref_m[b, ib], tk[b], rtol=5e-3, atol=5e-3), "idx/value mismatch"
        zb = np.rint(rz[b]).astype(np.int32)
        assert np.all(np.abs(rz[b] - zb) < 1e-3), "z coord not integral"
        assert np.all((zb >= 0) & (zb < COUT)), "z coord out of range"
        assert np.allclose(feats[b, ib, zb], tk[b], rtol=5e-3, atol=5e-3), "z coord mismatch"

    print("KERNEL_OK")
</pallas_src>

<mosaic_0001>
module attributes {stable_mosaic.version = 11 : i64} {
  func.func @ae10_fused_kernel(%arg0: i32, %arg1: memref<1x256x128xbf16, #tpu.memory_space<vmem>>, %arg2: memref<128x64xbf16, #tpu.memory_space<vmem>>, %arg3: memref<1x64xf32, #tpu.memory_space<vmem>>, %arg4: memref<1x64xf32, #tpu.memory_space<vmem>>, %arg5: memref<1664x64xbf16, #tpu.memory_space<vmem>>, %arg6: memref<1x64xf32, #tpu.memory_space<vmem>>, %arg7: memref<1x64xf32, #tpu.memory_space<vmem>>, %arg8: memref<1x1x128xf32, #tpu.memory_space<vmem>>, %arg9: memref<1x1x128xf32, #tpu.memory_space<vmem>>, %arg10: memref<1x1x128xi32, #tpu.memory_space<vmem>>, %arg11: memref<20x20x64xbf16, #tpu.memory_space<vmem>>) attributes {dimension_semantics = [#tpu.dimension_semantics<parallel>], iteration_bounds = array<i64: 2>, scalar_prefetch = 0 : i64, scratch_operands = 1 : i64, tpu.core_type = #tpu.core_type<tc>, window_params = [{transform_indices = @transform_0, window_bounds = array<i64: 1, 256, 128>}, {pipeline_mode = #tpu.pipeline_mode<synchronous>, transform_indices = @transform_1, window_bounds = array<i64: 128, 64>}, {pipeline_mode = #tpu.pipeline_mode<synchronous>, transform_indices = @transform_2, window_bounds = array<i64: 1, 64>}, {pipeline_mode = #tpu.pipeline_mode<synchronous>, transform_indices = @transform_3, window_bounds = array<i64: 1, 64>}, {pipeline_mode = #tpu.pipeline_mode<synchronous>, transform_indices = @transform_4, window_bounds = array<i64: 1664, 64>}, {pipeline_mode = #tpu.pipeline_mode<synchronous>, transform_indices = @transform_5, window_bounds = array<i64: 1, 64>}, {pipeline_mode = #tpu.pipeline_mode<synchronous>, transform_indices = @transform_6, window_bounds = array<i64: 1, 64>}, {transform_indices = @transform_7, window_bounds = array<i64: 1, 1, 128>}, {transform_indices = @transform_8, window_bounds = array<i64: 1, 1, 128>}, {transform_indices = @transform_9, window_bounds = array<i64: 1, 1, 128>}]} {
    %c0 = arith.constant 0 : index
    %c0_0 = arith.constant 0 : index
    %c0_1 = arith.constant 0 : index
    %0 = vector.load %arg1[%c0, %c0_0, %c0_1] : memref<1x256x128xbf16, #tpu.memory_space<vmem>>, vector<1x256x128xbf16>
    %1 = vector.shape_cast %0 : vector<1x256x128xbf16> to vector<256x128xbf16>
    %c0_2 = arith.constant 0 : index
    %c0_3 = arith.constant 0 : index
    %2 = vector.load %arg2[%c0_2, %c0_3] : memref<128x64xbf16, #tpu.memory_space<vmem>>, vector<128x64xbf16>
    %cst = arith.constant dense<0.000000e+00> : vector<256x64xf32>
    %3 = tpu.matmul %1, %2, %cst {dimension_numbers = #tpu.dot_dimension_numbers<[1], [0], [0], [1], [0, 0, 1, 1], [], []>} : vector<256x128xbf16>, vector<128x64xbf16>, vector<256x64xf32> -> vector<256x64xf32>
    %c0_4 = arith.constant 0 : index
    %c0_5 = arith.constant 0 : index
    %4 = vector.load %arg3[%c0_4, %c0_5] : memref<1x64xf32, #tpu.memory_space<vmem>>, vector<1x64xf32>
    %5 = vector.broadcast %4 : vector<1x64xf32> to vector<256x64xf32>
    %6 = arith.mulf %3, %5 : vector<256x64xf32>
    %c0_6 = arith.constant 0 : index
    %c0_7 = arith.constant 0 : index
    %7 = vector.load %arg4[%c0_6, %c0_7] : memref<1x64xf32, #tpu.memory_space<vmem>>, vector<1x64xf32>
    %8 = vector.broadcast %7 : vector<1x64xf32> to vector<256x64xf32>
    %9 = arith.addf %6, %8 : vector<256x64xf32>
    %cst_8 = arith.constant 0.000000e+00 : f32
    %10 = vector.broadcast %cst_8 : f32 to vector<256x64xf32>
    %11 = arith.cmpf ogt, %9, %10 : vector<256x64xf32>
    %cst_9 = arith.constant 0.000000e+00 : f32
    %12 = vector.broadcast %cst_9 : f32 to vector<256x64xf32>
    %13 = arith.minimumf %9, %12 : vector<256x64xf32>
    %14 = math.exp %13 : vector<256x64xf32>
    %cst_10 = arith.constant 1.000000e+00 : f32
    %15 = vector.broadcast %cst_10 : f32 to vector<256x64xf32>
    %16 = arith.subf %14, %15 : vector<256x64xf32>
    %17 = arith.select %11, %9, %16 : vector<256x64xi1>, vector<256x64xf32>
    %cst_11 = arith.constant 0.000000e+00 : bf16
    %18 = vector.broadcast %cst_11 : bf16 to vector<2x20x64xbf16>
    %c0_12 = arith.constant 0 : index
    %c0_13 = arith.constant 0 : index
    %c0_14 = arith.constant 0 : index
    %19 = vector.load %arg11[%c0_12, %c0_13, %c0_14] : memref<20x20x64xbf16, #tpu.memory_space<vmem>>, vector<2x20x64xbf16>
    tpu.vector_store %arg11[%c0_12, %c0_13, %c0_14], %18 {strides = array<i32>} : memref<20x20x64xbf16, #tpu.memory_space<vmem>>, vector<2x20x64xbf16>,
    %cst_15 = arith.constant 0.000000e+00 : bf16
    %20 = vector.broadcast %cst_15 : bf16 to vector<2x20x64xbf16>
    %c18 = arith.constant 18 : index
    %c0_16 = arith.constant 0 : index
    %c0_17 = arith.constant 0 : index
    %21 = vector.load %arg11[%c18, %c0_16, %c0_17] : memref<20x20x64xbf16, #tpu.memory_space<vmem>>, vector<2x20x64xbf16>
    tpu.vector_store %arg11[%c18, %c0_16, %c0_17], %20 {strides = array<i32>} : memref<20x20x64xbf16, #tpu.memory_space<vmem>>, vector<2x20x64xbf16>,
    %cst_18 = arith.constant 0.000000e+00 : bf16
    %22 = vector.broadcast %cst_18 : bf16 to vector<20x2x64xbf16>
    %c0_19 = arith.constant 0 : index
    %c0_20 = arith.constant 0 : index
    %c0_21 = arith.constant 0 : index
    %23 = vector.load %arg11[%c0_19, %c0_20, %c0_21] : memref<20x20x64xbf16, #tpu.memory_space<vmem>>, vector<20x2x64xbf16>
    tpu.vector_store %arg11[%c0_19, %c0_20, %c0_21], %22 {strides = array<i32>} : memref<20x20x64xbf16, #tpu.memory_space<vmem>>, vector<20x2x64xbf16>,
    %cst_22 = arith.constant 0.000000e+00 : bf16
    %24 = vector.broadcast %cst_22 : bf16 to vector<20x2x64xbf16>
    %c0_23 = arith.constant 0 : index
    %c18_24 = arith.constant 18 : index
    %c0_25 = arith.constant 0 : index
    %25 = vector.load %arg11[%c0_23, %c18_24, %c0_25] : memref<20x20x64xbf16, #tpu.memory_space<vmem>>, vector<20x2x64xbf16>
    tpu.vector_store %arg11[%c0_23, %c18_24, %c0_25], %24 {strides = array<i32>} : memref<20x20x64xbf16, #tpu.memory_space<vmem>>, vector<20x2x64xbf16>,
    %26 = arith.truncf %17 : vector<256x64xf32> to vector<256x64xbf16>
    %27 = vector.shape_cast %26 : vector<256x64xbf16> to vector<16x16x64xbf16>
    %c2 = arith.constant 2 : index
    %c2_26 = arith.constant 2 : index
    %c0_27 = arith.constant 0 : index
    %28 = vector.load %arg11[%c2, %c2_26, %c0_27] : memref<20x20x64xbf16, #tpu.memory_space<vmem>>, vector<16x16x64xbf16>
    tpu.vector_store %arg11[%c2, %c2_26, %c0_27], %27 {strides = array<i32>} : memref<20x20x64xbf16, #tpu.memory_space<vmem>>, vector<16x16x64xbf16>,
    %cst_28 = arith.constant 0.000000e+00 : f32
    %29 = vector.broadcast %cst_28 : f32 to vector<256x64xf32>
    %c0_29 = arith.constant 0 : index
    %c0_30 = arith.constant 0 : index
    %c0_31 = arith.constant 0 : index
    %30 = vector.load %arg11[%c0_29, %c0_30, %c0_31] : memref<20x20x64xbf16, #tpu.memory_space<vmem>>, vector<16x16x64xbf16>
    %31 = vector.shape_cast %30 : vector<16x16x64xbf16> to vector<256x64xbf16>
    %c0_32 = arith.constant 0 : index
    %c1 = arith.constant 1 : index
    %c0_33 = arith.constant 0 : index
    %32 = vector.load %arg11[%c0_32, %c1, %c0_33] : memref<20x20x64xbf16, #tpu.memory_space<vmem>>, vector<16x16x64xbf16>
    %33 = vector.shape_cast %32 : vector<16x16x64xbf16> to vector<256x64xbf16>
    %c0_34 = arith.constant 0 : index
    %c2_35 = arith.constant 2 : index
    %c0_36 = arith.constant 0 : index
    %34 = vector.load %arg11[%c0_34, %c2_35, %c0_36] : memref<20x20x64xbf16, #tpu.memory_space<vmem>>, vector<16x16x64xbf16>
    %35 = vector.shape_cast %34 : vector<16x16x64xbf16> to vector<256x64xbf16>
    %c0_37 = arith.constant 0 : index
    %c3 = arith.constant 3 : index
    %c0_38 = arith.constant 0 : index
    %36 = vector.load %arg11[%c0_37, %c3, %c0_38] : memref<20x20x64xbf16, #tpu.memory_space<vmem>>, vector<16x16x64xbf16>
    %37 = vector.shape_cast %36 : vector<16x16x64xbf16> to vector<256x64xbf16>
    %38 = tpu.concatenate %31, %33, %35, %37 in 1 : vector<256x64xbf16>, vector<256x64xbf16>, vector<256x64xbf16>, vector<256x64xbf16> -> vector<256x256xbf16>
    %c0_39 = arith.constant 0 : index
    %c0_40 = arith.constant 0 : index
    %39 = vector.load %arg5[%c0_39, %c0_40] : memref<1664x64xbf16, #tpu.memory_space<vmem>>, vector<256x64xbf16>
    %cst_41 = arith.constant dense<0.000000e+00> : vector<256x64xf32>
    %40 = tpu.matmul %38, %39, %cst_41 {dimension_numbers = #tpu.dot_dimension_numbers<[1], [0], [0], [1], [0, 0, 1, 1], [], []>} : vector<256x256xbf16>, vector<256x64xbf16>, vector<256x64xf32> -> vector<256x64xf32>
    %41 = arith.addf %29, %40 : vector<256x64xf32>
    %c0_42 = arith.constant 0 : index
    %c4 = arith.constant 4 : index
    %c0_43 = arith.constant 0 : index
    %42 = vector.load %arg11[%c0_42, %c4, %c0_43] : memref<20x20x64xbf16, #tpu.memory_space<vmem>>, vector<16x16x64xbf16>
    %43 = vector.shape_cast %42 : vector<16x16x64xbf16> to vector<256x64xbf16>
    %c1_44 = arith.constant 1 : index
    %c0_45 = arith.constant 0 : index
    %c0_46 = arith.constant 0 : index
    %44 = vector.load %arg11[%c1_44, %c0_45, %c0_46] : memref<20x20x64xbf16, #tpu.memory_space<vmem>>, vector<16x16x64xbf16>
    %45 = vector.shape_cast %44 : vector<16x16x64xbf16> to vector<256x64xbf16>
    %c1_47 = arith.constant 1 : index
    %c1_48 = arith.constant 1 : index
    %c0_49 = arith.constant 0 : index
    %46 = vector.load %arg11[%c1_47, %c1_48, %c0_49] : memref<20x20x64xbf16, #tpu.memory_space<vmem>>, vector<16x16x64xbf16>
    %47 = vector.shape_cast %46 : vector<16x16x64xbf16> to vector<256x64xbf16>
    %c1_50 = arith.constant 1 : index
    %c2_51 = arith.constant 2 : index
    %c0_52 = arith.constant 0 : index
    %48 = vector.load %arg11[%c1_50, %c2_51, %c0_52] : memref<20x20x64xbf16, #tpu.memory_space<vmem>>, vector<16x16x64xbf16>
    %49 = vector.shape_cast %48 : vector<16x16x64xbf16> to vector<256x64xbf16>
    %50 = tpu.concatenate %43, %45, %47, %49 in 1 : vector<256x64xbf16>, vector<256x64xbf16>, vector<256x64xbf16>, vector<256x64xbf16> -> vector<256x256xbf16>
    %c256 = arith.constant 256 : index
    %c0_53 = arith.constant 0 : index
    %51 = vector.load %arg5[%c256, %c0_53] : memref<1664x64xbf16, #tpu.memory_space<vmem>>, vector<256x64xbf16>
    %cst_54 = arith.constant dense<0.000000e+00> : vector<256x64xf32>
    %52 = tpu.matmul %50, %51, %cst_54 {dimension_numbers = #tpu.dot_dimension_numbers<[1], [0], [0], [1], [0, 0, 1, 1], [], []>} : vector<256x256xbf16>, vector<256x64xbf16>, vector<256x64xf32> -> vector<256x64xf32>
    %53 = arith.addf %41, %52 : vector<256x64xf32>
    %c1_55 = arith.constant 1 : index
    %c3_56 = arith.constant 3 : index
    %c0_57 = arith.constant 0 : index
    %54 = vector.load %arg11[%c1_55, %c3_56, %c0_57] : memref<20x20x64xbf16, #tpu.memory_space<vmem>>, vector<16x16x64xbf16>
    %55 = vector.shape_cast %54 : vector<16x16x64xbf16> to vector<256x64xbf16>
    %c1_58 = arith.constant 1 : index
    %c4_59 = arith.constant 4 : index
    %c0_60 = arith.constant 0 : index
    %56 = vector.load %arg11[%c1_58, %c4_59, %c0_60] : memref<20x20x64xbf16, #tpu.memory_space<vmem>>, vector<16x16x64xbf16>
    %57 = vector.shape_cast %56 : vector<16x16x64xbf16> to vector<256x64xbf16>
    %c2_61 = arith.constant 2 : index
    %c0_62 = arith.constant 0 : index
    %c0_63 = arith.constant 0 : index
    %58 = vector.load %arg11[%c2_61, %c0_62, %c0_63] : memref<20x20x64xbf16, #tpu.memory_space<vmem>>, vector<16x16x64xbf16>
    %59 = vector.shape_cast %58 : vector<16x16x64xbf16> to vector<256x64xbf16>
    %c2_64 = arith.constant 2 : index
    %c1_65 = arith.constant 1 : index
    %c0_66 = arith.constant 0 : index
    %60 = vector.load %arg11[%c2_64, %c1_65, %c0_66] : memref<20x20x64xbf16, #tpu.memory_space<vmem>>, vector<16x16x64xbf16>
    %61 = vector.shape_cast %60 : vector<16x16x64xbf16> to vector<256x64xbf16>
    %62 = tpu.concatenate %55, %57, %59, %61 in 1 : vector<256x64xbf16>, vector<256x64xbf16>, vector<256x64xbf16>, vector<256x64xbf16> -> vector<256x256xbf16>
    %c512 = arith.constant 512 : index
    %c0_67 = arith.constant 0 : index
    %63 = vector.load %arg5[%c512, %c0_67] : memref<1664x64xbf16, #tpu.memory_space<vmem>>, vector<256x64xbf16>
    %cst_68 = arith.constant dense<0.000000e+00> : vector<256x64xf32>
    %64 = tpu.matmul %62, %63, %cst_68 {dimension_numbers = #tpu.dot_dimension_numbers<[1], [0], [0], [1], [0, 0, 1, 1], [], []>} : vector<256x256xbf16>, vector<256x64xbf16>, vector<256x64xf32> -> vector<256x64xf32>
    %65 = arith.addf %53, %64 : vector<256x64xf32>
    %c2_69 = arith.constant 2 : index
    %c2_70 = arith.constant 2 : index
    %c0_71 = arith.constant 0 : index
    %66 = vector.load %arg11[%c2_69, %c2_70, %c0_71] : memref<20x20x64xbf16, #tpu.memory_space<vmem>>, vector<16x16x64xbf16>
    %67 = vector.shape_cast %66 : vector<16x16x64xbf16> to vector<256x64xbf16>
    %c2_72 = arith.constant 2 : index
    %c3_73 = arith.constant 3 : index
    %c0_74 = arith.constant 0 : index
    %68 = vector.load %arg11[%c2_72, %c3_73, %c0_74] : memref<20x20x64xbf16, #tpu.memory_space<vmem>>, vector<16x16x64xbf16>
    %69 = vector.shape_cast %68 : vector<16x16x64xbf16> to vector<256x64xbf16>
    %c2_75 = arith.constant 2 : index
    %c4_76 = arith.constant 4 : index
    %c0_77 = arith.constant 0 : index
    %70 = vector.load %arg11[%c2_75, %c4_76, %c0_77] : memref<20x20x64xbf16, #tpu.memory_space<vmem>>, vector<16x16x64xbf16>
    %71 = vector.shape_cast %70 : vector<16x16x64xbf16> to vector<256x64xbf16>
    %c3_78 = arith.constant 3 : index
    %c0_79 = arith.constant 0 : index
    %c0_80 = arith.constant 0 : index
    %72 = vector.load %arg11[%c3_78, %c0_79, %c0_80] : memref<20x20x64xbf16, #tpu.memory_space<vmem>>, vector<16x16x64xbf16>
    %73 = vector.shape_cast %72 : vector<16x16x64xbf16> to vector<256x64xbf16>
    %74 = tpu.concatenate %67, %69, %71, %73 in 1 : vector<256x64xbf16>, vector<256x64xbf16>, vector<256x64xbf16>, vector<256x64xbf16> -> vector<256x256xbf16>
    %c768 = arith.constant 768 : index
    %c0_81 = arith.constant 0 : index
    %75 = vector.load %arg5[%c768, %c0_81] : memref<1664x64xbf16, #tpu.memory_space<vmem>>, vector<256x64xbf16>
    %cst_82 = arith.constant dense<0.000000e+00> : vector<256x64xf32>
    %76 = tpu.matmul %74, %75, %cst_82 {dimension_numbers = #tpu.dot_dimension_numbers<[1], [0], [0], [1], [0, 0, 1, 1], [], []>} : vector<256x256xbf16>, vector<256x64xbf16>, vector<256x64xf32> -> vector<256x64xf32>
    %77 = arith.addf %65, %76 : vector<256x64xf32>
    %c3_83 = arith.constant 3 : index
    %c1_84 = arith.constant 1 : index
    %c0_85 = arith.constant 0 : index
    %78 = vector.load %arg11[%c3_83, %c1_84, %c0_85] : memref<20x20x64xbf16, #tpu.memory_space<vmem>>, vector<16x16x64xbf16>
    %79 = vector.shape_cast %78 : vector<16x16x64xbf16> to vector<256x64xbf16>
    %c3_86 = arith.constant 3 : index
    %c2_87 = arith.constant 2 : index
    %c0_88 = arith.constant 0 : index
    %80 = vector.load %arg11[%c3_86, %c2_87, %c0_88] : memref<20x20x64xbf16, #tpu.memory_space<vmem>>, vector<16x16x64xbf16>
    %81 = vector.shape_cast %80 : vector<16x16x64xbf16> to vector<256x64xbf16>
    %c3_89 = arith.constant 3 : index
    %c3_90 = arith.constant 3 : index
    %c0_91 = arith.constant 0 : index
    %82 = vector.load %arg11[%c3_89, %c3_90, %c0_91] : memref<20x20x64xbf16, #tpu.memory_space<vmem>>, vector<16x16x64xbf16>
    %83 = vector.shape_cast %82 : vector<16x16x64xbf16> to vector<256x64xbf16>
    %c3_92 = arith.constant 3 : index
    %c4_93 = arith.constant 4 : index
    %c0_94 = arith.constant 0 : index
    %84 = vector.load %arg11[%c3_92, %c4_93, %c0_94] : memref<20x20x64xbf16, #tpu.memory_space<vmem>>, vector<16x16x64xbf16>
    %85 = vector.shape_cast %84 : vector<16x16x64xbf16> to vector<256x64xbf16>
    %86 = tpu.concatenate %79, %81, %83, %85 in 1 : vector<256x64xbf16>, vector<256x64xbf16>, vector<256x64xbf16>, vector<256x64xbf16> -> vector<256x256xbf16>
    %c1024 = arith.constant 1024 : index
    %c0_95 = arith.constant 0 : index
    %87 = vector.load %arg5[%c1024, %c0_95] : memref<1664x64xbf16, #tpu.memory_space<vmem>>, vector<256x64xbf16>
    %cst_96 = arith.constant dense<0.000000e+00> : vector<256x64xf32>
    %88 = tpu.matmul %86, %87, %cst_96 {dimension_numbers = #tpu.dot_dimension_numbers<[1], [0], [0], [1], [0, 0, 1, 1], [], []>} : vector<256x256xbf16>, vector<256x64xbf16>, vector<256x64xf32> -> vector<256x64xf32>
    %89 = arith.addf %77, %88 : vector<256x64xf32>
    %c4_97 = arith.constant 4 : index
    %c0_98 = arith.constant 0 : index
    %c0_99 = arith.constant 0 : index
    %90 = vector.load %arg11[%c4_97, %c0_98, %c0_99] : memref<20x20x64xbf16, #tpu.memory_space<vmem>>, vector<16x16x64xbf16>
    %91 = vector.shape_cast %90 : vector<16x16x64xbf16> to vector<256x64xbf16>
    %c4_100 = arith.constant 4 : index
    %c1_101 = arith.constant 1 : index
    %c0_102 = arith.constant 0 : index
    %92 = vector.load %arg11[%c4_100, %c1_101, %c0_102] : memref<20x20x64xbf16, #tpu.memory_space<vmem>>, vector<16x16x64xbf16>
    %93 = vector.shape_cast %92 : vector<16x16x64xbf16> to vector<256x64xbf16>
    %c4_103 = arith.constant 4 : index
    %c2_104 = arith.constant 2 : index
    %c0_105 = arith.constant 0 : index
    %94 = vector.load %arg11[%c4_103, %c2_104, %c0_105] : memref<20x20x64xbf16, #tpu.memory_space<vmem>>, vector<16x16x64xbf16>
    %95 = vector.shape_cast %94 : vector<16x16x64xbf16> to vector<256x64xbf16>
    %c4_106 = arith.constant 4 : index
    %c3_107 = arith.constant 3 : index
    %c0_108 = arith.constant 0 : index
    %96 = vector.load %arg11[%c4_106, %c3_107, %c0_108] : memref<20x20x64xbf16, #tpu.memory_space<vmem>>, vector<16x16x64xbf16>
    %97 = vector.shape_cast %96 : vector<16x16x64xbf16> to vector<256x64xbf16>
    %98 = tpu.concatenate %91, %93, %95, %97 in 1 : vector<256x64xbf16>, vector<256x64xbf16>, vector<256x64xbf16>, vector<256x64xbf16> -> vector<256x256xbf16>
    %c1280 = arith.constant 1280 : index
    %c0_109 = arith.constant 0 : index
    %99 = vector.load %arg5[%c1280, %c0_109] : memref<1664x64xbf16, #tpu.memory_space<vmem>>, vector<256x64xbf16>
    %cst_110 = arith.constant dense<0.000000e+00> : vector<256x64xf32>
    %100 = tpu.matmul %98, %99, %cst_110 {dimension_numbers = #tpu.dot_dimension_numbers<[1], [0], [0], [1], [0, 0, 1, 1], [], []>} : vector<256x256xbf16>, vector<256x64xbf16>, vector<256x64xf32> -> vector<256x64xf32>
    %101 = arith.addf %89, %100 : vector<256x64xf32>
    %c4_111 = arith.constant 4 : index
    %c4_112 = arith.constant 4 : index
    %c0_113 = arith.constant 0 : index
    %102 = vector.load %arg11[%c4_111, %c4_112, %c0_113] : memref<20x20x64xbf16, #tpu.memory_space<vmem>>, vector<16x16x64xbf16>
    %103 = vector.shape_cast %102 : vector<16x16x64xbf16> to vector<256x64xbf16>
    %c1536 = arith.constant 1536 : index
    %c0_114 = arith.constant 0 : index
    %104 = vector.load %arg5[%c1536, %c0_114] : memref<1664x64xbf16, #tpu.memory_space<vmem>>, vector<64x64xbf16>
    %cst_115 = arith.constant dense<0.000000e+00> : vector<256x64xf32>
    %105 = tpu.matmul %103, %104, %cst_115 {dimension_numbers = #tpu.dot_dimension_numbers<[1], [0], [0], [1], [0, 0, 1, 1], [], []>} : vector<256x64xbf16>, vector<64x64xbf16>, vector<256x64xf32> -> vector<256x64xf32>
    %106 = arith.addf %101, %105 : vector<256x64xf32>
    %c0_116 = arith.constant 0 : index
    %c0_117 = arith.constant 0 : index
    %107 = vector.load %arg6[%c0_116, %c0_117] : memref<1x64xf32, #tpu.memory_space<vmem>>, vector<1x64xf32>
    %108 = vector.broadcast %107 : vector<1x64xf32> to vector<256x64xf32>
    %109 = arith.mulf %106, %108 : vector<256x64xf32>
    %c0_118 = arith.constant 0 : index
    %c0_119 = arith.constant 0 : index
    %110 = vector.load %arg7[%c0_118, %c0_119] : memref<1x64xf32, #tpu.memory_space<vmem>>, vector<1x64xf32>
    %111 = vector.broadcast %110 : vector<1x64xf32> to vector<256x64xf32>
    %112 = arith.addf %109, %111 : vector<256x64xf32>
    %cst_120 = arith.constant 0.000000e+00 : f32
    %113 = vector.broadcast %cst_120 : f32 to vector<256x64xf32>
    %114 = arith.cmpf ogt, %112, %113 : vector<256x64xf32>
    %cst_121 = arith.constant 0.000000e+00 : f32
    %115 = vector.broadcast %cst_121 : f32 to vector<256x64xf32>
    %116 = arith.minimumf %112, %115 : vector<256x64xf32>
    %117 = math.exp %116 : vector<256x64xf32>
    %cst_122 = arith.constant 1.000000e+00 : f32
    %118 = vector.broadcast %cst_122 : f32 to vector<256x64xf32>
    %119 = arith.subf %117, %118 : vector<256x64xf32>
    %120 = arith.select %114, %112, %119 : vector<256x64xi1>, vector<256x64xf32>
    %cst_123 = arith.constant dense<0xFF800000> : vector<256xf32>
    %121 = vector.multi_reduction <maximumf>, %120, %cst_123 [1] : vector<256x64xf32> to vector<256xf32>
    %122 = vector.shape_cast %121 : vector<256xf32> to vector<256x1xf32>
    %123 = tpu.iota {dimensions = array<i32: 1>} : vector<256x64xi32>
    %124 = vector.broadcast %122 : vector<256x1xf32> to vector<256x64xf32>
    %125 = arith.cmpf oeq, %120, %124 : vector<256x64xf32>
    %c64_i32 = arith.constant 64 : i32
    %126 = vector.broadcast %c64_i32 : i32 to vector<256x64xi32>
    %127 = arith.select %125, %123, %126 : vector<256x64xi1>, vector<256x64xi32>
    %cst_124 = arith.constant dense<2147483647> : vector<256xi32>
    %128 = vector.multi_reduction <minsi>, %127, %cst_124 [1] : vector<256x64xi32> to vector<256xi32>
    %129 = vector.shape_cast %128 : vector<256xi32> to vector<256x1xi32>
    %130 = vector.shape_cast %122 : vector<256x1xf32> to vector<2x128xf32>
    %131 = vector.shape_cast %129 : vector<256x1xi32> to vector<2x128xi32>
    %132 = tpu.iota {dimensions = array<i32: 0>} : vector<2x128xi32>
    %c128_i32 = arith.constant 128 : i32
    %133 = vector.broadcast %c128_i32 : i32 to vector<2x128xi32>
    %134 = arith.muli %132, %133 : vector<2x128xi32>
    %135 = tpu.iota {dimensions = array<i32: 1>} : vector<2x128xi32>
    %136 = arith.addi %134, %135 : vector<2x128xi32>
    %137 = tpu.iota {dimensions = array<i32: 1>} : vector<1x128xi32>
    %cst_125 = arith.constant 0.000000e+00 : f32
    %138 = vector.broadcast %cst_125 : f32 to vector<1x128xf32>
    %cst_126 = arith.constant 0.000000e+00 : f32
    %139 = vector.broadcast %cst_126 : f32 to vector<1x128xf32>
    %c0_i32 = arith.constant 0 : i32
    %140 = vector.broadcast %c0_i32 : i32 to vector<1x128xi32>
    %c0_i32_127 = arith.constant 0 : i32
    %c128_i32_128 = arith.constant 128 : i32
    %141 = arith.addi %c0_i32_127, %c128_i32_128 : i32
    %c1_i32 = arith.constant 1 : i32
    %142:4 = scf.for %arg12 = %c0_i32_127 to %141 step %c1_i32 iter_args(%arg13 = %130, %arg14 = %138, %arg15 = %139, %arg16 = %140) -> (vector<2x128xf32>, vector<1x128xf32>, vector<1x128xf32>, vector<1x128xi32>)  : i32 {
      %cst_139 = arith.constant dense<0xFF800000> : vector<128xf32>
      %149 = vector.multi_reduction <maximumf>, %arg13, %cst_139 [0] : vector<2x128xf32> to vector<128xf32>
      %150 = vector.shape_cast %149 : vector<128xf32> to vector<1x128xf32>
      %cst_140 = arith.constant dense<0xFF800000> : vector<1xf32>
      %151 = vector.multi_reduction <maximumf>, %150, %cst_140 [1] : vector<1x128xf32> to vector<1xf32>
      %152 = vector.shape_cast %151 : vector<1xf32> to vector<1x1xf32>
      %153 = vector.broadcast %152 : vector<1x1xf32> to vector<2x128xf32>
      %154 = arith.cmpf oeq, %arg13, %153 : vector<2x128xf32>
      %c256_i32 = arith.constant 256 : i32
      %155 = vector.broadcast %c256_i32 : i32 to vector<2x128xi32>
      %156 = arith.select %154, %136, %155 : vector<2x128xi1>, vector<2x128xi32>
      %cst_141 = arith.constant dense<2147483647> : vector<128xi32>
      %157 = vector.multi_reduction <minsi>, %156, %cst_141 [0] : vector<2x128xi32> to vector<128xi32>
      %158 = vector.shape_cast %157 : vector<128xi32> to vector<1x128xi32>
      %cst_142 = arith.constant dense<2147483647> : vector<1xi32>
      %159 = vector.multi_reduction <minsi>, %158, %cst_142 [1] : vector<1x128xi32> to vector<1xi32>
      %160 = vector.shape_cast %159 : vector<1xi32> to vector<1x1xi32>
      %161 = vector.broadcast %160 : vector<1x1xi32> to vector<2x128xi32>
      %162 = arith.cmpi eq, %136, %161 : vector<2x128xi32>
      %c0_i32_143 = arith.constant 0 : i32
      %163 = vector.broadcast %c0_i32_143 : i32 to vector<2x128xi32>
      %164 = arith.select %162, %131, %163 : vector<2x128xi1>, vector<2x128xi32>
      %cst_144 = arith.constant dense<0> : vector<128xi32>
      %165 = vector.multi_reduction <add>, %164, %cst_144 [0] : vector<2x128xi32> to vector<128xi32>
      %166 = vector.shape_cast %165 : vector<128xi32> to vector<1x128xi32>
      %cst_145 = arith.constant dense<0> : vector<1xi32>
      %167 = vector.multi_reduction <add>, %166, %cst_145 [1] : vector<1x128xi32> to vector<1xi32>
      %168 = vector.shape_cast %167 : vector<1xi32> to vector<1x1xi32>
      %169 = vector.broadcast %arg12 : i32 to vector<1x128xi32>
      %170 = arith.cmpi eq, %137, %169 : vector<1x128xi32>
      %171 = vector.shape_cast %152 : vector<1x1xf32> to vector<1x1xf32>
      %172 = vector.broadcast %171 : vector<1x1xf32> to vector<1x128xf32>
      %173 = arith.select %170, %172, %arg14 : vector<1x128xi1>, vector<1x128xf32>
      %174 = arith.sitofp %168 : vector<1x1xi32> to vector<1x1xf32>
      %175 = vector.shape_cast %174 : vector<1x1xf32> to vector<1x1xf32>
      %176 = vector.broadcast %175 : vector<1x1xf32> to vector<1x128xf32>
      %177 = arith.select %170, %176, %arg15 : vector<1x128xi1>, vector<1x128xf32>
      %178 = vector.shape_cast %160 : vector<1x1xi32> to vector<1x1xi32>
      %179 = vector.broadcast %178 : vector<1x1xi32> to vector<1x128xi32>
      %180 = arith.select %170, %179, %arg16 : vector<1x128xi1>, vector<1x128xi32>
      %cst_146 = arith.constant -1.000000e+30 : f32
      %181 = vector.broadcast %cst_146 : f32 to vector<2x128xf32>
      %182 = arith.select %162, %181, %arg13 : vector<2x128xi1>, vector<2x128xf32>
      scf.yield %182, %173, %177, %180 : vector<2x128xf32>, vector<1x128xf32>, vector<1x128xf32>, vector<1x128xi32>
    }
    %c128_i32_129 = arith.constant 128 : i32
    %143 = vector.shape_cast %142#1 : vector<1x128xf32> to vector<1x1x128xf32>
    %c0_130 = arith.constant 0 : index
    %c0_131 = arith.constant 0 : index
    %c0_132 = arith.constant 0 : index
    %144 = vector.load %arg9[%c0_130, %c0_131, %c0_132] : memref<1x1x128xf32, #tpu.memory_space<vmem>>, vector<1x1x128xf32>
    tpu.vector_store %arg9[%c0_130, %c0_131, %c0_132], %143 {strides = array<i32>} : memref<1x1x128xf32, #tpu.memory_space<vmem>>, vector<1x1x128xf32>,
    %145 = vector.shape_cast %142#2 : vector<1x128xf32> to vector<1x1x128xf32>
    %c0_133 = arith.constant 0 : index
    %c0_134 = arith.constant 0 : index
    %c0_135 = arith.constant 0 : index
    %146 = vector.load %arg8[%c0_133, %c0_134, %c0_135] : memref<1x1x128xf32, #tpu.memory_space<vmem>>, vector<1x1x128xf32>
    tpu.vector_store %arg8[%c0_133, %c0_134, %c0_135], %145 {strides = array<i32>} : memref<1x1x128xf32, #tpu.memory_space<vmem>>, vector<1x1x128xf32>,
    %147 = vector.shape_cast %142#3 : vector<1x128xi32> to vector<1x1x128xi32>
    %c0_136 = arith.constant 0 : index
    %c0_137 = arith.constant 0 : index
    %c0_138 = arith.constant 0 : index
    %148 = vector.load %arg10[%c0_136, %c0_137, %c0_138] : memref<1x1x128xi32, #tpu.memory_space<vmem>>, vector<1x1x128xi32>
    tpu.vector_store %arg10[%c0_136, %c0_137, %c0_138], %147 {strides = array<i32>} : memref<1x1x128xi32, #tpu.memory_space<vmem>>, vector<1x1x128xi32>,
    return
  }
  func.func @transform_0(%arg0: i32) -> (i32, i32, i32) {
    %c0_i32 = arith.constant 0 : i32
    %c0_i32_0 = arith.constant 0 : i32
    %c0_i32_1 = arith.constant 0 : i32
    return %arg0, %c0_i32, %c0_i32_0 : i32, i32, i32
  }
  func.func @transform_1(%arg0: i32) -> (i32, i32) {
    %c0_i32 = arith.constant 0 : i32
    %c0_i32_0 = arith.constant 0 : i32
    %c0_i32_1 = arith.constant 0 : i32
    return %c0_i32, %c0_i32_0 : i32, i32
  }
  func.func @transform_2(%arg0: i32) -> (i32, i32) {
    %c0_i32 = arith.constant 0 : i32
    %c0_i32_0 = arith.constant 0 : i32
    %c0_i32_1 = arith.constant 0 : i32
    return %c0_i32, %c0_i32_0 : i32, i32
  }
  func.func @transform_3(%arg0: i32) -> (i32, i32) {
    %c0_i32 = arith.constant 0 : i32
    %c0_i32_0 = arith.constant 0 : i32
    %c0_i32_1 = arith.constant 0 : i32
    return %c0_i32, %c0_i32_0 : i32, i32
  }
  func.func @transform_4(%arg0: i32) -> (i32, i32) {
    %c0_i32 = arith.constant 0 : i32
    %c0_i32_0 = arith.constant 0 : i32
    %c0_i32_1 = arith.constant 0 : i32
    return %c0_i32, %c0_i32_0 : i32, i32
  }
  func.func @transform_5(%arg0: i32) -> (i32, i32) {
    %c0_i32 = arith.constant 0 : i32
    %c0_i32_0 = arith.constant 0 : i32
    %c0_i32_1 = arith.constant 0 : i32
    return %c0_i32, %c0_i32_0 : i32, i32
  }
  func.func @transform_6(%arg0: i32) -> (i32, i32) {
    %c0_i32 = arith.constant 0 : i32
    %c0_i32_0 = arith.constant 0 : i32
    %c0_i32_1 = arith.constant 0 : i32
    return %c0_i32, %c0_i32_0 : i32, i32
  }
  func.func @transform_7(%arg0: i32) -> (i32, i32, i32) {
    %c0_i32 = arith.constant 0 : i32
    %c0_i32_0 = arith.constant 0 : i32
    %c0_i32_1 = arith.constant 0 : i32
    return %arg0, %c0_i32, %c0_i32_0 : i32, i32, i32
  }
  func.func @transform_8(%arg0: i32) -> (i32, i32, i32) {
    %c0_i32 = arith.constant 0 : i32
    %c0_i32_0 = arith.constant 0 : i32
    %c0_i32_1 = arith.constant 0 : i32
    return %arg0, %c0_i32, %c0_i32_0 : i32, i32, i32
  }
  func.func @transform_9(%arg0: i32) -> (i32, i32, i32) {
    %c0_i32 = arith.constant 0 : i32
    %c0_i32_0 = arith.constant 0 : i32
    %c0_i32_1 = arith.constant 0 : i32
    return %arg0, %c0_i32, %c0_i32_0 : i32, i32, i32
  }
}

</mosaic_0001>

<llo_original>
// kernel: tpu_custom_call.1
$region0: #{tpu_custom_call.1}
  #allocation0 [shape = 'u32[]', space=smem, size = 0x4, offset = 0x4, fixed_abs, tag = 'smem constant byte address 0x4 - core index']
  #allocation1 [shape = 'u32[144,128]{1,0:T(1,128)}', space=vmem, size = 0x12000, scoped, tag = 'internal scratch']
  #allocation2 [shape = 'bf16[20,20,64]{2,1,0:T(8,128)(2,1)}', space=vmem, size = 0x1e000, scoped, tag = 'scratch operand']
  %s0 = inlined_call_operand.vmem [shape: bf16[2,256,128], index: 0, kind: input, shape index: {}]
  %s1 = inlined_call_operand.vmem [shape: bf16[128,64], index: 1, kind: input, shape index: {}]
  %s2 = inlined_call_operand.vmem [shape: f32[1,64], index: 2, kind: input, shape index: {}]
  %s3 = inlined_call_operand.vmem [shape: f32[1,64], index: 3, kind: input, shape index: {}]
  %s4 = inlined_call_operand.vmem [shape: bf16[1664,64], index: 4, kind: input, shape index: {}]
  %s5 = inlined_call_operand.vmem [shape: f32[1,64], index: 5, kind: input, shape index: {}]
  %s6 = inlined_call_operand.vmem [shape: f32[1,64], index: 6, kind: input, shape index: {}]
  %s7 = inlined_call_operand.hbm [shape: f32[2,1,128], index: 7, kind: output, shape index: {0}]
  %s8 = inlined_call_operand.hbm [shape: f32[2,1,128], index: 8, kind: output, shape index: {1}]
  %s9 = inlined_call_operand.hbm [shape: s32[2,1,128], index: 9, kind: output, shape index: {2}]
  %10 = xla_tuple %s7, %s8, %s9
  %s11 = sld [smem:[#allocation0]]
  $region84: #{tpu_custom_call.1} parent=0
    _
  %s13 = ssub.s32 1, %s11
  %s14 = scalar_select 0, %s13, %s11
  $region1: #{tpu_custom_call.1} parent=0
    #allocation3 [shape = 'u8[1024]{0}', space=vmem, size = 0x400, scoped, tag = 'output window, operand 0']
    #allocation4 [shape = 's32[2]{0}', space=sflag, size = 0x8, scoped, tag = 'scoped memory for tpu_custom_call.1']
    #allocation5 [shape = 'u8[1024]{0}', space=vmem, size = 0x400, scoped, tag = 'output window, operand 1']
    #allocation6 [shape = 's32[2]{0}', space=sflag, size = 0x8, scoped, tag = 'scoped memory for tpu_custom_call.1']
    #allocation7 [shape = 'u8[1024]{0}', space=vmem, size = 0x400, scoped, tag = 'output window, operand 2']
    %15 = vsyncpa [#allocation4], 0
    %s16 = scalar_lea.sflag [#allocation4], 1
    %17 = vsyncpa %s16, 0
    %18 = vsyncpa [#allocation6], 0
    %s19 = scalar_lea.sflag [#allocation6], 1
    %20 = vsyncpa %s19, 0
    loop: start=0, step=1, limit=4
    $region2: #{tpu_custom_call.1} parent=1 // loop_pre_header
      _
    $region3: #{tpu_custom_call.1} parent=1 // loop_header
      %s22 = sphi 0, %s26
      %p23 = scmp.ge.s32.totalorder %s22, 4
      %s32 = sphi 0, %s34
      %s35 = sphi 0, %s32
      %s36 = sphi 0, %s35
      %s52 = sphi 0, %s36
      %s56 = sphi 0, %s56
      %s58 = sphi 0, %s56
      %s59 = sphi 0, %s58
      %s73 = sphi 0, %s59
      %s77 = sphi 0, %s77
      %s79 = sphi 0, %s77
      %s80 = sphi 0, %s79
      %s94 = sphi 0, %s80
      %s98 = sphi 0, %s98
      %s100 = sphi 0, %s98
      %s101 = sphi 0, %s100
      %s115 = sphi 0, %s101
      %s119 = sphi 0, %s119
      %s121 = sphi 0, %s119
      %s122 = sphi 0, %s121
      %s136 = sphi 0, %s122
      %s140 = sphi 0, %s140
      %s142 = sphi 0, %s140
      %s143 = sphi 0, %s142
      %s157 = sphi 0, %s143
      %s161 = sphi 0, %s161
      %s163 = sphi 0, %s161
      %s164 = sphi 0, %s163
      %s178 = sphi 0, %s164
      %s184 = sphi 0, %s186
      %s187 = sphi 0, %s184
      %s188 = sphi 0, %s187
      %s204 = sphi 0, %s188
      %s210 = sphi 0, %s212
      %s213 = sphi 0, %s210
      %s214 = sphi 0, %s213
      %s230 = sphi 0, %s214
      %s236 = sphi 0, %s238
      %s239 = sphi 0, %s236
      %s240 = sphi 0, %s239
      %s256 = sphi 0, %s240
    $region4: #{tpu_custom_call.1} parent=1 // loop_header_branch
      %25 = sbr.rel (%p23) target = $region8
    $region5: #{tpu_custom_call.1} parent=1 // loop_body
      %s27 = ssub.s32 %s22, 1
      %s28 = ssub.s32 %s22, 2
      %s29 = sadd.s32 %s22, 1
      %s30 = ssub.s32 %s22, %s29
      %p31 = scmp.eq.s32.totalorder %s30, 0
      %s33 = sadd.s32 %s32, 1
      %s34 = scalar_select %p31, %s32, %s33
      %p37 = pneg %p31
      %p38 = scmp.eq.s32.totalorder %s22, 1
      %p39 = por %p37, %p38
      %p40 = scmp.ne.s32.totalorder %s32, %s35
      %p41 = scmp.eq.s32.totalorder %s22, 0
      %p42 = por %p40, %p41
      %p43 = scmp.ne.s32.totalorder %s32, %s35
      %p44 = scmp.eq.s32.totalorder %s27, 1
      %p45 = por %p43, %p44
      %p46 = scmp.ne.s32.totalorder %s35, %s36
      %p47 = scmp.eq.s32.totalorder %s27, 0
      %p48 = por %p46, %p47
      %p49 = scmp.ne.s32.totalorder %s35, %s36
      %p50 = scmp.eq.s32.totalorder %s28, 1
      %p51 = por %p49, %p50
      %p53 = scmp.ne.s32.totalorder %s36, %s52
      %p54 = scmp.eq.s32.totalorder %s28, 0
      %p55 = por %p53, %p54
      %s57 = sadd.s32 %s56, 1
      %p60 = scmp.eq.s32.totalorder %s22, 1
      %p61 = scmp.ne.s32.totalorder %s56, %s58
      %p62 = scmp.eq.s32.totalorder %s22, 0
      %p63 = por %p61, %p62
      %p64 = scmp.ne.s32.totalorder %s56, %s58
      %p65 = scmp.eq.s32.totalorder %s27, 1
      %p66 = por %p64, %p65
      %p67 = scmp.ne.s32.totalorder %s58, %s59
      %p68 = scmp.eq.s32.totalorder %s27, 0
      %p69 = por %p67, %p68
      %p70 = scmp.ne.s32.totalorder %s58, %s59
      %p71 = scmp.eq.s32.totalorder %s28, 1
      %p72 = por %p70, %p71
      %p74 = scmp.ne.s32.totalorder %s59, %s73
      %p75 = scmp.eq.s32.totalorder %s28, 0
      %p76 = por %p74, %p75
      %s78 = sadd.s32 %s77, 1
      %p81 = scmp.eq.s32.totalorder %s22, 1
      %p82 = scmp.ne.s32.totalorder %s77, %s79
      %p83 = scmp.eq.s32.totalorder %s22, 0
      %p84 = por %p82, %p83
      %p85 = scmp.ne.s32.totalorder %s77, %s79
      %p86 = scmp.eq.s32.totalorder %s27, 1
      %p87 = por %p85, %p86
      %p88 = scmp.ne.s32.totalorder %s79, %s80
      %p89 = scmp.eq.s32.totalorder %s27, 0
      %p90 = por %p88, %p89
      %p91 = scmp.ne.s32.totalorder %s79, %s80
      %p92 = scmp.eq.s32.totalorder %s28, 1
      %p93 = por %p91, %p92
      %p95 = scmp.ne.s32.totalorder %s80, %s94
      %p96 = scmp.eq.s32.totalorder %s28, 0
      %p97 = por %p95, %p96
      %s99 = sadd.s32 %s98, 1
      %p102 = scmp.eq.s32.totalorder %s22, 1
      %p103 = scmp.ne.s32.totalorder %s98, %s100
      %p104 = scmp.eq.s32.totalorder %s22, 0
      %p105 = por %p103, %p104
      %p106 = scmp.ne.s32.totalorder %s98, %s100
      %p107 = scmp.eq.s32.totalorder %s27, 1
      %p108 = por %p106, %p107
      %p109 = scmp.ne.s32.totalorder %s100, %s101
      %p110 = scmp.eq.s32.totalorder %s27, 0
      %p111 = por %p109, %p110
      %p112 = scmp.ne.s32.totalorder %s100, %s101
      %p113 = scmp.eq.s32.totalorder %s28, 1
      %p114 = por %p112, %p113
      %p116 = scmp.ne.s32.totalorder %s101, %s115
      %p117 = scmp.eq.s32.totalorder %s28, 0
      %p118 = por %p116, %p117
      %s120 = sadd.s32 %s119, 1
      %p123 = scmp.eq.s32.totalorder %s22, 1
      %p124 = scmp.ne.s32.totalorder %s119, %s121
      %p125 = scmp.eq.s32.totalorder %s22, 0
      %p126 = por %p124, %p125
      %p127 = scmp.ne.s32.totalorder %s119, %s121
      %p128 = scmp.eq.s32.totalorder %s27, 1
      %p129 = por %p127, %p128
      %p130 = scmp.ne.s32.totalorder %s121, %s122
      %p131 = scmp.eq.s32.totalorder %s27, 0
      %p132 = por %p130, %p131
      %p133 = scmp.ne.s32.totalorder %s121, %s122
      %p134 = scmp.eq.s32.totalorder %s28, 1
      %p135 = por %p133, %p134
      %p137 = scmp.ne.s32.totalorder %s122, %s136
      %p138 = scmp.eq.s32.totalorder %s28, 0
      %p139 = por %p137, %p138
      %s141 = sadd.s32 %s140, 1
      %p144 = scmp.eq.s32.totalorder %s22, 1
      %p145 = scmp.ne.s32.totalorder %s140, %s142
      %p146 = scmp.eq.s32.totalorder %s22, 0
      %p147 = por %p145, %p146
      %p148 = scmp.ne.s32.totalorder %s140, %s142
      %p149 = scmp.eq.s32.totalorder %s27, 1
      %p150 = por %p148, %p149
      %p151 = scmp.ne.s32.totalorder %s142, %s143
      %p152 = scmp.eq.s32.totalorder %s27, 0
      %p153 = por %p151, %p152
      %p154 = scmp.ne.s32.totalorder %s142, %s143
      %p155 = scmp.eq.s32.totalorder %s28, 1
      %p156 = por %p154, %p155
      %p158 = scmp.ne.s32.totalorder %s143, %s157
      %p159 = scmp.eq.s32.totalorder %s28, 0
      %p160 = por %p158, %p159
      %s162 = sadd.s32 %s161, 1
      %p165 = scmp.eq.s32.totalorder %s22, 1
      %p166 = scmp.ne.s32.totalorder %s161, %s163
      %p167 = scmp.eq.s32.totalorder %s22, 0
      %p168 = por %p166, %p167
      %p169 = scmp.ne.s32.totalorder %s161, %s163
      %p170 = scmp.eq.s32.totalorder %s27, 1
      %p171 = por %p169, %p170
      %p172 = scmp.ne.s32.totalorder %s163, %s164
      %p173 = scmp.eq.s32.totalorder %s27, 0
      %p174 = por %p172, %p173
      %p175 = scmp.ne.s32.totalorder %s163, %s164
      %p176 = scmp.eq.s32.totalorder %s28, 1
      %p177 = por %p175, %p176
      %p179 = scmp.ne.s32.totalorder %s164, %s178
      %p180 = scmp.eq.s32.totalorder %s28, 0
      %p181 = por %p179, %p180
      %s182 = ssub.s32 %s22, %s29
      %p183 = scmp.eq.s32.totalorder %s182, 0
      %s185 = sadd.s32 %s184, 1
      %s186 = scalar_select %p183, %s184, %s185
      %p189 = pneg %p183
      %p190 = scmp.eq.s32.totalorder %s22, 1
      %p191 = por %p189, %p190
      %p192 = scmp.ne.s32.totalorder %s184, %s187
      %p193 = scmp.eq.s32.totalorder %s22, 0
      %p194 = por %p192, %p193
      %p195 = scmp.ne.s32.totalorder %s184, %s187
      %p196 = scmp.eq.s32.totalorder %s27, 1
      %p197 = por %p195, %p196
      %p198 = scmp.ne.s32.totalorder %s187, %s188
      %p199 = scmp.eq.s32.totalorder %s27, 0
      %p200 = por %p198, %p199
      %p201 = scmp.ne.s32.totalorder %s187, %s188
      %p202 = scmp.eq.s32.totalorder %s28, 1
      %p203 = por %p201, %p202
      %p205 = scmp.ne.s32.totalorder %s188, %s204
      %p206 = scmp.eq.s32.totalorder %s28, 0
      %p207 = por %p205, %p206
      %s208 = ssub.s32 %s22, %s29
      %p209 = scmp.eq.s32.totalorder %s208, 0
      %s211 = sadd.s32 %s210, 1
      %s212 = scalar_select %p209, %s210, %s211
      %p215 = pneg %p209
      %p216 = scmp.eq.s32.totalorder %s22, 1
      %p217 = por %p215, %p216
      %p218 = scmp.ne.s32.totalorder %s210, %s213
      %p219 = scmp.eq.s32.totalorder %s22, 0
      %p220 = por %p218, %p219
      %p221 = scmp.ne.s32.totalorder %s210, %s213
      %p222 = scmp.eq.s32.totalorder %s27, 1
      %p223 = por %p221, %p222
      %p224 = scmp.ne.s32.totalorder %s213, %s214
      %p225 = scmp.eq.s32.totalorder %s27, 0
      %p226 = por %p224, %p225
      %p227 = scmp.ne.s32.totalorder %s213, %s214
      %p228 = scmp.eq.s32.totalorder %s28, 1
      %p229 = por %p227, %p228
      %p231 = scmp.ne.s32.totalorder %s214, %s230
      %p232 = scmp.eq.s32.totalorder %s28, 0
      %p233 = por %p231, %p232
      %s234 = ssub.s32 %s22, %s29
      %p235 = scmp.eq.s32.totalorder %s234, 0
      %s237 = sadd.s32 %s236, 1
      %s238 = scalar_select %p235, %s236, %s237
      %p241 = pneg %p235
      %p242 = scmp.eq.s32.totalorder %s22, 1
      %p243 = por %p241, %p242
      %p244 = scmp.ne.s32.totalorder %s236, %s239
      %p245 = scmp.eq.s32.totalorder %s22, 0
      %p246 = por %p244, %p245
      %p247 = scmp.ne.s32.totalorder %s236, %s239
      %p248 = scmp.eq.s32.totalorder %s27, 1
      %p249 = por %p247, %p248
      %p250 = scmp.ne.s32.totalorder %s239, %s240
      %p251 = scmp.eq.s32.totalorder %s27, 0
      %p252 = por %p250, %p251
      %p253 = scmp.ne.s32.totalorder %s239, %s240
      %p254 = scmp.eq.s32.totalorder %s28, 1
      %p255 = por %p253, %p254
      %p257 = scmp.ne.s32.totalorder %s240, %s256
      %p258 = scmp.eq.s32.totalorder %s28, 0
      %p259 = por %p257, %p258
      %p260 = scmp.le.s32.totalorder 1, %s22
      %p261 = scmp.lt.s32.totalorder %s22, 3
      %p262 = pnand %p260, %p261
      %p263 = pneg %p262
      // Predicated region
      $region9: #{tpu_custom_call.1} parent=5 // pred_check
        _
      $region10: #{tpu_custom_call.1} parent=5 // pred_check_branch
        %265 = sbr.rel (%p262) target = $region12
      $region11: #{tpu_custom_call.1} parent=5 // pred_region
        %s266 = ssub.s32 %s22, 1
        // Predicated region
        $region13: #{tpu_custom_call.1} parent=11 // pred_check
          %p267 = pneg %p69
        $region14: #{tpu_custom_call.1} parent=11 // pred_check_branch
          %269 = sbr.rel (%p267) target = $region16
        $region15: #{tpu_custom_call.1} parent=11 // pred_region
          _
        $region16: #{tpu_custom_call.1} parent=11 // pred_fallthru
          _
        // Predicated region
        $region17: #{tpu_custom_call.1} parent=11 // pred_check
          %p270 = pneg %p90
        $region18: #{tpu_custom_call.1} parent=11 // pred_check_branch
          %272 = sbr.rel (%p270) target = $region20
        $region19: #{tpu_custom_call.1} parent=11 // pred_region
          _
        $region20: #{tpu_custom_call.1} parent=11 // pred_fallthru
          _
        // Predicated region
        $region21: #{tpu_custom_call.1} parent=11 // pred_check
          %p273 = pneg %p111
        $region22: #{tpu_custom_call.1} parent=11 // pred_check_branch
          %275 = sbr.rel (%p273) target = $region24
        $region23: #{tpu_custom_call.1} parent=11 // pred_region
          _
        $region24: #{tpu_custom_call.1} parent=11 // pred_fallthru
          _
        // Predicated region
        $region25: #{tpu_custom_call.1} parent=11 // pred_check
          %p276 = pneg %p132
        $region26: #{tpu_custom_call.1} parent=11 // pred_check_branch
          %278 = sbr.rel (%p276) target = $region28
        $region27: #{tpu_custom_call.1} parent=11 // pred_region
          _
        $region28: #{tpu_custom_call.1} parent=11 // pred_fallthru
          _
        // Predicated region
        $region29: #{tpu_custom_call.1} parent=11 // pred_check
          %p279 = pneg %p153
        $region30: #{tpu_custom_call.1} parent=11 // pred_check_branch
          %281 = sbr.rel (%p279) target = $region32
        $region31: #{tpu_custom_call.1} parent=11 // pred_region
          _
        $region32: #{tpu_custom_call.1} parent=11 // pred_fallthru
          _
        // Predicated region
        $region33: #{tpu_custom_call.1} parent=11 // pred_check
          %p282 = pneg %p174
        $region34: #{tpu_custom_call.1} parent=11 // pred_check_branch
          %284 = sbr.rel (%p282) target = $region36
        $region35: #{tpu_custom_call.1} parent=11 // pred_region
          _
        $region36: #{tpu_custom_call.1} parent=11 // pred_fallthru
          _
      $region12: #{tpu_custom_call.1} parent=5 // pred_fallthru
        _
      %p285 = scmp.lt.s32.totalorder %s22, 2
      // Predicated region
      $region37: #{tpu_custom_call.1} parent=5 // pred_check
        %p286 = pneg %p285
      $region38: #{tpu_custom_call.1} parent=5 // pred_check_branch
        %288 = sbr.rel (%p286) target = $region40
      $region39: #{tpu_custom_call.1} parent=5 // pred_region
        // Predicated region
        $region41: #{tpu_custom_call.1} parent=39 // pred_check
          %p289 = pneg %p42
        $region42: #{tpu_custom_call.1} parent=39 // pred_check_branch
          %291 = sbr.rel (%p289) target = $region44
        $region43: #{tpu_custom_call.1} parent=39 // pred_region
          %p292 = scmp.lt.s32.totalorder %s22, 1
          %s293 = scalar_select %p292, %s22, 1
          %s294 = smul.addr %s293, 32
          %s295 = smul.addr %s294, 4
          %s296 = scalar_lea.vmem %s0, %s295
        $region44: #{tpu_custom_call.1} parent=39 // pred_fallthru
          _
      $region40: #{tpu_custom_call.1} parent=5 // pred_fallthru
        _
      %p297 = scmp.le.s32.totalorder 1, %s22
      %p298 = scmp.lt.s32.totalorder %s22, 3
      %p299 = pnand %p297, %p298
      %p300 = pneg %p299
      // Predicated region
      $region45: #{tpu_custom_call.1} parent=5 // pred_check
        _
      $region46: #{tpu_custom_call.1} parent=5 // pred_check_branch
        %302 = sbr.rel (%p299) target = $region48
      $region47: #{tpu_custom_call.1} parent=5 // pred_region
        %s303 = ssub.s32 %s22, 1
        %p304 = scmp.lt.s32.totalorder %s27, 1
        %s305 = scalar_select %p304, %s27, 1
        %s306 = smul.addr %s305, 32
        %s307 = smul.addr %s306, 4
        %s308 = scalar_lea.vmem %s0, %s307
        %p309 = pneg %p48
        %p310 = pneg %p45
        %p311 = pneg %p69
        %p312 = pneg %p66
        %p313 = pneg %p90
        %p314 = pneg %p87
        %p315 = pneg %p111
        %p316 = pneg %p108
        %p317 = pneg %p132
        %p318 = pneg %p129
        %p319 = pneg %p153
        %p320 = pneg %p150
        %p321 = pneg %p174
        %p322 = pneg %p171
        %p323 = pneg %p200
        %p324 = pneg %p197
        %s325 = sand.u32 %s187, 1
        %s326 = scalar_lea.sflag [#allocation4], %s325
        %s327 = sand.u32 %s187, 1
        %s328 = scalar_lea.vmem [#allocation3], %s327
        %p329 = pneg %p226
        %p330 = pneg %p223
        %s331 = sand.u32 %s27, 1
        %s332 = scalar_lea.sflag [#allocation6], %s331
        %s333 = sand.u32 %s213, 1
        %s334 = scalar_lea.vmem [#allocation5], %s333
        %p335 = pneg %p252
        %p336 = pneg %p249
        %s337 = sand.u32 %s27, 1
        %s338 = scalar_lea.sflag [#allocation6], %s337
        %s339 = sand.u32 %s239, 1
        %s340 = scalar_lea.vmem [#allocation7], %s339
        %p341 = scmp.lt.s32.totalorder %s27, 1
        %s342 = scalar_select %p341, %s27, 1
        %s343 = smul.addr %s342, 32
        %s344 = smul.addr %s343, 4
        %s345 = scalar_lea.vmem %s0, %s344
        %v347 = vld [vmem:[%s345] sm:$0xf]
        %v348 = vld [vmem:[%s345 + $0x4] sm:$0xf]
        %v349 = vld [vmem:[%s345 + $0x8] sm:$0xf]
        %v350 = vld [vmem:[%s345 + $0xc] sm:$0xf]
        %v351 = vld [vmem:[%s345 + $0x10] sm:$0xf]
        %v352 = vld [vmem:[%s345 + $0x14] sm:$0xf]
        %v353 = vld [vmem:[%s345 + $0x18] sm:$0xf]
        %v354 = vld [vmem:[%s345 + $0x1c] sm:$0xf]
        %v355 = vld [vmem:[%s345 + $0x20] sm:$0xf]
        %v356 = vld [vmem:[%s345 + $0x24] sm:$0xf]
        %v357 = vld [vmem:[%s345 + $0x28] sm:$0xf]
        %v358 = vld [vmem:[%s345 + $0x2c] sm:$0xf]
        %v359 = vld [vmem:[%s345 + $0x30] sm:$0xf]
        %v360 = vld [vmem:[%s345 + $0x34] sm:$0xf]
        %v361 = vld [vmem:[%s345 + $0x38] sm:$0xf]
        %v362 = vld [vmem:[%s345 + $0x3c] sm:$0xf]
        %v363 = vld [vmem:[%s345 + $0x40] sm:$0xf]
        %v364 = vld [vmem:[%s345 + $0x44] sm:$0xf]
        %v365 = vld [vmem:[%s345 + $0x48] sm:$0xf]
        %v366 = vld [vmem:[%s345 + $0x4c] sm:$0xf]
        %v367 = vld [vmem:[%s345 + $0x50] sm:$0xf]
        %v368 = vld [vmem:[%s345 + $0x54] sm:$0xf]
        %v369 = vld [vmem:[%s345 + $0x58] sm:$0xf]
        %v370 = vld [vmem:[%s345 + $0x5c] sm:$0xf]
        %v371 = vld [vmem:[%s345 + $0x60] sm:$0xf]
        %v372 = vld [vmem:[%s345 + $0x64] sm:$0xf]
        %v373 = vld [vmem:[%s345 + $0x68] sm:$0xf]
        %v374 = vld [vmem:[%s345 + $0x6c] sm:$0xf]
        %v375 = vld [vmem:[%s345 + $0x70] sm:$0xf]
        %v376 = vld [vmem:[%s345 + $0x74] sm:$0xf]
        %v377 = vld [vmem:[%s345 + $0x78] sm:$0xf]
        %v378 = vld [vmem:[%s345 + $0x7c] sm:$0xf]
        %v379 = vld [vmem:[%s1] sm:$0xf]
        %v380 = vld [vmem:[%s1 + $0x4] sm:$0xf]
        %v381 = vld [vmem:[%s1 + $0x8] sm:$0xf]
        %v382 = vld [vmem:[%s1 + $0xc] sm:$0xf]
        %v383 = vld [vmem:[%s1 + $0x10] sm:$0xf]
        %v384 = vld [vmem:[%s1 + $0x14] sm:$0xf]
        %v385 = vld [vmem:[%s1 + $0x18] sm:$0xf]
        %v386 = vld [vmem:[%s1 + $0x1c] sm:$0xf]
        %v387 = vld [vmem:[%s1 + $0x20] sm:$0xf]
        %v388 = vld [vmem:[%s1 + $0x24] sm:$0xf]
        %v389 = vld [vmem:[%s1 + $0x28] sm:$0xf]
        %v390 = vld [vmem:[%s1 + $0x2c] sm:$0xf]
        %v391 = vld [vmem:[%s1 + $0x30] sm:$0xf]
        %v392 = vld [vmem:[%s1 + $0x34] sm:$0xf]
        %v393 = vld [vmem:[%s1 + $0x38] sm:$0xf]
        %v394 = vld [vmem:[%s1 + $0x3c] sm:$0xf]
        %v427 = vunpack.c.l.b16 %v347
        %v428 = vunpack.c.l.b16 %v348
        %v429 = vunpack.c.l.b16 %v349
        %v430 = vunpack.c.l.b16 %v350
        %v431 = vunpack.c.l.b16 %v351
        %v432 = vunpack.c.l.b16 %v352
        %v433 = vunpack.c.l.b16 %v353
        %v434 = vunpack.c.l.b16 %v354
        %v435 = vunpack.c.l.b16 %v355
        %v436 = vunpack.c.l.b16 %v356
        %v437 = vunpack.c.l.b16 %v357
        %v438 = vunpack.c.l.b16 %v358
        %v439 = vunpack.c.l.b16 %v359
        %v440 = vunpack.c.l.b16 %v360
        %v441 = vunpack.c.l.b16 %v361
        %v442 = vunpack.c.l.b16 %v362
        %v443 = vunpack.c.l.b16 %v363
        %v444 = vunpack.c.l.b16 %v364
        %v445 = vunpack.c.l.b16 %v365
        %v446 = vunpack.c.l.b16 %v366
        %v447 = vunpack.c.l.b16 %v367
        %v448 = vunpack.c.l.b16 %v368
        %v449 = vunpack.c.l.b16 %v369
        %v450 = vunpack.c.l.b16 %v370
        %v451 = vunpack.c.l.b16 %v371
        %v452 = vunpack.c.l.b16 %v372
        %v453 = vunpack.c.l.b16 %v373
        %v454 = vunpack.c.l.b16 %v374
        %v455 = vunpack.c.l.b16 %v375
        %v456 = vunpack.c.l.b16 %v376
        %v457 = vunpack.c.l.b16 %v377
        %v458 = vunpack.c.l.b16 %v378
        %v459 = vpack.c.b16 %v428, %v427
        %v460 = vpack.c.b16 %v430, %v429
        %v461 = vpack.c.b16 %v432, %v431
        %v462 = vpack.c.b16 %v434, %v433
        %v463 = vpack.c.b16 %v436, %v435
        %v464 = vpack.c.b16 %v438, %v437
        %v465 = vpack.c.b16 %v440, %v439
        %v466 = vpack.c.b16 %v442, %v441
        %v467 = vpack.c.b16 %v444, %v443
        %v468 = vpack.c.b16 %v446, %v445
        %v469 = vpack.c.b16 %v448, %v447
        %v470 = vpack.c.b16 %v450, %v449
        %v471 = vpack.c.b16 %v452, %v451
        %v472 = vpack.c.b16 %v454, %v453
        %v473 = vpack.c.b16 %v456, %v455
        %v474 = vpack.c.b16 %v458, %v457
        %v507 = vunpack.c.l.b16 %v379
        %v508 = vunpack.c.l.b16 %v380
        %v509 = vunpack.c.l.b16 %v381
        %v510 = vunpack.c.l.b16 %v382
        %v511 = vunpack.c.l.b16 %v383
        %v512 = vunpack.c.l.b16 %v384
        %v513 = vunpack.c.l.b16 %v385
        %v514 = vunpack.c.l.b16 %v386
        %v515 = vunpack.c.l.b16 %v387
        %v516 = vunpack.c.l.b16 %v388
        %v517 = vunpack.c.l.b16 %v389
        %v518 = vunpack.c.l.b16 %v390
        %v519 = vunpack.c.l.b16 %v391
        %v520 = vunpack.c.l.b16 %v392
        %v521 = vunpack.c.l.b16 %v393
        %v522 = vunpack.c.l.b16 %v394
        %v523 = vpack.c.b16 %v508, %v507
        %v524 = vpack.c.b16 %v510, %v509
        %v525 = vpack.c.b16 %v512, %v511
        %v526 = vpack.c.b16 %v514, %v513
        %v527 = vpack.c.b16 %v516, %v515
        %v528 = vpack.c.b16 %v518, %v517
        %v529 = vpack.c.b16 %v520, %v519
        %v530 = vpack.c.b16 %v522, %v521
        %539 = vmatprep.subr.bf16.mxu0 0
        %540 = vmatpush1.bf16.msra.mxu0 %v523
        %541 = vmatprep.subr.bf16.mxu0 0
        %542 = vmatpush1.bf16.msra.mxu0 %v524
        %543 = vmatprep.subr.bf16.mxu0 0
        %544 = vmatpush1.bf16.msra.mxu0 %v525
        %545 = vmatprep.subr.bf16.mxu0 0
        %546 = vmatpush1.bf16.msra.mxu0 %v526
        %547 = vmatprep.subr.bf16.mxu0 0
        %548 = vmatpush1.bf16.msra.mxu0 %v527
        %549 = vmatprep.subr.bf16.mxu0 0
        %550 = vmatpush1.bf16.msra.mxu0 %v528
        %551 = vmatprep.subr.bf16.mxu0 0
        %552 = vmatpush1.bf16.msra.mxu0 %v529
        %553 = vmatprep.subr.bf16.mxu0 0
        %554 = vmatpush1.bf16.msra.mxu0 %v530
        %555 = vmatprep.subr.bf16.mxu0 0
        %556 = vmatpush1.bf16.msra.mxu0 0
        %557 = vmatprep.subr.bf16.mxu0 0
        %558 = vmatpush1.bf16.msra.mxu0 0
        %559 = vmatprep.subr.bf16.mxu0 0
        %560 = vmatpush1.bf16.msra.mxu0 0
        %561 = vmatprep.subr.bf16.mxu0 0
        %562 = vmatpush1.bf16.msra.mxu0 0
        %563 = vmatprep.subr.bf16.mxu0 0
        %564 = vmatpush1.bf16.msra.mxu0 0
        %565 = vmatprep.subr.bf16.mxu0 0
        %566 = vmatpush1.bf16.msra.mxu0 0
        %567 = vmatprep.subr.bf16.mxu0 0
        %568 = vmatpush1.bf16.msra.mxu0 0
        %569 = vmatprep.subr.bf16.mxu0 0
        %570 = vmatpush1.bf16.msra.mxu0 0
        %571 = vmatprep.mubr.bf16.mxu0 0
        %572 = vmatmul.mubr.bf16.gmra.mrb[0].mxu0 %v459
        %v573 = vpop.f32.mrb[0].mxu0
        %v574 = vadd.f32 0.0, %v573
        %v575 = vpop.f32.mrb[0].mxu0
        %v576 = vpop.f32.mrb[0].mxu0
        %v577 = vadd.f32 0.0, %v576
        %v578 = vpop.f32.mrb[0].mxu0
        %579 = vmatprep.mubr.bf16.mxu0 0
        %580 = vmatmul.mubr.bf16.gmra.mrb[0].mxu0 %v460
        %v581 = vpop.f32.mrb[0].mxu0
        %v582 = vadd.f32 0.0, %v581
        %v583 = vpop.f32.mrb[0].mxu0
        %v584 = vpop.f32.mrb[0].mxu0
        %v585 = vadd.f32 0.0, %v584
        %v586 = vpop.f32.mrb[0].mxu0
        %587 = vmatprep.mubr.bf16.mxu0 0
        %588 = vmatmul.mubr.bf16.gmra.mrb[0].mxu0 %v461
        %v589 = vpop.f32.mrb[0].mxu0
        %v590 = vadd.f32 0.0, %v589
        %v591 = vpop.f32.mrb[0].mxu0
        %v592 = vpop.f32.mrb[0].mxu0
        %v593 = vadd.f32 0.0, %v592
        %v594 = vpop.f32.mrb[0].mxu0
        %595 = vmatprep.mubr.bf16.mxu0 0
        %596 = vmatmul.mubr.bf16.gmra.mrb[0].mxu0 %v462
        %v597 = vpop.f32.mrb[0].mxu0
        %v598 = vadd.f32 0.0, %v597
        %v599 = vpop.f32.mrb[0].mxu0
        %v600 = vpop.f32.mrb[0].mxu0
        %v601 = vadd.f32 0.0, %v600
        %v602 = vpop.f32.mrb[0].mxu0
        %603 = vmatprep.mubr.bf16.mxu0 0
        %604 = vmatmul.mubr.bf16.gmra.mrb[0].mxu0 %v463
        %v605 = vpop.f32.mrb[0].mxu0
        %v606 = vadd.f32 0.0, %v605
        %v607 = vpop.f32.mrb[0].mxu0
        %v608 = vpop.f32.mrb[0].mxu0
        %v609 = vadd.f32 0.0, %v608
        %v610 = vpop.f32.mrb[0].mxu0
        %611 = vmatprep.mubr.bf16.mxu0 0
        %612 = vmatmul.mubr.bf16.gmra.mrb[0].mxu0 %v464
        %v613 = vpop.f32.mrb[0].mxu0
        %v614 = vadd.f32 0.0, %v613
        %v615 = vpop.f32.mrb[0].mxu0
        %v616 = vpop.f32.mrb[0].mxu0
        %v617 = vadd.f32 0.0, %v616
        %v618 = vpop.f32.mrb[0].mxu0
        %619 = vmatprep.mubr.bf16.mxu0 0
        %620 = vmatmul.mubr.bf16.gmra.mrb[0].mxu0 %v465
        %v621 = vpop.f32.mrb[0].mxu0
        %v622 = vadd.f32 0.0, %v621
        %v623 = vpop.f32.mrb[0].mxu0
        %v624 = vpop.f32.mrb[0].mxu0
        %v625 = vadd.f32 0.0, %v624
        %v626 = vpop.f32.mrb[0].mxu0
        %627 = vmatprep.mubr.bf16.mxu0 0
        %628 = vmatmul.mubr.bf16.gmra.mrb[0].mxu0 %v466
        %v629 = vpop.f32.mrb[0].mxu0
        %v630 = vadd.f32 0.0, %v629
        %v631 = vpop.f32.mrb[0].mxu0
        %v632 = vpop.f32.mrb[0].mxu0
        %v633 = vadd.f32 0.0, %v632
        %v634 = vpop.f32.mrb[0].mxu0
        %635 = vmatprep.mubr.bf16.mxu0 0
        %636 = vmatmul.mubr.bf16.gmra.mrb[0].mxu0 %v467
        %v637 = vpop.f32.mrb[0].mxu0
        %v638 = vadd.f32 0.0, %v637
        %v639 = vpop.f32.mrb[0].mxu0
        %v640 = vpop.f32.mrb[0].mxu0
        %v641 = vadd.f32 0.0, %v640
        %v642 = vpop.f32.mrb[0].mxu0
        %643 = vmatprep.mubr.bf16.mxu0 0
        %644 = vmatmul.mubr.bf16.gmra.mrb[0].mxu0 %v468
        %v645 = vpop.f32.mrb[0].mxu0
        %v646 = vadd.f32 0.0, %v645
        %v647 = vpop.f32.mrb[0].mxu0
        %v648 = vpop.f32.mrb[0].mxu0
        %v649 = vadd.f32 0.0, %v648
        %v650 = vpop.f32.mrb[0].mxu0
        %651 = vmatprep.mubr.bf16.mxu0 0
        %652 = vmatmul.mubr.bf16.gmra.mrb[0].mxu0 %v469
        %v653 = vpop.f32.mrb[0].mxu0
        %v654 = vadd.f32 0.0, %v653
        %v655 = vpop.f32.mrb[0].mxu0
        %v656 = vpop.f32.mrb[0].mxu0
        %v657 = vadd.f32 0.0, %v656
        %v658 = vpop.f32.mrb[0].mxu0
        %659 = vmatprep.mubr.bf16.mxu0 0
        %660 = vmatmul.mubr.bf16.gmra.mrb[0].mxu0 %v470
        %v661 = vpop.f32.mrb[0].mxu0
        %v662 = vadd.f32 0.0, %v661
        %v663 = vpop.f32.mrb[0].mxu0
        %v664 = vpop.f32.mrb[0].mxu0
        %v665 = vadd.f32 0.0, %v664
        %v666 = vpop.f32.mrb[0].mxu0
        %667 = vmatprep.mubr.bf16.mxu0 0
        %668 = vmatmul.mubr.bf16.gmra.mrb[0].mxu0 %v471
        %v669 = vpop.f32.mrb[0].mxu0
        %v670 = vadd.f32 0.0, %v669
        %v671 = vpop.f32.mrb[0].mxu0
        %v672 = vpop.f32.mrb[0].mxu0
        %v673 = vadd.f32 0.0, %v672
        %v674 = vpop.f32.mrb[0].mxu0
        %675 = vmatprep.mubr.bf16.mxu0 0
        %676 = vmatmul.mubr.bf16.gmra.mrb[0].mxu0 %v472
        %v677 = vpop.f32.mrb[0].mxu0
        %v678 = vadd.f32 0.0, %v677
        %v679 = vpop.f32.mrb[0].mxu0
        %v680 = vpop.f32.mrb[0].mxu0
        %v681 = vadd.f32 0.0, %v680
        %v682 = vpop.f32.mrb[0].mxu0
        %683 = vmatprep.mubr.bf16.mxu0 0
        %684 = vmatmul.mubr.bf16.gmra.mrb[0].mxu0 %v473
        %v685 = vpop.f32.mrb[0].mxu0
        %v686 = vadd.f32 0.0, %v685
        %v687 = vpop.f32.mrb[0].mxu0
        %v688 = vpop.f32.mrb[0].mxu0
        %v689 = vadd.f32 0.0, %v688
        %v690 = vpop.f32.mrb[0].mxu0
        %691 = vmatprep.mubr.bf16.mxu0 0
        %692 = vmatmul.mubr.bf16.gmra.mrb[0].mxu0 %v474
        %v693 = vpop.f32.mrb[0].mxu0
        %v694 = vadd.f32 0.0, %v693
        %v695 = vpop.f32.mrb[0].mxu0
        %v696 = vpop.f32.mrb[0].mxu0
        %v697 = vadd.f32 0.0, %v696
        %v698 = vpop.f32.mrb[0].mxu0
        %699 = vdwg.mxu0
        %v700 = vld [vmem:[%s2] sm:$0x1]
        %v702 = vlaneseq
        %v703 = vshrl.u32 %v702, 7
        %v704 = vsub.s32 0, %v703
        %v705 = vrot.slane %v700, %v704
        %v707 = vmul.f32 %v574, %v705
        %v708 = vmul.f32 %v577, %v705
        %v709 = vmul.f32 %v582, %v705
        %v710 = vmul.f32 %v585, %v705
        %v711 = vmul.f32 %v590, %v705
        %v712 = vmul.f32 %v593, %v705
        %v713 = vmul.f32 %v598, %v705
        %v714 = vmul.f32 %v601, %v705
        %v715 = vmul.f32 %v606, %v705
        %v716 = vmul.f32 %v609, %v705
        %v717 = vmul.f32 %v614, %v705
        %v718 = vmul.f32 %v617, %v705
        %v719 = vmul.f32 %v622, %v705
        %v720 = vmul.f32 %v625, %v705
        %v721 = vmul.f32 %v630, %v705
        %v722 = vmul.f32 %v633, %v705
        %v723 = vmul.f32 %v638, %v705
        %v724 = vmul.f32 %v641, %v705
        %v725 = vmul.f32 %v646, %v705
        %v726 = vmul.f32 %v649, %v705
        %v727 = vmul.f32 %v654, %v705
        %v728 = vmul.f32 %v657, %v705
        %v729 = vmul.f32 %v662, %v705
        %v730 = vmul.f32 %v665, %v705
        %v731 = vmul.f32 %v670, %v705
        %v732 = vmul.f32 %v673, %v705
        %v733 = vmul.f32 %v678, %v705
        %v734 = vmul.f32 %v681, %v705
        %v735 = vmul.f32 %v686, %v705
        %v736 = vmul.f32 %v689, %v705
        %v737 = vmul.f32 %v694, %v705
        %v738 = vmul.f32 %v697, %v705
        %v739 = vld [vmem:[%s3] sm:$0x1]
        %v741 = vlaneseq
        %v742 = vshrl.u32 %v741, 7
        %v743 = vsub.s32 0, %v742
        %v744 = vrot.slane %v739, %v743
        %v746 = vadd.f32 %v707, %v744
        %v747 = vadd.f32 %v708, %v744
        %v748 = vadd.f32 %v709, %v744
        %v749 = vadd.f32 %v710, %v744
        %v750 = vadd.f32 %v711, %v744
        %v751 = vadd.f32 %v712, %v744
        %v752 = vadd.f32 %v713, %v744
        %v753 = vadd.f32 %v714, %v744
        %v754 = vadd.f32 %v715, %v744
        %v755 = vadd.f32 %v716, %v744
        %v756 = vadd.f32 %v717, %v744
        %v757 = vadd.f32 %v718, %v744
        %v758 = vadd.f32 %v719, %v744
        %v759 = vadd.f32 %v720, %v744
        %v760 = vadd.f32 %v721, %v744
        %v761 = vadd.f32 %v722, %v744
        %v762 = vadd.f32 %v723, %v744
        %v763 = vadd.f32 %v724, %v744
        %v764 = vadd.f32 %v725, %v744
        %v765 = vadd.f32 %v726, %v744
        %v766 = vadd.f32 %v727, %v744
        %v767 = vadd.f32 %v728, %v744
        %v768 = vadd.f32 %v729, %v744
        %v769 = vadd.f32 %v730, %v744
        %v770 = vadd.f32 %v731, %v744
        %v771 = vadd.f32 %v732, %v744
        %v772 = vadd.f32 %v733, %v744
        %v773 = vadd.f32 %v734, %v744
        %v774 = vadd.f32 %v735, %v744
        %v775 = vadd.f32 %v736, %v744
        %v776 = vadd.f32 %v737, %v744
        %v777 = vadd.f32 %v738, %v744
        %vm778 = vcmp.gt.f32.partialorder %v746, 0.0
        %vm779 = vcmp.gt.f32.partialorder %v747, 0.0
        %vm780 = vcmp.gt.f32.partialorder %v748, 0.0
        %vm781 = vcmp.gt.f32.partialorder %v749, 0.0
        %vm782 = vcmp.gt.f32.partialorder %v750, 0.0
        %vm783 = vcmp.gt.f32.partialorder %v751, 0.0
        %vm784 = vcmp.gt.f32.partialorder %v752, 0.0
        %vm785 = vcmp.gt.f32.partialorder %v753, 0.0
        %vm786 = vcmp.gt.f32.partialorder %v754, 0.0
        %vm787 = vcmp.gt.f32.partialorder %v755, 0.0
        %vm788 = vcmp.gt.f32.partialorder %v756, 0.0
        %vm789 = vcmp.gt.f32.partialorder %v757, 0.0
        %vm790 = vcmp.gt.f32.partialorder %v758, 0.0
        %vm791 = vcmp.gt.f32.partialorder %v759, 0.0
        %vm792 = vcmp.gt.f32.partialorder %v760, 0.0
        %vm793 = vcmp.gt.f32.partialorder %v761, 0.0
        %vm794 = vcmp.gt.f32.partialorder %v762, 0.0
        %vm795 = vcmp.gt.f32.partialorder %v763, 0.0
        %vm796 = vcmp.gt.f32.partialorder %v764, 0.0
        %vm797 = vcmp.gt.f32.partialorder %v765, 0.0
        %vm798 = vcmp.gt.f32.partialorder %v766, 0.0
        %vm799 = vcmp.gt.f32.partialorder %v767, 0.0
        %vm800 = vcmp.gt.f32.partialorder %v768, 0.0
        %vm801 = vcmp.gt.f32.partialorder %v769, 0.0
        %vm802 = vcmp.gt.f32.partialorder %v770, 0.0
        %vm803 = vcmp.gt.f32.partialorder %v771, 0.0
        %vm804 = vcmp.gt.f32.partialorder %v772, 0.0
        %vm805 = vcmp.gt.f32.partialorder %v773, 0.0
        %vm806 = vcmp.gt.f32.partialorder %v774, 0.0
        %vm807 = vcmp.gt.f32.partialorder %v775, 0.0
        %vm808 = vcmp.gt.f32.partialorder %v776, 0.0
        %vm809 = vcmp.gt.f32.partialorder %v777, 0.0
        %v810 = vmin.f32 %v746, 0.0
        %v811 = vmin.f32 %v747, 0.0
        %v812 = vmin.f32 %v748, 0.0
        %v813 = vmin.f32 %v749, 0.0
        %v814 = vmin.f32 %v750, 0.0
        %v815 = vmin.f32 %v751, 0.0
        %v816 = vmin.f32 %v752, 0.0
        %v817 = vmin.f32 %v753, 0.0
        %v818 = vmin.f32 %v754, 0.0
        %v819 = vmin.f32 %v755, 0.0
        %v820 = vmin.f32 %v756, 0.0
        %v821 = vmin.f32 %v757, 0.0
        %v822 = vmin.f32 %v758, 0.0
        %v823 = vmin.f32 %v759, 0.0
        %v824 = vmin.f32 %v760, 0.0
        %v825 = vmin.f32 %v761, 0.0
        %v826 = vmin.f32 %v762, 0.0
        %v827 = vmin.f32 %v763, 0.0
        %v828 = vmin.f32 %v764, 0.0
        %v829 = vmin.f32 %v765, 0.0
        %v830 = vmin.f32 %v766, 0.0
        %v831 = vmin.f32 %v767, 0.0
        %v832 = vmin.f32 %v768, 0.0
        %v833 = vmin.f32 %v769, 0.0
        %v834 = vmin.f32 %v770, 0.0
        %v835 = vmin.f32 %v771, 0.0
        %v836 = vmin.f32 %v772, 0.0
        %v837 = vmin.f32 %v773, 0.0
        %v838 = vmin.f32 %v774, 0.0
        %v839 = vmin.f32 %v775, 0.0
        %v840 = vmin.f32 %v776, 0.0
        %v841 = vmin.f32 %v777, 0.0
        %v842 = vmul.f32 %v810, 1.442695
        %v843 = vpow.pop %v842
        %v844 = vmul.f32 %v811, 1.442695
        %v845 = vpow.pop %v844
        %v846 = vmul.f32 %v812, 1.442695
        %v847 = vpow.pop %v846
        %v848 = vmul.f32 %v813, 1.442695
        %v849 = vpow.pop %v848
        %v850 = vmul.f32 %v814, 1.442695
        %v851 = vpow.pop %v850
        %v852 = vmul.f32 %v815, 1.442695
        %v853 = vpow.pop %v852
        %v854 = vmul.f32 %v816, 1.442695
        %v855 = vpow.pop %v854
        %v856 = vmul.f32 %v817, 1.442695
        %v857 = vpow.pop %v856
        %v858 = vmul.f32 %v818, 1.442695
        %v859 = vpow.pop %v858
        %v860 = vmul.f32 %v819, 1.442695
        %v861 = vpow.pop %v860
        %v862 = vmul.f32 %v820, 1.442695
        %v863 = vpow.pop %v862
        %v864 = vmul.f32 %v821, 1.442695
        %v865 = vpow.pop %v864
        %v866 = vmul.f32 %v822, 1.442695
        %v867 = vpow.pop %v866
        %v868 = vmul.f32 %v823, 1.442695
        %v869 = vpow.pop %v868
        %v870 = vmul.f32 %v824, 1.442695
        %v871 = vpow.pop %v870
        %v872 = vmul.f32 %v825, 1.442695
        %v873 = vpow.pop %v872
        %v874 = vmul.f32 %v826, 1.442695
        %v875 = vpow.pop %v874
        %v876 = vmul.f32 %v827, 1.442695
        %v877 = vpow.pop %v876
        %v878 = vmul.f32 %v828, 1.442695
        %v879 = vpow.pop %v878
        %v880 = vmul.f32 %v829, 1.442695
        %v881 = vpow.pop %v880
        %v882 = vmul.f32 %v830, 1.442695
        %v883 = vpow.pop %v882
        %v884 = vmul.f32 %v831, 1.442695
        %v885 = vpow.pop %v884
        %v886 = vmul.f32 %v832, 1.442695
        %v887 = vpow.pop %v886
        %v888 = vmul.f32 %v833, 1.442695
        %v889 = vpow.pop %v888
        %v890 = vmul.f32 %v834, 1.442695
        %v891 = vpow.pop %v890
        %v892 = vmul.f32 %v835, 1.442695
        %v893 = vpow.pop %v892
        %v894 = vmul.f32 %v836, 1.442695
        %v895 = vpow.pop %v894
        %v896 = vmul.f32 %v837, 1.442695
        %v897 = vpow.pop %v896
        %v898 = vmul.f32 %v838, 1.442695
        %v899 = vpow.pop %v898
        %v900 = vmul.f32 %v839, 1.442695
        %v901 = vpow.pop %v900
        %v902 = vmul.f32 %v840, 1.442695
        %v903 = vpow.pop %v902
        %v904 = vmul.f32 %v841, 1.442695
        %v905 = vpow.pop %v904
        %v906 = vsub.f32 %v843, 1.0
        %v907 = vsub.f32 %v845, 1.0
        %v908 = vsub.f32 %v847, 1.0
        %v909 = vsub.f32 %v849, 1.0
        %v910 = vsub.f32 %v851, 1.0
        %v911 = vsub.f32 %v853, 1.0
        %v912 = vsub.f32 %v855, 1.0
        %v913 = vsub.f32 %v857, 1.0
        %v914 = vsub.f32 %v859, 1.0
        %v915 = vsub.f32 %v861, 1.0
        %v916 = vsub.f32 %v863, 1.0
        %v917 = vsub.f32 %v865, 1.0
        %v918 = vsub.f32 %v867, 1.0
        %v919 = vsub.f32 %v869, 1.0
        %v920 = vsub.f32 %v871, 1.0
        %v921 = vsub.f32 %v873, 1.0
        %v922 = vsub.f32 %v875, 1.0
        %v923 = vsub.f32 %v877, 1.0
        %v924 = vsub.f32 %v879, 1.0
        %v925 = vsub.f32 %v881, 1.0
        %v926 = vsub.f32 %v883, 1.0
        %v927 = vsub.f32 %v885, 1.0
        %v928 = vsub.f32 %v887, 1.0
        %v929 = vsub.f32 %v889, 1.0
        %v930 = vsub.f32 %v891, 1.0
        %v931 = vsub.f32 %v893, 1.0
        %v932 = vsub.f32 %v895, 1.0
        %v933 = vsub.f32 %v897, 1.0
        %v934 = vsub.f32 %v899, 1.0
        %v935 = vsub.f32 %v901, 1.0
        %v936 = vsub.f32 %v903, 1.0
        %v937 = vsub.f32 %v905, 1.0
        %v938 = vsel %vm778, %v746, %v906
        %v939 = vsel %vm779, %v747, %v907
        %v940 = vsel %vm780, %v748, %v908
        %v941 = vsel %vm781, %v749, %v909
        %v942 = vsel %vm782, %v750, %v910
        %v943 = vsel %vm783, %v751, %v911
        %v944 = vsel %vm784, %v752, %v912
        %v945 = vsel %vm785, %v753, %v913
        %v946 = vsel %vm786, %v754, %v914
        %v947 = vsel %vm787, %v755, %v915
        %v948 = vsel %vm788, %v756, %v916
        %v949 = vsel %vm789, %v757, %v917
        %v950 = vsel %vm790, %v758, %v918
        %v951 = vsel %vm791, %v759, %v919
        %v952 = vsel %vm792, %v760, %v920
        %v953 = vsel %vm793, %v761, %v921
        %v954 = vsel %vm794, %v762, %v922
        %v955 = vsel %vm795, %v763, %v923
        %v956 = vsel %vm796, %v764, %v924
        %v957 = vsel %vm797, %v765, %v925
        %v958 = vsel %vm798, %v766, %v926
        %v959 = vsel %vm799, %v767, %v927
        %v960 = vsel %vm800, %v768, %v928
        %v961 = vsel %vm801, %v769, %v929
        %v962 = vsel %vm802, %v770, %v930
        %v963 = vsel %vm803, %v771, %v931
        %v964 = vsel %vm804, %v772, %v932
        %v965 = vsel %vm805, %v773, %v933
        %v966 = vsel %vm806, %v774, %v934
        %v967 = vsel %vm807, %v775, %v935
        %v968 = vsel %vm808, %v776, %v936
        %v969 = vsel %vm809, %v777, %v937
        %vm970 = vcmask 519168
        %971 = vst.msk [vmem:[#allocation2] sm:$0xf] %vm970, 0
        %972 = vst.msk [vmem:[#allocation2 + $0x4] sm:$0xf] %vm970, 0
        %vm973 = vcmask 517120
        %974 = vst.msk [vmem:[#allocation2 + $0x8] sm:$0x3] %vm973, 0
        %975 = vst.msk [vmem:[#allocation2 + $0xc] sm:$0xf] %vm970, 0
        %976 = vst.msk [vmem:[#allocation2 + $0x10] sm:$0xf] %vm970, 0
        %977 = vst.msk [vmem:[#allocation2 + $0x14] sm:$0x3] %vm973, 0
        %s978 = scalar_lea.vmem [#allocation2], 216
        %979 = vst.msk [vmem:[%s978] sm:$0xf] %vm970, 0
        %980 = vst.msk [vmem:[%s978 + $0x4] sm:$0xf] %vm970, 0
        %981 = vst.msk [vmem:[%s978 + $0x8] sm:$0x3] %vm973, 0
        %982 = vst.msk [vmem:[%s978 + $0xc] sm:$0xf] %vm970, 0
        %983 = vst.msk [vmem:[%s978 + $0x10] sm:$0xf] %vm970, 0
        %984 = vst.msk [vmem:[%s978 + $0x14] sm:$0x3] %vm973, 0
        %vm985 = vcmask 516096
        %986 = vst.msk [vmem:[#allocation2] sm:$0x1] %vm985, 0
        %987 = vst.msk [vmem:[#allocation2 + $0xc] sm:$0x1] %vm985, 0
        %988 = vst.msk [vmem:[#allocation2 + $0x18] sm:$0x1] %vm985, 0
        %989 = vst.msk [vmem:[#allocation2 + $0x24] sm:$0x1] %vm985, 0
        %990 = vst.msk [vmem:[#allocation2 + $0x30] sm:$0x1] %vm985, 0
        %991 = vst.msk [vmem:[#allocation2 + $0x3c] sm:$0x1] %vm985, 0
        %992 = vst.msk [vmem:[#allocation2 + $0x48] sm:$0x1] %vm985, 0
        %993 = vst.msk [vmem:[#allocation2 + $0x54] sm:$0x1] %vm985, 0
        %994 = vst.msk [vmem:[#allocation2 + $0x60] sm:$0x1] %vm985, 0
        %995 = vst.msk [vmem:[#allocation2 + $0x6c] sm:$0x1] %vm985, 0
        %996 = vst.msk [vmem:[#allocation2 + $0x78] sm:$0x1] %vm985, 0
        %997 = vst.msk [vmem:[#allocation2 + $0x84] sm:$0x1] %vm985, 0
        %998 = vst.msk [vmem:[#allocation2 + $0x90] sm:$0x1] %vm985, 0
        %999 = vst.msk [vmem:[#allocation2 + $0x9c] sm:$0x1] %vm985, 0
        %1000 = vst.msk [vmem:[#allocation2 + $0xa8] sm:$0x1] %vm985, 0
        %1001 = vst.msk [vmem:[#allocation2 + $0xb4] sm:$0x1] %vm985, 0
        %1002 = vst.msk [vmem:[#allocation2 + $0xc0] sm:$0x1] %vm985, 0
        %1003 = vst.msk [vmem:[#allocation2 + $0xcc] sm:$0x1] %vm985, 0
        %1004 = vst.msk [vmem:[#allocation2 + $0xd8] sm:$0x1] %vm985, 0
        %1005 = vst.msk [vmem:[#allocation2 + $0xe4] sm:$0x1] %vm985, 0
        %vm1006 = vcmask 517121
        %1007 = vst.msk [vmem:[#allocation2 + $0x8] sm:$0x2] %vm1006, 0
        %1008 = vst.msk [vmem:[#allocation2 + $0x14] sm:$0x2] %vm1006, 0
        %1009 = vst.msk [vmem:[#allocation2 + $0x20] sm:$0x2] %vm1006, 0
        %1010 = vst.msk [vmem:[#allocation2 + $0x2c] sm:$0x2] %vm1006, 0
        %1011 = vst.msk [vmem:[#allocation2 + $0x38] sm:$0x2] %vm1006, 0
        %1012 = vst.msk [vmem:[#allocation2 + $0x44] sm:$0x2] %vm1006, 0
        %1013 = vst.msk [vmem:[#allocation2 + $0x50] sm:$0x2] %vm1006, 0
        %1014 = vst.msk [vmem:[#allocation2 + $0x5c] sm:$0x2] %vm1006, 0
        %1015 = vst.msk [vmem:[#allocation2 + $0x68] sm:$0x2] %vm1006, 0
        %1016 = vst.msk [vmem:[#allocation2 + $0x74] sm:$0x2] %vm1006, 0
        %1017 = vst.msk [vmem:[#allocation2 + $0x80] sm:$0x2] %vm1006, 0
        %1018 = vst.msk [vmem:[#allocation2 + $0x8c] sm:$0x2] %vm1006, 0
        %1019 = vst.msk [vmem:[#allocation2 + $0x98] sm:$0x2] %vm1006, 0
        %1020 = vst.msk [vmem:[#allocation2 + $0xa4] sm:$0x2] %vm1006, 0
        %1021 = vst.msk [vmem:[#allocation2 + $0xb0] sm:$0x2] %vm1006, 0
        %1022 = vst.msk [vmem:[#allocation2 + $0xbc] sm:$0x2] %vm1006, 0
        %1023 = vst.msk [vmem:[#allocation2 + $0xc8] sm:$0x2] %vm1006, 0
        %1024 = vst.msk [vmem:[#allocation2 + $0xd4] sm:$0x2] %vm1006, 0
        %1025 = vst.msk [vmem:[#allocation2 + $0xe0] sm:$0x2] %vm1006, 0
        %1026 = vst.msk [vmem:[#allocation2 + $0xec] sm:$0x2] %vm1006, 0
        %v1027 = vpack.c.bf16 %v939, %v938
        %v1028 = vpack.c.bf16 %v941, %v940
        %v1029 = vpack.c.bf16 %v943, %v942
        %v1030 = vpack.c.bf16 %v945, %v944
        %v1031 = vpack.c.bf16 %v947, %v946
        %v1032 = vpack.c.bf16 %v949, %v948
        %v1033 = vpack.c.bf16 %v951, %v950
        %v1034 = vpack.c.bf16 %v953, %v952
        %v1035 = vpack.c.bf16 %v955, %v954
        %v1036 = vpack.c.bf16 %v957, %v956
        %v1037 = vpack.c.bf16 %v959, %v958
        %v1038 = vpack.c.bf16 %v961, %v960
        %v1039 = vpack.c.bf16 %v963, %v962
        %v1040 = vpack.c.bf16 %v965, %v964
        %v1041 = vpack.c.bf16 %v967, %v966
        %v1042 = vpack.c.bf16 %v969, %v968
        %v1059 = vunpack.c.l.b16 %v1027
        %v1060 = vunpack.c.h.b16 %v1027
        %v1061 = vunpack.c.l.b16 %v1028
        %v1062 = vunpack.c.h.b16 %v1028
        %v1063 = vunpack.c.l.b16 %v1029
        %v1064 = vunpack.c.h.b16 %v1029
        %v1065 = vunpack.c.l.b16 %v1030
        %v1066 = vunpack.c.h.b16 %v1030
        %v1067 = vunpack.c.l.b16 %v1031
        %v1068 = vunpack.c.h.b16 %v1031
        %v1069 = vunpack.c.l.b16 %v1032
        %v1070 = vunpack.c.h.b16 %v1032
        %v1071 = vunpack.c.l.b16 %v1033
        %v1072 = vunpack.c.h.b16 %v1033
        %v1073 = vunpack.c.l.b16 %v1034
        %v1074 = vunpack.c.h.b16 %v1034
        %v1075 = vunpack.c.l.b16 %v1035
        %v1076 = vunpack.c.h.b16 %v1035
        %v1077 = vunpack.c.l.b16 %v1036
        %v1078 = vunpack.c.h.b16 %v1036
        %v1079 = vunpack.c.l.b16 %v1037
        %v1080 = vunpack.c.h.b16 %v1037
        %v1081 = vunpack.c.l.b16 %v1038
        %v1082 = vunpack.c.h.b16 %v1038
        %v1083 = vunpack.c.l.b16 %v1039
        %v1084 = vunpack.c.h.b16 %v1039
        %v1085 = vunpack.c.l.b16 %v1040
        %v1086 = vunpack.c.h.b16 %v1040
        %v1087 = vunpack.c.l.b16 %v1041
        %v1088 = vunpack.c.h.b16 %v1041
        %v1089 = vunpack.c.l.b16 %v1042
        %v1090 = vunpack.c.h.b16 %v1042
        %v1091 = vpack.c.b16 %v1059, %v1059
        %v1092 = vpack.c.b16 %v1060, %v1060
        %v1093 = vpack.c.b16 %v1061, %v1061
        %v1094 = vpack.c.b16 %v1062, %v1062
        %v1095 = vpack.c.b16 %v1063, %v1063
        %v1096 = vpack.c.b16 %v1064, %v1064
        %v1097 = vpack.c.b16 %v1065, %v1065
        %v1098 = vpack.c.b16 %v1066, %v1066
        %v1099 = vpack.c.b16 %v1067, %v1067
        %v1100 = vpack.c.b16 %v1068, %v1068
        %v1101 = vpack.c.b16 %v1069, %v1069
        %v1102 = vpack.c.b16 %v1070, %v1070
        %v1103 = vpack.c.b16 %v1071, %v1071
        %v1104 = vpack.c.b16 %v1072, %v1072
        %v1105 = vpack.c.b16 %v1073, %v1073
        %v1106 = vpack.c.b16 %v1074, %v1074
        %v1107 = vpack.c.b16 %v1075, %v1075
        %v1108 = vpack.c.b16 %v1076, %v1076
        %v1109 = vpack.c.b16 %v1077, %v1077
        %v1110 = vpack.c.b16 %v1078, %v1078
        %v1111 = vpack.c.b16 %v1079, %v1079
        %v1112 = vpack.c.b16 %v1080, %v1080
        %v1113 = vpack.c.b16 %v1081, %v1081
        %v1114 = vpack.c.b16 %v1082, %v1082
        %v1115 = vpack.c.b16 %v1083, %v1083
        %v1116 = vpack.c.b16 %v1084, %v1084
        %v1117 = vpack.c.b16 %v1085, %v1085
        %v1118 = vpack.c.b16 %v1086, %v1086
        %v1119 = vpack.c.b16 %v1087, %v1087
        %v1120 = vpack.c.b16 %v1088, %v1088
        %v1121 = vpack.c.b16 %v1089, %v1089
        %v1122 = vpack.c.b16 %v1090, %v1090
        %vm1123 = vcmask 1040384
        %vm1124 = vcmask 1044484
        %vm1125 = vmor %vm1123, %vm1124
        %v1126 = vrot.slane %v1091, 7
        %v1127 = vrot.slane %v1126, 4
        %v1128 = vrot.slane %v1092, 7
        %v1129 = vsel %vm1125, %v1127, %v1128
        %v1130 = vrot.slane %v1128, 4
        %v1131 = vrot.slane %v1093, 7
        %v1132 = vrot.slane %v1131, 4
        %v1133 = vrot.slane %v1094, 7
        %v1134 = vsel %vm1125, %v1132, %v1133
        %v1135 = vrot.slane %v1133, 4
        %v1136 = vrot.slane %v1095, 7
        %v1137 = vrot.slane %v1136, 4
        %v1138 = vrot.slane %v1096, 7
        %v1139 = vsel %vm1125, %v1137, %v1138
        %v1140 = vrot.slane %v1138, 4
        %v1141 = vrot.slane %v1097, 7
        %v1142 = vrot.slane %v1141, 4
        %v1143 = vrot.slane %v1098, 7
        %v1144 = vsel %vm1125, %v1142, %v1143
        %v1145 = vrot.slane %v1143, 4
        %v1146 = vrot.slane %v1099, 7
        %v1147 = vrot.slane %v1146, 4
        %v1148 = vrot.slane %v1100, 7
        %v1149 = vsel %vm1125, %v1147, %v1148
        %v1150 = vrot.slane %v1148, 4
        %v1151 = vrot.slane %v1101, 7
        %v1152 = vrot.slane %v1151, 4
        %v1153 = vrot.slane %v1102, 7
        %v1154 = vsel %vm1125, %v1152, %v1153
        %v1155 = vrot.slane %v1153, 4
        %v1156 = vrot.slane %v1103, 7
        %v1157 = vrot.slane %v1156, 4
        %v1158 = vrot.slane %v1104, 7
        %v1159 = vsel %vm1125, %v1157, %v1158
        %v1160 = vrot.slane %v1158, 4
        %v1161 = vrot.slane %v1105, 7
        %v1162 = vrot.slane %v1161, 4
        %v1163 = vrot.slane %v1106, 7
        %v1164 = vsel %vm1125, %v1162, %v1163
        %v1165 = vrot.slane %v1163, 4
        %v1166 = vrot.slane %v1107, 7
        %v1167 = vrot.slane %v1166, 4
        %v1168 = vrot.slane %v1108, 7
        %v1169 = vsel %vm1125, %v1167, %v1168
        %v1170 = vrot.slane %v1168, 4
        %v1171 = vrot.slane %v1109, 7
        %v1172 = vrot.slane %v1171, 4
        %v1173 = vrot.slane %v1110, 7
        %v1174 = vsel %vm1125, %v1172, %v1173
        %v1175 = vrot.slane %v1173, 4
        %v1176 = vrot.slane %v1111, 7
        %v1177 = vrot.slane %v1176, 4
        %v1178 = vrot.slane %v1112, 7
        %v1179 = vsel %vm1125, %v1177, %v1178
        %v1180 = vrot.slane %v1178, 4
        %v1181 = vrot.slane %v1113, 7
        %v1182 = vrot.slane %v1181, 4
        %v1183 = vrot.slane %v1114, 7
        %v1184 = vsel %vm1125, %v1182, %v1183
        %v1185 = vrot.slane %v1183, 4
        %v1186 = vrot.slane %v1115, 7
        %v1187 = vrot.slane %v1186, 4
        %v1188 = vrot.slane %v1116, 7
        %v1189 = vsel %vm1125, %v1187, %v1188
        %v1190 = vrot.slane %v1188, 4
        %v1191 = vrot.slane %v1117, 7
        %v1192 = vrot.slane %v1191, 4
        %v1193 = vrot.slane %v1118, 7
        %v1194 = vsel %vm1125, %v1192, %v1193
        %v1195 = vrot.slane %v1193, 4
        %v1196 = vrot.slane %v1119, 7
        %v1197 = vrot.slane %v1196, 4
        %v1198 = vrot.slane %v1120, 7
        %v1199 = vsel %vm1125, %v1197, %v1198
        %v1200 = vrot.slane %v1198, 4
        %v1201 = vrot.slane %v1121, 7
        %v1202 = vrot.slane %v1201, 4
        %v1203 = vrot.slane %v1122, 7
        %v1204 = vsel %vm1125, %v1202, %v1203
        %v1205 = vrot.slane %v1203, 4
        %s1254 = scalar_lea.vmem [#allocation2], 24
        %vm1255 = vcmask 519169
        %1256 = vst.msk [vmem:[%s1254] sm:$0xe] %vm1255, %v1126
        %1257 = vst.msk [vmem:[%s1254 + $0x4] sm:$0xf] %vm970, %v1129
        %1258 = vst.msk [vmem:[%s1254 + $0x8] sm:$0x1] %vm985, %v1130
        %1259 = vst.msk [vmem:[%s1254 + $0xc] sm:$0xe] %vm1255, %v1131
        %1260 = vst.msk [vmem:[%s1254 + $0x10] sm:$0xf] %vm970, %v1134
        %1261 = vst.msk [vmem:[%s1254 + $0x14] sm:$0x1] %vm985, %v1135
        %1262 = vst.msk [vmem:[%s1254 + $0x18] sm:$0xe] %vm1255, %v1136
        %1263 = vst.msk [vmem:[%s1254 + $0x1c] sm:$0xf] %vm970, %v1139
        %1264 = vst.msk [vmem:[%s1254 + $0x20] sm:$0x1] %vm985, %v1140
        %1265 = vst.msk [vmem:[%s1254 + $0x24] sm:$0xe] %vm1255, %v1141
        %1266 = vst.msk [vmem:[%s1254 + $0x28] sm:$0xf] %vm970, %v1144
        %1267 = vst.msk [vmem:[%s1254 + $0x2c] sm:$0x1] %vm985, %v1145
        %1268 = vst.msk [vmem:[%s1254 + $0x30] sm:$0xe] %vm1255, %v1146
        %1269 = vst.msk [vmem:[%s1254 + $0x34] sm:$0xf] %vm970, %v1149
        %1270 = vst.msk [vmem:[%s1254 + $0x38] sm:$0x1] %vm985, %v1150
        %1271 = vst.msk [vmem:[%s1254 + $0x3c] sm:$0xe] %vm1255, %v1151
        %1272 = vst.msk [vmem:[%s1254 + $0x40] sm:$0xf] %vm970, %v1154
        %1273 = vst.msk [vmem:[%s1254 + $0x44] sm:$0x1] %vm985, %v1155
        %1274 = vst.msk [vmem:[%s1254 + $0x48] sm:$0xe] %vm1255, %v1156
        %1275 = vst.msk [vmem:[%s1254 + $0x4c] sm:$0xf] %vm970, %v1159
        %1276 = vst.msk [vmem:[%s1254 + $0x50] sm:$0x1] %vm985, %v1160
        %1277 = vst.msk [vmem:[%s1254 + $0x54] sm:$0xe] %vm1255, %v1161
        %1278 = vst.msk [vmem:[%s1254 + $0x58] sm:$0xf] %vm970, %v1164
        %1279 = vst.msk [vmem:[%s1254 + $0x5c] sm:$0x1] %vm985, %v1165
        %1280 = vst.msk [vmem:[%s1254 + $0x60] sm:$0xe] %vm1255, %v1166
        %1281 = vst.msk [vmem:[%s1254 + $0x64] sm:$0xf] %vm970, %v1169
        %1282 = vst.msk [vmem:[%s1254 + $0x68] sm:$0x1] %vm985, %v1170
        %1283 = vst.msk [vmem:[%s1254 + $0x6c] sm:$0xe] %vm1255, %v1171
        %1284 = vst.msk [vmem:[%s1254 + $0x70] sm:$0xf] %vm970, %v1174
        %1285 = vst.msk [vmem:[%s1254 + $0x74] sm:$0x1] %vm985, %v1175
        %1286 = vst.msk [vmem:[%s1254 + $0x78] sm:$0xe] %vm1255, %v1176
        %1287 = vst.msk [vmem:[%s1254 + $0x7c] sm:$0xf] %vm970, %v1179
        %1288 = vst.msk [vmem:[%s1254 + $0x80] sm:$0x1] %vm985, %v1180
        %1289 = vst.msk [vmem:[%s1254 + $0x84] sm:$0xe] %vm1255, %v1181
        %1290 = vst.msk [vmem:[%s1254 + $0x88] sm:$0xf] %vm970, %v1184
        %1291 = vst.msk [vmem:[%s1254 + $0x8c] sm:$0x1] %vm985, %v1185
        %1292 = vst.msk [vmem:[%s1254 + $0x90] sm:$0xe] %vm1255, %v1186
        %1293 = vst.msk [vmem:[%s1254 + $0x94] sm:$0xf] %vm970, %v1189
        %1294 = vst.msk [vmem:[%s1254 + $0x98] sm:$0x1] %vm985, %v1190
        %1295 = vst.msk [vmem:[%s1254 + $0x9c] sm:$0xe] %vm1255, %v1191
        %1296 = vst.msk [vmem:[%s1254 + $0xa0] sm:$0xf] %vm970, %v1194
        %1297 = vst.msk [vmem:[%s1254 + $0xa4] sm:$0x1] %vm985, %v1195
        %1298 = vst.msk [vmem:[%s1254 + $0xa8] sm:$0xe] %vm1255, %v1196
        %1299 = vst.msk [vmem:[%s1254 + $0xac] sm:$0xf] %vm970, %v1199
        %1300 = vst.msk [vmem:[%s1254 + $0xb0] sm:$0x1] %vm985, %v1200
        %1301 = vst.msk [vmem:[%s1254 + $0xb4] sm:$0xe] %vm1255, %v1201
        %1302 = vst.msk [vmem:[%s1254 + $0xb8] sm:$0xf] %vm970, %v1204
        %1303 = vst.msk [vmem:[%s1254 + $0xbc] sm:$0x1] %vm985, %v1205
        %v1304 = vld [vmem:[#allocation2] sm:$0xf]
        %v1305 = vld [vmem:[#allocation2 + $0x4] sm:$0xf]
        %v1306 = vld [vmem:[#allocation2 + $0xc] sm:$0xf]
        %v1307 = vld [vmem:[#allocation2 + $0x10] sm:$0xf]
        %v1308 = vld [vmem:[#allocation2 + $0x18] sm:$0xf]
        %v1309 = vld [vmem:[#allocation2 + $0x1c] sm:$0xf]
        %v1310 = vld [vmem:[#allocation2 + $0x24] sm:$0xf]
        %v1311 = vld [vmem:[#allocation2 + $0x28] sm:$0xf]
        %v1312 = vld [vmem:[#allocation2 + $0x30] sm:$0xf]
        %v1313 = vld [vmem:[#allocation2 + $0x34] sm:$0xf]
        %v1314 = vld [vmem:[#allocation2 + $0x3c] sm:$0xf]
        %v1315 = vld [vmem:[#allocation2 + $0x40] sm:$0xf]
        %v1316 = vld [vmem:[#allocation2 + $0x48] sm:$0xf]
        %v1317 = vld [vmem:[#allocation2 + $0x4c] sm:$0xf]
        %v1318 = vld [vmem:[#allocation2 + $0x54] sm:$0xf]
        %v1319 = vld [vmem:[#allocation2 + $0x58] sm:$0xf]
        %v1320 = vld [vmem:[#allocation2 + $0x60] sm:$0xf]
        %v1321 = vld [vmem:[#allocation2 + $0x64] sm:$0xf]
        %v1322 = vld [vmem:[#allocation2 + $0x6c] sm:$0xf]
        %v1323 = vld [vmem:[#allocation2 + $0x70] sm:$0xf]
        %v1324 = vld [vmem:[#allocation2 + $0x78] sm:$0xf]
        %v1325 = vld [vmem:[#allocation2 + $0x7c] sm:$0xf]
        %v1326 = vld [vmem:[#allocation2 + $0x84] sm:$0xf]
        %v1327 = vld [vmem:[#allocation2 + $0x88] sm:$0xf]
        %v1328 = vld [vmem:[#allocation2 + $0x90] sm:$0xf]
        %v1329 = vld [vmem:[#allocation2 + $0x94] sm:$0xf]
        %v1330 = vld [vmem:[#allocation2 + $0x9c] sm:$0xf]
        %v1331 = vld [vmem:[#allocation2 + $0xa0] sm:$0xf]
        %v1332 = vld [vmem:[#allocation2 + $0xa8] sm:$0xf]
        %v1333 = vld [vmem:[#allocation2 + $0xac] sm:$0xf]
        %v1334 = vld [vmem:[#allocation2 + $0xb4] sm:$0xf]
        %v1335 = vld [vmem:[#allocation2 + $0xb8] sm:$0xf]
        %v1336 = vld [vmem:[#allocation2 + $0x8] sm:$0x1]
        %v1337 = vld [vmem:[#allocation2 + $0x14] sm:$0x1]
        %v1338 = vld [vmem:[#allocation2 + $0x20] sm:$0x1]
        %v1339 = vld [vmem:[#allocation2 + $0x2c] sm:$0x1]
        %v1340 = vld [vmem:[#allocation2 + $0x38] sm:$0x1]
        %v1341 = vld [vmem:[#allocation2 + $0x44] sm:$0x1]
        %v1342 = vld [vmem:[#allocation2 + $0x50] sm:$0x1]
        %v1343 = vld [vmem:[#allocation2 + $0x5c] sm:$0x1]
        %v1344 = vld [vmem:[#allocation2 + $0x68] sm:$0x1]
        %v1345 = vld [vmem:[#allocation2 + $0x74] sm:$0x1]
        %v1346 = vld [vmem:[#allocation2 + $0x80] sm:$0x1]
        %v1347 = vld [vmem:[#allocation2 + $0x8c] sm:$0x1]
        %v1348 = vld [vmem:[#allocation2 + $0x98] sm:$0x1]
        %v1349 = vld [vmem:[#allocation2 + $0xa4] sm:$0x1]
        %v1350 = vld [vmem:[#allocation2 + $0xb0] sm:$0x1]
        %v1351 = vld [vmem:[#allocation2 + $0xbc] sm:$0x1]
        %vm1352 = vsmask.f32 3328
        %vm1353 = vsmask.f32 7440
        %vm1354 = vmor %vm1352, %vm1353
        %v1356 = vshrl.u32 %v1304, 16
        %v1358 = vrot.slane %v1356, 4
        %v1359 = vshll.u32 %v1304, 16
        %v1361 = vrot.slane %v1359, 5
        %v1362 = vor.u32 %v1358, %v1361
        %v1363 = vrot.slane %v1362, 4
        %v1365 = vshll.u32 %v1305, 16
        %v1367 = vrot.slane %v1365, 5
        %v1368 = vsel %vm1354, %v1363, %v1367
        %v1369 = vshrl.u32 %v1305, 16
        %v1371 = vrot.slane %v1369, 4
        %v1372 = vor.u32 %v1371, %v1367
        %v1373 = vrot.slane %v1372, 4
        %v1375 = vshll.u32 %v1336, 16
        %v1377 = vrot.slane %v1375, 5
        %v1378 = vsel %vm1354, %v1373, %v1377
        %v1380 = vshrl.u32 %v1306, 16
        %v1382 = vrot.slane %v1380, 4
        %v1383 = vshll.u32 %v1306, 16
        %v1385 = vrot.slane %v1383, 5
        %v1386 = vor.u32 %v1382, %v1385
        %v1387 = vrot.slane %v1386, 4
        %v1389 = vshll.u32 %v1307, 16
        %v1391 = vrot.slane %v1389, 5
        %v1392 = vsel %vm1354, %v1387, %v1391
        %v1393 = vshrl.u32 %v1307, 16
        %v1395 = vrot.slane %v1393, 4
        %v1396 = vor.u32 %v1395, %v1391
        %v1397 = vrot.slane %v1396, 4
        %v1399 = vshll.u32 %v1337, 16
        %v1401 = vrot.slane %v1399, 5
        %v1402 = vsel %vm1354, %v1397, %v1401
        %v1404 = vshrl.u32 %v1308, 16
        %v1406 = vrot.slane %v1404, 4
        %v1407 = vshll.u32 %v1308, 16
        %v1409 = vrot.slane %v1407, 5
        %v1410 = vor.u32 %v1406, %v1409
        %v1411 = vrot.slane %v1410, 4
        %v1413 = vshll.u32 %v1309, 16
        %v1415 = vrot.slane %v1413, 5
        %v1416 = vsel %vm1354, %v1411, %v1415
        %v1417 = vshrl.u32 %v1309, 16
        %v1419 = vrot.slane %v1417, 4
        %v1420 = vor.u32 %v1419, %v1415
        %v1421 = vrot.slane %v1420, 4
        %v1423 = vshll.u32 %v1338, 16
        %v1425 = vrot.slane %v1423, 5
        %v1426 = vsel %vm1354, %v1421, %v1425
        %v1428 = vshrl.u32 %v1310, 16
        %v1430 = vrot.slane %v1428, 4
        %v1431 = vshll.u32 %v1310, 16
        %v1433 = vrot.slane %v1431, 5
        %v1434 = vor.u32 %v1430, %v1433
        %v1435 = vrot.slane %v1434, 4
        %v1437 = vshll.u32 %v1311, 16
        %v1439 = vrot.slane %v1437, 5
        %v1440 = vsel %vm1354, %v1435, %v1439
        %v1441 = vshrl.u32 %v1311, 16
        %v1443 = vrot.slane %v1441, 4
        %v1444 = vor.u32 %v1443, %v1439
        %v1445 = vrot.slane %v1444, 4
        %v1447 = vshll.u32 %v1339, 16
        %v1449 = vrot.slane %v1447, 5
        %v1450 = vsel %vm1354, %v1445, %v1449
        %v1452 = vshrl.u32 %v1312, 16
        %v1454 = vrot.slane %v1452, 4
        %v1455 = vshll.u32 %v1312, 16
        %v1457 = vrot.slane %v1455, 5
        %v1458 = vor.u32 %v1454, %v1457
        %v1459 = vrot.slane %v1458, 4
        %v1461 = vshll.u32 %v1313, 16
        %v1463 = vrot.slane %v1461, 5
        %v1464 = vsel %vm1354, %v1459, %v1463
        %v1465 = vshrl.u32 %v1313, 16
        %v1467 = vrot.slane %v1465, 4
        %v1468 = vor.u32 %v1467, %v1463
        %v1469 = vrot.slane %v1468, 4
        %v1471 = vshll.u32 %v1340, 16
        %v1473 = vrot.slane %v1471, 5
        %v1474 = vsel %vm1354, %v1469, %v1473
        %v1476 = vshrl.u32 %v1314, 16
        %v1478 = vrot.slane %v1476, 4
        %v1479 = vshll.u32 %v1314, 16
        %v1481 = vrot.slane %v1479, 5
        %v1482 = vor.u32 %v1478, %v1481
        %v1483 = vrot.slane %v1482, 4
        %v1485 = vshll.u32 %v1315, 16
        %v1487 = vrot.slane %v1485, 5
        %v1488 = vsel %vm1354, %v1483, %v1487
        %v1489 = vshrl.u32 %v1315, 16
        %v1491 = vrot.slane %v1489, 4
        %v1492 = vor.u32 %v1491, %v1487
        %v1493 = vrot.slane %v1492, 4
        %v1495 = vshll.u32 %v1341, 16
        %v1497 = vrot.slane %v1495, 5
        %v1498 = vsel %vm1354, %v1493, %v1497
        %v1500 = vshrl.u32 %v1316, 16
        %v1502 = vrot.slane %v1500, 4
        %v1503 = vshll.u32 %v1316, 16
        %v1505 = vrot.slane %v1503, 5
        %v1506 = vor.u32 %v1502, %v1505
        %v1507 = vrot.slane %v1506, 4
        %v1509 = vshll.u32 %v1317, 16
        %v1511 = vrot.slane %v1509, 5
        %v1512 = vsel %vm1354, %v1507, %v1511
        %v1513 = vshrl.u32 %v1317, 16
        %v1515 = vrot.slane %v1513, 4
        %v1516 = vor.u32 %v1515, %v1511
        %v1517 = vrot.slane %v1516, 4
        %v1519 = vshll.u32 %v1342, 16
        %v1521 = vrot.slane %v1519, 5
        %v1522 = vsel %vm1354, %v1517, %v1521
        %v1524 = vshrl.u32 %v1318, 16
        %v1526 = vrot.slane %v1524, 4
        %v1527 = vshll.u32 %v1318, 16
        %v1529 = vrot.slane %v1527, 5
        %v1530 = vor.u32 %v1526, %v1529
        %v1531 = vrot.slane %v1530, 4
        %v1533 = vshll.u32 %v1319, 16
        %v1535 = vrot.slane %v1533, 5
        %v1536 = vsel %vm1354, %v1531, %v1535
        %v1537 = vshrl.u32 %v1319, 16
        %v1539 = vrot.slane %v1537, 4
        %v1540 = vor.u32 %v1539, %v1535
        %v1541 = vrot.slane %v1540, 4
        %v1543 = vshll.u32 %v1343, 16
        %v1545 = vrot.slane %v1543, 5
        %v1546 = vsel %vm1354, %v1541, %v1545
        %v1548 = vshrl.u32 %v1320, 16
        %v1550 = vrot.slane %v1548, 4
        %v1551 = vshll.u32 %v1320, 16
        %v1553 = vrot.slane %v1551, 5
        %v1554 = vor.u32 %v1550, %v1553
        %v1555 = vrot.slane %v1554, 4
        %v1557 = vshll.u32 %v1321, 16
        %v1559 = vrot.slane %v1557, 5
        %v1560 = vsel %vm1354, %v1555, %v1559
        %v1561 = vshrl.u32 %v1321, 16
        %v1563 = vrot.slane %v1561, 4
        %v1564 = vor.u32 %v1563, %v1559
        %v1565 = vrot.slane %v1564, 4
        %v1567 = vshll.u32 %v1344, 16
        %v1569 = vrot.slane %v1567, 5
        %v1570 = vsel %vm1354, %v1565, %v1569
        %v1572 = vshrl.u32 %v1322, 16
        %v1574 = vrot.slane %v1572, 4
        %v1575 = vshll.u32 %v1322, 16
        %v1577 = vrot.slane %v1575, 5
        %v1578 = vor.u32 %v1574, %v1577
        %v1579 = vrot.slane %v1578, 4
        %v1581 = vshll.u32 %v1323, 16
        %v1583 = vrot.slane %v1581, 5
        %v1584 = vsel %vm1354, %v1579, %v1583
        %v1585 = vshrl.u32 %v1323, 16
        %v1587 = vrot.slane %v1585, 4
        %v1588 = vor.u32 %v1587, %v1583
        %v1589 = vrot.slane %v1588, 4
        %v1591 = vshll.u32 %v1345, 16
        %v1593 = vrot.slane %v1591, 5
        %v1594 = vsel %vm1354, %v1589, %v1593
        %v1596 = vshrl.u32 %v1324, 16
        %v1598 = vrot.slane %v1596, 4
        %v1599 = vshll.u32 %v1324, 16
        %v1601 = vrot.slane %v1599, 5
        %v1602 = vor.u32 %v1598, %v1601
        %v1603 = vrot.slane %v1602, 4
        %v1605 = vshll.u32 %v1325, 16
        %v1607 = vrot.slane %v1605, 5
        %v1608 = vsel %vm1354, %v1603, %v1607
        %v1609 = vshrl.u32 %v1325, 16
        %v1611 = vrot.slane %v1609, 4
        %v1612 = vor.u32 %v1611, %v1607
        %v1613 = vrot.slane %v1612, 4
        %v1615 = vshll.u32 %v1346, 16
        %v1617 = vrot.slane %v1615, 5
        %v1618 = vsel %vm1354, %v1613, %v1617
        %v1620 = vshrl.u32 %v1326, 16
        %v1622 = vrot.slane %v1620, 4
        %v1623 = vshll.u32 %v1326, 16
        %v1625 = vrot.slane %v1623, 5
        %v1626 = vor.u32 %v1622, %v1625
        %v1627 = vrot.slane %v1626, 4
        %v1629 = vshll.u32 %v1327, 16
        %v1631 = vrot.slane %v1629, 5
        %v1632 = vsel %vm1354, %v1627, %v1631
        %v1633 = vshrl.u32 %v1327, 16
        %v1635 = vrot.slane %v1633, 4
        %v1636 = vor.u32 %v1635, %v1631
        %v1637 = vrot.slane %v1636, 4
        %v1639 = vshll.u32 %v1347, 16
        %v1641 = vrot.slane %v1639, 5
        %v1642 = vsel %vm1354, %v1637, %v1641
        %v1644 = vshrl.u32 %v1328, 16
        %v1646 = vrot.slane %v1644, 4
        %v1647 = vshll.u32 %v1328, 16
        %v1649 = vrot.slane %v1647, 5
        %v1650 = vor.u32 %v1646, %v1649
        %v1651 = vrot.slane %v1650, 4
        %v1653 = vshll.u32 %v1329, 16
        %v1655 = vrot.slane %v1653, 5
        %v1656 = vsel %vm1354, %v1651, %v1655
        %v1657 = vshrl.u32 %v1329, 16
        %v1659 = vrot.slane %v1657, 4
        %v1660 = vor.u32 %v1659, %v1655
        %v1661 = vrot.slane %v1660, 4
        %v1663 = vshll.u32 %v1348, 16
        %v1665 = vrot.slane %v1663, 5
        %v1666 = vsel %vm1354, %v1661, %v1665
        %v1668 = vshrl.u32 %v1330, 16
        %v1670 = vrot.slane %v1668, 4
        %v1671 = vshll.u32 %v1330, 16
        %v1673 = vrot.slane %v1671, 5
        %v1674 = vor.u32 %v1670, %v1673
        %v1675 = vrot.slane %v1674, 4
        %v1677 = vshll.u32 %v1331, 16
        %v1679 = vrot.slane %v1677, 5
        %v1680 = vsel %vm1354, %v1675, %v1679
        %v1681 = vshrl.u32 %v1331, 16
        %v1683 = vrot.slane %v1681, 4
        %v1684 = vor.u32 %v1683, %v1679
        %v1685 = vrot.slane %v1684, 4
        %v1687 = vshll.u32 %v1349, 16
        %v1689 = vrot.slane %v1687, 5
        %v1690 = vsel %vm1354, %v1685, %v1689
        %v1692 = vshrl.u32 %v1332, 16
        %v1694 = vrot.slane %v1692, 4
        %v1695 = vshll.u32 %v1332, 16
        %v1697 = vrot.slane %v1695, 5
        %v1698 = vor.u32 %v1694, %v1697
        %v1699 = vrot.slane %v1698, 4
        %v1701 = vshll.u32 %v1333, 16
        %v1703 = vrot.slane %v1701, 5
        %v1704 = vsel %vm1354, %v1699, %v1703
        %v1705 = vshrl.u32 %v1333, 16
        %v1707 = vrot.slane %v1705, 4
        %v1708 = vor.u32 %v1707, %v1703
        %v1709 = vrot.slane %v1708, 4
        %v1711 = vshll.u32 %v1350, 16
        %v1713 = vrot.slane %v1711, 5
        %v1714 = vsel %vm1354, %v1709, %v1713
        %v1716 = vshrl.u32 %v1334, 16
        %v1718 = vrot.slane %v1716, 4
        %v1719 = vshll.u32 %v1334, 16
        %v1721 = vrot.slane %v1719, 5
        %v1722 = vor.u32 %v1718, %v1721
        %v1723 = vrot.slane %v1722, 4
        %v1725 = vshll.u32 %v1335, 16
        %v1727 = vrot.slane %v1725, 5
        %v1728 = vsel %vm1354, %v1723, %v1727
        %v1729 = vshrl.u32 %v1335, 16
        %v1731 = vrot.slane %v1729, 4
        %v1732 = vor.u32 %v1731, %v1727
        %v1733 = vrot.slane %v1732, 4
        %v1735 = vshll.u32 %v1351, 16
        %v1737 = vrot.slane %v1735, 5
        %v1738 = vsel %vm1354, %v1733, %v1737
        %v1739 = vld [vmem:[#allocation2] sm:$0xe]
        %v1740 = vld [vmem:[#allocation2 + $0xc] sm:$0xe]
        %v1741 = vld [vmem:[#allocation2 + $0x18] sm:$0xe]
        %v1742 = vld [vmem:[#allocation2 + $0x24] sm:$0xe]
        %v1743 = vld [vmem:[#allocation2 + $0x30] sm:$0xe]
        %v1744 = vld [vmem:[#allocation2 + $0x3c] sm:$0xe]
        %v1745 = vld [vmem:[#allocation2 + $0x48] sm:$0xe]
        %v1746 = vld [vmem:[#allocation2 + $0x54] sm:$0xe]
        %v1747 = vld [vmem:[#allocation2 + $0x60] sm:$0xe]
        %v1748 = vld [vmem:[#allocation2 + $0x6c] sm:$0xe]
        %v1749 = vld [vmem:[#allocation2 + $0x78] sm:$0xe]
        %v1750 = vld [vmem:[#allocation2 + $0x84] sm:$0xe]
        %v1751 = vld [vmem:[#allocation2 + $0x90] sm:$0xe]
        %v1752 = vld [vmem:[#allocation2 + $0x9c] sm:$0xe]
        %v1753 = vld [vmem:[#allocation2 + $0xa8] sm:$0xe]
        %v1754 = vld [vmem:[#allocation2 + $0xb4] sm:$0xe]
        %vm1803 = vcmask 1042432
        %vm1804 = vcmask 1046532
        %vm1805 = vmor %vm1803, %vm1804
        %v1806 = vrot.slane %v1739, 5
        %v1807 = vrot.slane %v1806, 4
        %v1808 = vrot.slane %v1305, 5
        %v1809 = vsel %vm1805, %v1807, %v1808
        %v1810 = vrot.slane %v1808, 4
        %v1811 = vrot.slane %v1336, 5
        %v1812 = vsel %vm1805, %v1810, %v1811
        %v1813 = vrot.slane %v1740, 5
        %v1814 = vrot.slane %v1813, 4
        %v1815 = vrot.slane %v1307, 5
        %v1816 = vsel %vm1805, %v1814, %v1815
        %v1817 = vrot.slane %v1815, 4
        %v1818 = vrot.slane %v1337, 5
        %v1819 = vsel %vm1805, %v1817, %v1818
        %v1820 = vrot.slane %v1741, 5
        %v1821 = vrot.slane %v1820, 4
        %v1822 = vrot.slane %v1309, 5
        %v1823 = vsel %vm1805, %v1821, %v1822
        %v1824 = vrot.slane %v1822, 4
        %v1825 = vrot.slane %v1338, 5
        %v1826 = vsel %vm1805, %v1824, %v1825
        %v1827 = vrot.slane %v1742, 5
        %v1828 = vrot.slane %v1827, 4
        %v1829 = vrot.slane %v1311, 5
        %v1830 = vsel %vm1805, %v1828, %v1829
        %v1831 = vrot.slane %v1829, 4
        %v1832 = vrot.slane %v1339, 5
        %v1833 = vsel %vm1805, %v1831, %v1832
        %v1834 = vrot.slane %v1743, 5
        %v1835 = vrot.slane %v1834, 4
        %v1836 = vrot.slane %v1313, 5
        %v1837 = vsel %vm1805, %v1835, %v1836
        %v1838 = vrot.slane %v1836, 4
        %v1839 = vrot.slane %v1340, 5
        %v1840 = vsel %vm1805, %v1838, %v1839
        %v1841 = vrot.slane %v1744, 5
        %v1842 = vrot.slane %v1841, 4
        %v1843 = vrot.slane %v1315, 5
        %v1844 = vsel %vm1805, %v1842, %v1843
        %v1845 = vrot.slane %v1843, 4
        %v1846 = vrot.slane %v1341, 5
        %v1847 = vsel %vm1805, %v1845, %v1846
        %v1848 = vrot.slane %v1745, 5
        %v1849 = vrot.slane %v1848, 4
        %v1850 = vrot.slane %v1317, 5
        %v1851 = vsel %vm1805, %v1849, %v1850
        %v1852 = vrot.slane %v1850, 4
        %v1853 = vrot.slane %v1342, 5
        %v1854 = vsel %vm1805, %v1852, %v1853
        %v1855 = vrot.slane %v1746, 5
        %v1856 = vrot.slane %v1855, 4
        %v1857 = vrot.slane %v1319, 5
        %v1858 = vsel %vm1805, %v1856, %v1857
        %v1859 = vrot.slane %v1857, 4
        %v1860 = vrot.slane %v1343, 5
        %v1861 = vsel %vm1805, %v1859, %v1860
        %v1862 = vrot.slane %v1747, 5
        %v1863 = vrot.slane %v1862, 4
        %v1864 = vrot.slane %v1321, 5
        %v1865 = vsel %vm1805, %v1863, %v1864
        %v1866 = vrot.slane %v1864, 4
        %v1867 = vrot.slane %v1344, 5
        %v1868 = vsel %vm1805, %v1866, %v1867
        %v1869 = vrot.slane %v1748, 5
        %v1870 = vrot.slane %v1869, 4
        %v1871 = vrot.slane %v1323, 5
        %v1872 = vsel %vm1805, %v1870, %v1871
        %v1873 = vrot.slane %v1871, 4
        %v1874 = vrot.slane %v1345, 5
        %v1875 = vsel %vm1805, %v1873, %v1874
        %v1876 = vrot.slane %v1749, 5
        %v1877 = vrot.slane %v1876, 4
        %v1878 = vrot.slane %v1325, 5
        %v1879 = vsel %vm1805, %v1877, %v1878
        %v1880 = vrot.slane %v1878, 4
        %v1881 = vrot.slane %v1346, 5
        %v1882 = vsel %vm1805, %v1880, %v1881
        %v1883 = vrot.slane %v1750, 5
        %v1884 = vrot.slane %v1883, 4
        %v1885 = vrot.slane %v1327, 5
        %v1886 = vsel %vm1805, %v1884, %v1885
        %v1887 = vrot.slane %v1885, 4
        %v1888 = vrot.slane %v1347, 5
        %v1889 = vsel %vm1805, %v1887, %v1888
        %v1890 = vrot.slane %v1751, 5
        %v1891 = vrot.slane %v1890, 4
        %v1892 = vrot.slane %v1329, 5
        %v1893 = vsel %vm1805, %v1891, %v1892
        %v1894 = vrot.slane %v1892, 4
        %v1895 = vrot.slane %v1348, 5
        %v1896 = vsel %vm1805, %v1894, %v1895
        %v1897 = vrot.slane %v1752, 5
        %v1898 = vrot.slane %v1897, 4
        %v1899 = vrot.slane %v1331, 5
        %v1900 = vsel %vm1805, %v1898, %v1899
        %v1901 = vrot.slane %v1899, 4
        %v1902 = vrot.slane %v1349, 5
        %v1903 = vsel %vm1805, %v1901, %v1902
        %v1904 = vrot.slane %v1753, 5
        %v1905 = vrot.slane %v1904, 4
        %v1906 = vrot.slane %v1333, 5
        %v1907 = vsel %vm1805, %v1905, %v1906
        %v1908 = vrot.slane %v1906, 4
        %v1909 = vrot.slane %v1350, 5
        %v1910 = vsel %vm1805, %v1908, %v1909
        %v1911 = vrot.slane %v1754, 5
        %v1912 = vrot.slane %v1911, 4
        %v1913 = vrot.slane %v1335, 5
        %v1914 = vsel %vm1805, %v1912, %v1913
        %v1915 = vrot.slane %v1913, 4
        %v1916 = vrot.slane %v1351, 5
        %v1917 = vsel %vm1805, %v1915, %v1916
        %v1918 = vld [vmem:[#allocation2 + $0x8] sm:$0x3]
        %v1919 = vld [vmem:[#allocation2 + $0x14] sm:$0x3]
        %v1920 = vld [vmem:[#allocation2 + $0x20] sm:$0x3]
        %v1921 = vld [vmem:[#allocation2 + $0x2c] sm:$0x3]
        %v1922 = vld [vmem:[#allocation2 + $0x38] sm:$0x3]
        %v1923 = vld [vmem:[#allocation2 + $0x44] sm:$0x3]
        %v1924 = vld [vmem:[#allocation2 + $0x50] sm:$0x3]
        %v1925 = vld [vmem:[#allocation2 + $0x5c] sm:$0x3]
        %v1926 = vld [vmem:[#allocation2 + $0x68] sm:$0x3]
        %v1927 = vld [vmem:[#allocation2 + $0x74] sm:$0x3]
        %v1928 = vld [vmem:[#allocation2 + $0x80] sm:$0x3]
        %v1929 = vld [vmem:[#allocation2 + $0x8c] sm:$0x3]
        %v1930 = vld [vmem:[#allocation2 + $0x98] sm:$0x3]
        %v1931 = vld [vmem:[#allocation2 + $0xa4] sm:$0x3]
        %v1932 = vld [vmem:[#allocation2 + $0xb0] sm:$0x3]
        %v1933 = vld [vmem:[#allocation2 + $0xbc] sm:$0x3]
        %vm1934 = vsmask.f32 2304
        %vm1935 = vsmask.f32 6416
        %vm1936 = vmor %vm1934, %vm1935
        %v1938 = vshrl.u32 %v1739, 16
        %v1940 = vrot.slane %v1938, 5
        %v1941 = vshll.u32 %v1739, 16
        %v1943 = vrot.slane %v1941, 6
        %v1944 = vor.u32 %v1940, %v1943
        %v1945 = vrot.slane %v1944, 4
        %v1946 = vrot.slane %v1369, 5
        %v1947 = vrot.slane %v1365, 6
        %v1948 = vor.u32 %v1946, %v1947
        %v1949 = vsel %vm1936, %v1945, %v1948
        %v1950 = vrot.slane %v1948, 4
        %v1952 = vshrl.u32 %v1918, 16
        %v1954 = vrot.slane %v1952, 5
        %v1955 = vshll.u32 %v1918, 16
        %v1957 = vrot.slane %v1955, 6
        %v1958 = vor.u32 %v1954, %v1957
        %v1959 = vsel %vm1936, %v1950, %v1958
        %v1961 = vshrl.u32 %v1740, 16
        %v1963 = vrot.slane %v1961, 5
        %v1964 = vshll.u32 %v1740, 16
        %v1966 = vrot.slane %v1964, 6
        %v1967 = vor.u32 %v1963, %v1966
        %v1968 = vrot.slane %v1967, 4
        %v1969 = vrot.slane %v1393, 5
        %v1970 = vrot.slane %v1389, 6
        %v1971 = vor.u32 %v1969, %v1970
        %v1972 = vsel %vm1936, %v1968, %v1971
        %v1973 = vrot.slane %v1971, 4
        %v1975 = vshrl.u32 %v1919, 16
        %v1977 = vrot.slane %v1975, 5
        %v1978 = vshll.u32 %v1919, 16
        %v1980 = vrot.slane %v1978, 6
        %v1981 = vor.u32 %v1977, %v1980
        %v1982 = vsel %vm1936, %v1973, %v1981
        %v1984 = vshrl.u32 %v1741, 16
        %v1986 = vrot.slane %v1984, 5
        %v1987 = vshll.u32 %v1741, 16
        %v1989 = vrot.slane %v1987, 6
        %v1990 = vor.u32 %v1986, %v1989
        %v1991 = vrot.slane %v1990, 4
        %v1992 = vrot.slane %v1417, 5
        %v1993 = vrot.slane %v1413, 6
        %v1994 = vor.u32 %v1992, %v1993
        %v1995 = vsel %vm1936, %v1991, %v1994
        %v1996 = vrot.slane %v1994, 4
        %v1998 = vshrl.u32 %v1920, 16
        %v2000 = vrot.slane %v1998, 5
        %v2001 = vshll.u32 %v1920, 16
        %v2003 = vrot.slane %v2001, 6
        %v2004 = vor.u32 %v2000, %v2003
        %v2005 = vsel %vm1936, %v1996, %v2004
        %v2007 = vshrl.u32 %v1742, 16
        %v2009 = vrot.slane %v2007, 5
        %v2010 = vshll.u32 %v1742, 16
        %v2012 = vrot.slane %v2010, 6
        %v2013 = vor.u32 %v2009, %v2012
        %v2014 = vrot.slane %v2013, 4
        %v2015 = vrot.slane %v1441, 5
        %v2016 = vrot.slane %v1437, 6
        %v2017 = vor.u32 %v2015, %v2016
        %v2018 = vsel %vm1936, %v2014, %v2017
        %v2019 = vrot.slane %v2017, 4
        %v2021 = vshrl.u32 %v1921, 16
        %v2023 = vrot.slane %v2021, 5
        %v2024 = vshll.u32 %v1921, 16
        %v2026 = vrot.slane %v2024, 6
        %v2027 = vor.u32 %v2023, %v2026
        %v2028 = vsel %vm1936, %v2019, %v2027
        %v2030 = vshrl.u32 %v1743, 16
        %v2032 = vrot.slane %v2030, 5
        %v2033 = vshll.u32 %v1743, 16
        %v2035 = vrot.slane %v2033, 6
        %v2036 = vor.u32 %v2032, %v2035
        %v2037 = vrot.slane %v2036, 4
        %v2038 = vrot.slane %v1465, 5
        %v2039 = vrot.slane %v1461, 6
        %v2040 = vor.u32 %v2038, %v2039
        %v2041 = vsel %vm1936, %v2037, %v2040
        %v2042 = vrot.slane %v2040, 4
        %v2044 = vshrl.u32 %v1922, 16
        %v2046 = vrot.slane %v2044, 5
        %v2047 = vshll.u32 %v1922, 16
        %v2049 = vrot.slane %v2047, 6
        %v2050 = vor.u32 %v2046, %v2049
        %v2051 = vsel %vm1936, %v2042, %v2050
        %v2053 = vshrl.u32 %v1744, 16
        %v2055 = vrot.slane %v2053, 5
        %v2056 = vshll.u32 %v1744, 16
        %v2058 = vrot.slane %v2056, 6
        %v2059 = vor.u32 %v2055, %v2058
        %v2060 = vrot.slane %v2059, 4
        %v2061 = vrot.slane %v1489, 5
        %v2062 = vrot.slane %v1485, 6
        %v2063 = vor.u32 %v2061, %v2062
        %v2064 = vsel %vm1936, %v2060, %v2063
        %v2065 = vrot.slane %v2063, 4
        %v2067 = vshrl.u32 %v1923, 16
        %v2069 = vrot.slane %v2067, 5
        %v2070 = vshll.u32 %v1923, 16
        %v2072 = vrot.slane %v2070, 6
        %v2073 = vor.u32 %v2069, %v2072
        %v2074 = vsel %vm1936, %v2065, %v2073
        %v2076 = vshrl.u32 %v1745, 16
        %v2078 = vrot.slane %v2076, 5
        %v2079 = vshll.u32 %v1745, 16
        %v2081 = vrot.slane %v2079, 6
        %v2082 = vor.u32 %v2078, %v2081
        %v2083 = vrot.slane %v2082, 4
        %v2084 = vrot.slane %v1513, 5
        %v2085 = vrot.slane %v1509, 6
        %v2086 = vor.u32 %v2084, %v2085
        %v2087 = vsel %vm1936, %v2083, %v2086
        %v2088 = vrot.slane %v2086, 4
        %v2090 = vshrl.u32 %v1924, 16
        %v2092 = vrot.slane %v2090, 5
        %v2093 = vshll.u32 %v1924, 16
        %v2095 = vrot.slane %v2093, 6
        %v2096 = vor.u32 %v2092, %v2095
        %v2097 = vsel %vm1936, %v2088, %v2096
        %v2099 = vshrl.u32 %v1746, 16
        %v2101 = vrot.slane %v2099, 5
        %v2102 = vshll.u32 %v1746, 16
        %v2104 = vrot.slane %v2102, 6
        %v2105 = vor.u32 %v2101, %v2104
        %v2106 = vrot.slane %v2105, 4
        %v2107 = vrot.slane %v1537, 5
        %v2108 = vrot.slane %v1533, 6
        %v2109 = vor.u32 %v2107, %v2108
        %v2110 = vsel %vm1936, %v2106, %v2109
        %v2111 = vrot.slane %v2109, 4
        %v2113 = vshrl.u32 %v1925, 16
        %v2115 = vrot.slane %v2113, 5
        %v2116 = vshll.u32 %v1925, 16
        %v2118 = vrot.slane %v2116, 6
        %v2119 = vor.u32 %v2115, %v2118
        %v2120 = vsel %vm1936, %v2111, %v2119
        %v2122 = vshrl.u32 %v1747, 16
        %v2124 = vrot.slane %v2122, 5
        %v2125 = vshll.u32 %v1747, 16
        %v2127 = vrot.slane %v2125, 6
        %v2128 = vor.u32 %v2124, %v2127
        %v2129 = vrot.slane %v2128, 4
        %v2130 = vrot.slane %v1561, 5
        %v2131 = vrot.slane %v1557, 6
        %v2132 = vor.u32 %v2130, %v2131
        %v2133 = vsel %vm1936, %v2129, %v2132
        %v2134 = vrot.slane %v2132, 4
        %v2136 = vshrl.u32 %v1926, 16
        %v2138 = vrot.slane %v2136, 5
        %v2139 = vshll.u32 %v1926, 16
        %v2141 = vrot.slane %v2139, 6
        %v2142 = vor.u32 %v2138, %v2141
        %v2143 = vsel %vm1936, %v2134, %v2142
        %v2145 = vshrl.u32 %v1748, 16
        %v2147 = vrot.slane %v2145, 5
        %v2148 = vshll.u32 %v1748, 16
        %v2150 = vrot.slane %v2148, 6
        %v2151 = vor.u32 %v2147, %v2150
        %v2152 = vrot.slane %v2151, 4
        %v2153 = vrot.slane %v1585, 5
        %v2154 = vrot.slane %v1581, 6
        %v2155 = vor.u32 %v2153, %v2154
        %v2156 = vsel %vm1936, %v2152, %v2155
        %v2157 = vrot.slane %v2155, 4
        %v2159 = vshrl.u32 %v1927, 16
        %v2161 = vrot.slane %v2159, 5
        %v2162 = vshll.u32 %v1927, 16
        %v2164 = vrot.slane %v2162, 6
        %v2165 = vor.u32 %v2161, %v2164
        %v2166 = vsel %vm1936, %v2157, %v2165
        %v2168 = vshrl.u32 %v1749, 16
        %v2170 = vrot.slane %v2168, 5
        %v2171 = vshll.u32 %v1749, 16
        %v2173 = vrot.slane %v2171, 6
        %v2174 = vor.u32 %v2170, %v2173
        %v2175 = vrot.slane %v2174, 4
        %v2176 = vrot.slane %v1609, 5
        %v2177 = vrot.slane %v1605, 6
        %v2178 = vor.u32 %v2176, %v2177
        %v2179 = vsel %vm1936, %v2175, %v2178
        %v2180 = vrot.slane %v2178, 4
        %v2182 = vshrl.u32 %v1928, 16
        %v2184 = vrot.slane %v2182, 5
        %v2185 = vshll.u32 %v1928, 16
        %v2187 = vrot.slane %v2185, 6
        %v2188 = vor.u32 %v2184, %v2187
        %v2189 = vsel %vm1936, %v2180, %v2188
        %v2191 = vshrl.u32 %v1750, 16
        %v2193 = vrot.slane %v2191, 5
        %v2194 = vshll.u32 %v1750, 16
        %v2196 = vrot.slane %v2194, 6
        %v2197 = vor.u32 %v2193, %v2196
        %v2198 = vrot.slane %v2197, 4
        %v2199 = vrot.slane %v1633, 5
        %v2200 = vrot.slane %v1629, 6
        %v2201 = vor.u32 %v2199, %v2200
        %v2202 = vsel %vm1936, %v2198, %v2201
        %v2203 = vrot.slane %v2201, 4
        %v2205 = vshrl.u32 %v1929, 16
        %v2207 = vrot.slane %v2205, 5
        %v2208 = vshll.u32 %v1929, 16
        %v2210 = vrot.slane %v2208, 6
        %v2211 = vor.u32 %v2207, %v2210
        %v2212 = vsel %vm1936, %v2203, %v2211
        %v2214 = vshrl.u32 %v1751, 16
        %v2216 = vrot.slane %v2214, 5
        %v2217 = vshll.u32 %v1751, 16
        %v2219 = vrot.slane %v2217, 6
        %v2220 = vor.u32 %v2216, %v2219
        %v2221 = vrot.slane %v2220, 4
        %v2222 = vrot.slane %v1657, 5
        %v2223 = vrot.slane %v1653, 6
        %v2224 = vor.u32 %v2222, %v2223
        %v2225 = vsel %vm1936, %v2221, %v2224
        %v2226 = vrot.slane %v2224, 4
        %v2228 = vshrl.u32 %v1930, 16
        %v2230 = vrot.slane %v2228, 5
        %v2231 = vshll.u32 %v1930, 16
        %v2233 = vrot.slane %v2231, 6
        %v2234 = vor.u32 %v2230, %v2233
        %v2235 = vsel %vm1936, %v2226, %v2234
        %v2237 = vshrl.u32 %v1752, 16
        %v2239 = vrot.slane %v2237, 5
        %v2240 = vshll.u32 %v1752, 16
        %v2242 = vrot.slane %v2240, 6
        %v2243 = vor.u32 %v2239, %v2242
        %v2244 = vrot.slane %v2243, 4
        %v2245 = vrot.slane %v1681, 5
        %v2246 = vrot.slane %v1677, 6
        %v2247 = vor.u32 %v2245, %v2246
        %v2248 = vsel %vm1936, %v2244, %v2247
        %v2249 = vrot.slane %v2247, 4
        %v2251 = vshrl.u32 %v1931, 16
        %v2253 = vrot.slane %v2251, 5
        %v2254 = vshll.u32 %v1931, 16
        %v2256 = vrot.slane %v2254, 6
        %v2257 = vor.u32 %v2253, %v2256
        %v2258 = vsel %vm1936, %v2249, %v2257
        %v2260 = vshrl.u32 %v1753, 16
        %v2262 = vrot.slane %v2260, 5
        %v2263 = vshll.u32 %v1753, 16
        %v2265 = vrot.slane %v2263, 6
        %v2266 = vor.u32 %v2262, %v2265
        %v2267 = vrot.slane %v2266, 4
        %v2268 = vrot.slane %v1705, 5
        %v2269 = vrot.slane %v1701, 6
        %v2270 = vor.u32 %v2268, %v2269
        %v2271 = vsel %vm1936, %v2267, %v2270
        %v2272 = vrot.slane %v2270, 4
        %v2274 = vshrl.u32 %v1932, 16
        %v2276 = vrot.slane %v2274, 5
        %v2277 = vshll.u32 %v1932, 16
        %v2279 = vrot.slane %v2277, 6
        %v2280 = vor.u32 %v2276, %v2279
        %v2281 = vsel %vm1936, %v2272, %v2280
        %v2283 = vshrl.u32 %v1754, 16
        %v2285 = vrot.slane %v2283, 5
        %v2286 = vshll.u32 %v1754, 16
        %v2288 = vrot.slane %v2286, 6
        %v2289 = vor.u32 %v2285, %v2288
        %v2290 = vrot.slane %v2289, 4
        %v2291 = vrot.slane %v1729, 5
        %v2292 = vrot.slane %v1725, 6
        %v2293 = vor.u32 %v2291, %v2292
        %v2294 = vsel %vm1936, %v2290, %v2293
        %v2295 = vrot.slane %v2293, 4
        %v2297 = vshrl.u32 %v1933, 16
        %v2299 = vrot.slane %v2297, 5
        %v2300 = vshll.u32 %v1933, 16
        %v2302 = vrot.slane %v2300, 6
        %v2303 = vor.u32 %v2299, %v2302
        %v2304 = vsel %vm1936, %v2295, %v2303
        %v2321 = vunpack.c.l.b16 %v1304
        %v2322 = vunpack.c.l.b16 %v1305
        %v2323 = vunpack.c.l.b16 %v1306
        %v2324 = vunpack.c.l.b16 %v1307
        %v2325 = vunpack.c.l.b16 %v1308
        %v2326 = vunpack.c.l.b16 %v1309
        %v2327 = vunpack.c.l.b16 %v1310
        %v2328 = vunpack.c.l.b16 %v1311
        %v2329 = vunpack.c.l.b16 %v1312
        %v2330 = vunpack.c.l.b16 %v1313
        %v2331 = vunpack.c.l.b16 %v1314
        %v2332 = vunpack.c.l.b16 %v1315
        %v2333 = vunpack.c.l.b16 %v1316
        %v2334 = vunpack.c.l.b16 %v1317
        %v2335 = vunpack.c.l.b16 %v1318
        %v2336 = vunpack.c.l.b16 %v1319
        %v2337 = vunpack.c.l.b16 %v1320
        %v2338 = vunpack.c.l.b16 %v1321
        %v2339 = vunpack.c.l.b16 %v1322
        %v2340 = vunpack.c.l.b16 %v1323
        %v2341 = vunpack.c.l.b16 %v1324
        %v2342 = vunpack.c.l.b16 %v1325
        %v2343 = vunpack.c.l.b16 %v1326
        %v2344 = vunpack.c.l.b16 %v1327
        %v2345 = vunpack.c.l.b16 %v1328
        %v2346 = vunpack.c.l.b16 %v1329
        %v2347 = vunpack.c.l.b16 %v1330
        %v2348 = vunpack.c.l.b16 %v1331
        %v2349 = vunpack.c.l.b16 %v1332
        %v2350 = vunpack.c.l.b16 %v1333
        %v2351 = vunpack.c.l.b16 %v1334
        %v2352 = vunpack.c.l.b16 %v1335
        %v2353 = vpack.c.b16 %v2322, %v2321
        %v2354 = vpack.c.b16 %v2324, %v2323
        %v2355 = vpack.c.b16 %v2326, %v2325
        %v2356 = vpack.c.b16 %v2328, %v2327
        %v2357 = vpack.c.b16 %v2330, %v2329
        %v2358 = vpack.c.b16 %v2332, %v2331
        %v2359 = vpack.c.b16 %v2334, %v2333
        %v2360 = vpack.c.b16 %v2336, %v2335
        %v2361 = vpack.c.b16 %v2338, %v2337
        %v2362 = vpack.c.b16 %v2340, %v2339
        %v2363 = vpack.c.b16 %v2342, %v2341
        %v2364 = vpack.c.b16 %v2344, %v2343
        %v2365 = vpack.c.b16 %v2346, %v2345
        %v2366 = vpack.c.b16 %v2348, %v2347
        %v2367 = vpack.c.b16 %v2350, %v2349
        %v2368 = vpack.c.b16 %v2352, %v2351
        %v2369 = vunpack.c.l.b16 %v1368
        %v2370 = vunpack.c.l.b16 %v1378
        %v2371 = vunpack.c.l.b16 %v1392
        %v2372 = vunpack.c.l.b16 %v1402
        %v2373 = vunpack.c.l.b16 %v1416
        %v2374 = vunpack.c.l.b16 %v1426
        %v2375 = vunpack.c.l.b16 %v1440
        %v2376 = vunpack.c.l.b16 %v1450
        %v2377 = vunpack.c.l.b16 %v1464
        %v2378 = vunpack.c.l.b16 %v1474
        %v2379 = vunpack.c.l.b16 %v1488
        %v2380 = vunpack.c.l.b16 %v1498
        %v2381 = vunpack.c.l.b16 %v1512
        %v2382 = vunpack.c.l.b16 %v1522
        %v2383 = vunpack.c.l.b16 %v1536
        %v2384 = vunpack.c.l.b16 %v1546
        %v2385 = vunpack.c.l.b16 %v1560
        %v2386 = vunpack.c.l.b16 %v1570
        %v2387 = vunpack.c.l.b16 %v1584
        %v2388 = vunpack.c.l.b16 %v1594
        %v2389 = vunpack.c.l.b16 %v1608
        %v2390 = vunpack.c.l.b16 %v1618
        %v2391 = vunpack.c.l.b16 %v1632
        %v2392 = vunpack.c.l.b16 %v1642
        %v2393 = vunpack.c.l.b16 %v1656
        %v2394 = vunpack.c.l.b16 %v1666
        %v2395 = vunpack.c.l.b16 %v1680
        %v2396 = vunpack.c.l.b16 %v1690
        %v2397 = vunpack.c.l.b16 %v1704
        %v2398 = vunpack.c.l.b16 %v1714
        %v2399 = vunpack.c.l.b16 %v1728
        %v2400 = vunpack.c.l.b16 %v1738
        %v2401 = vpack.c.b16 %v2370, %v2369
        %v2402 = vpack.c.b16 %v2372, %v2371
        %v2403 = vpack.c.b16 %v2374, %v2373
        %v2404 = vpack.c.b16 %v2376, %v2375
        %v2405 = vpack.c.b16 %v2378, %v2377
        %v2406 = vpack.c.b16 %v2380, %v2379
        %v2407 = vpack.c.b16 %v2382, %v2381
        %v2408 = vpack.c.b16 %v2384, %v2383
        %v2409 = vpack.c.b16 %v2386, %v2385
        %v2410 = vpack.c.b16 %v2388, %v2387
        %v2411 = vpack.c.b16 %v2390, %v2389
        %v2412 = vpack.c.b16 %v2392, %v2391
        %v2413 = vpack.c.b16 %v2394, %v2393
        %v2414 = vpack.c.b16 %v2396, %v2395
        %v2415 = vpack.c.b16 %v2398, %v2397
        %v2416 = vpack.c.b16 %v2400, %v2399
        %2417 = vrot.lane.b32.xlu0 %v2401, 64
        %v2418 = vpop.permute.xlu0 %2417
        %2419 = vrot.lane.b32.xlu0 %v2402, 64
        %v2420 = vpop.permute.xlu0 %2419
        %2421 = vrot.lane.b32.xlu0 %v2403, 64
        %v2422 = vpop.permute.xlu0 %2421
        %2423 = vrot.lane.b32.xlu0 %v2404, 64
        %v2424 = vpop.permute.xlu0 %2423
        %2425 = vrot.lane.b32.xlu0 %v2405, 64
        %v2426 = vpop.permute.xlu0 %2425
        %2427 = vrot.lane.b32.xlu0 %v2406, 64
        %v2428 = vpop.permute.xlu0 %2427
        %2429 = vrot.lane.b32.xlu0 %v2407, 64
        %v2430 = vpop.permute.xlu0 %2429
        %2431 = vrot.lane.b32.xlu0 %v2408, 64
        %v2432 = vpop.permute.xlu0 %2431
        %2433 = vrot.lane.b32.xlu0 %v2409, 64
        %v2434 = vpop.permute.xlu0 %2433
        %2435 = vrot.lane.b32.xlu0 %v2410, 64
        %v2436 = vpop.permute.xlu0 %2435
        %2437 = vrot.lane.b32.xlu0 %v2411, 64
        %v2438 = vpop.permute.xlu0 %2437
        %2439 = vrot.lane.b32.xlu0 %v2412, 64
        %v2440 = vpop.permute.xlu0 %2439
        %2441 = vrot.lane.b32.xlu0 %v2413, 64
        %v2442 = vpop.permute.xlu0 %2441
        %2443 = vrot.lane.b32.xlu0 %v2414, 64
        %v2444 = vpop.permute.xlu0 %2443
        %2445 = vrot.lane.b32.xlu0 %v2415, 64
        %v2446 = vpop.permute.xlu0 %2445
        %2447 = vrot.lane.b32.xlu0 %v2416, 64
        %v2448 = vpop.permute.xlu0 %2447
        %v2449 = vunpack.c.l.b16 %v1809
        %v2450 = vunpack.c.l.b16 %v1812
        %v2451 = vunpack.c.l.b16 %v1816
        %v2452 = vunpack.c.l.b16 %v1819
        %v2453 = vunpack.c.l.b16 %v1823
        %v2454 = vunpack.c.l.b16 %v1826
        %v2455 = vunpack.c.l.b16 %v1830
        %v2456 = vunpack.c.l.b16 %v1833
        %v2457 = vunpack.c.l.b16 %v1837
        %v2458 = vunpack.c.l.b16 %v1840
        %v2459 = vunpack.c.l.b16 %v1844
        %v2460 = vunpack.c.l.b16 %v1847
        %v2461 = vunpack.c.l.b16 %v1851
        %v2462 = vunpack.c.l.b16 %v1854
        %v2463 = vunpack.c.l.b16 %v1858
        %v2464 = vunpack.c.l.b16 %v1861
        %v2465 = vunpack.c.l.b16 %v1865
        %v2466 = vunpack.c.l.b16 %v1868
        %v2467 = vunpack.c.l.b16 %v1872
        %v2468 = vunpack.c.l.b16 %v1875
        %v2469 = vunpack.c.l.b16 %v1879
        %v2470 = vunpack.c.l.b16 %v1882
        %v2471 = vunpack.c.l.b16 %v1886
        %v2472 = vunpack.c.l.b16 %v1889
        %v2473 = vunpack.c.l.b16 %v1893
        %v2474 = vunpack.c.l.b16 %v1896
        %v2475 = vunpack.c.l.b16 %v1900
        %v2476 = vunpack.c.l.b16 %v1903
        %v2477 = vunpack.c.l.b16 %v1907
        %v2478 = vunpack.c.l.b16 %v1910
        %v2479 = vunpack.c.l.b16 %v1914
        %v2480 = vunpack.c.l.b16 %v1917
        %v2481 = vpack.c.b16 %v2450, %v2449
        %v2482 = vpack.c.b16 %v2452, %v2451
        %v2483 = vpack.c.b16 %v2454, %v2453
        %v2484 = vpack.c.b16 %v2456, %v2455
        %v2485 = vpack.c.b16 %v2458, %v2457
        %v2486 = vpack.c.b16 %v2460, %v2459
        %v2487 = vpack.c.b16 %v2462, %v2461
        %v2488 = vpack.c.b16 %v2464, %v2463
        %v2489 = vpack.c.b16 %v2466, %v2465
        %v2490 = vpack.c.b16 %v2468, %v2467
        %v2491 = vpack.c.b16 %v2470, %v2469
        %v2492 = vpack.c.b16 %v2472, %v2471
        %v2493 = vpack.c.b16 %v2474, %v2473
        %v2494 = vpack.c.b16 %v2476, %v2475
        %v2495 = vpack.c.b16 %v2478, %v2477
        %v2496 = vpack.c.b16 %v2480, %v2479
        %v2497 = vunpack.c.l.b16 %v1949
        %v2498 = vunpack.c.l.b16 %v1959
        %v2499 = vunpack.c.l.b16 %v1972
        %v2500 = vunpack.c.l.b16 %v1982
        %v2501 = vunpack.c.l.b16 %v1995
        %v2502 = vunpack.c.l.b16 %v2005
        %v2503 = vunpack.c.l.b16 %v2018
        %v2504 = vunpack.c.l.b16 %v2028
        %v2505 = vunpack.c.l.b16 %v2041
        %v2506 = vunpack.c.l.b16 %v2051
        %v2507 = vunpack.c.l.b16 %v2064
        %v2508 = vunpack.c.l.b16 %v2074
        %v2509 = vunpack.c.l.b16 %v2087
        %v2510 = vunpack.c.l.b16 %v2097
        %v2511 = vunpack.c.l.b16 %v2110
        %v2512 = vunpack.c.l.b16 %v2120
        %v2513 = vunpack.c.l.b16 %v2133
        %v2514 = vunpack.c.l.b16 %v2143
        %v2515 = vunpack.c.l.b16 %v2156
        %v2516 = vunpack.c.l.b16 %v2166
        %v2517 = vunpack.c.l.b16 %v2179
        %v2518 = vunpack.c.l.b16 %v2189
        %v2519 = vunpack.c.l.b16 %v2202
        %v2520 = vunpack.c.l.b16 %v2212
        %v2521 = vunpack.c.l.b16 %v2225
        %v2522 = vunpack.c.l.b16 %v2235
        %v2523 = vunpack.c.l.b16 %v2248
        %v2524 = vunpack.c.l.b16 %v2258
        %v2525 = vunpack.c.l.b16 %v2271
        %v2526 = vunpack.c.l.b16 %v2281
        %v2527 = vunpack.c.l.b16 %v2294
        %v2528 = vunpack.c.l.b16 %v2304
        %v2529 = vpack.c.b16 %v2498, %v2497
        %v2530 = vpack.c.b16 %v2500, %v2499
        %v2531 = vpack.c.b16 %v2502, %v2501
        %v2532 = vpack.c.b16 %v2504, %v2503
        %v2533 = vpack.c.b16 %v2506, %v2505
        %v2534 = vpack.c.b16 %v2508, %v2507
        %v2535 = vpack.c.b16 %v2510, %v2509
        %v2536 = vpack.c.b16 %v2512, %v2511
        %v2537 = vpack.c.b16 %v2514, %v2513
        %v2538 = vpack.c.b16 %v2516, %v2515
        %v2539 = vpack.c.b16 %v2518, %v2517
        %v2540 = vpack.c.b16 %v2520, %v2519
        %v2541 = vpack.c.b16 %v2522, %v2521
        %v2542 = vpack.c.b16 %v2524, %v2523
        %v2543 = vpack.c.b16 %v2526, %v2525
        %v2544 = vpack.c.b16 %v2528, %v2527
        %2545 = vrot.lane.b32.xlu0 %v2529, 64
        %v2546 = vpop.permute.xlu0 %2545
        %2547 = vrot.lane.b32.xlu0 %v2530, 64
        %v2548 = vpop.permute.xlu0 %2547
        %2549 = vrot.lane.b32.xlu0 %v2531, 64
        %v2550 = vpop.permute.xlu0 %2549
        %2551 = vrot.lane.b32.xlu0 %v2532, 64
        %v2552 = vpop.permute.xlu0 %2551
        %2553 = vrot.lane.b32.xlu0 %v2533, 64
        %v2554 = vpop.permute.xlu0 %2553
        %2555 = vrot.lane.b32.xlu0 %v2534, 64
        %v2556 = vpop.permute.xlu0 %2555
        %2557 = vrot.lane.b32.xlu0 %v2535, 64
        %v2558 = vpop.permute.xlu0 %2557
        %2559 = vrot.lane.b32.xlu0 %v2536, 64
        %v2560 = vpop.permute.xlu0 %2559
        %2561 = vrot.lane.b32.xlu0 %v2537, 64
        %v2562 = vpop.permute.xlu0 %2561
        %2563 = vrot.lane.b32.xlu0 %v2538, 64
        %v2564 = vpop.permute.xlu0 %2563
        %2565 = vrot.lane.b32.xlu0 %v2539, 64
        %v2566 = vpop.permute.xlu0 %2565
        %2567 = vrot.lane.b32.xlu0 %v2540, 64
        %v2568 = vpop.permute.xlu0 %2567
        %2569 = vrot.lane.b32.xlu0 %v2541, 64
        %v2570 = vpop.permute.xlu0 %2569
        %2571 = vrot.lane.b32.xlu0 %v2542, 64
        %v2572 = vpop.permute.xlu0 %2571
        %2573 = vrot.lane.b32.xlu0 %v2543, 64
        %v2574 = vpop.permute.xlu0 %2573
        %2575 = vrot.lane.b32.xlu0 %v2544, 64
        %v2576 = vpop.permute.xlu0 %2575
        %vm2577 = vcmask 523264
        %v2580 = vsel %vm2577, %v2353, %v2418
        %v2584 = vsel %vm2577, %v2354, %v2420
        %v2588 = vsel %vm2577, %v2355, %v2422
        %v2592 = vsel %vm2577, %v2356, %v2424
        %v2596 = vsel %vm2577, %v2357, %v2426
        %v2600 = vsel %vm2577, %v2358, %v2428
        %v2604 = vsel %vm2577, %v2359, %v2430
        %v2608 = vsel %vm2577, %v2360, %v2432
        %v2612 = vsel %vm2577, %v2361, %v2434
        %v2616 = vsel %vm2577, %v2362, %v2436
        %v2620 = vsel %vm2577, %v2363, %v2438
        %v2624 = vsel %vm2577, %v2364, %v2440
        %v2628 = vsel %vm2577, %v2365, %v2442
        %v2632 = vsel %vm2577, %v2366, %v2444
        %v2636 = vsel %vm2577, %v2367, %v2446
        %v2640 = vsel %vm2577, %v2368, %v2448
        %v2644 = vsel %vm2577, %v2481, %v2546
        %v2648 = vsel %vm2577, %v2482, %v2548
        %v2652 = vsel %vm2577, %v2483, %v2550
        %v2656 = vsel %vm2577, %v2484, %v2552
        %v2660 = vsel %vm2577, %v2485, %v2554
        %v2664 = vsel %vm2577, %v2486, %v2556
        %v2668 = vsel %vm2577, %v2487, %v2558
        %v2672 = vsel %vm2577, %v2488, %v2560
        %v2676 = vsel %vm2577, %v2489, %v2562
        %v2680 = vsel %vm2577, %v2490, %v2564
        %v2684 = vsel %vm2577, %v2491, %v2566
        %v2688 = vsel %vm2577, %v2492, %v2568
        %v2692 = vsel %vm2577, %v2493, %v2570
        %v2696 = vsel %vm2577, %v2494, %v2572
        %v2700 = vsel %vm2577, %v2495, %v2574
        %v2704 = vsel %vm2577, %v2496, %v2576
        %v2706 = vld [vmem:[%s4] sm:$0xf]
        %v2707 = vld [vmem:[%s4 + $0x4] sm:$0xf]
        %v2708 = vld [vmem:[%s4 + $0x8] sm:$0xf]
        %v2709 = vld [vmem:[%s4 + $0xc] sm:$0xf]
        %v2710 = vld [vmem:[%s4 + $0x10] sm:$0xf]
        %v2711 = vld [vmem:[%s4 + $0x14] sm:$0xf]
        %v2712 = vld [vmem:[%s4 + $0x18] sm:$0xf]
        %v2713 = vld [vmem:[%s4 + $0x1c] sm:$0xf]
        %v2714 = vld [vmem:[%s4 + $0x20] sm:$0xf]
        %v2715 = vld [vmem:[%s4 + $0x24] sm:$0xf]
        %v2716 = vld [vmem:[%s4 + $0x28] sm:$0xf]
        %v2717 = vld [vmem:[%s4 + $0x2c] sm:$0xf]
        %v2718 = vld [vmem:[%s4 + $0x30] sm:$0xf]
        %v2719 = vld [vmem:[%s4 + $0x34] sm:$0xf]
        %v2720 = vld [vmem:[%s4 + $0x38] sm:$0xf]
        %v2721 = vld [vmem:[%s4 + $0x3c] sm:$0xf]
        %v2722 = vld [vmem:[%s4 + $0x40] sm:$0xf]
        %v2723 = vld [vmem:[%s4 + $0x44] sm:$0xf]
        %v2724 = vld [vmem:[%s4 + $0x48] sm:$0xf]
        %v2725 = vld [vmem:[%s4 + $0x4c] sm:$0xf]
        %v2726 = vld [vmem:[%s4 + $0x50] sm:$0xf]
        %v2727 = vld [vmem:[%s4 + $0x54] sm:$0xf]
        %v2728 = vld [vmem:[%s4 + $0x58] sm:$0xf]
        %v2729 = vld [vmem:[%s4 + $0x5c] sm:$0xf]
        %v2730 = vld [vmem:[%s4 + $0x60] sm:$0xf]
        %v2731 = vld [vmem:[%s4 + $0x64] sm:$0xf]
        %v2732 = vld [vmem:[%s4 + $0x68] sm:$0xf]
        %v2733 = vld [vmem:[%s4 + $0x6c] sm:$0xf]
        %v2734 = vld [vmem:[%s4 + $0x70] sm:$0xf]
        %v2735 = vld [vmem:[%s4 + $0x74] sm:$0xf]
        %v2736 = vld [vmem:[%s4 + $0x78] sm:$0xf]
        %v2737 = vld [vmem:[%s4 + $0x7c] sm:$0xf]
        %v2738 = vld [vmem:[#allocation2] sm:$0xc]
        %v2739 = vld [vmem:[#allocation2 + $0xc] sm:$0xc]
        %v2740 = vld [vmem:[#allocation2 + $0x18] sm:$0xc]
        %v2741 = vld [vmem:[#allocation2 + $0x24] sm:$0xc]
        %v2742 = vld [vmem:[#allocation2 + $0x30] sm:$0xc]
        %v2743 = vld [vmem:[#allocation2 + $0x3c] sm:$0xc]
        %v2744 = vld [vmem:[#allocation2 + $0x48] sm:$0xc]
        %v2745 = vld [vmem:[#allocation2 + $0x54] sm:$0xc]
        %v2746 = vld [vmem:[#allocation2 + $0x60] sm:$0xc]
        %v2747 = vld [vmem:[#allocation2 + $0x6c] sm:$0xc]
        %v2748 = vld [vmem:[#allocation2 + $0x78] sm:$0xc]
        %v2749 = vld [vmem:[#allocation2 + $0x84] sm:$0xc]
        %v2750 = vld [vmem:[#allocation2 + $0x90] sm:$0xc]
        %v2751 = vld [vmem:[#allocation2 + $0x9c] sm:$0xc]
        %v2752 = vld [vmem:[#allocation2 + $0xa8] sm:$0xc]
        %v2753 = vld [vmem:[#allocation2 + $0xb4] sm:$0xc]
        %vm2786 = vcmask 1041408
        %vm2787 = vcmask 1045508
        %vm2788 = vmor %vm2786, %vm2787
        %v2789 = vrot.slane %v2738, 6
        %v2790 = vrot.slane %v2789, 4
        %v2791 = vrot.slane %v1305, 6
        %v2792 = vsel %vm2788, %v2790, %v2791
        %v2793 = vrot.slane %v2791, 4
        %v2794 = vrot.slane %v1918, 6
        %v2795 = vsel %vm2788, %v2793, %v2794
        %v2796 = vrot.slane %v2739, 6
        %v2797 = vrot.slane %v2796, 4
        %v2798 = vrot.slane %v1307, 6
        %v2799 = vsel %vm2788, %v2797, %v2798
        %v2800 = vrot.slane %v2798, 4
        %v2801 = vrot.slane %v1919, 6
        %v2802 = vsel %vm2788, %v2800, %v2801
        %v2803 = vrot.slane %v2740, 6
        %v2804 = vrot.slane %v2803, 4
        %v2805 = vrot.slane %v1309, 6
        %v2806 = vsel %vm2788, %v2804, %v2805
        %v2807 = vrot.slane %v2805, 4
        %v2808 = vrot.slane %v1920, 6
        %v2809 = vsel %vm2788, %v2807, %v2808
        %v2810 = vrot.slane %v2741, 6
        %v2811 = vrot.slane %v2810, 4
        %v2812 = vrot.slane %v1311, 6
        %v2813 = vsel %vm2788, %v2811, %v2812
        %v2814 = vrot.slane %v2812, 4
        %v2815 = vrot.slane %v1921, 6
        %v2816 = vsel %vm2788, %v2814, %v2815
        %v2817 = vrot.slane %v2742, 6
        %v2818 = vrot.slane %v2817, 4
        %v2819 = vrot.slane %v1313, 6
        %v2820 = vsel %vm2788, %v2818, %v2819
        %v2821 = vrot.slane %v2819, 4
        %v2822 = vrot.slane %v1922, 6
        %v2823 = vsel %vm2788, %v2821, %v2822
        %v2824 = vrot.slane %v2743, 6
        %v2825 = vrot.slane %v2824, 4
        %v2826 = vrot.slane %v1315, 6
        %v2827 = vsel %vm2788, %v2825, %v2826
        %v2828 = vrot.slane %v2826, 4
        %v2829 = vrot.slane %v1923, 6
        %v2830 = vsel %vm2788, %v2828, %v2829
        %v2831 = vrot.slane %v2744, 6
        %v2832 = vrot.slane %v2831, 4
        %v2833 = vrot.slane %v1317, 6
        %v2834 = vsel %vm2788, %v2832, %v2833
        %v2835 = vrot.slane %v2833, 4
        %v2836 = vrot.slane %v1924, 6
        %v2837 = vsel %vm2788, %v2835, %v2836
        %v2838 = vrot.slane %v2745, 6
        %v2839 = vrot.slane %v2838, 4
        %v2840 = vrot.slane %v1319, 6
        %v2841 = vsel %vm2788, %v2839, %v2840
        %v2842 = vrot.slane %v2840, 4
        %v2843 = vrot.slane %v1925, 6
        %v2844 = vsel %vm2788, %v2842, %v2843
        %v2845 = vrot.slane %v2746, 6
        %v2846 = vrot.slane %v2845, 4
        %v2847 = vrot.slane %v1321, 6
        %v2848 = vsel %vm2788, %v2846, %v2847
        %v2849 = vrot.slane %v2847, 4
        %v2850 = vrot.slane %v1926, 6
        %v2851 = vsel %vm2788, %v2849, %v2850
        %v2852 = vrot.slane %v2747, 6
        %v2853 = vrot.slane %v2852, 4
        %v2854 = vrot.slane %v1323, 6
        %v2855 = vsel %vm2788, %v2853, %v2854
        %v2856 = vrot.slane %v2854, 4
        %v2857 = vrot.slane %v1927, 6
        %v2858 = vsel %vm2788, %v2856, %v2857
        %v2859 = vrot.slane %v2748, 6
        %v2860 = vrot.slane %v2859, 4
        %v2861 = vrot.slane %v1325, 6
        %v2862 = vsel %vm2788, %v2860, %v2861
        %v2863 = vrot.slane %v2861, 4
        %v2864 = vrot.slane %v1928, 6
        %v2865 = vsel %vm2788, %v2863, %v2864
        %v2866 = vrot.slane %v2749, 6
        %v2867 = vrot.slane %v2866, 4
        %v2868 = vrot.slane %v1327, 6
        %v2869 = vsel %vm2788, %v2867, %v2868
        %v2870 = vrot.slane %v2868, 4
        %v2871 = vrot.slane %v1929, 6
        %v2872 = vsel %vm2788, %v2870, %v2871
        %v2873 = vrot.slane %v2750, 6
        %v2874 = vrot.slane %v2873, 4
        %v2875 = vrot.slane %v1329, 6
        %v2876 = vsel %vm2788, %v2874, %v2875
        %v2877 = vrot.slane %v2875, 4
        %v2878 = vrot.slane %v1930, 6
        %v2879 = vsel %vm2788, %v2877, %v2878
        %v2880 = vrot.slane %v2751, 6
        %v2881 = vrot.slane %v2880, 4
        %v2882 = vrot.slane %v1331, 6
        %v2883 = vsel %vm2788, %v2881, %v2882
        %v2884 = vrot.slane %v2882, 4
        %v2885 = vrot.slane %v1931, 6
        %v2886 = vsel %vm2788, %v2884, %v2885
        %v2887 = vrot.slane %v2752, 6
        %v2888 = vrot.slane %v2887, 4
        %v2889 = vrot.slane %v1333, 6
        %v2890 = vsel %vm2788, %v2888, %v2889
        %v2891 = vrot.slane %v2889, 4
        %v2892 = vrot.slane %v1932, 6
        %v2893 = vsel %vm2788, %v2891, %v2892
        %v2894 = vrot.slane %v2753, 6
        %v2895 = vrot.slane %v2894, 4
        %v2896 = vrot.slane %v1335, 6
        %v2897 = vsel %vm2788, %v2895, %v2896
        %v2898 = vrot.slane %v2896, 4
        %v2899 = vrot.slane %v1933, 6
        %v2900 = vsel %vm2788, %v2898, %v2899
        %s2901 = scalar_lea.vmem [#allocation2], 12
        %v2902 = vld [vmem:[%s2901] sm:$0xf]
        %v2903 = vld [vmem:[%s2901 + $0x4] sm:$0xf]
        %v2904 = vld [vmem:[%s2901 + $0xc] sm:$0xf]
        %v2905 = vld [vmem:[%s2901 + $0x10] sm:$0xf]
        %v2906 = vld [vmem:[%s2901 + $0x18] sm:$0xf]
        %v2907 = vld [vmem:[%s2901 + $0x1c] sm:$0xf]
        %v2908 = vld [vmem:[%s2901 + $0x24] sm:$0xf]
        %v2909 = vld [vmem:[%s2901 + $0x28] sm:$0xf]
        %v2910 = vld [vmem:[%s2901 + $0x30] sm:$0xf]
        %v2911 = vld [vmem:[%s2901 + $0x34] sm:$0xf]
        %v2912 = vld [vmem:[%s2901 + $0x3c] sm:$0xf]
        %v2913 = vld [vmem:[%s2901 + $0x40] sm:$0xf]
        %v2914 = vld [vmem:[%s2901 + $0x48] sm:$0xf]
        %v2915 = vld [vmem:[%s2901 + $0x4c] sm:$0xf]
        %v2916 = vld [vmem:[%s2901 + $0x54] sm:$0xf]
        %v2917 = vld [vmem:[%s2901 + $0x58] sm:$0xf]
        %v2918 = vld [vmem:[%s2901 + $0x60] sm:$0xf]
        %v2919 = vld [vmem:[%s2901 + $0x64] sm:$0xf]
        %v2920 = vld [vmem:[%s2901 + $0x6c] sm:$0xf]
        %v2921 = vld [vmem:[%s2901 + $0x70] sm:$0xf]
        %v2922 = vld [vmem:[%s2901 + $0x78] sm:$0xf]
        %v2923 = vld [vmem:[%s2901 + $0x7c] sm:$0xf]
        %v2924 = vld [vmem:[%s2901 + $0x84] sm:$0xf]
        %v2925 = vld [vmem:[%s2901 + $0x88] sm:$0xf]
        %v2926 = vld [vmem:[%s2901 + $0x90] sm:$0xf]
        %v2927 = vld [vmem:[%s2901 + $0x94] sm:$0xf]
        %v2928 = vld [vmem:[%s2901 + $0x9c] sm:$0xf]
        %v2929 = vld [vmem:[%s2901 + $0xa0] sm:$0xf]
        %v2930 = vld [vmem:[%s2901 + $0xa8] sm:$0xf]
        %v2931 = vld [vmem:[%s2901 + $0xac] sm:$0xf]
        %v2932 = vld [vmem:[%s2901 + $0xb4] sm:$0xf]
        %v2933 = vld [vmem:[%s2901 + $0xb8] sm:$0xf]
        %v2934 = vld [vmem:[%s2901 + $0x8] sm:$0x1]
        %v2935 = vld [vmem:[%s2901 + $0x14] sm:$0x1]
        %v2936 = vld [vmem:[%s2901 + $0x20] sm:$0x1]
        %v2937 = vld [vmem:[%s2901 + $0x2c] sm:$0x1]
        %v2938 = vld [vmem:[%s2901 + $0x38] sm:$0x1]
        %v2939 = vld [vmem:[%s2901 + $0x44] sm:$0x1]
        %v2940 = vld [vmem:[%s2901 + $0x50] sm:$0x1]
        %v2941 = vld [vmem:[%s2901 + $0x5c] sm:$0x1]
        %v2942 = vld [vmem:[%s2901 + $0x68] sm:$0x1]
        %v2943 = vld [vmem:[%s2901 + $0x74] sm:$0x1]
        %v2944 = vld [vmem:[%s2901 + $0x80] sm:$0x1]
        %v2945 = vld [vmem:[%s2901 + $0x8c] sm:$0x1]
        %v2946 = vld [vmem:[%s2901 + $0x98] sm:$0x1]
        %v2947 = vld [vmem:[%s2901 + $0xa4] sm:$0x1]
        %v2948 = vld [vmem:[%s2901 + $0xb0] sm:$0x1]
        %v2949 = vld [vmem:[%s2901 + $0xbc] sm:$0x1]
        %v2951 = vshrl.u32 %v2902, 16
        %v2953 = vrot.slane %v2951, 4
        %v2954 = vshll.u32 %v2902, 16
        %v2956 = vrot.slane %v2954, 5
        %v2957 = vor.u32 %v2953, %v2956
        %v2958 = vrot.slane %v2957, 4
        %v2960 = vshll.u32 %v2903, 16
        %v2962 = vrot.slane %v2960, 5
        %v2963 = vsel %vm1354, %v2958, %v2962
        %v2964 = vshrl.u32 %v2903, 16
        %v2966 = vrot.slane %v2964, 4
        %v2967 = vor.u32 %v2966, %v2962
        %v2968 = vrot.slane %v2967, 4
        %v2970 = vshll.u32 %v2934, 16
        %v2972 = vrot.slane %v2970, 5
        %v2973 = vsel %vm1354, %v2968, %v2972
        %v2975 = vshrl.u32 %v2904, 16
        %v2977 = vrot.slane %v2975, 4
        %v2978 = vshll.u32 %v2904, 16
        %v2980 = vrot.slane %v2978, 5
        %v2981 = vor.u32 %v2977, %v2980
        %v2982 = vrot.slane %v2981, 4
        %v2984 = vshll.u32 %v2905, 16
        %v2986 = vrot.slane %v2984, 5
        %v2987 = vsel %vm1354, %v2982, %v2986
        %v2988 = vshrl.u32 %v2905, 16
        %v2990 = vrot.slane %v2988, 4
        %v2991 = vor.u32 %v2990, %v2986
        %v2992 = vrot.slane %v2991, 4
        %v2994 = vshll.u32 %v2935, 16
        %v2996 = vrot.slane %v2994, 5
        %v2997 = vsel %vm1354, %v2992, %v2996
        %v2999 = vshrl.u32 %v2906, 16
        %v3001 = vrot.slane %v2999, 4
        %v3002 = vshll.u32 %v2906, 16
        %v3004 = vrot.slane %v3002, 5
        %v3005 = vor.u32 %v3001, %v3004
        %v3006 = vrot.slane %v3005, 4
        %v3008 = vshll.u32 %v2907, 16
        %v3010 = vrot.slane %v3008, 5
        %v3011 = vsel %vm1354, %v3006, %v3010
        %v3012 = vshrl.u32 %v2907, 16
        %v3014 = vrot.slane %v3012, 4
        %v3015 = vor.u32 %v3014, %v3010
        %v3016 = vrot.slane %v3015, 4
        %v3018 = vshll.u32 %v2936, 16
        %v3020 = vrot.slane %v3018, 5
        %v3021 = vsel %vm1354, %v3016, %v3020
        %v3023 = vshrl.u32 %v2908, 16
        %v3025 = vrot.slane %v3023, 4
        %v3026 = vshll.u32 %v2908, 16
        %v3028 = vrot.slane %v3026, 5
        %v3029 = vor.u32 %v3025, %v3028
        %v3030 = vrot.slane %v3029, 4
        %v3032 = vshll.u32 %v2909, 16
        %v3034 = vrot.slane %v3032, 5
        %v3035 = vsel %vm1354, %v3030, %v3034
        %v3036 = vshrl.u32 %v2909, 16
        %v3038 = vrot.slane %v3036, 4
        %v3039 = vor.u32 %v3038, %v3034
        %v3040 = vrot.slane %v3039, 4
        %v3042 = vshll.u32 %v2937, 16
        %v3044 = vrot.slane %v3042, 5
        %v3045 = vsel %vm1354, %v3040, %v3044
        %v3047 = vshrl.u32 %v2910, 16
        %v3049 = vrot.slane %v3047, 4
        %v3050 = vshll.u32 %v2910, 16
        %v3052 = vrot.slane %v3050, 5
        %v3053 = vor.u32 %v3049, %v3052
        %v3054 = vrot.slane %v3053, 4
        %v3056 = vshll.u32 %v2911, 16
        %v3058 = vrot.slane %v3056, 5
        %v3059 = vsel %vm1354, %v3054, %v3058
        %v3060 = vshrl.u32 %v2911, 16
        %v3062 = vrot.slane %v3060, 4
        %v3063 = vor.u32 %v3062, %v3058
        %v3064 = vrot.slane %v3063, 4
        %v3066 = vshll.u32 %v2938, 16
        %v3068 = vrot.slane %v3066, 5
        %v3069 = vsel %vm1354, %v3064, %v3068
        %v3071 = vshrl.u32 %v2912, 16
        %v3073 = vrot.slane %v3071, 4
        %v3074 = vshll.u32 %v2912, 16
        %v3076 = vrot.slane %v3074, 5
        %v3077 = vor.u32 %v3073, %v3076
        %v3078 = vrot.slane %v3077, 4
        %v3080 = vshll.u32 %v2913, 16
        %v3082 = vrot.slane %v3080, 5
        %v3083 = vsel %vm1354, %v3078, %v3082
        %v3084 = vshrl.u32 %v2913, 16
        %v3086 = vrot.slane %v3084, 4
        %v3087 = vor.u32 %v3086, %v3082
        %v3088 = vrot.slane %v3087, 4
        %v3090 = vshll.u32 %v2939, 16
        %v3092 = vrot.slane %v3090, 5
        %v3093 = vsel %vm1354, %v3088, %v3092
        %v3095 = vshrl.u32 %v2914, 16
        %v3097 = vrot.slane %v3095, 4
        %v3098 = vshll.u32 %v2914, 16
        %v3100 = vrot.slane %v3098, 5
        %v3101 = vor.u32 %v3097, %v3100
        %v3102 = vrot.slane %v3101, 4
        %v3104 = vshll.u32 %v2915, 16
        %v3106 = vrot.slane %v3104, 5
        %v3107 = vsel %vm1354, %v3102, %v3106
        %v3108 = vshrl.u32 %v2915, 16
        %v3110 = vrot.slane %v3108, 4
        %v3111 = vor.u32 %v3110, %v3106
        %v3112 = vrot.slane %v3111, 4
        %v3114 = vshll.u32 %v2940, 16
        %v3116 = vrot.slane %v3114, 5
        %v3117 = vsel %vm1354, %v3112, %v3116
        %v3119 = vshrl.u32 %v2916, 16
        %v3121 = vrot.slane %v3119, 4
        %v3122 = vshll.u32 %v2916, 16
        %v3124 = vrot.slane %v3122, 5
        %v3125 = vor.u32 %v3121, %v3124
        %v3126 = vrot.slane %v3125, 4
        %v3128 = vshll.u32 %v2917, 16
        %v3130 = vrot.slane %v3128, 5
        %v3131 = vsel %vm1354, %v3126, %v3130
        %v3132 = vshrl.u32 %v2917, 16
        %v3134 = vrot.slane %v3132, 4
        %v3135 = vor.u32 %v3134, %v3130
        %v3136 = vrot.slane %v3135, 4
        %v3138 = vshll.u32 %v2941, 16
        %v3140 = vrot.slane %v3138, 5
        %v3141 = vsel %vm1354, %v3136, %v3140
        %v3143 = vshrl.u32 %v2918, 16
        %v3145 = vrot.slane %v3143, 4
        %v3146 = vshll.u32 %v2918, 16
        %v3148 = vrot.slane %v3146, 5
        %v3149 = vor.u32 %v3145, %v3148
        %v3150 = vrot.slane %v3149, 4
        %v3152 = vshll.u32 %v2919, 16
        %v3154 = vrot.slane %v3152, 5
        %v3155 = vsel %vm1354, %v3150, %v3154
        %v3156 = vshrl.u32 %v2919, 16
        %v3158 = vrot.slane %v3156, 4
        %v3159 = vor.u32 %v3158, %v3154
        %v3160 = vrot.slane %v3159, 4
        %v3162 = vshll.u32 %v2942, 16
        %v3164 = vrot.slane %v3162, 5
        %v3165 = vsel %vm1354, %v3160, %v3164
        %v3167 = vshrl.u32 %v2920, 16
        %v3169 = vrot.slane %v3167, 4
        %v3170 = vshll.u32 %v2920, 16
        %v3172 = vrot.slane %v3170, 5
        %v3173 = vor.u32 %v3169, %v3172
        %v3174 = vrot.slane %v3173, 4
        %v3176 = vshll.u32 %v2921, 16
        %v3178 = vrot.slane %v3176, 5
        %v3179 = vsel %vm1354, %v3174, %v3178
        %v3180 = vshrl.u32 %v2921, 16
        %v3182 = vrot.slane %v3180, 4
        %v3183 = vor.u32 %v3182, %v3178
        %v3184 = vrot.slane %v3183, 4
        %v3186 = vshll.u32 %v2943, 16
        %v3188 = vrot.slane %v3186, 5
        %v3189 = vsel %vm1354, %v3184, %v3188
        %v3191 = vshrl.u32 %v2922, 16
        %v3193 = vrot.slane %v3191, 4
        %v3194 = vshll.u32 %v2922, 16
        %v3196 = vrot.slane %v3194, 5
        %v3197 = vor.u32 %v3193, %v3196
        %v3198 = vrot.slane %v3197, 4
        %v3200 = vshll.u32 %v2923, 16
        %v3202 = vrot.slane %v3200, 5
        %v3203 = vsel %vm1354, %v3198, %v3202
        %v3204 = vshrl.u32 %v2923, 16
        %v3206 = vrot.slane %v3204, 4
        %v3207 = vor.u32 %v3206, %v3202
        %v3208 = vrot.slane %v3207, 4
        %v3210 = vshll.u32 %v2944, 16
        %v3212 = vrot.slane %v3210, 5
        %v3213 = vsel %vm1354, %v3208, %v3212
        %v3215 = vshrl.u32 %v2924, 16
        %v3217 = vrot.slane %v3215, 4
        %v3218 = vshll.u32 %v2924, 16
        %v3220 = vrot.slane %v3218, 5
        %v3221 = vor.u32 %v3217, %v3220
        %v3222 = vrot.slane %v3221, 4
        %v3224 = vshll.u32 %v2925, 16
        %v3226 = vrot.slane %v3224, 5
        %v3227 = vsel %vm1354, %v3222, %v3226
        %v3228 = vshrl.u32 %v2925, 16
        %v3230 = vrot.slane %v3228, 4
        %v3231 = vor.u32 %v3230, %v3226
        %v3232 = vrot.slane %v3231, 4
        %v3234 = vshll.u32 %v2945, 16
        %v3236 = vrot.slane %v3234, 5
        %v3237 = vsel %vm1354, %v3232, %v3236
        %v3239 = vshrl.u32 %v2926, 16
        %v3241 = vrot.slane %v3239, 4
        %v3242 = vshll.u32 %v2926, 16
        %v3244 = vrot.slane %v3242, 5
        %v3245 = vor.u32 %v3241, %v3244
        %v3246 = vrot.slane %v3245, 4
        %v3248 = vshll.u32 %v2927, 16
        %v3250 = vrot.slane %v3248, 5
        %v3251 = vsel %vm1354, %v3246, %v3250
        %v3252 = vshrl.u32 %v2927, 16
        %v3254 = vrot.slane %v3252, 4
        %v3255 = vor.u32 %v3254, %v3250
        %v3256 = vrot.slane %v3255, 4
        %v3258 = vshll.u32 %v2946, 16
        %v3260 = vrot.slane %v3258, 5
        %v3261 = vsel %vm1354, %v3256, %v3260
        %v3263 = vshrl.u32 %v2928, 16
        %v3265 = vrot.slane %v3263, 4
        %v3266 = vshll.u32 %v2928, 16
        %v3268 = vrot.slane %v3266, 5
        %v3269 = vor.u32 %v3265, %v3268
        %v3270 = vrot.slane %v3269, 4
        %v3272 = vshll.u32 %v2929, 16
        %v3274 = vrot.slane %v3272, 5
        %v3275 = vsel %vm1354, %v3270, %v3274
        %v3276 = vshrl.u32 %v2929, 16
        %v3278 = vrot.slane %v3276, 4
        %v3279 = vor.u32 %v3278, %v3274
        %v3280 = vrot.slane %v3279, 4
        %v3282 = vshll.u32 %v2947, 16
        %v3284 = vrot.slane %v3282, 5
        %v3285 = vsel %vm1354, %v3280, %v3284
        %v3287 = vshrl.u32 %v2930, 16
        %v3289 = vrot.slane %v3287, 4
        %v3290 = vshll.u32 %v2930, 16
        %v3292 = vrot.slane %v3290, 5
        %v3293 = vor.u32 %v3289, %v3292
        %v3294 = vrot.slane %v3293, 4
        %v3296 = vshll.u32 %v2931, 16
        %v3298 = vrot.slane %v3296, 5
        %v3299 = vsel %vm1354, %v3294, %v3298
        %v3300 = vshrl.u32 %v2931, 16
        %v3302 = vrot.slane %v3300, 4
        %v3303 = vor.u32 %v3302, %v3298
        %v3304 = vrot.slane %v3303, 4
        %v3306 = vshll.u32 %v2948, 16
        %v3308 = vrot.slane %v3306, 5
        %v3309 = vsel %vm1354, %v3304, %v3308
        %v3311 = vshrl.u32 %v2932, 16
        %v3313 = vrot.slane %v3311, 4
        %v3314 = vshll.u32 %v2932, 16
        %v3316 = vrot.slane %v3314, 5
        %v3317 = vor.u32 %v3313, %v3316
        %v3318 = vrot.slane %v3317, 4
        %v3320 = vshll.u32 %v2933, 16
        %v3322 = vrot.slane %v3320, 5
        %v3323 = vsel %vm1354, %v3318, %v3322
        %v3324 = vshrl.u32 %v2933, 16
        %v3326 = vrot.slane %v3324, 4
        %v3327 = vor.u32 %v3326, %v3322
        %v3328 = vrot.slane %v3327, 4
        %v3330 = vshll.u32 %v2949, 16
        %v3332 = vrot.slane %v3330, 5
        %v3333 = vsel %vm1354, %v3328, %v3332
        %v3334 = vld [vmem:[%s2901] sm:$0xe]
        %v3335 = vld [vmem:[%s2901 + $0xc] sm:$0xe]
        %v3336 = vld [vmem:[%s2901 + $0x18] sm:$0xe]
        %v3337 = vld [vmem:[%s2901 + $0x24] sm:$0xe]
        %v3338 = vld [vmem:[%s2901 + $0x30] sm:$0xe]
        %v3339 = vld [vmem:[%s2901 + $0x3c] sm:$0xe]
        %v3340 = vld [vmem:[%s2901 + $0x48] sm:$0xe]
        %v3341 = vld [vmem:[%s2901 + $0x54] sm:$0xe]
        %v3342 = vld [vmem:[%s2901 + $0x60] sm:$0xe]
        %v3343 = vld [vmem:[%s2901 + $0x6c] sm:$0xe]
        %v3344 = vld [vmem:[%s2901 + $0x78] sm:$0xe]
        %v3345 = vld [vmem:[%s2901 + $0x84] sm:$0xe]
        %v3346 = vld [vmem:[%s2901 + $0x90] sm:$0xe]
        %v3347 = vld [vmem:[%s2901 + $0x9c] sm:$0xe]
        %v3348 = vld [vmem:[%s2901 + $0xa8] sm:$0xe]
        %v3349 = vld [vmem:[%s2901 + $0xb4] sm:$0xe]
        %v3398 = vrot.slane %v3334, 5
        %v3399 = vrot.slane %v3398, 4
        %v3400 = vrot.slane %v2903, 5
        %v3401 = vsel %vm1805, %v3399, %v3400
        %v3402 = vrot.slane %v3400, 4
        %v3403 = vrot.slane %v2934, 5
        %v3404 = vsel %vm1805, %v3402, %v3403
        %v3405 = vrot.slane %v3335, 5
        %v3406 = vrot.slane %v3405, 4
        %v3407 = vrot.slane %v2905, 5
        %v3408 = vsel %vm1805, %v3406, %v3407
        %v3409 = vrot.slane %v3407, 4
        %v3410 = vrot.slane %v2935, 5
        %v3411 = vsel %vm1805, %v3409, %v3410
        %v3412 = vrot.slane %v3336, 5
        %v3413 = vrot.slane %v3412, 4
        %v3414 = vrot.slane %v2907, 5
        %v3415 = vsel %vm1805, %v3413, %v3414
        %v3416 = vrot.slane %v3414, 4
        %v3417 = vrot.slane %v2936, 5
        %v3418 = vsel %vm1805, %v3416, %v3417
        %v3419 = vrot.slane %v3337, 5
        %v3420 = vrot.slane %v3419, 4
        %v3421 = vrot.slane %v2909, 5
        %v3422 = vsel %vm1805, %v3420, %v3421
        %v3423 = vrot.slane %v3421, 4
        %v3424 = vrot.slane %v2937, 5
        %v3425 = vsel %vm1805, %v3423, %v3424
        %v3426 = vrot.slane %v3338, 5
        %v3427 = vrot.slane %v3426, 4
        %v3428 = vrot.slane %v2911, 5
        %v3429 = vsel %vm1805, %v3427, %v3428
        %v3430 = vrot.slane %v3428, 4
        %v3431 = vrot.slane %v2938, 5
        %v3432 = vsel %vm1805, %v3430, %v3431
        %v3433 = vrot.slane %v3339, 5
        %v3434 = vrot.slane %v3433, 4
        %v3435 = vrot.slane %v2913, 5
        %v3436 = vsel %vm1805, %v3434, %v3435
        %v3437 = vrot.slane %v3435, 4
        %v3438 = vrot.slane %v2939, 5
        %v3439 = vsel %vm1805, %v3437, %v3438
        %v3440 = vrot.slane %v3340, 5
        %v3441 = vrot.slane %v3440, 4
        %v3442 = vrot.slane %v2915, 5
        %v3443 = vsel %vm1805, %v3441, %v3442
        %v3444 = vrot.slane %v3442, 4
        %v3445 = vrot.slane %v2940, 5
        %v3446 = vsel %vm1805, %v3444, %v3445
        %v3447 = vrot.slane %v3341, 5
        %v3448 = vrot.slane %v3447, 4
        %v3449 = vrot.slane %v2917, 5
        %v3450 = vsel %vm1805, %v3448, %v3449
        %v3451 = vrot.slane %v3449, 4
        %v3452 = vrot.slane %v2941, 5
        %v3453 = vsel %vm1805, %v3451, %v3452
        %v3454 = vrot.slane %v3342, 5
        %v3455 = vrot.slane %v3454, 4
        %v3456 = vrot.slane %v2919, 5
        %v3457 = vsel %vm1805, %v3455, %v3456
        %v3458 = vrot.slane %v3456, 4
        %v3459 = vrot.slane %v2942, 5
        %v3460 = vsel %vm1805, %v3458, %v3459
        %v3461 = vrot.slane %v3343, 5
        %v3462 = vrot.slane %v3461, 4
        %v3463 = vrot.slane %v2921, 5
        %v3464 = vsel %vm1805, %v3462, %v3463
        %v3465 = vrot.slane %v3463, 4
        %v3466 = vrot.slane %v2943, 5
        %v3467 = vsel %vm1805, %v3465, %v3466
        %v3468 = vrot.slane %v3344, 5
        %v3469 = vrot.slane %v3468, 4
        %v3470 = vrot.slane %v2923, 5
        %v3471 = vsel %vm1805, %v3469, %v3470
        %v3472 = vrot.slane %v3470, 4
        %v3473 = vrot.slane %v2944, 5
        %v3474 = vsel %vm1805, %v3472, %v3473
        %v3475 = vrot.slane %v3345, 5
        %v3476 = vrot.slane %v3475, 4
        %v3477 = vrot.slane %v2925, 5
        %v3478 = vsel %vm1805, %v3476, %v3477
        %v3479 = vrot.slane %v3477, 4
        %v3480 = vrot.slane %v2945, 5
        %v3481 = vsel %vm1805, %v3479, %v3480
        %v3482 = vrot.slane %v3346, 5
        %v3483 = vrot.slane %v3482, 4
        %v3484 = vrot.slane %v2927, 5
        %v3485 = vsel %vm1805, %v3483, %v3484
        %v3486 = vrot.slane %v3484, 4
        %v3487 = vrot.slane %v2946, 5
        %v3488 = vsel %vm1805, %v3486, %v3487
        %v3489 = vrot.slane %v3347, 5
        %v3490 = vrot.slane %v3489, 4
        %v3491 = vrot.slane %v2929, 5
        %v3492 = vsel %vm1805, %v3490, %v3491
        %v3493 = vrot.slane %v3491, 4
        %v3494 = vrot.slane %v2947, 5
        %v3495 = vsel %vm1805, %v3493, %v3494
        %v3496 = vrot.slane %v3348, 5
        %v3497 = vrot.slane %v3496, 4
        %v3498 = vrot.slane %v2931, 5
        %v3499 = vsel %vm1805, %v3497, %v3498
        %v3500 = vrot.slane %v3498, 4
        %v3501 = vrot.slane %v2948, 5
        %v3502 = vsel %vm1805, %v3500, %v3501
        %v3503 = vrot.slane %v3349, 5
        %v3504 = vrot.slane %v3503, 4
        %v3505 = vrot.slane %v2933, 5
        %v3506 = vsel %vm1805, %v3504, %v3505
        %v3507 = vrot.slane %v3505, 4
        %v3508 = vrot.slane %v2949, 5
        %v3509 = vsel %vm1805, %v3507, %v3508
        %v3510 = vunpack.c.l.b16 %v2792
        %v3511 = vunpack.c.l.b16 %v2795
        %v3512 = vunpack.c.l.b16 %v2799
        %v3513 = vunpack.c.l.b16 %v2802
        %v3514 = vunpack.c.l.b16 %v2806
        %v3515 = vunpack.c.l.b16 %v2809
        %v3516 = vunpack.c.l.b16 %v2813
        %v3517 = vunpack.c.l.b16 %v2816
        %v3518 = vunpack.c.l.b16 %v2820
        %v3519 = vunpack.c.l.b16 %v2823
        %v3520 = vunpack.c.l.b16 %v2827
        %v3521 = vunpack.c.l.b16 %v2830
        %v3522 = vunpack.c.l.b16 %v2834
        %v3523 = vunpack.c.l.b16 %v2837
        %v3524 = vunpack.c.l.b16 %v2841
        %v3525 = vunpack.c.l.b16 %v2844
        %v3526 = vunpack.c.l.b16 %v2848
        %v3527 = vunpack.c.l.b16 %v2851
        %v3528 = vunpack.c.l.b16 %v2855
        %v3529 = vunpack.c.l.b16 %v2858
        %v3530 = vunpack.c.l.b16 %v2862
        %v3531 = vunpack.c.l.b16 %v2865
        %v3532 = vunpack.c.l.b16 %v2869
        %v3533 = vunpack.c.l.b16 %v2872
        %v3534 = vunpack.c.l.b16 %v2876
        %v3535 = vunpack.c.l.b16 %v2879
        %v3536 = vunpack.c.l.b16 %v2883
        %v3537 = vunpack.c.l.b16 %v2886
        %v3538 = vunpack.c.l.b16 %v2890
        %v3539 = vunpack.c.l.b16 %v2893
        %v3540 = vunpack.c.l.b16 %v2897
        %v3541 = vunpack.c.l.b16 %v2900
        %v3542 = vpack.c.b16 %v3511, %v3510
        %v3543 = vpack.c.b16 %v3513, %v3512
        %v3544 = vpack.c.b16 %v3515, %v3514
        %v3545 = vpack.c.b16 %v3517, %v3516
        %v3546 = vpack.c.b16 %v3519, %v3518
        %v3547 = vpack.c.b16 %v3521, %v3520
        %v3548 = vpack.c.b16 %v3523, %v3522
        %v3549 = vpack.c.b16 %v3525, %v3524
        %v3550 = vpack.c.b16 %v3527, %v3526
        %v3551 = vpack.c.b16 %v3529, %v3528
        %v3552 = vpack.c.b16 %v3531, %v3530
        %v3553 = vpack.c.b16 %v3533, %v3532
        %v3554 = vpack.c.b16 %v3535, %v3534
        %v3555 = vpack.c.b16 %v3537, %v3536
        %v3556 = vpack.c.b16 %v3539, %v3538
        %v3557 = vpack.c.b16 %v3541, %v3540
        %v3574 = vunpack.c.l.b16 %v2902
        %v3575 = vunpack.c.l.b16 %v2903
        %v3576 = vunpack.c.l.b16 %v2904
        %v3577 = vunpack.c.l.b16 %v2905
        %v3578 = vunpack.c.l.b16 %v2906
        %v3579 = vunpack.c.l.b16 %v2907
        %v3580 = vunpack.c.l.b16 %v2908
        %v3581 = vunpack.c.l.b16 %v2909
        %v3582 = vunpack.c.l.b16 %v2910
        %v3583 = vunpack.c.l.b16 %v2911
        %v3584 = vunpack.c.l.b16 %v2912
        %v3585 = vunpack.c.l.b16 %v2913
        %v3586 = vunpack.c.l.b16 %v2914
        %v3587 = vunpack.c.l.b16 %v2915
        %v3588 = vunpack.c.l.b16 %v2916
        %v3589 = vunpack.c.l.b16 %v2917
        %v3590 = vunpack.c.l.b16 %v2918
        %v3591 = vunpack.c.l.b16 %v2919
        %v3592 = vunpack.c.l.b16 %v2920
        %v3593 = vunpack.c.l.b16 %v2921
        %v3594 = vunpack.c.l.b16 %v2922
        %v3595 = vunpack.c.l.b16 %v2923
        %v3596 = vunpack.c.l.b16 %v2924
        %v3597 = vunpack.c.l.b16 %v2925
        %v3598 = vunpack.c.l.b16 %v2926
        %v3599 = vunpack.c.l.b16 %v2927
        %v3600 = vunpack.c.l.b16 %v2928
        %v3601 = vunpack.c.l.b16 %v2929
        %v3602 = vunpack.c.l.b16 %v2930
        %v3603 = vunpack.c.l.b16 %v2931
        %v3604 = vunpack.c.l.b16 %v2932
        %v3605 = vunpack.c.l.b16 %v2933
        %v3606 = vpack.c.b16 %v3575, %v3574
        %v3607 = vpack.c.b16 %v3577, %v3576
        %v3608 = vpack.c.b16 %v3579, %v3578
        %v3609 = vpack.c.b16 %v3581, %v3580
        %v3610 = vpack.c.b16 %v3583, %v3582
        %v3611 = vpack.c.b16 %v3585, %v3584
        %v3612 = vpack.c.b16 %v3587, %v3586
        %v3613 = vpack.c.b16 %v3589, %v3588
        %v3614 = vpack.c.b16 %v3591, %v3590
        %v3615 = vpack.c.b16 %v3593, %v3592
        %v3616 = vpack.c.b16 %v3595, %v3594
        %v3617 = vpack.c.b16 %v3597, %v3596
        %v3618 = vpack.c.b16 %v3599, %v3598
        %v3619 = vpack.c.b16 %v3601, %v3600
        %v3620 = vpack.c.b16 %v3603, %v3602
        %v3621 = vpack.c.b16 %v3605, %v3604
        %3622 = vrot.lane.b32.xlu0 %v3606, 64
        %v3623 = vpop.permute.xlu0 %3622
        %3624 = vrot.lane.b32.xlu0 %v3607, 64
        %v3625 = vpop.permute.xlu0 %3624
        %3626 = vrot.lane.b32.xlu0 %v3608, 64
        %v3627 = vpop.permute.xlu0 %3626
        %3628 = vrot.lane.b32.xlu0 %v3609, 64
        %v3629 = vpop.permute.xlu0 %3628
        %3630 = vrot.lane.b32.xlu0 %v3610, 64
        %v3631 = vpop.permute.xlu0 %3630
        %3632 = vrot.lane.b32.xlu0 %v3611, 64
        %v3633 = vpop.permute.xlu0 %3632
        %3634 = vrot.lane.b32.xlu0 %v3612, 64
        %v3635 = vpop.permute.xlu0 %3634
        %3636 = vrot.lane.b32.xlu0 %v3613, 64
        %v3637 = vpop.permute.xlu0 %3636
        %3638 = vrot.lane.b32.xlu0 %v3614, 64
        %v3639 = vpop.permute.xlu0 %3638
        %3640 = vrot.lane.b32.xlu0 %v3615, 64
        %v3641 = vpop.permute.xlu0 %3640
        %3642 = vrot.lane.b32.xlu0 %v3616, 64
        %v3643 = vpop.permute.xlu0 %3642
        %3644 = vrot.lane.b32.xlu0 %v3617, 64
        %v3645 = vpop.permute.xlu0 %3644
        %3646 = vrot.lane.b32.xlu0 %v3618, 64
        %v3647 = vpop.permute.xlu0 %3646
        %3648 = vrot.lane.b32.xlu0 %v3619, 64
        %v3649 = vpop.permute.xlu0 %3648
        %3650 = vrot.lane.b32.xlu0 %v3620, 64
        %v3651 = vpop.permute.xlu0 %3650
        %3652 = vrot.lane.b32.xlu0 %v3621, 64
        %v3653 = vpop.permute.xlu0 %3652
        %v3654 = vunpack.c.l.b16 %v2963
        %v3655 = vunpack.c.l.b16 %v2973
        %v3656 = vunpack.c.l.b16 %v2987
        %v3657 = vunpack.c.l.b16 %v2997
        %v3658 = vunpack.c.l.b16 %v3011
        %v3659 = vunpack.c.l.b16 %v3021
        %v3660 = vunpack.c.l.b16 %v3035
        %v3661 = vunpack.c.l.b16 %v3045
        %v3662 = vunpack.c.l.b16 %v3059
        %v3663 = vunpack.c.l.b16 %v3069
        %v3664 = vunpack.c.l.b16 %v3083
        %v3665 = vunpack.c.l.b16 %v3093
        %v3666 = vunpack.c.l.b16 %v3107
        %v3667 = vunpack.c.l.b16 %v3117
        %v3668 = vunpack.c.l.b16 %v3131
        %v3669 = vunpack.c.l.b16 %v3141
        %v3670 = vunpack.c.l.b16 %v3155
        %v3671 = vunpack.c.l.b16 %v3165
        %v3672 = vunpack.c.l.b16 %v3179
        %v3673 = vunpack.c.l.b16 %v3189
        %v3674 = vunpack.c.l.b16 %v3203
        %v3675 = vunpack.c.l.b16 %v3213
        %v3676 = vunpack.c.l.b16 %v3227
        %v3677 = vunpack.c.l.b16 %v3237
        %v3678 = vunpack.c.l.b16 %v3251
        %v3679 = vunpack.c.l.b16 %v3261
        %v3680 = vunpack.c.l.b16 %v3275
        %v3681 = vunpack.c.l.b16 %v3285
        %v3682 = vunpack.c.l.b16 %v3299
        %v3683 = vunpack.c.l.b16 %v3309
        %v3684 = vunpack.c.l.b16 %v3323
        %v3685 = vunpack.c.l.b16 %v3333
        %v3686 = vpack.c.b16 %v3655, %v3654
        %v3687 = vpack.c.b16 %v3657, %v3656
        %v3688 = vpack.c.b16 %v3659, %v3658
        %v3689 = vpack.c.b16 %v3661, %v3660
        %v3690 = vpack.c.b16 %v3663, %v3662
        %v3691 = vpack.c.b16 %v3665, %v3664
        %v3692 = vpack.c.b16 %v3667, %v3666
        %v3693 = vpack.c.b16 %v3669, %v3668
        %v3694 = vpack.c.b16 %v3671, %v3670
        %v3695 = vpack.c.b16 %v3673, %v3672
        %v3696 = vpack.c.b16 %v3675, %v3674
        %v3697 = vpack.c.b16 %v3677, %v3676
        %v3698 = vpack.c.b16 %v3679, %v3678
        %v3699 = vpack.c.b16 %v3681, %v3680
        %v3700 = vpack.c.b16 %v3683, %v3682
        %v3701 = vpack.c.b16 %v3685, %v3684
        %v3702 = vunpack.c.l.b16 %v3401
        %v3703 = vunpack.c.l.b16 %v3404
        %v3704 = vunpack.c.l.b16 %v3408
        %v3705 = vunpack.c.l.b16 %v3411
        %v3706 = vunpack.c.l.b16 %v3415
        %v3707 = vunpack.c.l.b16 %v3418
        %v3708 = vunpack.c.l.b16 %v3422
        %v3709 = vunpack.c.l.b16 %v3425
        %v3710 = vunpack.c.l.b16 %v3429
        %v3711 = vunpack.c.l.b16 %v3432
        %v3712 = vunpack.c.l.b16 %v3436
        %v3713 = vunpack.c.l.b16 %v3439
        %v3714 = vunpack.c.l.b16 %v3443
        %v3715 = vunpack.c.l.b16 %v3446
        %v3716 = vunpack.c.l.b16 %v3450
        %v3717 = vunpack.c.l.b16 %v3453
        %v3718 = vunpack.c.l.b16 %v3457
        %v3719 = vunpack.c.l.b16 %v3460
        %v3720 = vunpack.c.l.b16 %v3464
        %v3721 = vunpack.c.l.b16 %v3467
        %v3722 = vunpack.c.l.b16 %v3471
        %v3723 = vunpack.c.l.b16 %v3474
        %v3724 = vunpack.c.l.b16 %v3478
        %v3725 = vunpack.c.l.b16 %v3481
        %v3726 = vunpack.c.l.b16 %v3485
        %v3727 = vunpack.c.l.b16 %v3488
        %v3728 = vunpack.c.l.b16 %v3492
        %v3729 = vunpack.c.l.b16 %v3495
        %v3730 = vunpack.c.l.b16 %v3499
        %v3731 = vunpack.c.l.b16 %v3502
        %v3732 = vunpack.c.l.b16 %v3506
        %v3733 = vunpack.c.l.b16 %v3509
        %v3734 = vpack.c.b16 %v3703, %v3702
        %v3735 = vpack.c.b16 %v3705, %v3704
        %v3736 = vpack.c.b16 %v3707, %v3706
        %v3737 = vpack.c.b16 %v3709, %v3708
        %v3738 = vpack.c.b16 %v3711, %v3710
        %v3739 = vpack.c.b16 %v3713, %v3712
        %v3740 = vpack.c.b16 %v3715, %v3714
        %v3741 = vpack.c.b16 %v3717, %v3716
        %v3742 = vpack.c.b16 %v3719, %v3718
        %v3743 = vpack.c.b16 %v3721, %v3720
        %v3744 = vpack.c.b16 %v3723, %v3722
        %v3745 = vpack.c.b16 %v3725, %v3724
        %v3746 = vpack.c.b16 %v3727, %v3726
        %v3747 = vpack.c.b16 %v3729, %v3728
        %v3748 = vpack.c.b16 %v3731, %v3730
        %v3749 = vpack.c.b16 %v3733, %v3732
        %3750 = vrot.lane.b32.xlu0 %v3734, 64
        %v3751 = vpop.permute.xlu0 %3750
        %3752 = vrot.lane.b32.xlu0 %v3735, 64
        %v3753 = vpop.permute.xlu0 %3752
        %3754 = vrot.lane.b32.xlu0 %v3736, 64
        %v3755 = vpop.permute.xlu0 %3754
        %3756 = vrot.lane.b32.xlu0 %v3737, 64
        %v3757 = vpop.permute.xlu0 %3756
        %3758 = vrot.lane.b32.xlu0 %v3738, 64
        %v3759 = vpop.permute.xlu0 %3758
        %3760 = vrot.lane.b32.xlu0 %v3739, 64
        %v3761 = vpop.permute.xlu0 %3760
        %3762 = vrot.lane.b32.xlu0 %v3740, 64
        %v3763 = vpop.permute.xlu0 %3762
        %3764 = vrot.lane.b32.xlu0 %v3741, 64
        %v3765 = vpop.permute.xlu0 %3764
        %3766 = vrot.lane.b32.xlu0 %v3742, 64
        %v3767 = vpop.permute.xlu0 %3766
        %3768 = vrot.lane.b32.xlu0 %v3743, 64
        %v3769 = vpop.permute.xlu0 %3768
        %3770 = vrot.lane.b32.xlu0 %v3744, 64
        %v3771 = vpop.permute.xlu0 %3770
        %3772 = vrot.lane.b32.xlu0 %v3745, 64
        %v3773 = vpop.permute.xlu0 %3772
        %3774 = vrot.lane.b32.xlu0 %v3746, 64
        %v3775 = vpop.permute.xlu0 %3774
        %3776 = vrot.lane.b32.xlu0 %v3747, 64
        %v3777 = vpop.permute.xlu0 %3776
        %3778 = vrot.lane.b32.xlu0 %v3748, 64
        %v3779 = vpop.permute.xlu0 %3778
        %3780 = vrot.lane.b32.xlu0 %v3749, 64
        %v3781 = vpop.permute.xlu0 %3780
        %v3784 = vsel %vm2577, %v3542, %v3623
        %v3788 = vsel %vm2577, %v3543, %v3625
        %v3792 = vsel %vm2577, %v3544, %v3627
        %v3796 = vsel %vm2577, %v3545, %v3629
        %v3800 = vsel %vm2577, %v3546, %v3631
        %v3804 = vsel %vm2577, %v3547, %v3633
        %v3808 = vsel %vm2577, %v3548, %v3635
        %v3812 = vsel %vm2577, %v3549, %v3637
        %v3816 = vsel %vm2577, %v3550, %v3639
        %v3820 = vsel %vm2577, %v3551, %v3641
        %v3824 = vsel %vm2577, %v3552, %v3643
        %v3828 = vsel %vm2577, %v3553, %v3645
        %v3832 = vsel %vm2577, %v3554, %v3647
        %v3836 = vsel %vm2577, %v3555, %v3649
        %v3840 = vsel %vm2577, %v3556, %v3651
        %v3844 = vsel %vm2577, %v3557, %v3653
        %v3848 = vsel %vm2577, %v3686, %v3751
        %v3852 = vsel %vm2577, %v3687, %v3753
        %v3856 = vsel %vm2577, %v3688, %v3755
        %v3860 = vsel %vm2577, %v3689, %v3757
        %v3864 = vsel %vm2577, %v3690, %v3759
        %v3868 = vsel %vm2577, %v3691, %v3761
        %v3872 = vsel %vm2577, %v3692, %v3763
        %v3876 = vsel %vm2577, %v3693, %v3765
        %v3880 = vsel %vm2577, %v3694, %v3767
        %v3884 = vsel %vm2577, %v3695, %v3769
        %v3888 = vsel %vm2577, %v3696, %v3771
        %v3892 = vsel %vm2577, %v3697, %v3773
        %v3896 = vsel %vm2577, %v3698, %v3775
        %v3900 = vsel %vm2577, %v3699, %v3777
        %v3904 = vsel %vm2577, %v3700, %v3779
        %v3908 = vsel %vm2577, %v3701, %v3781
        %v3910 = vld [vmem:[%s4 + $0x80] sm:$0xf]
        %v3911 = vld [vmem:[%s4 + $0x84] sm:$0xf]
        %v3912 = vld [vmem:[%s4 + $0x88] sm:$0xf]
        %v3913 = vld [vmem:[%s4 + $0x8c] sm:$0xf]
        %v3914 = vld [vmem:[%s4 + $0x90] sm:$0xf]
        %v3915 = vld [vmem:[%s4 + $0x94] sm:$0xf]
        %v3916 = vld [vmem:[%s4 + $0x98] sm:$0xf]
        %v3917 = vld [vmem:[%s4 + $0x9c] sm:$0xf]
        %v3918 = vld [vmem:[%s4 + $0xa0] sm:$0xf]
        %v3919 = vld [vmem:[%s4 + $0xa4] sm:$0xf]
        %v3920 = vld [vmem:[%s4 + $0xa8] sm:$0xf]
        %v3921 = vld [vmem:[%s4 + $0xac] sm:$0xf]
        %v3922 = vld [vmem:[%s4 + $0xb0] sm:$0xf]
        %v3923 = vld [vmem:[%s4 + $0xb4] sm:$0xf]
        %v3924 = vld [vmem:[%s4 + $0xb8] sm:$0xf]
        %v3925 = vld [vmem:[%s4 + $0xbc] sm:$0xf]
        %v3926 = vld [vmem:[%s4 + $0xc0] sm:$0xf]
        %v3927 = vld [vmem:[%s4 + $0xc4] sm:$0xf]
        %v3928 = vld [vmem:[%s4 + $0xc8] sm:$0xf]
        %v3929 = vld [vmem:[%s4 + $0xcc] sm:$0xf]
        %v3930 = vld [vmem:[%s4 + $0xd0] sm:$0xf]
        %v3931 = vld [vmem:[%s4 + $0xd4] sm:$0xf]
        %v3932 = vld [vmem:[%s4 + $0xd8] sm:$0xf]
        %v3933 = vld [vmem:[%s4 + $0xdc] sm:$0xf]
        %v3934 = vld [vmem:[%s4 + $0xe0] sm:$0xf]
        %v3935 = vld [vmem:[%s4 + $0xe4] sm:$0xf]
        %v3936 = vld [vmem:[%s4 + $0xe8] sm:$0xf]
        %v3937 = vld [vmem:[%s4 + $0xec] sm:$0xf]
        %v3938 = vld [vmem:[%s4 + $0xf0] sm:$0xf]
        %v3939 = vld [vmem:[%s4 + $0xf4] sm:$0xf]
        %v3940 = vld [vmem:[%s4 + $0xf8] sm:$0xf]
        %v3941 = vld [vmem:[%s4 + $0xfc] sm:$0xf]
        %v3974 = vunpack.c.l.b16 %v3910
        %v3975 = vunpack.c.l.b16 %v3911
        %v3976 = vunpack.c.l.b16 %v3912
        %v3977 = vunpack.c.l.b16 %v3913
        %v3978 = vunpack.c.l.b16 %v3914
        %v3979 = vunpack.c.l.b16 %v3915
        %v3980 = vunpack.c.l.b16 %v3916
        %v3981 = vunpack.c.l.b16 %v3917
        %v3982 = vunpack.c.l.b16 %v3918
        %v3983 = vunpack.c.l.b16 %v3919
        %v3984 = vunpack.c.l.b16 %v3920
        %v3985 = vunpack.c.l.b16 %v3921
        %v3986 = vunpack.c.l.b16 %v3922
        %v3987 = vunpack.c.l.b16 %v3923
        %v3988 = vunpack.c.l.b16 %v3924
        %v3989 = vunpack.c.l.b16 %v3925
        %v3990 = vunpack.c.l.b16 %v3926
        %v3991 = vunpack.c.l.b16 %v3927
        %v3992 = vunpack.c.l.b16 %v3928
        %v3993 = vunpack.c.l.b16 %v3929
        %v3994 = vunpack.c.l.b16 %v3930
        %v3995 = vunpack.c.l.b16 %v3931
        %v3996 = vunpack.c.l.b16 %v3932
        %v3997 = vunpack.c.l.b16 %v3933
        %v3998 = vunpack.c.l.b16 %v3934
        %v3999 = vunpack.c.l.b16 %v3935
        %v4000 = vunpack.c.l.b16 %v3936
        %v4001 = vunpack.c.l.b16 %v3937
        %v4002 = vunpack.c.l.b16 %v3938
        %v4003 = vunpack.c.l.b16 %v3939
        %v4004 = vunpack.c.l.b16 %v3940
        %v4005 = vunpack.c.l.b16 %v3941
        %v4006 = vpack.c.b16 %v3975, %v3974
        %v4007 = vpack.c.b16 %v3977, %v3976
        %v4008 = vpack.c.b16 %v3979, %v3978
        %v4009 = vpack.c.b16 %v3981, %v3980
        %v4010 = vpack.c.b16 %v3983, %v3982
        %v4011 = vpack.c.b16 %v3985, %v3984
        %v4012 = vpack.c.b16 %v3987, %v3986
        %v4013 = vpack.c.b16 %v3989, %v3988
        %v4014 = vpack.c.b16 %v3991, %v3990
        %v4015 = vpack.c.b16 %v3993, %v3992
        %v4016 = vpack.c.b16 %v3995, %v3994
        %v4017 = vpack.c.b16 %v3997, %v3996
        %v4018 = vpack.c.b16 %v3999, %v3998
        %v4019 = vpack.c.b16 %v4001, %v4000
        %v4020 = vpack.c.b16 %v4003, %v4002
        %v4021 = vpack.c.b16 %v4005, %v4004
        %4038 = vmatprep.subr.bf16.mxu0 0
        %4039 = vmatpush1.bf16.msra.mxu0 %v4006
        %4040 = vmatprep.subr.bf16.mxu0 0
        %4041 = vmatpush1.bf16.msra.mxu0 %v4007
        %4042 = vmatprep.subr.bf16.mxu0 0
        %4043 = vmatpush1.bf16.msra.mxu0 %v4008
        %4044 = vmatprep.subr.bf16.mxu0 0
        %4045 = vmatpush1.bf16.msra.mxu0 %v4009
        %4046 = vmatprep.subr.bf16.mxu0 0
        %4047 = vmatpush1.bf16.msra.mxu0 %v4010
        %4048 = vmatprep.subr.bf16.mxu0 0
        %4049 = vmatpush1.bf16.msra.mxu0 %v4011
        %4050 = vmatprep.subr.bf16.mxu0 0
        %4051 = vmatpush1.bf16.msra.mxu0 %v4012
        %4052 = vmatprep.subr.bf16.mxu0 0
        %4053 = vmatpush1.bf16.msra.mxu0 %v4013
        %4054 = vmatprep.subr.bf16.mxu0 0
        %4055 = vmatpush1.bf16.msra.mxu0 %v4014
        %4056 = vmatprep.subr.bf16.mxu0 0
        %4057 = vmatpush1.bf16.msra.mxu0 %v4015
        %4058 = vmatprep.subr.bf16.mxu0 0
        %4059 = vmatpush1.bf16.msra.mxu0 %v4016
        %4060 = vmatprep.subr.bf16.mxu0 0
        %4061 = vmatpush1.bf16.msra.mxu0 %v4017
        %4062 = vmatprep.subr.bf16.mxu0 0
        %4063 = vmatpush1.bf16.msra.mxu0 %v4018
        %4064 = vmatprep.subr.bf16.mxu0 0
        %4065 = vmatpush1.bf16.msra.mxu0 %v4019
        %4066 = vmatprep.subr.bf16.mxu0 0
        %4067 = vmatpush1.bf16.msra.mxu0 %v4020
        %4068 = vmatprep.subr.bf16.mxu0 0
        %4069 = vmatpush1.bf16.msra.mxu0 %v4021
        %4070 = vmatprep.mubr.bf16.mxu0 %v3848
        %4071 = vmatmul.mubr.bf16.gmra.mrb[0].mxu0 %v3784
        %v4072 = vpop.f32.mrb[0].mxu0
        %v4073 = vadd.f32 0.0, %v4072
        %v4074 = vpop.f32.mrb[0].mxu0
        %v4075 = vpop.f32.mrb[0].mxu0
        %v4076 = vadd.f32 0.0, %v4075
        %v4077 = vpop.f32.mrb[0].mxu0
        %4078 = vmatprep.mubr.bf16.mxu0 %v3852
        %4079 = vmatmul.mubr.bf16.gmra.mrb[0].mxu0 %v3788
        %v4080 = vpop.f32.mrb[0].mxu0
        %v4081 = vadd.f32 0.0, %v4080
        %v4082 = vpop.f32.mrb[0].mxu0
        %v4083 = vpop.f32.mrb[0].mxu0
        %v4084 = vadd.f32 0.0, %v4083
        %v4085 = vpop.f32.mrb[0].mxu0
        %4086 = vmatprep.mubr.bf16.mxu0 %v3856
        %4087 = vmatmul.mubr.bf16.gmra.mrb[0].mxu0 %v3792
        %v4088 = vpop.f32.mrb[0].mxu0
        %v4089 = vadd.f32 0.0, %v4088
        %v4090 = vpop.f32.mrb[0].mxu0
        %v4091 = vpop.f32.mrb[0].mxu0
        %v4092 = vadd.f32 0.0, %v4091
        %v4093 = vpop.f32.mrb[0].mxu0
        %4094 = vmatprep.mubr.bf16.mxu0 %v3860
        %4095 = vmatmul.mubr.bf16.gmra.mrb[0].mxu0 %v3796
        %v4096 = vpop.f32.mrb[0].mxu0
        %v4097 = vadd.f32 0.0, %v4096
        %v4098 = vpop.f32.mrb[0].mxu0
        %v4099 = vpop.f32.mrb[0].mxu0
        %v4100 = vadd.f32 0.0, %v4099
        %v4101 = vpop.f32.mrb[0].mxu0
        %4102 = vmatprep.mubr.bf16.mxu0 %v3864
        %4103 = vmatmul.mubr.bf16.gmra.mrb[0].mxu0 %v3800
        %v4104 = vpop.f32.mrb[0].mxu0
        %v4105 = vadd.f32 0.0, %v4104
        %v4106 = vpop.f32.mrb[0].mxu0
        %v4107 = vpop.f32.mrb[0].mxu0
        %v4108 = vadd.f32 0.0, %v4107
        %v4109 = vpop.f32.mrb[0].mxu0
        %4110 = vmatprep.mubr.bf16.mxu0 %v3868
        %4111 = vmatmul.mubr.bf16.gmra.mrb[0].mxu0 %v3804
        %v4112 = vpop.f32.mrb[0].mxu0
        %v4113 = vadd.f32 0.0, %v4112
        %v4114 = vpop.f32.mrb[0].mxu0
        %v4115 = vpop.f32.mrb[0].mxu0
        %v4116 = vadd.f32 0.0, %v4115
        %v4117 = vpop.f32.mrb[0].mxu0
        %4118 = vmatprep.mubr.bf16.mxu0 %v3872
        %4119 = vmatmul.mubr.bf16.gmra.mrb[0].mxu0 %v3808
        %v4120 = vpop.f32.mrb[0].mxu0
        %v4121 = vadd.f32 0.0, %v4120
        %v4122 = vpop.f32.mrb[0].mxu0
        %v4123 = vpop.f32.mrb[0].mxu0
        %v4124 = vadd.f32 0.0, %v4123
        %v4125 = vpop.f32.mrb[0].mxu0
        %4126 = vmatprep.mubr.bf16.mxu0 %v3876
        %4127 = vmatmul.mubr.bf16.gmra.mrb[0].mxu0 %v3812
        %v4128 = vpop.f32.mrb[0].mxu0
        %v4129 = vadd.f32 0.0, %v4128
        %v4130 = vpop.f32.mrb[0].mxu0
        %v4131 = vpop.f32.mrb[0].mxu0
        %v4132 = vadd.f32 0.0, %v4131
        %v4133 = vpop.f32.mrb[0].mxu0
        %4134 = vmatprep.mubr.bf16.mxu0 %v3880
        %4135 = vmatmul.mubr.bf16.gmra.mrb[0].mxu0 %v3816
        %v4136 = vpop.f32.mrb[0].mxu0
        %v4137 = vadd.f32 0.0, %v4136
        %v4138 = vpop.f32.mrb[0].mxu0
        %v4139 = vpop.f32.mrb[0].mxu0
        %v4140 = vadd.f32 0.0, %v4139
        %v4141 = vpop.f32.mrb[0].mxu0
        %4142 = vmatprep.mubr.bf16.mxu0 %v3884
        %4143 = vmatmul.mubr.bf16.gmra.mrb[0].mxu0 %v3820
        %v4144 = vpop.f32.mrb[0].mxu0
        %v4145 = vadd.f32 0.0, %v4144
        %v4146 = vpop.f32.mrb[0].mxu0
        %v4147 = vpop.f32.mrb[0].mxu0
        %v4148 = vadd.f32 0.0, %v4147
        %v4149 = vpop.f32.mrb[0].mxu0
        %4150 = vmatprep.mubr.bf16.mxu0 %v3888
        %4151 = vmatmul.mubr.bf16.gmra.mrb[0].mxu0 %v3824
        %v4152 = vpop.f32.mrb[0].mxu0
        %v4153 = vadd.f32 0.0, %v4152
        %v4154 = vpop.f32.mrb[0].mxu0
        %v4155 = vpop.f32.mrb[0].mxu0
        %v4156 = vadd.f32 0.0, %v4155
        %v4157 = vpop.f32.mrb[0].mxu0
        %4158 = vmatprep.mubr.bf16.mxu0 %v3892
        %4159 = vmatmul.mubr.bf16.gmra.mrb[0].mxu0 %v3828
        %v4160 = vpop.f32.mrb[0].mxu0
        %v4161 = vadd.f32 0.0, %v4160
        %v4162 = vpop.f32.mrb[0].mxu0
        %v4163 = vpop.f32.mrb[0].mxu0
        %v4164 = vadd.f32 0.0, %v4163
        %v4165 = vpop.f32.mrb[0].mxu0
        %4166 = vmatprep.mubr.bf16.mxu0 %v3896
        %4167 = vmatmul.mubr.bf16.gmra.mrb[0].mxu0 %v3832
        %v4168 = vpop.f32.mrb[0].mxu0
        %v4169 = vadd.f32 0.0, %v4168
        %v4170 = vpop.f32.mrb[0].mxu0
        %v4171 = vpop.f32.mrb[0].mxu0
        %v4172 = vadd.f32 0.0, %v4171
        %v4173 = vpop.f32.mrb[0].mxu0
        %4174 = vmatprep.mubr.bf16.mxu0 %v3900
        %4175 = vmatmul.mubr.bf16.gmra.mrb[0].mxu0 %v3836
        %v4176 = vpop.f32.mrb[0].mxu0
        %v4177 = vadd.f32 0.0, %v4176
        %v4178 = vpop.f32.mrb[0].mxu0
        %v4179 = vpop.f32.mrb[0].mxu0
        %v4180 = vadd.f32 0.0, %v4179
        %v4181 = vpop.f32.mrb[0].mxu0
        %4182 = vmatprep.mubr.bf16.mxu0 %v3904
        %4183 = vmatmul.mubr.bf16.gmra.mrb[0].mxu0 %v3840
        %v4184 = vpop.f32.mrb[0].mxu0
        %v4185 = vadd.f32 0.0, %v4184
        %v4186 = vpop.f32.mrb[0].mxu0
        %v4187 = vpop.f32.mrb[0].mxu0
        %v4188 = vadd.f32 0.0, %v4187
        %v4189 = vpop.f32.mrb[0].mxu0
        %4190 = vmatprep.mubr.bf16.mxu0 %v3908
        %4191 = vmatmul.mubr.bf16.gmra.mrb[0].mxu0 %v3844
        %v4192 = vpop.f32.mrb[0].mxu0
        %v4193 = vadd.f32 0.0, %v4192
        %v4194 = vpop.f32.mrb[0].mxu0
        %v4195 = vpop.f32.mrb[0].mxu0
        %v4196 = vadd.f32 0.0, %v4195
        %v4197 = vpop.f32.mrb[0].mxu0
        %4198 = vdwg.mxu0
        %v4231 = vunpack.c.l.b16 %v2706
        %v4232 = vunpack.c.l.b16 %v2707
        %v4233 = vunpack.c.l.b16 %v2708
        %v4234 = vunpack.c.l.b16 %v2709
        %v4235 = vunpack.c.l.b16 %v2710
        %v4236 = vunpack.c.l.b16 %v2711
        %v4237 = vunpack.c.l.b16 %v2712
        %v4238 = vunpack.c.l.b16 %v2713
        %v4239 = vunpack.c.l.b16 %v2714
        %v4240 = vunpack.c.l.b16 %v2715
        %v4241 = vunpack.c.l.b16 %v2716
        %v4242 = vunpack.c.l.b16 %v2717
        %v4243 = vunpack.c.l.b16 %v2718
        %v4244 = vunpack.c.l.b16 %v2719
        %v4245 = vunpack.c.l.b16 %v2720
        %v4246 = vunpack.c.l.b16 %v2721
        %v4247 = vunpack.c.l.b16 %v2722
        %v4248 = vunpack.c.l.b16 %v2723
        %v4249 = vunpack.c.l.b16 %v2724
        %v4250 = vunpack.c.l.b16 %v2725
        %v4251 = vunpack.c.l.b16 %v2726
        %v4252 = vunpack.c.l.b16 %v2727
        %v4253 = vunpack.c.l.b16 %v2728
        %v4254 = vunpack.c.l.b16 %v2729
        %v4255 = vunpack.c.l.b16 %v2730
        %v4256 = vunpack.c.l.b16 %v2731
        %v4257 = vunpack.c.l.b16 %v2732
        %v4258 = vunpack.c.l.b16 %v2733
        %v4259 = vunpack.c.l.b16 %v2734
        %v4260 = vunpack.c.l.b16 %v2735
        %v4261 = vunpack.c.l.b16 %v2736
        %v4262 = vunpack.c.l.b16 %v2737
        %v4263 = vpack.c.b16 %v4232, %v4231
        %v4264 = vpack.c.b16 %v4234, %v4233
        %v4265 = vpack.c.b16 %v4236, %v4235
        %v4266 = vpack.c.b16 %v4238, %v4237
        %v4267 = vpack.c.b16 %v4240, %v4239
        %v4268 = vpack.c.b16 %v4242, %v4241
        %v4269 = vpack.c.b16 %v4244, %v4243
        %v4270 = vpack.c.b16 %v4246, %v4245
        %v4271 = vpack.c.b16 %v4248, %v4247
        %v4272 = vpack.c.b16 %v4250, %v4249
        %v4273 = vpack.c.b16 %v4252, %v4251
        %v4274 = vpack.c.b16 %v4254, %v4253
        %v4275 = vpack.c.b16 %v4256, %v4255
        %v4276 = vpack.c.b16 %v4258, %v4257
        %v4277 = vpack.c.b16 %v4260, %v4259
        %v4278 = vpack.c.b16 %v4262, %v4261
        %4295 = vmatprep.subr.bf16.mxu0 0
        %4296 = vmatpush1.bf16.msra.mxu0 %v4263
        %4297 = vmatprep.subr.bf16.mxu0 0
        %4298 = vmatpush1.bf16.msra.mxu0 %v4264
        %4299 = vmatprep.subr.bf16.mxu0 0
        %4300 = vmatpush1.bf16.msra.mxu0 %v4265
        %4301 = vmatprep.subr.bf16.mxu0 0
        %4302 = vmatpush1.bf16.msra.mxu0 %v4266
        %4303 = vmatprep.subr.bf16.mxu0 0
        %4304 = vmatpush1.bf16.msra.mxu0 %v4267
        %4305 = vmatprep.subr.bf16.mxu0 0
        %4306 = vmatpush1.bf16.msra.mxu0 %v4268
        %4307 = vmatprep.subr.bf16.mxu0 0
        %4308 = vmatpush1.bf16.msra.mxu0 %v4269
        %4309 = vmatprep.subr.bf16.mxu0 0
        %4310 = vmatpush1.bf16.msra.mxu0 %v4270
        %4311 = vmatprep.subr.bf16.mxu0 0
        %4312 = vmatpush1.bf16.msra.mxu0 %v4271
        %4313 = vmatprep.subr.bf16.mxu0 0
        %4314 = vmatpush1.bf16.msra.mxu0 %v4272
        %4315 = vmatprep.subr.bf16.mxu0 0
        %4316 = vmatpush1.bf16.msra.mxu0 %v4273
        %4317 = vmatprep.subr.bf16.mxu0 0
        %4318 = vmatpush1.bf16.msra.mxu0 %v4274
        %4319 = vmatprep.subr.bf16.mxu0 0
        %4320 = vmatpush1.bf16.msra.mxu0 %v4275
        %4321 = vmatprep.subr.bf16.mxu0 0
        %4322 = vmatpush1.bf16.msra.mxu0 %v4276
        %4323 = vmatprep.subr.bf16.mxu0 0
        %4324 = vmatpush1.bf16.msra.mxu0 %v4277
        %4325 = vmatprep.subr.bf16.mxu0 0
        %4326 = vmatpush1.bf16.msra.mxu0 %v4278
        %4327 = vmatprep.mubr.bf16.mxu0 %v2644
        %4328 = vmatmul.mubr.bf16.gmra.mrb[0].mxu0 %v2580
        %v4329 = vpop.f32.mrb[0].mxu0
        %v4330 = vadd.f32 %v4073, %v4329
        %v4331 = vpop.f32.mrb[0].mxu0
        %v4332 = vpop.f32.mrb[0].mxu0
        %v4333 = vadd.f32 %v4076, %v4332
        %v4334 = vpop.f32.mrb[0].mxu0
        %4335 = vmatprep.mubr.bf16.mxu0 %v2648
        %4336 = vmatmul.mubr.bf16.gmra.mrb[0].mxu0 %v2584
        %v4337 = vpop.f32.mrb[0].mxu0
        %v4338 = vadd.f32 %v4081, %v4337
        %v4339 = vpop.f32.mrb[0].mxu0
        %v4340 = vpop.f32.mrb[0].mxu0
        %v4341 = vadd.f32 %v4084, %v4340
        %v4342 = vpop.f32.mrb[0].mxu0
        %4343 = vmatprep.mubr.bf16.mxu0 %v2652
        %4344 = vmatmul.mubr.bf16.gmra.mrb[0].mxu0 %v2588
        %v4345 = vpop.f32.mrb[0].mxu0
        %v4346 = vadd.f32 %v4089, %v4345
        %v4347 = vpop.f32.mrb[0].mxu0
        %v4348 = vpop.f32.mrb[0].mxu0
        %v4349 = vadd.f32 %v4092, %v4348
        %v4350 = vpop.f32.mrb[0].mxu0
        %4351 = vmatprep.mubr.bf16.mxu0 %v2656
        %4352 = vmatmul.mubr.bf16.gmra.mrb[0].mxu0 %v2592
        %v4353 = vpop.f32.mrb[0].mxu0
        %v4354 = vadd.f32 %v4097, %v4353
        %v4355 = vpop.f32.mrb[0].mxu0
        %v4356 = vpop.f32.mrb[0].mxu0
        %v4357 = vadd.f32 %v4100, %v4356
        %v4358 = vpop.f32.mrb[0].mxu0
        %4359 = vmatprep.mubr.bf16.mxu0 %v2660
        %4360 = vmatmul.mubr.bf16.gmra.mrb[0].mxu0 %v2596
        %v4361 = vpop.f32.mrb[0].mxu0
        %v4362 = vadd.f32 %v4105, %v4361
        %v4363 = vpop.f32.mrb[0].mxu0
        %v4364 = vpop.f32.mrb[0].mxu0
        %v4365 = vadd.f32 %v4108, %v4364
        %v4366 = vpop.f32.mrb[0].mxu0
        %4367 = vmatprep.mubr.bf16.mxu0 %v2664
        %4368 = vmatmul.mubr.bf16.gmra.mrb[0].mxu0 %v2600
        %v4369 = vpop.f32.mrb[0].mxu0
        %v4370 = vadd.f32 %v4113, %v4369
        %v4371 = vpop.f32.mrb[0].mxu0
        %v4372 = vpop.f32.mrb[0].mxu0
        %v4373 = vadd.f32 %v4116, %v4372
        %v4374 = vpop.f32.mrb[0].mxu0
        %4375 = vmatprep.mubr.bf16.mxu0 %v2668
        %4376 = vmatmul.mubr.bf16.gmra.mrb[0].mxu0 %v2604
        %v4377 = vpop.f32.mrb[0].mxu0
        %v4378 = vadd.f32 %v4121, %v4377
        %v4379 = vpop.f32.mrb[0].mxu0
        %v4380 = vpop.f32.mrb[0].mxu0
        %v4381 = vadd.f32 %v4124, %v4380
        %v4382 = vpop.f32.mrb[0].mxu0
        %4383 = vmatprep.mubr.bf16.mxu0 %v2672
        %4384 = vmatmul.mubr.bf16.gmra.mrb[0].mxu0 %v2608
        %v4385 = vpop.f32.mrb[0].mxu0
        %v4386 = vadd.f32 %v4129, %v4385
        %v4387 = vpop.f32.mrb[0].mxu0
        %v4388 = vpop.f32.mrb[0].mxu0
        %v4389 = vadd.f32 %v4132, %v4388
        %v4390 = vpop.f32.mrb[0].mxu0
        %4391 = vmatprep.mubr.bf16.mxu0 %v2676
        %4392 = vmatmul.mubr.bf16.gmra.mrb[0].mxu0 %v2612
        %v4393 = vpop.f32.mrb[0].mxu0
        %v4394 = vadd.f32 %v4137, %v4393
        %v4395 = vpop.f32.mrb[0].mxu0
        %v4396 = vpop.f32.mrb[0].mxu0
        %v4397 = vadd.f32 %v4140, %v4396
        %v4398 = vpop.f32.mrb[0].mxu0
        %4399 = vmatprep.mubr.bf16.mxu0 %v2680
        %4400 = vmatmul.mubr.bf16.gmra.mrb[0].mxu0 %v2616
        %v4401 = vpop.f32.mrb[0].mxu0
        %v4402 = vadd.f32 %v4145, %v4401
        %v4403 = vpop.f32.mrb[0].mxu0
        %v4404 = vpop.f32.mrb[0].mxu0
        %v4405 = vadd.f32 %v4148, %v4404
        %v4406 = vpop.f32.mrb[0].mxu0
        %4407 = vmatprep.mubr.bf16.mxu0 %v2684
        %4408 = vmatmul.mubr.bf16.gmra.mrb[0].mxu0 %v2620
        %v4409 = vpop.f32.mrb[0].mxu0
        %v4410 = vadd.f32 %v4153, %v4409
        %v4411 = vpop.f32.mrb[0].mxu0
        %v4412 = vpop.f32.mrb[0].mxu0
        %v4413 = vadd.f32 %v4156, %v4412
        %v4414 = vpop.f32.mrb[0].mxu0
        %4415 = vmatprep.mubr.bf16.mxu0 %v2688
        %4416 = vmatmul.mubr.bf16.gmra.mrb[0].mxu0 %v2624
        %v4417 = vpop.f32.mrb[0].mxu0
        %v4418 = vadd.f32 %v4161, %v4417
        %v4419 = vpop.f32.mrb[0].mxu0
        %v4420 = vpop.f32.mrb[0].mxu0
        %v4421 = vadd.f32 %v4164, %v4420
        %v4422 = vpop.f32.mrb[0].mxu0
        %4423 = vmatprep.mubr.bf16.mxu0 %v2692
        %4424 = vmatmul.mubr.bf16.gmra.mrb[0].mxu0 %v2628
        %v4425 = vpop.f32.mrb[0].mxu0
        %v4426 = vadd.f32 %v4169, %v4425
        %v4427 = vpop.f32.mrb[0].mxu0
        %v4428 = vpop.f32.mrb[0].mxu0
        %v4429 = vadd.f32 %v4172, %v4428
        %v4430 = vpop.f32.mrb[0].mxu0
        %4431 = vmatprep.mubr.bf16.mxu0 %v2696
        %4432 = vmatmul.mubr.bf16.gmra.mrb[0].mxu0 %v2632
        %v4433 = vpop.f32.mrb[0].mxu0
        %v4434 = vadd.f32 %v4177, %v4433
        %v4435 = vpop.f32.mrb[0].mxu0
        %v4436 = vpop.f32.mrb[0].mxu0
        %v4437 = vadd.f32 %v4180, %v4436
        %v4438 = vpop.f32.mrb[0].mxu0
        %4439 = vmatprep.mubr.bf16.mxu0 %v2700
        %4440 = vmatmul.mubr.bf16.gmra.mrb[0].mxu0 %v2636
        %v4441 = vpop.f32.mrb[0].mxu0
        %v4442 = vadd.f32 %v4185, %v4441
        %v4443 = vpop.f32.mrb[0].mxu0
        %v4444 = vpop.f32.mrb[0].mxu0
        %v4445 = vadd.f32 %v4188, %v4444
        %v4446 = vpop.f32.mrb[0].mxu0
        %4447 = vmatprep.mubr.bf16.mxu0 %v2704
        %4448 = vmatmul.mubr.bf16.gmra.mrb[0].mxu0 %v2640
        %v4449 = vpop.f32.mrb[0].mxu0
        %v4450 = vadd.f32 %v4193, %v4449
        %v4451 = vpop.f32.mrb[0].mxu0
        %v4452 = vpop.f32.mrb[0].mxu0
        %v4453 = vadd.f32 %v4196, %v4452
        %v4454 = vpop.f32.mrb[0].mxu0
        %4455 = vdwg.mxu0
        %v4456 = vld [vmem:[%s2901 + $0x8] sm:$0x3]
        %v4457 = vld [vmem:[%s2901 + $0x14] sm:$0x3]
        %v4458 = vld [vmem:[%s2901 + $0x20] sm:$0x3]
        %v4459 = vld [vmem:[%s2901 + $0x2c] sm:$0x3]
        %v4460 = vld [vmem:[%s2901 + $0x38] sm:$0x3]
        %v4461 = vld [vmem:[%s2901 + $0x44] sm:$0x3]
        %v4462 = vld [vmem:[%s2901 + $0x50] sm:$0x3]
        %v4463 = vld [vmem:[%s2901 + $0x5c] sm:$0x3]
        %v4464 = vld [vmem:[%s2901 + $0x68] sm:$0x3]
        %v4465 = vld [vmem:[%s2901 + $0x74] sm:$0x3]
        %v4466 = vld [vmem:[%s2901 + $0x80] sm:$0x3]
        %v4467 = vld [vmem:[%s2901 + $0x8c] sm:$0x3]
        %v4468 = vld [vmem:[%s2901 + $0x98] sm:$0x3]
        %v4469 = vld [vmem:[%s2901 + $0xa4] sm:$0x3]
        %v4470 = vld [vmem:[%s2901 + $0xb0] sm:$0x3]
        %v4471 = vld [vmem:[%s2901 + $0xbc] sm:$0x3]
        %v4473 = vshrl.u32 %v3334, 16
        %v4475 = vrot.slane %v4473, 5
        %v4476 = vshll.u32 %v3334, 16
        %v4478 = vrot.slane %v4476, 6
        %v4479 = vor.u32 %v4475, %v4478
        %v4480 = vrot.slane %v4479, 4
        %v4481 = vrot.slane %v2964, 5
        %v4482 = vrot.slane %v2960, 6
        %v4483 = vor.u32 %v4481, %v4482
        %v4484 = vsel %vm1936, %v4480, %v4483
        %v4485 = vrot.slane %v4483, 4
        %v4487 = vshrl.u32 %v4456, 16
        %v4489 = vrot.slane %v4487, 5
        %v4490 = vshll.u32 %v4456, 16
        %v4492 = vrot.slane %v4490, 6
        %v4493 = vor.u32 %v4489, %v4492
        %v4494 = vsel %vm1936, %v4485, %v4493
        %v4496 = vshrl.u32 %v3335, 16
        %v4498 = vrot.slane %v4496, 5
        %v4499 = vshll.u32 %v3335, 16
        %v4501 = vrot.slane %v4499, 6
        %v4502 = vor.u32 %v4498, %v4501
        %v4503 = vrot.slane %v4502, 4
        %v4504 = vrot.slane %v2988, 5
        %v4505 = vrot.slane %v2984, 6
        %v4506 = vor.u32 %v4504, %v4505
        %v4507 = vsel %vm1936, %v4503, %v4506
        %v4508 = vrot.slane %v4506, 4
        %v4510 = vshrl.u32 %v4457, 16
        %v4512 = vrot.slane %v4510, 5
        %v4513 = vshll.u32 %v4457, 16
        %v4515 = vrot.slane %v4513, 6
        %v4516 = vor.u32 %v4512, %v4515
        %v4517 = vsel %vm1936, %v4508, %v4516
        %v4519 = vshrl.u32 %v3336, 16
        %v4521 = vrot.slane %v4519, 5
        %v4522 = vshll.u32 %v3336, 16
        %v4524 = vrot.slane %v4522, 6
        %v4525 = vor.u32 %v4521, %v4524
        %v4526 = vrot.slane %v4525, 4
        %v4527 = vrot.slane %v3012, 5
        %v4528 = vrot.slane %v3008, 6
        %v4529 = vor.u32 %v4527, %v4528
        %v4530 = vsel %vm1936, %v4526, %v4529
        %v4531 = vrot.slane %v4529, 4
        %v4533 = vshrl.u32 %v4458, 16
        %v4535 = vrot.slane %v4533, 5
        %v4536 = vshll.u32 %v4458, 16
        %v4538 = vrot.slane %v4536, 6
        %v4539 = vor.u32 %v4535, %v4538
        %v4540 = vsel %vm1936, %v4531, %v4539
        %v4542 = vshrl.u32 %v3337, 16
        %v4544 = vrot.slane %v4542, 5
        %v4545 = vshll.u32 %v3337, 16
        %v4547 = vrot.slane %v4545, 6
        %v4548 = vor.u32 %v4544, %v4547
        %v4549 = vrot.slane %v4548, 4
        %v4550 = vrot.slane %v3036, 5
        %v4551 = vrot.slane %v3032, 6
        %v4552 = vor.u32 %v4550, %v4551
        %v4553 = vsel %vm1936, %v4549, %v4552
        %v4554 = vrot.slane %v4552, 4
        %v4556 = vshrl.u32 %v4459, 16
        %v4558 = vrot.slane %v4556, 5
        %v4559 = vshll.u32 %v4459, 16
        %v4561 = vrot.slane %v4559, 6
        %v4562 = vor.u32 %v4558, %v4561
        %v4563 = vsel %vm1936, %v4554, %v4562
        %v4565 = vshrl.u32 %v3338, 16
        %v4567 = vrot.slane %v4565, 5
        %v4568 = vshll.u32 %v3338, 16
        %v4570 = vrot.slane %v4568, 6
        %v4571 = vor.u32 %v4567, %v4570
        %v4572 = vrot.slane %v4571, 4
        %v4573 = vrot.slane %v3060, 5
        %v4574 = vrot.slane %v3056, 6
        %v4575 = vor.u32 %v4573, %v4574
        %v4576 = vsel %vm1936, %v4572, %v4575
        %v4577 = vrot.slane %v4575, 4
        %v4579 = vshrl.u32 %v4460, 16
        %v4581 = vrot.slane %v4579, 5
        %v4582 = vshll.u32 %v4460, 16
        %v4584 = vrot.slane %v4582, 6
        %v4585 = vor.u32 %v4581, %v4584
        %v4586 = vsel %vm1936, %v4577, %v4585
        %v4588 = vshrl.u32 %v3339, 16
        %v4590 = vrot.slane %v4588, 5
        %v4591 = vshll.u32 %v3339, 16
        %v4593 = vrot.slane %v4591, 6
        %v4594 = vor.u32 %v4590, %v4593
        %v4595 = vrot.slane %v4594, 4
        %v4596 = vrot.slane %v3084, 5
        %v4597 = vrot.slane %v3080, 6
        %v4598 = vor.u32 %v4596, %v4597
        %v4599 = vsel %vm1936, %v4595, %v4598
        %v4600 = vrot.slane %v4598, 4
        %v4602 = vshrl.u32 %v4461, 16
        %v4604 = vrot.slane %v4602, 5
        %v4605 = vshll.u32 %v4461, 16
        %v4607 = vrot.slane %v4605, 6
        %v4608 = vor.u32 %v4604, %v4607
        %v4609 = vsel %vm1936, %v4600, %v4608
        %v4611 = vshrl.u32 %v3340, 16
        %v4613 = vrot.slane %v4611, 5
        %v4614 = vshll.u32 %v3340, 16
        %v4616 = vrot.slane %v4614, 6
        %v4617 = vor.u32 %v4613, %v4616
        %v4618 = vrot.slane %v4617, 4
        %v4619 = vrot.slane %v3108, 5
        %v4620 = vrot.slane %v3104, 6
        %v4621 = vor.u32 %v4619, %v4620
        %v4622 = vsel %vm1936, %v4618, %v4621
        %v4623 = vrot.slane %v4621, 4
        %v4625 = vshrl.u32 %v4462, 16
        %v4627 = vrot.slane %v4625, 5
        %v4628 = vshll.u32 %v4462, 16
        %v4630 = vrot.slane %v4628, 6
        %v4631 = vor.u32 %v4627, %v4630
        %v4632 = vsel %vm1936, %v4623, %v4631
        %v4634 = vshrl.u32 %v3341, 16
        %v4636 = vrot.slane %v4634, 5
        %v4637 = vshll.u32 %v3341, 16
        %v4639 = vrot.slane %v4637, 6
        %v4640 = vor.u32 %v4636, %v4639
        %v4641 = vrot.slane %v4640, 4
        %v4642 = vrot.slane %v3132, 5
        %v4643 = vrot.slane %v3128, 6
        %v4644 = vor.u32 %v4642, %v4643
        %v4645 = vsel %vm1936, %v4641, %v4644
        %v4646 = vrot.slane %v4644, 4
        %v4648 = vshrl.u32 %v4463, 16
        %v4650 = vrot.slane %v4648, 5
        %v4651 = vshll.u32 %v4463, 16
        %v4653 = vrot.slane %v4651, 6
        %v4654 = vor.u32 %v4650, %v4653
        %v4655 = vsel %vm1936, %v4646, %v4654
        %v4657 = vshrl.u32 %v3342, 16
        %v4659 = vrot.slane %v4657, 5
        %v4660 = vshll.u32 %v3342, 16
        %v4662 = vrot.slane %v4660, 6
        %v4663 = vor.u32 %v4659, %v4662
        %v4664 = vrot.slane %v4663, 4
        %v4665 = vrot.slane %v3156, 5
        %v4666 = vrot.slane %v3152, 6
        %v4667 = vor.u32 %v4665, %v4666
        %v4668 = vsel %vm1936, %v4664, %v4667
        %v4669 = vrot.slane %v4667, 4
        %v4671 = vshrl.u32 %v4464, 16
        %v4673 = vrot.slane %v4671, 5
        %v4674 = vshll.u32 %v4464, 16
        %v4676 = vrot.slane %v4674, 6
        %v4677 = vor.u32 %v4673, %v4676
        %v4678 = vsel %vm1936, %v4669, %v4677
        %v4680 = vshrl.u32 %v3343, 16
        %v4682 = vrot.slane %v4680, 5
        %v4683 = vshll.u32 %v3343, 16
        %v4685 = vrot.slane %v4683, 6
        %v4686 = vor.u32 %v4682, %v4685
        %v4687 = vrot.slane %v4686, 4
        %v4688 = vrot.slane %v3180, 5
        %v4689 = vrot.slane %v3176, 6
        %v4690 = vor.u32 %v4688, %v4689
        %v4691 = vsel %vm1936, %v4687, %v4690
        %v4692 = vrot.slane %v4690, 4
        %v4694 = vshrl.u32 %v4465, 16
        %v4696 = vrot.slane %v4694, 5
        %v4697 = vshll.u32 %v4465, 16
        %v4699 = vrot.slane %v4697, 6
        %v4700 = vor.u32 %v4696, %v4699
        %v4701 = vsel %vm1936, %v4692, %v4700
        %v4703 = vshrl.u32 %v3344, 16
        %v4705 = vrot.slane %v4703, 5
        %v4706 = vshll.u32 %v3344, 16
        %v4708 = vrot.slane %v4706, 6
        %v4709 = vor.u32 %v4705, %v4708
        %v4710 = vrot.slane %v4709, 4
        %v4711 = vrot.slane %v3204, 5
        %v4712 = vrot.slane %v3200, 6
        %v4713 = vor.u32 %v4711, %v4712
        %v4714 = vsel %vm1936, %v4710, %v4713
        %v4715 = vrot.slane %v4713, 4
        %v4717 = vshrl.u32 %v4466, 16
        %v4719 = vrot.slane %v4717, 5
        %v4720 = vshll.u32 %v4466, 16
        %v4722 = vrot.slane %v4720, 6
        %v4723 = vor.u32 %v4719, %v4722
        %v4724 = vsel %vm1936, %v4715, %v4723
        %v4726 = vshrl.u32 %v3345, 16
        %v4728 = vrot.slane %v4726, 5
        %v4729 = vshll.u32 %v3345, 16
        %v4731 = vrot.slane %v4729, 6
        %v4732 = vor.u32 %v4728, %v4731
        %v4733 = vrot.slane %v4732, 4
        %v4734 = vrot.slane %v3228, 5
        %v4735 = vrot.slane %v3224, 6
        %v4736 = vor.u32 %v4734, %v4735
        %v4737 = vsel %vm1936, %v4733, %v4736
        %v4738 = vrot.slane %v4736, 4
        %v4740 = vshrl.u32 %v4467, 16
        %v4742 = vrot.slane %v4740, 5
        %v4743 = vshll.u32 %v4467, 16
        %v4745 = vrot.slane %v4743, 6
        %v4746 = vor.u32 %v4742, %v4745
        %v4747 = vsel %vm1936, %v4738, %v4746
        %v4749 = vshrl.u32 %v3346, 16
        %v4751 = vrot.slane %v4749, 5
        %v4752 = vshll.u32 %v3346, 16
        %v4754 = vrot.slane %v4752, 6
        %v4755 = vor.u32 %v4751, %v4754
        %v4756 = vrot.slane %v4755, 4
        %v4757 = vrot.slane %v3252, 5
        %v4758 = vrot.slane %v3248, 6
        %v4759 = vor.u32 %v4757, %v4758
        %v4760 = vsel %vm1936, %v4756, %v4759
        %v4761 = vrot.slane %v4759, 4
        %v4763 = vshrl.u32 %v4468, 16
        %v4765 = vrot.slane %v4763, 5
        %v4766 = vshll.u32 %v4468, 16
        %v4768 = vrot.slane %v4766, 6
        %v4769 = vor.u32 %v4765, %v4768
        %v4770 = vsel %vm1936, %v4761, %v4769
        %v4772 = vshrl.u32 %v3347, 16
        %v4774 = vrot.slane %v4772, 5
        %v4775 = vshll.u32 %v3347, 16
        %v4777 = vrot.slane %v4775, 6
        %v4778 = vor.u32 %v4774, %v4777
        %v4779 = vrot.slane %v4778, 4
        %v4780 = vrot.slane %v3276, 5
        %v4781 = vrot.slane %v3272, 6
        %v4782 = vor.u32 %v4780, %v4781
        %v4783 = vsel %vm1936, %v4779, %v4782
        %v4784 = vrot.slane %v4782, 4
        %v4786 = vshrl.u32 %v4469, 16
        %v4788 = vrot.slane %v4786, 5
        %v4789 = vshll.u32 %v4469, 16
        %v4791 = vrot.slane %v4789, 6
        %v4792 = vor.u32 %v4788, %v4791
        %v4793 = vsel %vm1936, %v4784, %v4792
        %v4795 = vshrl.u32 %v3348, 16
        %v4797 = vrot.slane %v4795, 5
        %v4798 = vshll.u32 %v3348, 16
        %v4800 = vrot.slane %v4798, 6
        %v4801 = vor.u32 %v4797, %v4800
        %v4802 = vrot.slane %v4801, 4
        %v4803 = vrot.slane %v3300, 5
        %v4804 = vrot.slane %v3296, 6
        %v4805 = vor.u32 %v4803, %v4804
        %v4806 = vsel %vm1936, %v4802, %v4805
        %v4807 = vrot.slane %v4805, 4
        %v4809 = vshrl.u32 %v4470, 16
        %v4811 = vrot.slane %v4809, 5
        %v4812 = vshll.u32 %v4470, 16
        %v4814 = vrot.slane %v4812, 6
        %v4815 = vor.u32 %v4811, %v4814
        %v4816 = vsel %vm1936, %v4807, %v4815
        %v4818 = vshrl.u32 %v3349, 16
        %v4820 = vrot.slane %v4818, 5
        %v4821 = vshll.u32 %v3349, 16
        %v4823 = vrot.slane %v4821, 6
        %v4824 = vor.u32 %v4820, %v4823
        %v4825 = vrot.slane %v4824, 4
        %v4826 = vrot.slane %v3324, 5
        %v4827 = vrot.slane %v3320, 6
        %v4828 = vor.u32 %v4826, %v4827
        %v4829 = vsel %vm1936, %v4825, %v4828
        %v4830 = vrot.slane %v4828, 4
        %v4832 = vshrl.u32 %v4471, 16
        %v4834 = vrot.slane %v4832, 5
        %v4835 = vshll.u32 %v4471, 16
        %v4837 = vrot.slane %v4835, 6
        %v4838 = vor.u32 %v4834, %v4837
        %v4839 = vsel %vm1936, %v4830, %v4838
        %v4840 = vld [vmem:[%s2901] sm:$0xc]
        %v4841 = vld [vmem:[%s2901 + $0xc] sm:$0xc]
        %v4842 = vld [vmem:[%s2901 + $0x18] sm:$0xc]
        %v4843 = vld [vmem:[%s2901 + $0x24] sm:$0xc]
        %v4844 = vld [vmem:[%s2901 + $0x30] sm:$0xc]
        %v4845 = vld [vmem:[%s2901 + $0x3c] sm:$0xc]
        %v4846 = vld [vmem:[%s2901 + $0x48] sm:$0xc]
        %v4847 = vld [vmem:[%s2901 + $0x54] sm:$0xc]
        %v4848 = vld [vmem:[%s2901 + $0x60] sm:$0xc]
        %v4849 = vld [vmem:[%s2901 + $0x6c] sm:$0xc]
        %v4850 = vld [vmem:[%s2901 + $0x78] sm:$0xc]
        %v4851 = vld [vmem:[%s2901 + $0x84] sm:$0xc]
        %v4852 = vld [vmem:[%s2901 + $0x90] sm:$0xc]
        %v4853 = vld [vmem:[%s2901 + $0x9c] sm:$0xc]
        %v4854 = vld [vmem:[%s2901 + $0xa8] sm:$0xc]
        %v4855 = vld [vmem:[%s2901 + $0xb4] sm:$0xc]
        %v4888 = vrot.slane %v4840, 6
        %v4889 = vrot.slane %v4888, 4
        %v4890 = vrot.slane %v2903, 6
        %v4891 = vsel %vm2788, %v4889, %v4890
        %v4892 = vrot.slane %v4890, 4
        %v4893 = vrot.slane %v4456, 6
        %v4894 = vsel %vm2788, %v4892, %v4893
        %v4895 = vrot.slane %v4841, 6
        %v4896 = vrot.slane %v4895, 4
        %v4897 = vrot.slane %v2905, 6
        %v4898 = vsel %vm2788, %v4896, %v4897
        %v4899 = vrot.slane %v4897, 4
        %v4900 = vrot.slane %v4457, 6
        %v4901 = vsel %vm2788, %v4899, %v4900
        %v4902 = vrot.slane %v4842, 6
        %v4903 = vrot.slane %v4902, 4
        %v4904 = vrot.slane %v2907, 6
        %v4905 = vsel %vm2788, %v4903, %v4904
        %v4906 = vrot.slane %v4904, 4
        %v4907 = vrot.slane %v4458, 6
        %v4908 = vsel %vm2788, %v4906, %v4907
        %v4909 = vrot.slane %v4843, 6
        %v4910 = vrot.slane %v4909, 4
        %v4911 = vrot.slane %v2909, 6
        %v4912 = vsel %vm2788, %v4910, %v4911
        %v4913 = vrot.slane %v4911, 4
        %v4914 = vrot.slane %v4459, 6
        %v4915 = vsel %vm2788, %v4913, %v4914
        %v4916 = vrot.slane %v4844, 6
        %v4917 = vrot.slane %v4916, 4
        %v4918 = vrot.slane %v2911, 6
        %v4919 = vsel %vm2788, %v4917, %v4918
        %v4920 = vrot.slane %v4918, 4
        %v4921 = vrot.slane %v4460, 6
        %v4922 = vsel %vm2788, %v4920, %v4921
        %v4923 = vrot.slane %v4845, 6
        %v4924 = vrot.slane %v4923, 4
        %v4925 = vrot.slane %v2913, 6
        %v4926 = vsel %vm2788, %v4924, %v4925
        %v4927 = vrot.slane %v4925, 4
        %v4928 = vrot.slane %v4461, 6
        %v4929 = vsel %vm2788, %v4927, %v4928
        %v4930 = vrot.slane %v4846, 6
        %v4931 = vrot.slane %v4930, 4
        %v4932 = vrot.slane %v2915, 6
        %v4933 = vsel %vm2788, %v4931, %v4932
        %v4934 = vrot.slane %v4932, 4
        %v4935 = vrot.slane %v4462, 6
        %v4936 = vsel %vm2788, %v4934, %v4935
        %v4937 = vrot.slane %v4847, 6
        %v4938 = vrot.slane %v4937, 4
        %v4939 = vrot.slane %v2917, 6
        %v4940 = vsel %vm2788, %v4938, %v4939
        %v4941 = vrot.slane %v4939, 4
        %v4942 = vrot.slane %v4463, 6
        %v4943 = vsel %vm2788, %v4941, %v4942
        %v4944 = vrot.slane %v4848, 6
        %v4945 = vrot.slane %v4944, 4
        %v4946 = vrot.slane %v2919, 6
        %v4947 = vsel %vm2788, %v4945, %v4946
        %v4948 = vrot.slane %v4946, 4
        %v4949 = vrot.slane %v4464, 6
        %v4950 = vsel %vm2788, %v4948, %v4949
        %v4951 = vrot.slane %v4849, 6
        %v4952 = vrot.slane %v4951, 4
        %v4953 = vrot.slane %v2921, 6
        %v4954 = vsel %vm2788, %v4952, %v4953
        %v4955 = vrot.slane %v4953, 4
        %v4956 = vrot.slane %v4465, 6
        %v4957 = vsel %vm2788, %v4955, %v4956
        %v4958 = vrot.slane %v4850, 6
        %v4959 = vrot.slane %v4958, 4
        %v4960 = vrot.slane %v2923, 6
        %v4961 = vsel %vm2788, %v4959, %v4960
        %v4962 = vrot.slane %v4960, 4
        %v4963 = vrot.slane %v4466, 6
        %v4964 = vsel %vm2788, %v4962, %v4963
        %v4965 = vrot.slane %v4851, 6
        %v4966 = vrot.slane %v4965, 4
        %v4967 = vrot.slane %v2925, 6
        %v4968 = vsel %vm2788, %v4966, %v4967
        %v4969 = vrot.slane %v4967, 4
        %v4970 = vrot.slane %v4467, 6
        %v4971 = vsel %vm2788, %v4969, %v4970
        %v4972 = vrot.slane %v4852, 6
        %v4973 = vrot.slane %v4972, 4
        %v4974 = vrot.slane %v2927, 6
        %v4975 = vsel %vm2788, %v4973, %v4974
        %v4976 = vrot.slane %v4974, 4
        %v4977 = vrot.slane %v4468, 6
        %v4978 = vsel %vm2788, %v4976, %v4977
        %v4979 = vrot.slane %v4853, 6
        %v4980 = vrot.slane %v4979, 4
        %v4981 = vrot.slane %v2929, 6
        %v4982 = vsel %vm2788, %v4980, %v4981
        %v4983 = vrot.slane %v4981, 4
        %v4984 = vrot.slane %v4469, 6
        %v4985 = vsel %vm2788, %v4983, %v4984
        %v4986 = vrot.slane %v4854, 6
        %v4987 = vrot.slane %v4986, 4
        %v4988 = vrot.slane %v2931, 6
        %v4989 = vsel %vm2788, %v4987, %v4988
        %v4990 = vrot.slane %v4988, 4
        %v4991 = vrot.slane %v4470, 6
        %v4992 = vsel %vm2788, %v4990, %v4991
        %v4993 = vrot.slane %v4855, 6
        %v4994 = vrot.slane %v4993, 4
        %v4995 = vrot.slane %v2933, 6
        %v4996 = vsel %vm2788, %v4994, %v4995
        %v4997 = vrot.slane %v4995, 4
        %v4998 = vrot.slane %v4471, 6
        %v4999 = vsel %vm2788, %v4997, %v4998
        %v5000 = vld [vmem:[%s1254] sm:$0xf]
        %v5001 = vld [vmem:[%s1254 + $0x4] sm:$0xf]
        %v5002 = vld [vmem:[%s1254 + $0xc] sm:$0xf]
        %v5003 = vld [vmem:[%s1254 + $0x10] sm:$0xf]
        %v5004 = vld [vmem:[%s1254 + $0x18] sm:$0xf]
        %v5005 = vld [vmem:[%s1254 + $0x1c] sm:$0xf]
        %v5006 = vld [vmem:[%s1254 + $0x24] sm:$0xf]
        %v5007 = vld [vmem:[%s1254 + $0x28] sm:$0xf]
        %v5008 = vld [vmem:[%s1254 + $0x30] sm:$0xf]
        %v5009 = vld [vmem:[%s1254 + $0x34] sm:$0xf]
        %v5010 = vld [vmem:[%s1254 + $0x3c] sm:$0xf]
        %v5011 = vld [vmem:[%s1254 + $0x40] sm:$0xf]
        %v5012 = vld [vmem:[%s1254 + $0x48] sm:$0xf]
        %v5013 = vld [vmem:[%s1254 + $0x4c] sm:$0xf]
        %v5014 = vld [vmem:[%s1254 + $0x54] sm:$0xf]
        %v5015 = vld [vmem:[%s1254 + $0x58] sm:$0xf]
        %v5016 = vld [vmem:[%s1254 + $0x60] sm:$0xf]
        %v5017 = vld [vmem:[%s1254 + $0x64] sm:$0xf]
        %v5018 = vld [vmem:[%s1254 + $0x6c] sm:$0xf]
        %v5019 = vld [vmem:[%s1254 + $0x70] sm:$0xf]
        %v5020 = vld [vmem:[%s1254 + $0x78] sm:$0xf]
        %v5021 = vld [vmem:[%s1254 + $0x7c] sm:$0xf]
        %v5022 = vld [vmem:[%s1254 + $0x84] sm:$0xf]
        %v5023 = vld [vmem:[%s1254 + $0x88] sm:$0xf]
        %v5024 = vld [vmem:[%s1254 + $0x90] sm:$0xf]
        %v5025 = vld [vmem:[%s1254 + $0x94] sm:$0xf]
        %v5026 = vld [vmem:[%s1254 + $0x9c] sm:$0xf]
        %v5027 = vld [vmem:[%s1254 + $0xa0] sm:$0xf]
        %v5028 = vld [vmem:[%s1254 + $0xa8] sm:$0xf]
        %v5029 = vld [vmem:[%s1254 + $0xac] sm:$0xf]
        %v5030 = vld [vmem:[%s1254 + $0xb4] sm:$0xf]
        %v5031 = vld [vmem:[%s1254 + $0xb8] sm:$0xf]
        %v5032 = vld [vmem:[%s1254 + $0x8] sm:$0x1]
        %v5033 = vld [vmem:[%s1254 + $0x14] sm:$0x1]
        %v5034 = vld [vmem:[%s1254 + $0x20] sm:$0x1]
        %v5035 = vld [vmem:[%s1254 + $0x2c] sm:$0x1]
        %v5036 = vld [vmem:[%s1254 + $0x38] sm:$0x1]
        %v5037 = vld [vmem:[%s1254 + $0x44] sm:$0x1]
        %v5038 = vld [vmem:[%s1254 + $0x50] sm:$0x1]
        %v5039 = vld [vmem:[%s1254 + $0x5c] sm:$0x1]
        %v5040 = vld [vmem:[%s1254 + $0x68] sm:$0x1]
        %v5041 = vld [vmem:[%s1254 + $0x74] sm:$0x1]
        %v5042 = vld [vmem:[%s1254 + $0x80] sm:$0x1]
        %v5043 = vld [vmem:[%s1254 + $0x8c] sm:$0x1]
        %v5044 = vld [vmem:[%s1254 + $0x98] sm:$0x1]
        %v5045 = vld [vmem:[%s1254 + $0xa4] sm:$0x1]
        %v5046 = vld [vmem:[%s1254 + $0xb0] sm:$0x1]
        %v5047 = vld [vmem:[%s1254 + $0xbc] sm:$0x1]
        %v5049 = vshrl.u32 %v5000, 16
        %v5051 = vrot.slane %v5049, 4
        %v5052 = vshll.u32 %v5000, 16
        %v5054 = vrot.slane %v5052, 5
        %v5055 = vor.u32 %v5051, %v5054
        %v5056 = vrot.slane %v5055, 4
        %v5058 = vshll.u32 %v5001, 16
        %v5060 = vrot.slane %v5058, 5
        %v5061 = vsel %vm1354, %v5056, %v5060
        %v5062 = vshrl.u32 %v5001, 16
        %v5064 = vrot.slane %v5062, 4
        %v5065 = vor.u32 %v5064, %v5060
        %v5066 = vrot.slane %v5065, 4
        %v5068 = vshll.u32 %v5032, 16
        %v5070 = vrot.slane %v5068, 5
        %v5071 = vsel %vm1354, %v5066, %v5070
        %v5073 = vshrl.u32 %v5002, 16
        %v5075 = vrot.slane %v5073, 4
        %v5076 = vshll.u32 %v5002, 16
        %v5078 = vrot.slane %v5076, 5
        %v5079 = vor.u32 %v5075, %v5078
        %v5080 = vrot.slane %v5079, 4
        %v5082 = vshll.u32 %v5003, 16
        %v5084 = vrot.slane %v5082, 5
        %v5085 = vsel %vm1354, %v5080, %v5084
        %v5086 = vshrl.u32 %v5003, 16
        %v5088 = vrot.slane %v5086, 4
        %v5089 = vor.u32 %v5088, %v5084
        %v5090 = vrot.slane %v5089, 4
        %v5092 = vshll.u32 %v5033, 16
        %v5094 = vrot.slane %v5092, 5
        %v5095 = vsel %vm1354, %v5090, %v5094
        %v5097 = vshrl.u32 %v5004, 16
        %v5099 = vrot.slane %v5097, 4
        %v5100 = vshll.u32 %v5004, 16
        %v5102 = vrot.slane %v5100, 5
        %v5103 = vor.u32 %v5099, %v5102
        %v5104 = vrot.slane %v5103, 4
        %v5106 = vshll.u32 %v5005, 16
        %v5108 = vrot.slane %v5106, 5
        %v5109 = vsel %vm1354, %v5104, %v5108
        %v5110 = vshrl.u32 %v5005, 16
        %v5112 = vrot.slane %v5110, 4
        %v5113 = vor.u32 %v5112, %v5108
        %v5114 = vrot.slane %v5113, 4
        %v5116 = vshll.u32 %v5034, 16
        %v5118 = vrot.slane %v5116, 5
        %v5119 = vsel %vm1354, %v5114, %v5118
        %v5121 = vshrl.u32 %v5006, 16
        %v5123 = vrot.slane %v5121, 4
        %v5124 = vshll.u32 %v5006, 16
        %v5126 = vrot.slane %v5124, 5
        %v5127 = vor.u32 %v5123, %v5126
        %v5128 = vrot.slane %v5127, 4
        %v5130 = vshll.u32 %v5007, 16
        %v5132 = vrot.slane %v5130, 5
        %v5133 = vsel %vm1354, %v5128, %v5132
        %v5134 = vshrl.u32 %v5007, 16
        %v5136 = vrot.slane %v5134, 4
        %v5137 = vor.u32 %v5136, %v5132
        %v5138 = vrot.slane %v5137, 4
        %v5140 = vshll.u32 %v5035, 16
        %v5142 = vrot.slane %v5140, 5
        %v5143 = vsel %vm1354, %v5138, %v5142
        %v5145 = vshrl.u32 %v5008, 16
        %v5147 = vrot.slane %v5145, 4
        %v5148 = vshll.u32 %v5008, 16
        %v5150 = vrot.slane %v5148, 5
        %v5151 = vor.u32 %v5147, %v5150
        %v5152 = vrot.slane %v5151, 4
        %v5154 = vshll.u32 %v5009, 16
        %v5156 = vrot.slane %v5154, 5
        %v5157 = vsel %vm1354, %v5152, %v5156
        %v5158 = vshrl.u32 %v5009, 16
        %v5160 = vrot.slane %v5158, 4
        %v5161 = vor.u32 %v5160, %v5156
        %v5162 = vrot.slane %v5161, 4
        %v5164 = vshll.u32 %v5036, 16
        %v5166 = vrot.slane %v5164, 5
        %v5167 = vsel %vm1354, %v5162, %v5166
        %v5169 = vshrl.u32 %v5010, 16
        %v5171 = vrot.slane %v5169, 4
        %v5172 = vshll.u32 %v5010, 16
        %v5174 = vrot.slane %v5172, 5
        %v5175 = vor.u32 %v5171, %v5174
        %v5176 = vrot.slane %v5175, 4
        %v5178 = vshll.u32 %v5011, 16
        %v5180 = vrot.slane %v5178, 5
        %v5181 = vsel %vm1354, %v5176, %v5180
        %v5182 = vshrl.u32 %v5011, 16
        %v5184 = vrot.slane %v5182, 4
        %v5185 = vor.u32 %v5184, %v5180
        %v5186 = vrot.slane %v5185, 4
        %v5188 = vshll.u32 %v5037, 16
        %v5190 = vrot.slane %v5188, 5
        %v5191 = vsel %vm1354, %v5186, %v5190
        %v5193 = vshrl.u32 %v5012, 16
        %v5195 = vrot.slane %v5193, 4
        %v5196 = vshll.u32 %v5012, 16
        %v5198 = vrot.slane %v5196, 5
        %v5199 = vor.u32 %v5195, %v5198
        %v5200 = vrot.slane %v5199, 4
        %v5202 = vshll.u32 %v5013, 16
        %v5204 = vrot.slane %v5202, 5
        %v5205 = vsel %vm1354, %v5200, %v5204
        %v5206 = vshrl.u32 %v5013, 16
        %v5208 = vrot.slane %v5206, 4
        %v5209 = vor.u32 %v5208, %v5204
        %v5210 = vrot.slane %v5209, 4
        %v5212 = vshll.u32 %v5038, 16
        %v5214 = vrot.slane %v5212, 5
        %v5215 = vsel %vm1354, %v5210, %v5214
        %v5217 = vshrl.u32 %v5014, 16
        %v5219 = vrot.slane %v5217, 4
        %v5220 = vshll.u32 %v5014, 16
        %v5222 = vrot.slane %v5220, 5
        %v5223 = vor.u32 %v5219, %v5222
        %v5224 = vrot.slane %v5223, 4
        %v5226 = vshll.u32 %v5015, 16
        %v5228 = vrot.slane %v5226, 5
        %v5229 = vsel %vm1354, %v5224, %v5228
        %v5230 = vshrl.u32 %v5015, 16
        %v5232 = vrot.slane %v5230, 4
        %v5233 = vor.u32 %v5232, %v5228
        %v5234 = vrot.slane %v5233, 4
        %v5236 = vshll.u32 %v5039, 16
        %v5238 = vrot.slane %v5236, 5
        %v5239 = vsel %vm1354, %v5234, %v5238
        %v5241 = vshrl.u32 %v5016, 16
        %v5243 = vrot.slane %v5241, 4
        %v5244 = vshll.u32 %v5016, 16
        %v5246 = vrot.slane %v5244, 5
        %v5247 = vor.u32 %v5243, %v5246
        %v5248 = vrot.slane %v5247, 4
        %v5250 = vshll.u32 %v5017, 16
        %v5252 = vrot.slane %v5250, 5
        %v5253 = vsel %vm1354, %v5248, %v5252
        %v5254 = vshrl.u32 %v5017, 16
        %v5256 = vrot.slane %v5254, 4
        %v5257 = vor.u32 %v5256, %v5252
        %v5258 = vrot.slane %v5257, 4
        %v5260 = vshll.u32 %v5040, 16
        %v5262 = vrot.slane %v5260, 5
        %v5263 = vsel %vm1354, %v5258, %v5262
        %v5265 = vshrl.u32 %v5018, 16
        %v5267 = vrot.slane %v5265, 4
        %v5268 = vshll.u32 %v5018, 16
        %v5270 = vrot.slane %v5268, 5
        %v5271 = vor.u32 %v5267, %v5270
        %v5272 = vrot.slane %v5271, 4
        %v5274 = vshll.u32 %v5019, 16
        %v5276 = vrot.slane %v5274, 5
        %v5277 = vsel %vm1354, %v5272, %v5276
        %v5278 = vshrl.u32 %v5019, 16
        %v5280 = vrot.slane %v5278, 4
        %v5281 = vor.u32 %v5280, %v5276
        %v5282 = vrot.slane %v5281, 4
        %v5284 = vshll.u32 %v5041, 16
        %v5286 = vrot.slane %v5284, 5
        %v5287 = vsel %vm1354, %v5282, %v5286
        %v5289 = vshrl.u32 %v5020, 16
        %v5291 = vrot.slane %v5289, 4
        %v5292 = vshll.u32 %v5020, 16
        %v5294 = vrot.slane %v5292, 5
        %v5295 = vor.u32 %v5291, %v5294
        %v5296 = vrot.slane %v5295, 4
        %v5298 = vshll.u32 %v5021, 16
        %v5300 = vrot.slane %v5298, 5
        %v5301 = vsel %vm1354, %v5296, %v5300
        %v5302 = vshrl.u32 %v5021, 16
        %v5304 = vrot.slane %v5302, 4
        %v5305 = vor.u32 %v5304, %v5300
        %v5306 = vrot.slane %v5305, 4
        %v5308 = vshll.u32 %v5042, 16
        %v5310 = vrot.slane %v5308, 5
        %v5311 = vsel %vm1354, %v5306, %v5310
        %v5313 = vshrl.u32 %v5022, 16
        %v5315 = vrot.slane %v5313, 4
        %v5316 = vshll.u32 %v5022, 16
        %v5318 = vrot.slane %v5316, 5
        %v5319 = vor.u32 %v5315, %v5318
        %v5320 = vrot.slane %v5319, 4
        %v5322 = vshll.u32 %v5023, 16
        %v5324 = vrot.slane %v5322, 5
        %v5325 = vsel %vm1354, %v5320, %v5324
        %v5326 = vshrl.u32 %v5023, 16
        %v5328 = vrot.slane %v5326, 4
        %v5329 = vor.u32 %v5328, %v5324
        %v5330 = vrot.slane %v5329, 4
        %v5332 = vshll.u32 %v5043, 16
        %v5334 = vrot.slane %v5332, 5
        %v5335 = vsel %vm1354, %v5330, %v5334
        %v5337 = vshrl.u32 %v5024, 16
        %v5339 = vrot.slane %v5337, 4
        %v5340 = vshll.u32 %v5024, 16
        %v5342 = vrot.slane %v5340, 5
        %v5343 = vor.u32 %v5339, %v5342
        %v5344 = vrot.slane %v5343, 4
        %v5346 = vshll.u32 %v5025, 16
        %v5348 = vrot.slane %v5346, 5
        %v5349 = vsel %vm1354, %v5344, %v5348
        %v5350 = vshrl.u32 %v5025, 16
        %v5352 = vrot.slane %v5350, 4
        %v5353 = vor.u32 %v5352, %v5348
        %v5354 = vrot.slane %v5353, 4
        %v5356 = vshll.u32 %v5044, 16
        %v5358 = vrot.slane %v5356, 5
        %v5359 = vsel %vm1354, %v5354, %v5358
        %v5361 = vshrl.u32 %v5026, 16
        %v5363 = vrot.slane %v5361, 4
        %v5364 = vshll.u32 %v5026, 16
        %v5366 = vrot.slane %v5364, 5
        %v5367 = vor.u32 %v5363, %v5366
        %v5368 = vrot.slane %v5367, 4
        %v5370 = vshll.u32 %v5027, 16
        %v5372 = vrot.slane %v5370, 5
        %v5373 = vsel %vm1354, %v5368, %v5372
        %v5374 = vshrl.u32 %v5027, 16
        %v5376 = vrot.slane %v5374, 4
        %v5377 = vor.u32 %v5376, %v5372
        %v5378 = vrot.slane %v5377, 4
        %v5380 = vshll.u32 %v5045, 16
        %v5382 = vrot.slane %v5380, 5
        %v5383 = vsel %vm1354, %v5378, %v5382
        %v5385 = vshrl.u32 %v5028, 16
        %v5387 = vrot.slane %v5385, 4
        %v5388 = vshll.u32 %v5028, 16
        %v5390 = vrot.slane %v5388, 5
        %v5391 = vor.u32 %v5387, %v5390
        %v5392 = vrot.slane %v5391, 4
        %v5394 = vshll.u32 %v5029, 16
        %v5396 = vrot.slane %v5394, 5
        %v5397 = vsel %vm1354, %v5392, %v5396
        %v5398 = vshrl.u32 %v5029, 16
        %v5400 = vrot.slane %v5398, 4
        %v5401 = vor.u32 %v5400, %v5396
        %v5402 = vrot.slane %v5401, 4
        %v5404 = vshll.u32 %v5046, 16
        %v5406 = vrot.slane %v5404, 5
        %v5407 = vsel %vm1354, %v5402, %v5406
        %v5409 = vshrl.u32 %v5030, 16
        %v5411 = vrot.slane %v5409, 4
        %v5412 = vshll.u32 %v5030, 16
        %v5414 = vrot.slane %v5412, 5
        %v5415 = vor.u32 %v5411, %v5414
        %v5416 = vrot.slane %v5415, 4
        %v5418 = vshll.u32 %v5031, 16
        %v5420 = vrot.slane %v5418, 5
        %v5421 = vsel %vm1354, %v5416, %v5420
        %v5422 = vshrl.u32 %v5031, 16
        %v5424 = vrot.slane %v5422, 4
        %v5425 = vor.u32 %v5424, %v5420
        %v5426 = vrot.slane %v5425, 4
        %v5428 = vshll.u32 %v5047, 16
        %v5430 = vrot.slane %v5428, 5
        %v5431 = vsel %vm1354, %v5426, %v5430
        %v5432 = vunpack.c.l.b16 %v4484
        %v5433 = vunpack.c.l.b16 %v4494
        %v5434 = vunpack.c.l.b16 %v4507
        %v5435 = vunpack.c.l.b16 %v4517
        %v5436 = vunpack.c.l.b16 %v4530
        %v5437 = vunpack.c.l.b16 %v4540
        %v5438 = vunpack.c.l.b16 %v4553
        %v5439 = vunpack.c.l.b16 %v4563
        %v5440 = vunpack.c.l.b16 %v4576
        %v5441 = vunpack.c.l.b16 %v4586
        %v5442 = vunpack.c.l.b16 %v4599
        %v5443 = vunpack.c.l.b16 %v4609
        %v5444 = vunpack.c.l.b16 %v4622
        %v5445 = vunpack.c.l.b16 %v4632
        %v5446 = vunpack.c.l.b16 %v4645
        %v5447 = vunpack.c.l.b16 %v4655
        %v5448 = vunpack.c.l.b16 %v4668
        %v5449 = vunpack.c.l.b16 %v4678
        %v5450 = vunpack.c.l.b16 %v4691
        %v5451 = vunpack.c.l.b16 %v4701
        %v5452 = vunpack.c.l.b16 %v4714
        %v5453 = vunpack.c.l.b16 %v4724
        %v5454 = vunpack.c.l.b16 %v4737
        %v5455 = vunpack.c.l.b16 %v4747
        %v5456 = vunpack.c.l.b16 %v4760
        %v5457 = vunpack.c.l.b16 %v4770
        %v5458 = vunpack.c.l.b16 %v4783
        %v5459 = vunpack.c.l.b16 %v4793
        %v5460 = vunpack.c.l.b16 %v4806
        %v5461 = vunpack.c.l.b16 %v4816
        %v5462 = vunpack.c.l.b16 %v4829
        %v5463 = vunpack.c.l.b16 %v4839
        %v5464 = vpack.c.b16 %v5433, %v5432
        %v5465 = vpack.c.b16 %v5435, %v5434
        %v5466 = vpack.c.b16 %v5437, %v5436
        %v5467 = vpack.c.b16 %v5439, %v5438
        %v5468 = vpack.c.b16 %v5441, %v5440
        %v5469 = vpack.c.b16 %v5443, %v5442
        %v5470 = vpack.c.b16 %v5445, %v5444
        %v5471 = vpack.c.b16 %v5447, %v5446
        %v5472 = vpack.c.b16 %v5449, %v5448
        %v5473 = vpack.c.b16 %v5451, %v5450
        %v5474 = vpack.c.b16 %v5453, %v5452
        %v5475 = vpack.c.b16 %v5455, %v5454
        %v5476 = vpack.c.b16 %v5457, %v5456
        %v5477 = vpack.c.b16 %v5459, %v5458
        %v5478 = vpack.c.b16 %v5461, %v5460
        %v5479 = vpack.c.b16 %v5463, %v5462
        %v5480 = vunpack.c.l.b16 %v4891
        %v5481 = vunpack.c.l.b16 %v4894
        %v5482 = vunpack.c.l.b16 %v4898
        %v5483 = vunpack.c.l.b16 %v4901
        %v5484 = vunpack.c.l.b16 %v4905
        %v5485 = vunpack.c.l.b16 %v4908
        %v5486 = vunpack.c.l.b16 %v4912
        %v5487 = vunpack.c.l.b16 %v4915
        %v5488 = vunpack.c.l.b16 %v4919
        %v5489 = vunpack.c.l.b16 %v4922
        %v5490 = vunpack.c.l.b16 %v4926
        %v5491 = vunpack.c.l.b16 %v4929
        %v5492 = vunpack.c.l.b16 %v4933
        %v5493 = vunpack.c.l.b16 %v4936
        %v5494 = vunpack.c.l.b16 %v4940
        %v5495 = vunpack.c.l.b16 %v4943
        %v5496 = vunpack.c.l.b16 %v4947
        %v5497 = vunpack.c.l.b16 %v4950
        %v5498 = vunpack.c.l.b16 %v4954
        %v5499 = vunpack.c.l.b16 %v4957
        %v5500 = vunpack.c.l.b16 %v4961
        %v5501 = vunpack.c.l.b16 %v4964
        %v5502 = vunpack.c.l.b16 %v4968
        %v5503 = vunpack.c.l.b16 %v4971
        %v5504 = vunpack.c.l.b16 %v4975
        %v5505 = vunpack.c.l.b16 %v4978
        %v5506 = vunpack.c.l.b16 %v4982
        %v5507 = vunpack.c.l.b16 %v4985
        %v5508 = vunpack.c.l.b16 %v4989
        %v5509 = vunpack.c.l.b16 %v4992
        %v5510 = vunpack.c.l.b16 %v4996
        %v5511 = vunpack.c.l.b16 %v4999
        %v5512 = vpack.c.b16 %v5481, %v5480
        %v5513 = vpack.c.b16 %v5483, %v5482
        %v5514 = vpack.c.b16 %v5485, %v5484
        %v5515 = vpack.c.b16 %v5487, %v5486
        %v5516 = vpack.c.b16 %v5489, %v5488
        %v5517 = vpack.c.b16 %v5491, %v5490
        %v5518 = vpack.c.b16 %v5493, %v5492
        %v5519 = vpack.c.b16 %v5495, %v5494
        %v5520 = vpack.c.b16 %v5497, %v5496
        %v5521 = vpack.c.b16 %v5499, %v5498
        %v5522 = vpack.c.b16 %v5501, %v5500
        %v5523 = vpack.c.b16 %v5503, %v5502
        %v5524 = vpack.c.b16 %v5505, %v5504
        %v5525 = vpack.c.b16 %v5507, %v5506
        %v5526 = vpack.c.b16 %v5509, %v5508
        %v5527 = vpack.c.b16 %v5511, %v5510
        %5528 = vrot.lane.b32.xlu0 %v5512, 64
        %v5529 = vpop.permute.xlu0 %5528
        %5530 = vrot.lane.b32.xlu0 %v5513, 64
        %v5531 = vpop.permute.xlu0 %5530
        %5532 = vrot.lane.b32.xlu0 %v5514, 64
        %v5533 = vpop.permute.xlu0 %5532
        %5534 = vrot.lane.b32.xlu0 %v5515, 64
        %v5535 = vpop.permute.xlu0 %5534
        %5536 = vrot.lane.b32.xlu0 %v5516, 64
        %v5537 = vpop.permute.xlu0 %5536
        %5538 = vrot.lane.b32.xlu0 %v5517, 64
        %v5539 = vpop.permute.xlu0 %5538
        %5540 = vrot.lane.b32.xlu0 %v5518, 64
        %v5541 = vpop.permute.xlu0 %5540
        %5542 = vrot.lane.b32.xlu0 %v5519, 64
        %v5543 = vpop.permute.xlu0 %5542
        %5544 = vrot.lane.b32.xlu0 %v5520, 64
        %v5545 = vpop.permute.xlu0 %5544
        %5546 = vrot.lane.b32.xlu0 %v5521, 64
        %v5547 = vpop.permute.xlu0 %5546
        %5548 = vrot.lane.b32.xlu0 %v5522, 64
        %v5549 = vpop.permute.xlu0 %5548
        %5550 = vrot.lane.b32.xlu0 %v5523, 64
        %v5551 = vpop.permute.xlu0 %5550
        %5552 = vrot.lane.b32.xlu0 %v5524, 64
        %v5553 = vpop.permute.xlu0 %5552
        %5554 = vrot.lane.b32.xlu0 %v5525, 64
        %v5555 = vpop.permute.xlu0 %5554
        %5556 = vrot.lane.b32.xlu0 %v5526, 64
        %v5557 = vpop.permute.xlu0 %5556
        %5558 = vrot.lane.b32.xlu0 %v5527, 64
        %v5559 = vpop.permute.xlu0 %5558
        %v5592 = vunpack.c.l.b16 %v5000
        %v5593 = vunpack.c.l.b16 %v5001
        %v5594 = vunpack.c.l.b16 %v5002
        %v5595 = vunpack.c.l.b16 %v5003
        %v5596 = vunpack.c.l.b16 %v5004
        %v5597 = vunpack.c.l.b16 %v5005
        %v5598 = vunpack.c.l.b16 %v5006
        %v5599 = vunpack.c.l.b16 %v5007
        %v5600 = vunpack.c.l.b16 %v5008
        %v5601 = vunpack.c.l.b16 %v5009
        %v5602 = vunpack.c.l.b16 %v5010
        %v5603 = vunpack.c.l.b16 %v5011
        %v5604 = vunpack.c.l.b16 %v5012
        %v5605 = vunpack.c.l.b16 %v5013
        %v5606 = vunpack.c.l.b16 %v5014
        %v5607 = vunpack.c.l.b16 %v5015
        %v5608 = vunpack.c.l.b16 %v5016
        %v5609 = vunpack.c.l.b16 %v5017
        %v5610 = vunpack.c.l.b16 %v5018
        %v5611 = vunpack.c.l.b16 %v5019
        %v5612 = vunpack.c.l.b16 %v5020
        %v5613 = vunpack.c.l.b16 %v5021
        %v5614 = vunpack.c.l.b16 %v5022
        %v5615 = vunpack.c.l.b16 %v5023
        %v5616 = vunpack.c.l.b16 %v5024
        %v5617 = vunpack.c.l.b16 %v5025
        %v5618 = vunpack.c.l.b16 %v5026
        %v5619 = vunpack.c.l.b16 %v5027
        %v5620 = vunpack.c.l.b16 %v5028
        %v5621 = vunpack.c.l.b16 %v5029
        %v5622 = vunpack.c.l.b16 %v5030
        %v5623 = vunpack.c.l.b16 %v5031
        %v5624 = vpack.c.b16 %v5593, %v5592
        %v5625 = vpack.c.b16 %v5595, %v5594
        %v5626 = vpack.c.b16 %v5597, %v5596
        %v5627 = vpack.c.b16 %v5599, %v5598
        %v5628 = vpack.c.b16 %v5601, %v5600
        %v5629 = vpack.c.b16 %v5603, %v5602
        %v5630 = vpack.c.b16 %v5605, %v5604
        %v5631 = vpack.c.b16 %v5607, %v5606
        %v5632 = vpack.c.b16 %v5609, %v5608
        %v5633 = vpack.c.b16 %v5611, %v5610
        %v5634 = vpack.c.b16 %v5613, %v5612
        %v5635 = vpack.c.b16 %v5615, %v5614
        %v5636 = vpack.c.b16 %v5617, %v5616
        %v5637 = vpack.c.b16 %v5619, %v5618
        %v5638 = vpack.c.b16 %v5621, %v5620
        %v5639 = vpack.c.b16 %v5623, %v5622
        %v5640 = vunpack.c.l.b16 %v5061
        %v5641 = vunpack.c.l.b16 %v5071
        %v5642 = vunpack.c.l.b16 %v5085
        %v5643 = vunpack.c.l.b16 %v5095
        %v5644 = vunpack.c.l.b16 %v5109
        %v5645 = vunpack.c.l.b16 %v5119
        %v5646 = vunpack.c.l.b16 %v5133
        %v5647 = vunpack.c.l.b16 %v5143
        %v5648 = vunpack.c.l.b16 %v5157
        %v5649 = vunpack.c.l.b16 %v5167
        %v5650 = vunpack.c.l.b16 %v5181
        %v5651 = vunpack.c.l.b16 %v5191
        %v5652 = vunpack.c.l.b16 %v5205
        %v5653 = vunpack.c.l.b16 %v5215
        %v5654 = vunpack.c.l.b16 %v5229
        %v5655 = vunpack.c.l.b16 %v5239
        %v5656 = vunpack.c.l.b16 %v5253
        %v5657 = vunpack.c.l.b16 %v5263
        %v5658 = vunpack.c.l.b16 %v5277
        %v5659 = vunpack.c.l.b16 %v5287
        %v5660 = vunpack.c.l.b16 %v5301
        %v5661 = vunpack.c.l.b16 %v5311
        %v5662 = vunpack.c.l.b16 %v5325
        %v5663 = vunpack.c.l.b16 %v5335
        %v5664 = vunpack.c.l.b16 %v5349
        %v5665 = vunpack.c.l.b16 %v5359
        %v5666 = vunpack.c.l.b16 %v5373
        %v5667 = vunpack.c.l.b16 %v5383
        %v5668 = vunpack.c.l.b16 %v5397
        %v5669 = vunpack.c.l.b16 %v5407
        %v5670 = vunpack.c.l.b16 %v5421
        %v5671 = vunpack.c.l.b16 %v5431
        %v5672 = vpack.c.b16 %v5641, %v5640
        %v5673 = vpack.c.b16 %v5643, %v5642
        %v5674 = vpack.c.b16 %v5645, %v5644
        %v5675 = vpack.c.b16 %v5647, %v5646
        %v5676 = vpack.c.b16 %v5649, %v5648
        %v5677 = vpack.c.b16 %v5651, %v5650
        %v5678 = vpack.c.b16 %v5653, %v5652
        %v5679 = vpack.c.b16 %v5655, %v5654
        %v5680 = vpack.c.b16 %v5657, %v5656
        %v5681 = vpack.c.b16 %v5659, %v5658
        %v5682 = vpack.c.b16 %v5661, %v5660
        %v5683 = vpack.c.b16 %v5663, %v5662
        %v5684 = vpack.c.b16 %v5665, %v5664
        %v5685 = vpack.c.b16 %v5667, %v5666
        %v5686 = vpack.c.b16 %v5669, %v5668
        %v5687 = vpack.c.b16 %v5671, %v5670
        %5688 = vrot.lane.b32.xlu0 %v5672, 64
        %v5689 = vpop.permute.xlu0 %5688
        %5690 = vrot.lane.b32.xlu0 %v5673, 64
        %v5691 = vpop.permute.xlu0 %5690
        %5692 = vrot.lane.b32.xlu0 %v5674, 64
        %v5693 = vpop.permute.xlu0 %5692
        %5694 = vrot.lane.b32.xlu0 %v5675, 64
        %v5695 = vpop.permute.xlu0 %5694
        %5696 = vrot.lane.b32.xlu0 %v5676, 64
        %v5697 = vpop.permute.xlu0 %5696
        %5698 = vrot.lane.b32.xlu0 %v5677, 64
        %v5699 = vpop.permute.xlu0 %5698
        %5700 = vrot.lane.b32.xlu0 %v5678, 64
        %v5701 = vpop.permute.xlu0 %5700
        %5702 = vrot.lane.b32.xlu0 %v5679, 64
        %v5703 = vpop.permute.xlu0 %5702
        %5704 = vrot.lane.b32.xlu0 %v5680, 64
        %v5705 = vpop.permute.xlu0 %5704
        %5706 = vrot.lane.b32.xlu0 %v5681, 64
        %v5707 = vpop.permute.xlu0 %5706
        %5708 = vrot.lane.b32.xlu0 %v5682, 64
        %v5709 = vpop.permute.xlu0 %5708
        %5710 = vrot.lane.b32.xlu0 %v5683, 64
        %v5711 = vpop.permute.xlu0 %5710
        %5712 = vrot.lane.b32.xlu0 %v5684, 64
        %v5713 = vpop.permute.xlu0 %5712
        %5714 = vrot.lane.b32.xlu0 %v5685, 64
        %v5715 = vpop.permute.xlu0 %5714
        %5716 = vrot.lane.b32.xlu0 %v5686, 64
        %v5717 = vpop.permute.xlu0 %5716
        %5718 = vrot.lane.b32.xlu0 %v5687, 64
        %v5719 = vpop.permute.xlu0 %5718
        %v5722 = vsel %vm2577, %v5464, %v5529
        %v5726 = vsel %vm2577, %v5465, %v5531
        %v5730 = vsel %vm2577, %v5466, %v5533
        %v5734 = vsel %vm2577, %v5467, %v5535
        %v5738 = vsel %vm2577, %v5468, %v5537
        %v5742 = vsel %vm2577, %v5469, %v5539
        %v5746 = vsel %vm2577, %v5470, %v5541
        %v5750 = vsel %vm2577, %v5471, %v5543
        %v5754 = vsel %vm2577, %v5472, %v5545
        %v5758 = vsel %vm2577, %v5473, %v5547
        %v5762 = vsel %vm2577, %v5474, %v5549
        %v5766 = vsel %vm2577, %v5475, %v5551
        %v5770 = vsel %vm2577, %v5476, %v5553
        %v5774 = vsel %vm2577, %v5477, %v5555
        %v5778 = vsel %vm2577, %v5478, %v5557
        %v5782 = vsel %vm2577, %v5479, %v5559
        %v5786 = vsel %vm2577, %v5624, %v5689
        %v5790 = vsel %vm2577, %v5625, %v5691
        %v5794 = vsel %vm2577, %v5626, %v5693
        %v5798 = vsel %vm2577, %v5627, %v5695
        %v5802 = vsel %vm2577, %v5628, %v5697
        %v5806 = vsel %vm2577, %v5629, %v5699
        %v5810 = vsel %vm2577, %v5630, %v5701
        %v5814 = vsel %vm2577, %v5631, %v5703
        %v5818 = vsel %vm2577, %v5632, %v5705
        %v5822 = vsel %vm2577, %v5633, %v5707
        %v5826 = vsel %vm2577, %v5634, %v5709
        %v5830 = vsel %vm2577, %v5635, %v5711
        %v5834 = vsel %vm2577, %v5636, %v5713
        %v5838 = vsel %vm2577, %v5637, %v5715
        %v5842 = vsel %vm2577, %v5638, %v5717
        %v5846 = vsel %vm2577, %v5639, %v5719
        %v5848 = vld [vmem:[%s4 + $0x100] sm:$0xf]
        %v5849 = vld [vmem:[%s4 + $0x104] sm:$0xf]
        %v5850 = vld [vmem:[%s4 + $0x108] sm:$0xf]
        %v5851 = vld [vmem:[%s4 + $0x10c] sm:$0xf]
        %v5852 = vld [vmem:[%s4 + $0x110] sm:$0xf]
        %v5853 = vld [vmem:[%s4 + $0x114] sm:$0xf]
        %v5854 = vld [vmem:[%s4 + $0x118] sm:$0xf]
        %v5855 = vld [vmem:[%s4 + $0x11c] sm:$0xf]
        %v5856 = vld [vmem:[%s4 + $0x120] sm:$0xf]
        %v5857 = vld [vmem:[%s4 + $0x124] sm:$0xf]
        %v5858 = vld [vmem:[%s4 + $0x128] sm:$0xf]
        %v5859 = vld [vmem:[%s4 + $0x12c] sm:$0xf]
        %v5860 = vld [vmem:[%s4 + $0x130] sm:$0xf]
        %v5861 = vld [vmem:[%s4 + $0x134] sm:$0xf]
        %v5862 = vld [vmem:[%s4 + $0x138] sm:$0xf]
        %v5863 = vld [vmem:[%s4 + $0x13c] sm:$0xf]
        %v5864 = vld [vmem:[%s4 + $0x140] sm:$0xf]
        %v5865 = vld [vmem:[%s4 + $0x144] sm:$0xf]
        %v5866 = vld [vmem:[%s4 + $0x148] sm:$0xf]
        %v5867 = vld [vmem:[%s4 + $0x14c] sm:$0xf]
        %v5868 = vld [vmem:[%s4 + $0x150] sm:$0xf]
        %v5869 = vld [vmem:[%s4 + $0x154] sm:$0xf]
        %v5870 = vld [vmem:[%s4 + $0x158] sm:$0xf]
        %v5871 = vld [vmem:[%s4 + $0x15c] sm:$0xf]
        %v5872 = vld [vmem:[%s4 + $0x160] sm:$0xf]
        %v5873 = vld [vmem:[%s4 + $0x164] sm:$0xf]
        %v5874 = vld [vmem:[%s4 + $0x168] sm:$0xf]
        %v5875 = vld [vmem:[%s4 + $0x16c] sm:$0xf]
        %v5876 = vld [vmem:[%s4 + $0x170] sm:$0xf]
        %v5877 = vld [vmem:[%s4 + $0x174] sm:$0xf]
        %v5878 = vld [vmem:[%s4 + $0x178] sm:$0xf]
        %v5879 = vld [vmem:[%s4 + $0x17c] sm:$0xf]
        %v5912 = vunpack.c.l.b16 %v5848
        %v5913 = vunpack.c.l.b16 %v5849
        %v5914 = vunpack.c.l.b16 %v5850
        %v5915 = vunpack.c.l.b16 %v5851
        %v5916 = vunpack.c.l.b16 %v5852
        %v5917 = vunpack.c.l.b16 %v5853
        %v5918 = vunpack.c.l.b16 %v5854
        %v5919 = vunpack.c.l.b16 %v5855
        %v5920 = vunpack.c.l.b16 %v5856
        %v5921 = vunpack.c.l.b16 %v5857
        %v5922 = vunpack.c.l.b16 %v5858
        %v5923 = vunpack.c.l.b16 %v5859
        %v5924 = vunpack.c.l.b16 %v5860
        %v5925 = vunpack.c.l.b16 %v5861
        %v5926 = vunpack.c.l.b16 %v5862
        %v5927 = vunpack.c.l.b16 %v5863
        %v5928 = vunpack.c.l.b16 %v5864
        %v5929 = vunpack.c.l.b16 %v5865
        %v5930 = vunpack.c.l.b16 %v5866
        %v5931 = vunpack.c.l.b16 %v5867
        %v5932 = vunpack.c.l.b16 %v5868
        %v5933 = vunpack.c.l.b16 %v5869
        %v5934 = vunpack.c.l.b16 %v5870
        %v5935 = vunpack.c.l.b16 %v5871
        %v5936 = vunpack.c.l.b16 %v5872
        %v5937 = vunpack.c.l.b16 %v5873
        %v5938 = vunpack.c.l.b16 %v5874
        %v5939 = vunpack.c.l.b16 %v5875
        %v5940 = vunpack.c.l.b16 %v5876
        %v5941 = vunpack.c.l.b16 %v5877
        %v5942 = vunpack.c.l.b16 %v5878
        %v5943 = vunpack.c.l.b16 %v5879
        %v5944 = vpack.c.b16 %v5913, %v5912
        %v5945 = vpack.c.b16 %v5915, %v5914
        %v5946 = vpack.c.b16 %v5917, %v5916
        %v5947 = vpack.c.b16 %v5919, %v5918
        %v5948 = vpack.c.b16 %v5921, %v5920
        %v5949 = vpack.c.b16 %v5923, %v5922
        %v5950 = vpack.c.b16 %v5925, %v5924
        %v5951 = vpack.c.b16 %v5927, %v5926
        %v5952 = vpack.c.b16 %v5929, %v5928
        %v5953 = vpack.c.b16 %v5931, %v5930
        %v5954 = vpack.c.b16 %v5933, %v5932
        %v5955 = vpack.c.b16 %v5935, %v5934
        %v5956 = vpack.c.b16 %v5937, %v5936
        %v5957 = vpack.c.b16 %v5939, %v5938
        %v5958 = vpack.c.b16 %v5941, %v5940
        %v5959 = vpack.c.b16 %v5943, %v5942
        %5976 = vmatprep.subr.bf16.mxu0 0
        %5977 = vmatpush1.bf16.msra.mxu0 %v5944
        %5978 = vmatprep.subr.bf16.mxu0 0
        %5979 = vmatpush1.bf16.msra.mxu0 %v5945
        %5980 = vmatprep.subr.bf16.mxu0 0
        %5981 = vmatpush1.bf16.msra.mxu0 %v5946
        %5982 = vmatprep.subr.bf16.mxu0 0
        %5983 = vmatpush1.bf16.msra.mxu0 %v5947
        %5984 = vmatprep.subr.bf16.mxu0 0
        %5985 = vmatpush1.bf16.msra.mxu0 %v5948
        %5986 = vmatprep.subr.bf16.mxu0 0
        %5987 = vmatpush1.bf16.msra.mxu0 %v5949
        %5988 = vmatprep.subr.bf16.mxu0 0
        %5989 = vmatpush1.bf16.msra.mxu0 %v5950
        %5990 = vmatprep.subr.bf16.mxu0 0
        %5991 = vmatpush1.bf16.msra.mxu0 %v5951
        %5992 = vmatprep.subr.bf16.mxu0 0
        %5993 = vmatpush1.bf16.msra.mxu0 %v5952
        %5994 = vmatprep.subr.bf16.mxu0 0
        %5995 = vmatpush1.bf16.msra.mxu0 %v5953
        %5996 = vmatprep.subr.bf16.mxu0 0
        %5997 = vmatpush1.bf16.msra.mxu0 %v5954
        %5998 = vmatprep.subr.bf16.mxu0 0
        %5999 = vmatpush1.bf16.msra.mxu0 %v5955
        %6000 = vmatprep.subr.bf16.mxu0 0
        %6001 = vmatpush1.bf16.msra.mxu0 %v5956
        %6002 = vmatprep.subr.bf16.mxu0 0
        %6003 = vmatpush1.bf16.msra.mxu0 %v5957
        %6004 = vmatprep.subr.bf16.mxu0 0
        %6005 = vmatpush1.bf16.msra.mxu0 %v5958
        %6006 = vmatprep.subr.bf16.mxu0 0
        %6007 = vmatpush1.bf16.msra.mxu0 %v5959
        %6008 = vmatprep.mubr.bf16.mxu0 %v5786
        %6009 = vmatmul.mubr.bf16.gmra.mrb[0].mxu0 %v5722
        %v6010 = vpop.f32.mrb[0].mxu0
        %v6011 = vadd.f32 0.0, %v6010
        %v6012 = vpop.f32.mrb[0].mxu0
        %v6013 = vpop.f32.mrb[0].mxu0
        %v6014 = vadd.f32 0.0, %v6013
        %v6015 = vpop.f32.mrb[0].mxu0
        %6016 = vmatprep.mubr.bf16.mxu0 %v5790
        %6017 = vmatmul.mubr.bf16.gmra.mrb[0].mxu0 %v5726
        %v6018 = vpop.f32.mrb[0].mxu0
        %v6019 = vadd.f32 0.0, %v6018
        %v6020 = vpop.f32.mrb[0].mxu0
        %v6021 = vpop.f32.mrb[0].mxu0
        %v6022 = vadd.f32 0.0, %v6021
        %v6023 = vpop.f32.mrb[0].mxu0
        %6024 = vmatprep.mubr.bf16.mxu0 %v5794
        %6025 = vmatmul.mubr.bf16.gmra.mrb[0].mxu0 %v5730
        %v6026 = vpop.f32.mrb[0].mxu0
        %v6027 = vadd.f32 0.0, %v6026
        %v6028 = vpop.f32.mrb[0].mxu0
        %v6029 = vpop.f32.mrb[0].mxu0
        %v6030 = vadd.f32 0.0, %v6029
        %v6031 = vpop.f32.mrb[0].mxu0
        %6032 = vmatprep.mubr.bf16.mxu0 %v5798
        %6033 = vmatmul.mubr.bf16.gmra.mrb[0].mxu0 %v5734
        %v6034 = vpop.f32.mrb[0].mxu0
        %v6035 = vadd.f32 0.0, %v6034
        %v6036 = vpop.f32.mrb[0].mxu0
        %v6037 = vpop.f32.mrb[0].mxu0
        %v6038 = vadd.f32 0.0, %v6037
        %v6039 = vpop.f32.mrb[0].mxu0
        %6040 = vmatprep.mubr.bf16.mxu0 %v5802
        %6041 = vmatmul.mubr.bf16.gmra.mrb[0].mxu0 %v5738
        %v6042 = vpop.f32.mrb[0].mxu0
        %v6043 = vadd.f32 0.0, %v6042
        %v6044 = vpop.f32.mrb[0].mxu0
        %v6045 = vpop.f32.mrb[0].mxu0
        %v6046 = vadd.f32 0.0, %v6045
        %v6047 = vpop.f32.mrb[0].mxu0
        %6048 = vmatprep.mubr.bf16.mxu0 %v5806
        %6049 = vmatmul.mubr.bf16.gmra.mrb[0].mxu0 %v5742
        %v6050 = vpop.f32.mrb[0].mxu0
        %v6051 = vadd.f32 0.0, %v6050
        %v6052 = vpop.f32.mrb[0].mxu0
        %v6053 = vpop.f32.mrb[0].mxu0
        %v6054 = vadd.f32 0.0, %v6053
        %v6055 = vpop.f32.mrb[0].mxu0
        %6056 = vmatprep.mubr.bf16.mxu0 %v5810
        %6057 = vmatmul.mubr.bf16.gmra.mrb[0].mxu0 %v5746
        %v6058 = vpop.f32.mrb[0].mxu0
        %v6059 = vadd.f32 0.0, %v6058
        %v6060 = vpop.f32.mrb[0].mxu0
        %v6061 = vpop.f32.mrb[0].mxu0
        %v6062 = vadd.f32 0.0, %v6061
        %v6063 = vpop.f32.mrb[0].mxu0
        %6064 = vmatprep.mubr.bf16.mxu0 %v5814
        %6065 = vmatmul.mubr.bf16.gmra.mrb[0].mxu0 %v5750
        %v6066 = vpop.f32.mrb[0].mxu0
        %v6067 = vadd.f32 0.0, %v6066
        %v6068 = vpop.f32.mrb[0].mxu0
        %v6069 = vpop.f32.mrb[0].mxu0
        %v6070 = vadd.f32 0.0, %v6069
        %v6071 = vpop.f32.mrb[0].mxu0
        %6072 = vmatprep.mubr.bf16.mxu0 %v5818
        %6073 = vmatmul.mubr.bf16.gmra.mrb[0].mxu0 %v5754
        %v6074 = vpop.f32.mrb[0].mxu0
        %v6075 = vadd.f32 0.0, %v6074
        %v6076 = vpop.f32.mrb[0].mxu0
        %v6077 = vpop.f32.mrb[0].mxu0
        %v6078 = vadd.f32 0.0, %v6077
        %v6079 = vpop.f32.mrb[0].mxu0
        %6080 = vmatprep.mubr.bf16.mxu0 %v5822
        %6081 = vmatmul.mubr.bf16.gmra.mrb[0].mxu0 %v5758
        %v6082 = vpop.f32.mrb[0].mxu0
        %v6083 = vadd.f32 0.0, %v6082
        %v6084 = vpop.f32.mrb[0].mxu0
        %v6085 = vpop.f32.mrb[0].mxu0
        %v6086 = vadd.f32 0.0, %v6085
        %v6087 = vpop.f32.mrb[0].mxu0
        %6088 = vmatprep.mubr.bf16.mxu0 %v5826
        %6089 = vmatmul.mubr.bf16.gmra.mrb[0].mxu0 %v5762
        %v6090 = vpop.f32.mrb[0].mxu0
        %v6091 = vadd.f32 0.0, %v6090
        %v6092 = vpop.f32.mrb[0].mxu0
        %v6093 = vpop.f32.mrb[0].mxu0
        %v6094 = vadd.f32 0.0, %v6093
        %v6095 = vpop.f32.mrb[0].mxu0
        %6096 = vmatprep.mubr.bf16.mxu0 %v5830
        %6097 = vmatmul.mubr.bf16.gmra.mrb[0].mxu0 %v5766
        %v6098 = vpop.f32.mrb[0].mxu0
        %v6099 = vadd.f32 0.0, %v6098
        %v6100 = vpop.f32.mrb[0].mxu0
        %v6101 = vpop.f32.mrb[0].mxu0
        %v6102 = vadd.f32 0.0, %v6101
        %v6103 = vpop.f32.mrb[0].mxu0
        %6104 = vmatprep.mubr.bf16.mxu0 %v5834
        %6105 = vmatmul.mubr.bf16.gmra.mrb[0].mxu0 %v5770
        %v6106 = vpop.f32.mrb[0].mxu0
        %v6107 = vadd.f32 0.0, %v6106
        %v6108 = vpop.f32.mrb[0].mxu0
        %v6109 = vpop.f32.mrb[0].mxu0
        %v6110 = vadd.f32 0.0, %v6109
        %v6111 = vpop.f32.mrb[0].mxu0
        %6112 = vmatprep.mubr.bf16.mxu0 %v5838
        %6113 = vmatmul.mubr.bf16.gmra.mrb[0].mxu0 %v5774
        %v6114 = vpop.f32.mrb[0].mxu0
        %v6115 = vadd.f32 0.0, %v6114
        %v6116 = vpop.f32.mrb[0].mxu0
        %v6117 = vpop.f32.mrb[0].mxu0
        %v6118 = vadd.f32 0.0, %v6117
        %v6119 = vpop.f32.mrb[0].mxu0
        %6120 = vmatprep.mubr.bf16.mxu0 %v5842
        %6121 = vmatmul.mubr.bf16.gmra.mrb[0].mxu0 %v5778
        %v6122 = vpop.f32.mrb[0].mxu0
        %v6123 = vadd.f32 0.0, %v6122
        %v6124 = vpop.f32.mrb[0].mxu0
        %v6125 = vpop.f32.mrb[0].mxu0
        %v6126 = vadd.f32 0.0, %v6125
        %v6127 = vpop.f32.mrb[0].mxu0
        %6128 = vmatprep.mubr.bf16.mxu0 %v5846
        %6129 = vmatmul.mubr.bf16.gmra.mrb[0].mxu0 %v5782
        %v6130 = vpop.f32.mrb[0].mxu0
        %v6131 = vadd.f32 0.0, %v6130
        %v6132 = vpop.f32.mrb[0].mxu0
        %v6133 = vpop.f32.mrb[0].mxu0
        %v6134 = vadd.f32 0.0, %v6133
        %v6135 = vpop.f32.mrb[0].mxu0
        %6136 = vdwg.mxu0
        %v6137 = vadd.f32 %v4330, %v6011
        %v6138 = vadd.f32 %v4333, %v6014
        %v6139 = vadd.f32 %v4338, %v6019
        %v6140 = vadd.f32 %v4341, %v6022
        %v6141 = vadd.f32 %v4346, %v6027
        %v6142 = vadd.f32 %v4349, %v6030
        %v6143 = vadd.f32 %v4354, %v6035
        %v6144 = vadd.f32 %v4357, %v6038
        %v6145 = vadd.f32 %v4362, %v6043
        %v6146 = vadd.f32 %v4365, %v6046
        %v6147 = vadd.f32 %v4370, %v6051
        %v6148 = vadd.f32 %v4373, %v6054
        %v6149 = vadd.f32 %v4378, %v6059
        %v6150 = vadd.f32 %v4381, %v6062
        %v6151 = vadd.f32 %v4386, %v6067
        %v6152 = vadd.f32 %v4389, %v6070
        %v6153 = vadd.f32 %v4394, %v6075
        %v6154 = vadd.f32 %v4397, %v6078
        %v6155 = vadd.f32 %v4402, %v6083
        %v6156 = vadd.f32 %v4405, %v6086
        %v6157 = vadd.f32 %v4410, %v6091
        %v6158 = vadd.f32 %v4413, %v6094
        %v6159 = vadd.f32 %v4418, %v6099
        %v6160 = vadd.f32 %v4421, %v6102
        %v6161 = vadd.f32 %v4426, %v6107
        %v6162 = vadd.f32 %v4429, %v6110
        %v6163 = vadd.f32 %v4434, %v6115
        %v6164 = vadd.f32 %v4437, %v6118
        %v6165 = vadd.f32 %v4442, %v6123
        %v6166 = vadd.f32 %v4445, %v6126
        %v6167 = vadd.f32 %v4450, %v6131
        %v6168 = vadd.f32 %v4453, %v6134
        %v6169 = vld [vmem:[%s1254] sm:$0xe]
        %v6170 = vld [vmem:[%s1254 + $0xc] sm:$0xe]
        %v6171 = vld [vmem:[%s1254 + $0x18] sm:$0xe]
        %v6172 = vld [vmem:[%s1254 + $0x24] sm:$0xe]
        %v6173 = vld [vmem:[%s1254 + $0x30] sm:$0xe]
        %v6174 = vld [vmem:[%s1254 + $0x3c] sm:$0xe]
        %v6175 = vld [vmem:[%s1254 + $0x48] sm:$0xe]
        %v6176 = vld [vmem:[%s1254 + $0x54] sm:$0xe]
        %v6177 = vld [vmem:[%s1254 + $0x60] sm:$0xe]
        %v6178 = vld [vmem:[%s1254 + $0x6c] sm:$0xe]
        %v6179 = vld [vmem:[%s1254 + $0x78] sm:$0xe]
        %v6180 = vld [vmem:[%s1254 + $0x84] sm:$0xe]
        %v6181 = vld [vmem:[%s1254 + $0x90] sm:$0xe]
        %v6182 = vld [vmem:[%s1254 + $0x9c] sm:$0xe]
        %v6183 = vld [vmem:[%s1254 + $0xa8] sm:$0xe]
        %v6184 = vld [vmem:[%s1254 + $0xb4] sm:$0xe]
        %v6217 = vrot.slane %v6169, 5
        %v6218 = vrot.slane %v6217, 4
        %v6219 = vrot.slane %v5001, 5
        %v6220 = vsel %vm1805, %v6218, %v6219
        %v6221 = vrot.slane %v6219, 4
        %v6222 = vrot.slane %v5032, 5
        %v6223 = vsel %vm1805, %v6221, %v6222
        %v6224 = vrot.slane %v6170, 5
        %v6225 = vrot.slane %v6224, 4
        %v6226 = vrot.slane %v5003, 5
        %v6227 = vsel %vm1805, %v6225, %v6226
        %v6228 = vrot.slane %v6226, 4
        %v6229 = vrot.slane %v5033, 5
        %v6230 = vsel %vm1805, %v6228, %v6229
        %v6231 = vrot.slane %v6171, 5
        %v6232 = vrot.slane %v6231, 4
        %v6233 = vrot.slane %v5005, 5
        %v6234 = vsel %vm1805, %v6232, %v6233
        %v6235 = vrot.slane %v6233, 4
        %v6236 = vrot.slane %v5034, 5
        %v6237 = vsel %vm1805, %v6235, %v6236
        %v6238 = vrot.slane %v6172, 5
        %v6239 = vrot.slane %v6238, 4
        %v6240 = vrot.slane %v5007, 5
        %v6241 = vsel %vm1805, %v6239, %v6240
        %v6242 = vrot.slane %v6240, 4
        %v6243 = vrot.slane %v5035, 5
        %v6244 = vsel %vm1805, %v6242, %v6243
        %v6245 = vrot.slane %v6173, 5
        %v6246 = vrot.slane %v6245, 4
        %v6247 = vrot.slane %v5009, 5
        %v6248 = vsel %vm1805, %v6246, %v6247
        %v6249 = vrot.slane %v6247, 4
        %v6250 = vrot.slane %v5036, 5
        %v6251 = vsel %vm1805, %v6249, %v6250
        %v6252 = vrot.slane %v6174, 5
        %v6253 = vrot.slane %v6252, 4
        %v6254 = vrot.slane %v5011, 5
        %v6255 = vsel %vm1805, %v6253, %v6254
        %v6256 = vrot.slane %v6254, 4
        %v6257 = vrot.slane %v5037, 5
        %v6258 = vsel %vm1805, %v6256, %v6257
        %v6259 = vrot.slane %v6175, 5
        %v6260 = vrot.slane %v6259, 4
        %v6261 = vrot.slane %v5013, 5
        %v6262 = vsel %vm1805, %v6260, %v6261
        %v6263 = vrot.slane %v6261, 4
        %v6264 = vrot.slane %v5038, 5
        %v6265 = vsel %vm1805, %v6263, %v6264
        %v6266 = vrot.slane %v6176, 5
        %v6267 = vrot.slane %v6266, 4
        %v6268 = vrot.slane %v5015, 5
        %v6269 = vsel %vm1805, %v6267, %v6268
        %v6270 = vrot.slane %v6268, 4
        %v6271 = vrot.slane %v5039, 5
        %v6272 = vsel %vm1805, %v6270, %v6271
        %v6273 = vrot.slane %v6177, 5
        %v6274 = vrot.slane %v6273, 4
        %v6275 = vrot.slane %v5017, 5
        %v6276 = vsel %vm1805, %v6274, %v6275
        %v6277 = vrot.slane %v6275, 4
        %v6278 = vrot.slane %v5040, 5
        %v6279 = vsel %vm1805, %v6277, %v6278
        %v6280 = vrot.slane %v6178, 5
        %v6281 = vrot.slane %v6280, 4
        %v6282 = vrot.slane %v5019, 5
        %v6283 = vsel %vm1805, %v6281, %v6282
        %v6284 = vrot.slane %v6282, 4
        %v6285 = vrot.slane %v5041, 5
        %v6286 = vsel %vm1805, %v6284, %v6285
        %v6287 = vrot.slane %v6179, 5
        %v6288 = vrot.slane %v6287, 4
        %v6289 = vrot.slane %v5021, 5
        %v6290 = vsel %vm1805, %v6288, %v6289
        %v6291 = vrot.slane %v6289, 4
        %v6292 = vrot.slane %v5042, 5
        %v6293 = vsel %vm1805, %v6291, %v6292
        %v6294 = vrot.slane %v6180, 5
        %v6295 = vrot.slane %v6294, 4
        %v6296 = vrot.slane %v5023, 5
        %v6297 = vsel %vm1805, %v6295, %v6296
        %v6298 = vrot.slane %v6296, 4
        %v6299 = vrot.slane %v5043, 5
        %v6300 = vsel %vm1805, %v6298, %v6299
        %v6301 = vrot.slane %v6181, 5
        %v6302 = vrot.slane %v6301, 4
        %v6303 = vrot.slane %v5025, 5
        %v6304 = vsel %vm1805, %v6302, %v6303
        %v6305 = vrot.slane %v6303, 4
        %v6306 = vrot.slane %v5044, 5
        %v6307 = vsel %vm1805, %v6305, %v6306
        %v6308 = vrot.slane %v6182, 5
        %v6309 = vrot.slane %v6308, 4
        %v6310 = vrot.slane %v5027, 5
        %v6311 = vsel %vm1805, %v6309, %v6310
        %v6312 = vrot.slane %v6310, 4
        %v6313 = vrot.slane %v5045, 5
        %v6314 = vsel %vm1805, %v6312, %v6313
        %v6315 = vrot.slane %v6183, 5
        %v6316 = vrot.slane %v6315, 4
        %v6317 = vrot.slane %v5029, 5
        %v6318 = vsel %vm1805, %v6316, %v6317
        %v6319 = vrot.slane %v6317, 4
        %v6320 = vrot.slane %v5046, 5
        %v6321 = vsel %vm1805, %v6319, %v6320
        %v6322 = vrot.slane %v6184, 5
        %v6323 = vrot.slane %v6322, 4
        %v6324 = vrot.slane %v5031, 5
        %v6325 = vsel %vm1805, %v6323, %v6324
        %v6326 = vrot.slane %v6324, 4
        %v6327 = vrot.slane %v5047, 5
        %v6328 = vsel %vm1805, %v6326, %v6327
        %v6329 = vld [vmem:[%s1254 + $0x8] sm:$0x3]
        %v6330 = vld [vmem:[%s1254 + $0x14] sm:$0x3]
        %v6331 = vld [vmem:[%s1254 + $0x20] sm:$0x3]
        %v6332 = vld [vmem:[%s1254 + $0x2c] sm:$0x3]
        %v6333 = vld [vmem:[%s1254 + $0x38] sm:$0x3]
        %v6334 = vld [vmem:[%s1254 + $0x44] sm:$0x3]
        %v6335 = vld [vmem:[%s1254 + $0x50] sm:$0x3]
        %v6336 = vld [vmem:[%s1254 + $0x5c] sm:$0x3]
        %v6337 = vld [vmem:[%s1254 + $0x68] sm:$0x3]
        %v6338 = vld [vmem:[%s1254 + $0x74] sm:$0x3]
        %v6339 = vld [vmem:[%s1254 + $0x80] sm:$0x3]
        %v6340 = vld [vmem:[%s1254 + $0x8c] sm:$0x3]
        %v6341 = vld [vmem:[%s1254 + $0x98] sm:$0x3]
        %v6342 = vld [vmem:[%s1254 + $0xa4] sm:$0x3]
        %v6343 = vld [vmem:[%s1254 + $0xb0] sm:$0x3]
        %v6344 = vld [vmem:[%s1254 + $0xbc] sm:$0x3]
        %v6346 = vshrl.u32 %v6169, 16
        %v6348 = vrot.slane %v6346, 5
        %v6349 = vshll.u32 %v6169, 16
        %v6351 = vrot.slane %v6349, 6
        %v6352 = vor.u32 %v6348, %v6351
        %v6353 = vrot.slane %v6352, 4
        %v6354 = vrot.slane %v5062, 5
        %v6355 = vrot.slane %v5058, 6
        %v6356 = vor.u32 %v6354, %v6355
        %v6357 = vsel %vm1936, %v6353, %v6356
        %v6358 = vrot.slane %v6356, 4
        %v6360 = vshrl.u32 %v6329, 16
        %v6362 = vrot.slane %v6360, 5
        %v6363 = vshll.u32 %v6329, 16
        %v6365 = vrot.slane %v6363, 6
        %v6366 = vor.u32 %v6362, %v6365
        %v6367 = vsel %vm1936, %v6358, %v6366
        %v6369 = vshrl.u32 %v6170, 16
        %v6371 = vrot.slane %v6369, 5
        %v6372 = vshll.u32 %v6170, 16
        %v6374 = vrot.slane %v6372, 6
        %v6375 = vor.u32 %v6371, %v6374
        %v6376 = vrot.slane %v6375, 4
        %v6377 = vrot.slane %v5086, 5
        %v6378 = vrot.slane %v5082, 6
        %v6379 = vor.u32 %v6377, %v6378
        %v6380 = vsel %vm1936, %v6376, %v6379
        %v6381 = vrot.slane %v6379, 4
        %v6383 = vshrl.u32 %v6330, 16
        %v6385 = vrot.slane %v6383, 5
        %v6386 = vshll.u32 %v6330, 16
        %v6388 = vrot.slane %v6386, 6
        %v6389 = vor.u32 %v6385, %v6388
        %v6390 = vsel %vm1936, %v6381, %v6389
        %v6392 = vshrl.u32 %v6171, 16
        %v6394 = vrot.slane %v6392, 5
        %v6395 = vshll.u32 %v6171, 16
        %v6397 = vrot.slane %v6395, 6
        %v6398 = vor.u32 %v6394, %v6397
        %v6399 = vrot.slane %v6398, 4
        %v6400 = vrot.slane %v5110, 5
        %v6401 = vrot.slane %v5106, 6
        %v6402 = vor.u32 %v6400, %v6401
        %v6403 = vsel %vm1936, %v6399, %v6402
        %v6404 = vrot.slane %v6402, 4
        %v6406 = vshrl.u32 %v6331, 16
        %v6408 = vrot.slane %v6406, 5
        %v6409 = vshll.u32 %v6331, 16
        %v6411 = vrot.slane %v6409, 6
        %v6412 = vor.u32 %v6408, %v6411
        %v6413 = vsel %vm1936, %v6404, %v6412
        %v6415 = vshrl.u32 %v6172, 16
        %v6417 = vrot.slane %v6415, 5
        %v6418 = vshll.u32 %v6172, 16
        %v6420 = vrot.slane %v6418, 6
        %v6421 = vor.u32 %v6417, %v6420
        %v6422 = vrot.slane %v6421, 4
        %v6423 = vrot.slane %v5134, 5
        %v6424 = vrot.slane %v5130, 6
        %v6425 = vor.u32 %v6423, %v6424
        %v6426 = vsel %vm1936, %v6422, %v6425
        %v6427 = vrot.slane %v6425, 4
        %v6429 = vshrl.u32 %v6332, 16
        %v6431 = vrot.slane %v6429, 5
        %v6432 = vshll.u32 %v6332, 16
        %v6434 = vrot.slane %v6432, 6
        %v6435 = vor.u32 %v6431, %v6434
        %v6436 = vsel %vm1936, %v6427, %v6435
        %v6438 = vshrl.u32 %v6173, 16
        %v6440 = vrot.slane %v6438, 5
        %v6441 = vshll.u32 %v6173, 16
        %v6443 = vrot.slane %v6441, 6
        %v6444 = vor.u32 %v6440, %v6443
        %v6445 = vrot.slane %v6444, 4
        %v6446 = vrot.slane %v5158, 5
        %v6447 = vrot.slane %v5154, 6
        %v6448 = vor.u32 %v6446, %v6447
        %v6449 = vsel %vm1936, %v6445, %v6448
        %v6450 = vrot.slane %v6448, 4
        %v6452 = vshrl.u32 %v6333, 16
        %v6454 = vrot.slane %v6452, 5
        %v6455 = vshll.u32 %v6333, 16
        %v6457 = vrot.slane %v6455, 6
        %v6458 = vor.u32 %v6454, %v6457
        %v6459 = vsel %vm1936, %v6450, %v6458
        %v6461 = vshrl.u32 %v6174, 16
        %v6463 = vrot.slane %v6461, 5
        %v6464 = vshll.u32 %v6174, 16
        %v6466 = vrot.slane %v6464, 6
        %v6467 = vor.u32 %v6463, %v6466
        %v6468 = vrot.slane %v6467, 4
        %v6469 = vrot.slane %v5182, 5
        %v6470 = vrot.slane %v5178, 6
        %v6471 = vor.u32 %v6469, %v6470
        %v6472 = vsel %vm1936, %v6468, %v6471
        %v6473 = vrot.slane %v6471, 4
        %v6475 = vshrl.u32 %v6334, 16
        %v6477 = vrot.slane %v6475, 5
        %v6478 = vshll.u32 %v6334, 16
        %v6480 = vrot.slane %v6478, 6
        %v6481 = vor.u32 %v6477, %v6480
        %v6482 = vsel %vm1936, %v6473, %v6481
        %v6484 = vshrl.u32 %v6175, 16
        %v6486 = vrot.slane %v6484, 5
        %v6487 = vshll.u32 %v6175, 16
        %v6489 = vrot.slane %v6487, 6
        %v6490 = vor.u32 %v6486, %v6489
        %v6491 = vrot.slane %v6490, 4
        %v6492 = vrot.slane %v5206, 5
        %v6493 = vrot.slane %v5202, 6
        %v6494 = vor.u32 %v6492, %v6493
        %v6495 = vsel %vm1936, %v6491, %v6494
        %v6496 = vrot.slane %v6494, 4
        %v6498 = vshrl.u32 %v6335, 16
        %v6500 = vrot.slane %v6498, 5
        %v6501 = vshll.u32 %v6335, 16
        %v6503 = vrot.slane %v6501, 6
        %v6504 = vor.u32 %v6500, %v6503
        %v6505 = vsel %vm1936, %v6496, %v6504
        %v6507 = vshrl.u32 %v6176, 16
        %v6509 = vrot.slane %v6507, 5
        %v6510 = vshll.u32 %v6176, 16
        %v6512 = vrot.slane %v6510, 6
        %v6513 = vor.u32 %v6509, %v6512
        %v6514 = vrot.slane %v6513, 4
        %v6515 = vrot.slane %v5230, 5
        %v6516 = vrot.slane %v5226, 6
        %v6517 = vor.u32 %v6515, %v6516
        %v6518 = vsel %vm1936, %v6514, %v6517
        %v6519 = vrot.slane %v6517, 4
        %v6521 = vshrl.u32 %v6336, 16
        %v6523 = vrot.slane %v6521, 5
        %v6524 = vshll.u32 %v6336, 16
        %v6526 = vrot.slane %v6524, 6
        %v6527 = vor.u32 %v6523, %v6526
        %v6528 = vsel %vm1936, %v6519, %v6527
        %v6530 = vshrl.u32 %v6177, 16
        %v6532 = vrot.slane %v6530, 5
        %v6533 = vshll.u32 %v6177, 16
        %v6535 = vrot.slane %v6533, 6
        %v6536 = vor.u32 %v6532, %v6535
        %v6537 = vrot.slane %v6536, 4
        %v6538 = vrot.slane %v5254, 5
        %v6539 = vrot.slane %v5250, 6
        %v6540 = vor.u32 %v6538, %v6539
        %v6541 = vsel %vm1936, %v6537, %v6540
        %v6542 = vrot.slane %v6540, 4
        %v6544 = vshrl.u32 %v6337, 16
        %v6546 = vrot.slane %v6544, 5
        %v6547 = vshll.u32 %v6337, 16
        %v6549 = vrot.slane %v6547, 6
        %v6550 = vor.u32 %v6546, %v6549
        %v6551 = vsel %vm1936, %v6542, %v6550
        %v6553 = vshrl.u32 %v6178, 16
        %v6555 = vrot.slane %v6553, 5
        %v6556 = vshll.u32 %v6178, 16
        %v6558 = vrot.slane %v6556, 6
        %v6559 = vor.u32 %v6555, %v6558
        %v6560 = vrot.slane %v6559, 4
        %v6561 = vrot.slane %v5278, 5
        %v6562 = vrot.slane %v5274, 6
        %v6563 = vor.u32 %v6561, %v6562
        %v6564 = vsel %vm1936, %v6560, %v6563
        %v6565 = vrot.slane %v6563, 4
        %v6567 = vshrl.u32 %v6338, 16
        %v6569 = vrot.slane %v6567, 5
        %v6570 = vshll.u32 %v6338, 16
        %v6572 = vrot.slane %v6570, 6
        %v6573 = vor.u32 %v6569, %v6572
        %v6574 = vsel %vm1936, %v6565, %v6573
        %v6576 = vshrl.u32 %v6179, 16
        %v6578 = vrot.slane %v6576, 5
        %v6579 = vshll.u32 %v6179, 16
        %v6581 = vrot.slane %v6579, 6
        %v6582 = vor.u32 %v6578, %v6581
        %v6583 = vrot.slane %v6582, 4
        %v6584 = vrot.slane %v5302, 5
        %v6585 = vrot.slane %v5298, 6
        %v6586 = vor.u32 %v6584, %v6585
        %v6587 = vsel %vm1936, %v6583, %v6586
        %v6588 = vrot.slane %v6586, 4
        %v6590 = vshrl.u32 %v6339, 16
        %v6592 = vrot.slane %v6590, 5
        %v6593 = vshll.u32 %v6339, 16
        %v6595 = vrot.slane %v6593, 6
        %v6596 = vor.u32 %v6592, %v6595
        %v6597 = vsel %vm1936, %v6588, %v6596
        %v6599 = vshrl.u32 %v6180, 16
        %v6601 = vrot.slane %v6599, 5
        %v6602 = vshll.u32 %v6180, 16
        %v6604 = vrot.slane %v6602, 6
        %v6605 = vor.u32 %v6601, %v6604
        %v6606 = vrot.slane %v6605, 4
        %v6607 = vrot.slane %v5326, 5
        %v6608 = vrot.slane %v5322, 6
        %v6609 = vor.u32 %v6607, %v6608
        %v6610 = vsel %vm1936, %v6606, %v6609
        %v6611 = vrot.slane %v6609, 4
        %v6613 = vshrl.u32 %v6340, 16
        %v6615 = vrot.slane %v6613, 5
        %v6616 = vshll.u32 %v6340, 16
        %v6618 = vrot.slane %v6616, 6
        %v6619 = vor.u32 %v6615, %v6618
        %v6620 = vsel %vm1936, %v6611, %v6619
        %v6622 = vshrl.u32 %v6181, 16
        %v6624 = vrot.slane %v6622, 5
        %v6625 = vshll.u32 %v6181, 16
        %v6627 = vrot.slane %v6625, 6
        %v6628 = vor.u32 %v6624, %v6627
        %v6629 = vrot.slane %v6628, 4
        %v6630 = vrot.slane %v5350, 5
        %v6631 = vrot.slane %v5346, 6
        %v6632 = vor.u32 %v6630, %v6631
        %v6633 = vsel %vm1936, %v6629, %v6632
        %v6634 = vrot.slane %v6632, 4
        %v6636 = vshrl.u32 %v6341, 16
        %v6638 = vrot.slane %v6636, 5
        %v6639 = vshll.u32 %v6341, 16
        %v6641 = vrot.slane %v6639, 6
        %v6642 = vor.u32 %v6638, %v6641
        %v6643 = vsel %vm1936, %v6634, %v6642
        %v6645 = vshrl.u32 %v6182, 16
        %v6647 = vrot.slane %v6645, 5
        %v6648 = vshll.u32 %v6182, 16
        %v6650 = vrot.slane %v6648, 6
        %v6651 = vor.u32 %v6647, %v6650
        %v6652 = vrot.slane %v6651, 4
        %v6653 = vrot.slane %v5374, 5
        %v6654 = vrot.slane %v5370, 6
        %v6655 = vor.u32 %v6653, %v6654
        %v6656 = vsel %vm1936, %v6652, %v6655
        %v6657 = vrot.slane %v6655, 4
        %v6659 = vshrl.u32 %v6342, 16
        %v6661 = vrot.slane %v6659, 5
        %v6662 = vshll.u32 %v6342, 16
        %v6664 = vrot.slane %v6662, 6
        %v6665 = vor.u32 %v6661, %v6664
        %v6666 = vsel %vm1936, %v6657, %v6665
        %v6668 = vshrl.u32 %v6183, 16
        %v6670 = vrot.slane %v6668, 5
        %v6671 = vshll.u32 %v6183, 16
        %v6673 = vrot.slane %v6671, 6
        %v6674 = vor.u32 %v6670, %v6673
        %v6675 = vrot.slane %v6674, 4
        %v6676 = vrot.slane %v5398, 5
        %v6677 = vrot.slane %v5394, 6
        %v6678 = vor.u32 %v6676, %v6677
        %v6679 = vsel %vm1936, %v6675, %v6678
        %v6680 = vrot.slane %v6678, 4
        %v6682 = vshrl.u32 %v6343, 16
        %v6684 = vrot.slane %v6682, 5
        %v6685 = vshll.u32 %v6343, 16
        %v6687 = vrot.slane %v6685, 6
        %v6688 = vor.u32 %v6684, %v6687
        %v6689 = vsel %vm1936, %v6680, %v6688
        %v6691 = vshrl.u32 %v6184, 16
        %v6693 = vrot.slane %v6691, 5
        %v6694 = vshll.u32 %v6184, 16
        %v6696 = vrot.slane %v6694, 6
        %v6697 = vor.u32 %v6693, %v6696
        %v6698 = vrot.slane %v6697, 4
        %v6699 = vrot.slane %v5422, 5
        %v6700 = vrot.slane %v5418, 6
        %v6701 = vor.u32 %v6699, %v6700
        %v6702 = vsel %vm1936, %v6698, %v6701
        %v6703 = vrot.slane %v6701, 4
        %v6705 = vshrl.u32 %v6344, 16
        %v6707 = vrot.slane %v6705, 5
        %v6708 = vshll.u32 %v6344, 16
        %v6710 = vrot.slane %v6708, 6
        %v6711 = vor.u32 %v6707, %v6710
        %v6712 = vsel %vm1936, %v6703, %v6711
        %v6713 = vld [vmem:[%s1254] sm:$0xc]
        %v6714 = vld [vmem:[%s1254 + $0xc] sm:$0xc]
        %v6715 = vld [vmem:[%s1254 + $0x18] sm:$0xc]
        %v6716 = vld [vmem:[%s1254 + $0x24] sm:$0xc]
        %v6717 = vld [vmem:[%s1254 + $0x30] sm:$0xc]
        %v6718 = vld [vmem:[%s1254 + $0x3c] sm:$0xc]
        %v6719 = vld [vmem:[%s1254 + $0x48] sm:$0xc]
        %v6720 = vld [vmem:[%s1254 + $0x54] sm:$0xc]
        %v6721 = vld [vmem:[%s1254 + $0x60] sm:$0xc]
        %v6722 = vld [vmem:[%s1254 + $0x6c] sm:$0xc]
        %v6723 = vld [vmem:[%s1254 + $0x78] sm:$0xc]
        %v6724 = vld [vmem:[%s1254 + $0x84] sm:$0xc]
        %v6725 = vld [vmem:[%s1254 + $0x90] sm:$0xc]
        %v6726 = vld [vmem:[%s1254 + $0x9c] sm:$0xc]
        %v6727 = vld [vmem:[%s1254 + $0xa8] sm:$0xc]
        %v6728 = vld [vmem:[%s1254 + $0xb4] sm:$0xc]
        %v6761 = vrot.slane %v6713, 6
        %v6762 = vrot.slane %v6761, 4
        %v6763 = vrot.slane %v5001, 6
        %v6764 = vsel %vm2788, %v6762, %v6763
        %v6765 = vrot.slane %v6763, 4
        %v6766 = vrot.slane %v6329, 6
        %v6767 = vsel %vm2788, %v6765, %v6766
        %v6768 = vrot.slane %v6714, 6
        %v6769 = vrot.slane %v6768, 4
        %v6770 = vrot.slane %v5003, 6
        %v6771 = vsel %vm2788, %v6769, %v6770
        %v6772 = vrot.slane %v6770, 4
        %v6773 = vrot.slane %v6330, 6
        %v6774 = vsel %vm2788, %v6772, %v6773
        %v6775 = vrot.slane %v6715, 6
        %v6776 = vrot.slane %v6775, 4
        %v6777 = vrot.slane %v5005, 6
        %v6778 = vsel %vm2788, %v6776, %v6777
        %v6779 = vrot.slane %v6777, 4
        %v6780 = vrot.slane %v6331, 6
        %v6781 = vsel %vm2788, %v6779, %v6780
        %v6782 = vrot.slane %v6716, 6
        %v6783 = vrot.slane %v6782, 4
        %v6784 = vrot.slane %v5007, 6
        %v6785 = vsel %vm2788, %v6783, %v6784
        %v6786 = vrot.slane %v6784, 4
        %v6787 = vrot.slane %v6332, 6
        %v6788 = vsel %vm2788, %v6786, %v6787
        %v6789 = vrot.slane %v6717, 6
        %v6790 = vrot.slane %v6789, 4
        %v6791 = vrot.slane %v5009, 6
        %v6792 = vsel %vm2788, %v6790, %v6791
        %v6793 = vrot.slane %v6791, 4
        %v6794 = vrot.slane %v6333, 6
        %v6795 = vsel %vm2788, %v6793, %v6794
        %v6796 = vrot.slane %v6718, 6
        %v6797 = vrot.slane %v6796, 4
        %v6798 = vrot.slane %v5011, 6
        %v6799 = vsel %vm2788, %v6797, %v6798
        %v6800 = vrot.slane %v6798, 4
        %v6801 = vrot.slane %v6334, 6
        %v6802 = vsel %vm2788, %v6800, %v6801
        %v6803 = vrot.slane %v6719, 6
        %v6804 = vrot.slane %v6803, 4
        %v6805 = vrot.slane %v5013, 6
        %v6806 = vsel %vm2788, %v6804, %v6805
        %v6807 = vrot.slane %v6805, 4
        %v6808 = vrot.slane %v6335, 6
        %v6809 = vsel %vm2788, %v6807, %v6808
        %v6810 = vrot.slane %v6720, 6
        %v6811 = vrot.slane %v6810, 4
        %v6812 = vrot.slane %v5015, 6
        %v6813 = vsel %vm2788, %v6811, %v6812
        %v6814 = vrot.slane %v6812, 4
        %v6815 = vrot.slane %v6336, 6
        %v6816 = vsel %vm2788, %v6814, %v6815
        %v6817 = vrot.slane %v6721, 6
        %v6818 = vrot.slane %v6817, 4
        %v6819 = vrot.slane %v5017, 6
        %v6820 = vsel %vm2788, %v6818, %v6819
        %v6821 = vrot.slane %v6819, 4
        %v6822 = vrot.slane %v6337, 6
        %v6823 = vsel %vm2788, %v6821, %v6822
        %v6824 = vrot.slane %v6722, 6
        %v6825 = vrot.slane %v6824, 4
        %v6826 = vrot.slane %v5019, 6
        %v6827 = vsel %vm2788, %v6825, %v6826
        %v6828 = vrot.slane %v6826, 4
        %v6829 = vrot.slane %v6338, 6
        %v6830 = vsel %vm2788, %v6828, %v6829
        %v6831 = vrot.slane %v6723, 6
        %v6832 = vrot.slane %v6831, 4
        %v6833 = vrot.slane %v5021, 6
        %v6834 = vsel %vm2788, %v6832, %v6833
        %v6835 = vrot.slane %v6833, 4
        %v6836 = vrot.slane %v6339, 6
        %v6837 = vsel %vm2788, %v6835, %v6836
        %v6838 = vrot.slane %v6724, 6
        %v6839 = vrot.slane %v6838, 4
        %v6840 = vrot.slane %v5023, 6
        %v6841 = vsel %vm2788, %v6839, %v6840
        %v6842 = vrot.slane %v6840, 4
        %v6843 = vrot.slane %v6340, 6
        %v6844 = vsel %vm2788, %v6842, %v6843
        %v6845 = vrot.slane %v6725, 6
        %v6846 = vrot.slane %v6845, 4
        %v6847 = vrot.slane %v5025, 6
        %v6848 = vsel %vm2788, %v6846, %v6847
        %v6849 = vrot.slane %v6847, 4
        %v6850 = vrot.slane %v6341, 6
        %v6851 = vsel %vm2788, %v6849, %v6850
        %v6852 = vrot.slane %v6726, 6
        %v6853 = vrot.slane %v6852, 4
        %v6854 = vrot.slane %v5027, 6
        %v6855 = vsel %vm2788, %v6853, %v6854
        %v6856 = vrot.slane %v6854, 4
        %v6857 = vrot.slane %v6342, 6
        %v6858 = vsel %vm2788, %v6856, %v6857
        %v6859 = vrot.slane %v6727, 6
        %v6860 = vrot.slane %v6859, 4
        %v6861 = vrot.slane %v5029, 6
        %v6862 = vsel %vm2788, %v6860, %v6861
        %v6863 = vrot.slane %v6861, 4
        %v6864 = vrot.slane %v6343, 6
        %v6865 = vsel %vm2788, %v6863, %v6864
        %v6866 = vrot.slane %v6728, 6
        %v6867 = vrot.slane %v6866, 4
        %v6868 = vrot.slane %v5031, 6
        %v6869 = vsel %vm2788, %v6867, %v6868
        %v6870 = vrot.slane %v6868, 4
        %v6871 = vrot.slane %v6344, 6
        %v6872 = vsel %vm2788, %v6870, %v6871
        %s6873 = scalar_lea.vmem [#allocation2], 36
        %v6874 = vld [vmem:[%s6873] sm:$0xf]
        %v6875 = vld [vmem:[%s6873 + $0x4] sm:$0xf]
        %v6876 = vld [vmem:[%s6873 + $0xc] sm:$0xf]
        %v6877 = vld [vmem:[%s6873 + $0x10] sm:$0xf]
        %v6878 = vld [vmem:[%s6873 + $0x18] sm:$0xf]
        %v6879 = vld [vmem:[%s6873 + $0x1c] sm:$0xf]
        %v6880 = vld [vmem:[%s6873 + $0x24] sm:$0xf]
        %v6881 = vld [vmem:[%s6873 + $0x28] sm:$0xf]
        %v6882 = vld [vmem:[%s6873 + $0x30] sm:$0xf]
        %v6883 = vld [vmem:[%s6873 + $0x34] sm:$0xf]
        %v6884 = vld [vmem:[%s6873 + $0x3c] sm:$0xf]
        %v6885 = vld [vmem:[%s6873 + $0x40] sm:$0xf]
        %v6886 = vld [vmem:[%s6873 + $0x48] sm:$0xf]
        %v6887 = vld [vmem:[%s6873 + $0x4c] sm:$0xf]
        %v6888 = vld [vmem:[%s6873 + $0x54] sm:$0xf]
        %v6889 = vld [vmem:[%s6873 + $0x58] sm:$0xf]
        %v6890 = vld [vmem:[%s6873 + $0x60] sm:$0xf]
        %v6891 = vld [vmem:[%s6873 + $0x64] sm:$0xf]
        %v6892 = vld [vmem:[%s6873 + $0x6c] sm:$0xf]
        %v6893 = vld [vmem:[%s6873 + $0x70] sm:$0xf]
        %v6894 = vld [vmem:[%s6873 + $0x78] sm:$0xf]
        %v6895 = vld [vmem:[%s6873 + $0x7c] sm:$0xf]
        %v6896 = vld [vmem:[%s6873 + $0x84] sm:$0xf]
        %v6897 = vld [vmem:[%s6873 + $0x88] sm:$0xf]
        %v6898 = vld [vmem:[%s6873 + $0x90] sm:$0xf]
        %v6899 = vld [vmem:[%s6873 + $0x94] sm:$0xf]
        %v6900 = vld [vmem:[%s6873 + $0x9c] sm:$0xf]
        %v6901 = vld [vmem:[%s6873 + $0xa0] sm:$0xf]
        %v6902 = vld [vmem:[%s6873 + $0xa8] sm:$0xf]
        %v6903 = vld [vmem:[%s6873 + $0xac] sm:$0xf]
        %v6904 = vld [vmem:[%s6873 + $0xb4] sm:$0xf]
        %v6905 = vld [vmem:[%s6873 + $0xb8] sm:$0xf]
        %v6906 = vunpack.c.l.b16 %v6220
        %v6907 = vunpack.c.l.b16 %v6223
        %v6908 = vunpack.c.l.b16 %v6227
        %v6909 = vunpack.c.l.b16 %v6230
        %v6910 = vunpack.c.l.b16 %v6234
        %v6911 = vunpack.c.l.b16 %v6237
        %v6912 = vunpack.c.l.b16 %v6241
        %v6913 = vunpack.c.l.b16 %v6244
        %v6914 = vunpack.c.l.b16 %v6248
        %v6915 = vunpack.c.l.b16 %v6251
        %v6916 = vunpack.c.l.b16 %v6255
        %v6917 = vunpack.c.l.b16 %v6258
        %v6918 = vunpack.c.l.b16 %v6262
        %v6919 = vunpack.c.l.b16 %v6265
        %v6920 = vunpack.c.l.b16 %v6269
        %v6921 = vunpack.c.l.b16 %v6272
        %v6922 = vunpack.c.l.b16 %v6276
        %v6923 = vunpack.c.l.b16 %v6279
        %v6924 = vunpack.c.l.b16 %v6283
        %v6925 = vunpack.c.l.b16 %v6286
        %v6926 = vunpack.c.l.b16 %v6290
        %v6927 = vunpack.c.l.b16 %v6293
        %v6928 = vunpack.c.l.b16 %v6297
        %v6929 = vunpack.c.l.b16 %v6300
        %v6930 = vunpack.c.l.b16 %v6304
        %v6931 = vunpack.c.l.b16 %v6307
        %v6932 = vunpack.c.l.b16 %v6311
        %v6933 = vunpack.c.l.b16 %v6314
        %v6934 = vunpack.c.l.b16 %v6318
        %v6935 = vunpack.c.l.b16 %v6321
        %v6936 = vunpack.c.l.b16 %v6325
        %v6937 = vunpack.c.l.b16 %v6328
        %v6938 = vpack.c.b16 %v6907, %v6906
        %v6939 = vpack.c.b16 %v6909, %v6908
        %v6940 = vpack.c.b16 %v6911, %v6910
        %v6941 = vpack.c.b16 %v6913, %v6912
        %v6942 = vpack.c.b16 %v6915, %v6914
        %v6943 = vpack.c.b16 %v6917, %v6916
        %v6944 = vpack.c.b16 %v6919, %v6918
        %v6945 = vpack.c.b16 %v6921, %v6920
        %v6946 = vpack.c.b16 %v6923, %v6922
        %v6947 = vpack.c.b16 %v6925, %v6924
        %v6948 = vpack.c.b16 %v6927, %v6926
        %v6949 = vpack.c.b16 %v6929, %v6928
        %v6950 = vpack.c.b16 %v6931, %v6930
        %v6951 = vpack.c.b16 %v6933, %v6932
        %v6952 = vpack.c.b16 %v6935, %v6934
        %v6953 = vpack.c.b16 %v6937, %v6936
        %v6954 = vunpack.c.l.b16 %v6357
        %v6955 = vunpack.c.l.b16 %v6367
        %v6956 = vunpack.c.l.b16 %v6380
        %v6957 = vunpack.c.l.b16 %v6390
        %v6958 = vunpack.c.l.b16 %v6403
        %v6959 = vunpack.c.l.b16 %v6413
        %v6960 = vunpack.c.l.b16 %v6426
        %v6961 = vunpack.c.l.b16 %v6436
        %v6962 = vunpack.c.l.b16 %v6449
        %v6963 = vunpack.c.l.b16 %v6459
        %v6964 = vunpack.c.l.b16 %v6472
        %v6965 = vunpack.c.l.b16 %v6482
        %v6966 = vunpack.c.l.b16 %v6495
        %v6967 = vunpack.c.l.b16 %v6505
        %v6968 = vunpack.c.l.b16 %v6518
        %v6969 = vunpack.c.l.b16 %v6528
        %v6970 = vunpack.c.l.b16 %v6541
        %v6971 = vunpack.c.l.b16 %v6551
        %v6972 = vunpack.c.l.b16 %v6564
        %v6973 = vunpack.c.l.b16 %v6574
        %v6974 = vunpack.c.l.b16 %v6587
        %v6975 = vunpack.c.l.b16 %v6597
        %v6976 = vunpack.c.l.b16 %v6610
        %v6977 = vunpack.c.l.b16 %v6620
        %v6978 = vunpack.c.l.b16 %v6633
        %v6979 = vunpack.c.l.b16 %v6643
        %v6980 = vunpack.c.l.b16 %v6656
        %v6981 = vunpack.c.l.b16 %v6666
        %v6982 = vunpack.c.l.b16 %v6679
        %v6983 = vunpack.c.l.b16 %v6689
        %v6984 = vunpack.c.l.b16 %v6702
        %v6985 = vunpack.c.l.b16 %v6712
        %v6986 = vpack.c.b16 %v6955, %v6954
        %v6987 = vpack.c.b16 %v6957, %v6956
        %v6988 = vpack.c.b16 %v6959, %v6958
        %v6989 = vpack.c.b16 %v6961, %v6960
        %v6990 = vpack.c.b16 %v6963, %v6962
        %v6991 = vpack.c.b16 %v6965, %v6964
        %v6992 = vpack.c.b16 %v6967, %v6966
        %v6993 = vpack.c.b16 %v6969, %v6968
        %v6994 = vpack.c.b16 %v6971, %v6970
        %v6995 = vpack.c.b16 %v6973, %v6972
        %v6996 = vpack.c.b16 %v6975, %v6974
        %v6997 = vpack.c.b16 %v6977, %v6976
        %v6998 = vpack.c.b16 %v6979, %v6978
        %v6999 = vpack.c.b16 %v6981, %v6980
        %v7000 = vpack.c.b16 %v6983, %v6982
        %v7001 = vpack.c.b16 %v6985, %v6984
        %7002 = vrot.lane.b32.xlu0 %v6986, 64
        %v7003 = vpop.permute.xlu0 %7002
        %7004 = vrot.lane.b32.xlu0 %v6987, 64
        %v7005 = vpop.permute.xlu0 %7004
        %7006 = vrot.lane.b32.xlu0 %v6988, 64
        %v7007 = vpop.permute.xlu0 %7006
        %7008 = vrot.lane.b32.xlu0 %v6989, 64
        %v7009 = vpop.permute.xlu0 %7008
        %7010 = vrot.lane.b32.xlu0 %v6990, 64
        %v7011 = vpop.permute.xlu0 %7010
        %7012 = vrot.lane.b32.xlu0 %v6991, 64
        %v7013 = vpop.permute.xlu0 %7012
        %7014 = vrot.lane.b32.xlu0 %v6992, 64
        %v7015 = vpop.permute.xlu0 %7014
        %7016 = vrot.lane.b32.xlu0 %v6993, 64
        %v7017 = vpop.permute.xlu0 %7016
        %7018 = vrot.lane.b32.xlu0 %v6994, 64
        %v7019 = vpop.permute.xlu0 %7018
        %7020 = vrot.lane.b32.xlu0 %v6995, 64
        %v7021 = vpop.permute.xlu0 %7020
        %7022 = vrot.lane.b32.xlu0 %v6996, 64
        %v7023 = vpop.permute.xlu0 %7022
        %7024 = vrot.lane.b32.xlu0 %v6997, 64
        %v7025 = vpop.permute.xlu0 %7024
        %7026 = vrot.lane.b32.xlu0 %v6998, 64
        %v7027 = vpop.permute.xlu0 %7026
        %7028 = vrot.lane.b32.xlu0 %v6999, 64
        %v7029 = vpop.permute.xlu0 %7028
        %7030 = vrot.lane.b32.xlu0 %v7000, 64
        %v7031 = vpop.permute.xlu0 %7030
        %7032 = vrot.lane.b32.xlu0 %v7001, 64
        %v7033 = vpop.permute.xlu0 %7032
        %v7034 = vunpack.c.l.b16 %v6764
        %v7035 = vunpack.c.l.b16 %v6767
        %v7036 = vunpack.c.l.b16 %v6771
        %v7037 = vunpack.c.l.b16 %v6774
        %v7038 = vunpack.c.l.b16 %v6778
        %v7039 = vunpack.c.l.b16 %v6781
        %v7040 = vunpack.c.l.b16 %v6785
        %v7041 = vunpack.c.l.b16 %v6788
        %v7042 = vunpack.c.l.b16 %v6792
        %v7043 = vunpack.c.l.b16 %v6795
        %v7044 = vunpack.c.l.b16 %v6799
        %v7045 = vunpack.c.l.b16 %v6802
        %v7046 = vunpack.c.l.b16 %v6806
        %v7047 = vunpack.c.l.b16 %v6809
        %v7048 = vunpack.c.l.b16 %v6813
        %v7049 = vunpack.c.l.b16 %v6816
        %v7050 = vunpack.c.l.b16 %v6820
        %v7051 = vunpack.c.l.b16 %v6823
        %v7052 = vunpack.c.l.b16 %v6827
        %v7053 = vunpack.c.l.b16 %v6830
        %v7054 = vunpack.c.l.b16 %v6834
        %v7055 = vunpack.c.l.b16 %v6837
        %v7056 = vunpack.c.l.b16 %v6841
        %v7057 = vunpack.c.l.b16 %v6844
        %v7058 = vunpack.c.l.b16 %v6848
        %v7059 = vunpack.c.l.b16 %v6851
        %v7060 = vunpack.c.l.b16 %v6855
        %v7061 = vunpack.c.l.b16 %v6858
        %v7062 = vunpack.c.l.b16 %v6862
        %v7063 = vunpack.c.l.b16 %v6865
        %v7064 = vunpack.c.l.b16 %v6869
        %v7065 = vunpack.c.l.b16 %v6872
        %v7066 = vpack.c.b16 %v7035, %v7034
        %v7067 = vpack.c.b16 %v7037, %v7036
        %v7068 = vpack.c.b16 %v7039, %v7038
        %v7069 = vpack.c.b16 %v7041, %v7040
        %v7070 = vpack.c.b16 %v7043, %v7042
        %v7071 = vpack.c.b16 %v7045, %v7044
        %v7072 = vpack.c.b16 %v7047, %v7046
        %v7073 = vpack.c.b16 %v7049, %v7048
        %v7074 = vpack.c.b16 %v7051, %v7050
        %v7075 = vpack.c.b16 %v7053, %v7052
        %v7076 = vpack.c.b16 %v7055, %v7054
        %v7077 = vpack.c.b16 %v7057, %v7056
        %v7078 = vpack.c.b16 %v7059, %v7058
        %v7079 = vpack.c.b16 %v7061, %v7060
        %v7080 = vpack.c.b16 %v7063, %v7062
        %v7081 = vpack.c.b16 %v7065, %v7064
        %v7114 = vunpack.c.l.b16 %v6874
        %v7115 = vunpack.c.l.b16 %v6875
        %v7116 = vunpack.c.l.b16 %v6876
        %v7117 = vunpack.c.l.b16 %v6877
        %v7118 = vunpack.c.l.b16 %v6878
        %v7119 = vunpack.c.l.b16 %v6879
        %v7120 = vunpack.c.l.b16 %v6880
        %v7121 = vunpack.c.l.b16 %v6881
        %v7122 = vunpack.c.l.b16 %v6882
        %v7123 = vunpack.c.l.b16 %v6883
        %v7124 = vunpack.c.l.b16 %v6884
        %v7125 = vunpack.c.l.b16 %v6885
        %v7126 = vunpack.c.l.b16 %v6886
        %v7127 = vunpack.c.l.b16 %v6887
        %v7128 = vunpack.c.l.b16 %v6888
        %v7129 = vunpack.c.l.b16 %v6889
        %v7130 = vunpack.c.l.b16 %v6890
        %v7131 = vunpack.c.l.b16 %v6891
        %v7132 = vunpack.c.l.b16 %v6892
        %v7133 = vunpack.c.l.b16 %v6893
        %v7134 = vunpack.c.l.b16 %v6894
        %v7135 = vunpack.c.l.b16 %v6895
        %v7136 = vunpack.c.l.b16 %v6896
        %v7137 = vunpack.c.l.b16 %v6897
        %v7138 = vunpack.c.l.b16 %v6898
        %v7139 = vunpack.c.l.b16 %v6899
        %v7140 = vunpack.c.l.b16 %v6900
        %v7141 = vunpack.c.l.b16 %v6901
        %v7142 = vunpack.c.l.b16 %v6902
        %v7143 = vunpack.c.l.b16 %v6903
        %v7144 = vunpack.c.l.b16 %v6904
        %v7145 = vunpack.c.l.b16 %v6905
        %v7146 = vpack.c.b16 %v7115, %v7114
        %v7147 = vpack.c.b16 %v7117, %v7116
        %v7148 = vpack.c.b16 %v7119, %v7118
        %v7149 = vpack.c.b16 %v7121, %v7120
        %v7150 = vpack.c.b16 %v7123, %v7122
        %v7151 = vpack.c.b16 %v7125, %v7124
        %v7152 = vpack.c.b16 %v7127, %v7126
        %v7153 = vpack.c.b16 %v7129, %v7128
        %v7154 = vpack.c.b16 %v7131, %v7130
        %v7155 = vpack.c.b16 %v7133, %v7132
        %v7156 = vpack.c.b16 %v7135, %v7134
        %v7157 = vpack.c.b16 %v7137, %v7136
        %v7158 = vpack.c.b16 %v7139, %v7138
        %v7159 = vpack.c.b16 %v7141, %v7140
        %v7160 = vpack.c.b16 %v7143, %v7142
        %v7161 = vpack.c.b16 %v7145, %v7144
        %7162 = vrot.lane.b32.xlu0 %v7146, 64
        %v7163 = vpop.permute.xlu0 %7162
        %7164 = vrot.lane.b32.xlu0 %v7147, 64
        %v7165 = vpop.permute.xlu0 %7164
        %7166 = vrot.lane.b32.xlu0 %v7148, 64
        %v7167 = vpop.permute.xlu0 %7166
        %7168 = vrot.lane.b32.xlu0 %v7149, 64
        %v7169 = vpop.permute.xlu0 %7168
        %7170 = vrot.lane.b32.xlu0 %v7150, 64
        %v7171 = vpop.permute.xlu0 %7170
        %7172 = vrot.lane.b32.xlu0 %v7151, 64
        %v7173 = vpop.permute.xlu0 %7172
        %7174 = vrot.lane.b32.xlu0 %v7152, 64
        %v7175 = vpop.permute.xlu0 %7174
        %7176 = vrot.lane.b32.xlu0 %v7153, 64
        %v7177 = vpop.permute.xlu0 %7176
        %7178 = vrot.lane.b32.xlu0 %v7154, 64
        %v7179 = vpop.permute.xlu0 %7178
        %7180 = vrot.lane.b32.xlu0 %v7155, 64
        %v7181 = vpop.permute.xlu0 %7180
        %7182 = vrot.lane.b32.xlu0 %v7156, 64
        %v7183 = vpop.permute.xlu0 %7182
        %7184 = vrot.lane.b32.xlu0 %v7157, 64
        %v7185 = vpop.permute.xlu0 %7184
        %7186 = vrot.lane.b32.xlu0 %v7158, 64
        %v7187 = vpop.permute.xlu0 %7186
        %7188 = vrot.lane.b32.xlu0 %v7159, 64
        %v7189 = vpop.permute.xlu0 %7188
        %7190 = vrot.lane.b32.xlu0 %v7160, 64
        %v7191 = vpop.permute.xlu0 %7190
        %7192 = vrot.lane.b32.xlu0 %v7161, 64
        %v7193 = vpop.permute.xlu0 %7192
        %v7196 = vsel %vm2577, %v6938, %v7003
        %v7200 = vsel %vm2577, %v6939, %v7005
        %v7204 = vsel %vm2577, %v6940, %v7007
        %v7208 = vsel %vm2577, %v6941, %v7009
        %v7212 = vsel %vm2577, %v6942, %v7011
        %v7216 = vsel %vm2577, %v6943, %v7013
        %v7220 = vsel %vm2577, %v6944, %v7015
        %v7224 = vsel %vm2577, %v6945, %v7017
        %v7228 = vsel %vm2577, %v6946, %v7019
        %v7232 = vsel %vm2577, %v6947, %v7021
        %v7236 = vsel %vm2577, %v6948, %v7023
        %v7240 = vsel %vm2577, %v6949, %v7025
        %v7244 = vsel %vm2577, %v6950, %v7027
        %v7248 = vsel %vm2577, %v6951, %v7029
        %v7252 = vsel %vm2577, %v6952, %v7031
        %v7256 = vsel %vm2577, %v6953, %v7033
        %v7260 = vsel %vm2577, %v7066, %v7163
        %v7264 = vsel %vm2577, %v7067, %v7165
        %v7268 = vsel %vm2577, %v7068, %v7167
        %v7272 = vsel %vm2577, %v7069, %v7169
        %v7276 = vsel %vm2577, %v7070, %v7171
        %v7280 = vsel %vm2577, %v7071, %v7173
        %v7284 = vsel %vm2577, %v7072, %v7175
        %v7288 = vsel %vm2577, %v7073, %v7177
        %v7292 = vsel %vm2577, %v7074, %v7179
        %v7296 = vsel %vm2577, %v7075, %v7181
        %v7300 = vsel %vm2577, %v7076, %v7183
        %v7304 = vsel %vm2577, %v7077, %v7185
        %v7308 = vsel %vm2577, %v7078, %v7187
        %v7312 = vsel %vm2577, %v7079, %v7189
        %v7316 = vsel %vm2577, %v7080, %v7191
        %v7320 = vsel %vm2577, %v7081, %v7193
        %v7322 = vld [vmem:[%s4 + $0x180] sm:$0xf]
        %v7323 = vld [vmem:[%s4 + $0x184] sm:$0xf]
        %v7324 = vld [vmem:[%s4 + $0x188] sm:$0xf]
        %v7325 = vld [vmem:[%s4 + $0x18c] sm:$0xf]
        %v7326 = vld [vmem:[%s4 + $0x190] sm:$0xf]
        %v7327 = vld [vmem:[%s4 + $0x194] sm:$0xf]
        %v7328 = vld [vmem:[%s4 + $0x198] sm:$0xf]
        %v7329 = vld [vmem:[%s4 + $0x19c] sm:$0xf]
        %v7330 = vld [vmem:[%s4 + $0x1a0] sm:$0xf]
        %v7331 = vld [vmem:[%s4 + $0x1a4] sm:$0xf]
        %v7332 = vld [vmem:[%s4 + $0x1a8] sm:$0xf]
        %v7333 = vld [vmem:[%s4 + $0x1ac] sm:$0xf]
        %v7334 = vld [vmem:[%s4 + $0x1b0] sm:$0xf]
        %v7335 = vld [vmem:[%s4 + $0x1b4] sm:$0xf]
        %v7336 = vld [vmem:[%s4 + $0x1b8] sm:$0xf]
        %v7337 = vld [vmem:[%s4 + $0x1bc] sm:$0xf]
        %v7338 = vld [vmem:[%s4 + $0x1c0] sm:$0xf]
        %v7339 = vld [vmem:[%s4 + $0x1c4] sm:$0xf]
        %v7340 = vld [vmem:[%s4 + $0x1c8] sm:$0xf]
        %v7341 = vld [vmem:[%s4 + $0x1cc] sm:$0xf]
        %v7342 = vld [vmem:[%s4 + $0x1d0] sm:$0xf]
        %v7343 = vld [vmem:[%s4 + $0x1d4] sm:$0xf]
        %v7344 = vld [vmem:[%s4 + $0x1d8] sm:$0xf]
        %v7345 = vld [vmem:[%s4 + $0x1dc] sm:$0xf]
        %v7346 = vld [vmem:[%s4 + $0x1e0] sm:$0xf]
        %v7347 = vld [vmem:[%s4 + $0x1e4] sm:$0xf]
        %v7348 = vld [vmem:[%s4 + $0x1e8] sm:$0xf]
        %v7349 = vld [vmem:[%s4 + $0x1ec] sm:$0xf]
        %v7350 = vld [vmem:[%s4 + $0x1f0] sm:$0xf]
        %v7351 = vld [vmem:[%s4 + $0x1f4] sm:$0xf]
        %v7352 = vld [vmem:[%s4 + $0x1f8] sm:$0xf]
        %v7353 = vld [vmem:[%s4 + $0x1fc] sm:$0xf]
        %v7386 = vunpack.c.l.b16 %v7322
        %v7387 = vunpack.c.l.b16 %v7323
        %v7388 = vunpack.c.l.b16 %v7324
        %v7389 = vunpack.c.l.b16 %v7325
        %v7390 = vunpack.c.l.b16 %v7326
        %v7391 = vunpack.c.l.b16 %v7327
        %v7392 = vunpack.c.l.b16 %v7328
        %v7393 = vunpack.c.l.b16 %v7329
        %v7394 = vunpack.c.l.b16 %v7330
        %v7395 = vunpack.c.l.b16 %v7331
        %v7396 = vunpack.c.l.b16 %v7332
        %v7397 = vunpack.c.l.b16 %v7333
        %v7398 = vunpack.c.l.b16 %v7334
        %v7399 = vunpack.c.l.b16 %v7335
        %v7400 = vunpack.c.l.b16 %v7336
        %v7401 = vunpack.c.l.b16 %v7337
        %v7402 = vunpack.c.l.b16 %v7338
        %v7403 = vunpack.c.l.b16 %v7339
        %v7404 = vunpack.c.l.b16 %v7340
        %v7405 = vunpack.c.l.b16 %v7341
        %v7406 = vunpack.c.l.b16 %v7342
        %v7407 = vunpack.c.l.b16 %v7343
        %v7408 = vunpack.c.l.b16 %v7344
        %v7409 = vunpack.c.l.b16 %v7345
        %v7410 = vunpack.c.l.b16 %v7346
        %v7411 = vunpack.c.l.b16 %v7347
        %v7412 = vunpack.c.l.b16 %v7348
        %v7413 = vunpack.c.l.b16 %v7349
        %v7414 = vunpack.c.l.b16 %v7350
        %v7415 = vunpack.c.l.b16 %v7351
        %v7416 = vunpack.c.l.b16 %v7352
        %v7417 = vunpack.c.l.b16 %v7353
        %v7418 = vpack.c.b16 %v7387, %v7386
        %v7419 = vpack.c.b16 %v7389, %v7388
        %v7420 = vpack.c.b16 %v7391, %v7390
        %v7421 = vpack.c.b16 %v7393, %v7392
        %v7422 = vpack.c.b16 %v7395, %v7394
        %v7423 = vpack.c.b16 %v7397, %v7396
        %v7424 = vpack.c.b16 %v7399, %v7398
        %v7425 = vpack.c.b16 %v7401, %v7400
        %v7426 = vpack.c.b16 %v7403, %v7402
        %v7427 = vpack.c.b16 %v7405, %v7404
        %v7428 = vpack.c.b16 %v7407, %v7406
        %v7429 = vpack.c.b16 %v7409, %v7408
        %v7430 = vpack.c.b16 %v7411, %v7410
        %v7431 = vpack.c.b16 %v7413, %v7412
        %v7432 = vpack.c.b16 %v7415, %v7414
        %v7433 = vpack.c.b16 %v7417, %v7416
        %7450 = vmatprep.subr.bf16.mxu0 0
        %7451 = vmatpush1.bf16.msra.mxu0 %v7418
        %7452 = vmatprep.subr.bf16.mxu0 0
        %7453 = vmatpush1.bf16.msra.mxu0 %v7419
        %7454 = vmatprep.subr.bf16.mxu0 0
        %7455 = vmatpush1.bf16.msra.mxu0 %v7420
        %7456 = vmatprep.subr.bf16.mxu0 0
        %7457 = vmatpush1.bf16.msra.mxu0 %v7421
        %7458 = vmatprep.subr.bf16.mxu0 0
        %7459 = vmatpush1.bf16.msra.mxu0 %v7422
        %7460 = vmatprep.subr.bf16.mxu0 0
        %7461 = vmatpush1.bf16.msra.mxu0 %v7423
        %7462 = vmatprep.subr.bf16.mxu0 0
        %7463 = vmatpush1.bf16.msra.mxu0 %v7424
        %7464 = vmatprep.subr.bf16.mxu0 0
        %7465 = vmatpush1.bf16.msra.mxu0 %v7425
        %7466 = vmatprep.subr.bf16.mxu0 0
        %7467 = vmatpush1.bf16.msra.mxu0 %v7426
        %7468 = vmatprep.subr.bf16.mxu0 0
        %7469 = vmatpush1.bf16.msra.mxu0 %v7427
        %7470 = vmatprep.subr.bf16.mxu0 0
        %7471 = vmatpush1.bf16.msra.mxu0 %v7428
        %7472 = vmatprep.subr.bf16.mxu0 0
        %7473 = vmatpush1.bf16.msra.mxu0 %v7429
        %7474 = vmatprep.subr.bf16.mxu0 0
        %7475 = vmatpush1.bf16.msra.mxu0 %v7430
        %7476 = vmatprep.subr.bf16.mxu0 0
        %7477 = vmatpush1.bf16.msra.mxu0 %v7431
        %7478 = vmatprep.subr.bf16.mxu0 0
        %7479 = vmatpush1.bf16.msra.mxu0 %v7432
        %7480 = vmatprep.subr.bf16.mxu0 0
        %7481 = vmatpush1.bf16.msra.mxu0 %v7433
        %7482 = vmatprep.mubr.bf16.mxu0 %v7260
        %7483 = vmatmul.mubr.bf16.gmra.mrb[0].mxu0 %v7196
        %v7484 = vpop.f32.mrb[0].mxu0
        %v7485 = vadd.f32 0.0, %v7484
        %v7486 = vpop.f32.mrb[0].mxu0
        %v7487 = vpop.f32.mrb[0].mxu0
        %v7488 = vadd.f32 0.0, %v7487
        %v7489 = vpop.f32.mrb[0].mxu0
        %7490 = vmatprep.mubr.bf16.mxu0 %v7264
        %7491 = vmatmul.mubr.bf16.gmra.mrb[0].mxu0 %v7200
        %v7492 = vpop.f32.mrb[0].mxu0
        %v7493 = vadd.f32 0.0, %v7492
        %v7494 = vpop.f32.mrb[0].mxu0
        %v7495 = vpop.f32.mrb[0].mxu0
        %v7496 = vadd.f32 0.0, %v7495
        %v7497 = vpop.f32.mrb[0].mxu0
        %7498 = vmatprep.mubr.bf16.mxu0 %v7268
        %7499 = vmatmul.mubr.bf16.gmra.mrb[0].mxu0 %v7204
        %v7500 = vpop.f32.mrb[0].mxu0
        %v7501 = vadd.f32 0.0, %v7500
        %v7502 = vpop.f32.mrb[0].mxu0
        %v7503 = vpop.f32.mrb[0].mxu0
        %v7504 = vadd.f32 0.0, %v7503
        %v7505 = vpop.f32.mrb[0].mxu0
        %7506 = vmatprep.mubr.bf16.mxu0 %v7272
        %7507 = vmatmul.mubr.bf16.gmra.mrb[0].mxu0 %v7208
        %v7508 = vpop.f32.mrb[0].mxu0
        %v7509 = vadd.f32 0.0, %v7508
        %v7510 = vpop.f32.mrb[0].mxu0
        %v7511 = vpop.f32.mrb[0].mxu0
        %v7512 = vadd.f32 0.0, %v7511
        %v7513 = vpop.f32.mrb[0].mxu0
        %7514 = vmatprep.mubr.bf16.mxu0 %v7276
        %7515 = vmatmul.mubr.bf16.gmra.mrb[0].mxu0 %v7212
        %v7516 = vpop.f32.mrb[0].mxu0
        %v7517 = vadd.f32 0.0, %v7516
        %v7518 = vpop.f32.mrb[0].mxu0
        %v7519 = vpop.f32.mrb[0].mxu0
        %v7520 = vadd.f32 0.0, %v7519
        %v7521 = vpop.f32.mrb[0].mxu0
        %7522 = vmatprep.mubr.bf16.mxu0 %v7280
        %7523 = vmatmul.mubr.bf16.gmra.mrb[0].mxu0 %v7216
        %v7524 = vpop.f32.mrb[0].mxu0
        %v7525 = vadd.f32 0.0, %v7524
        %v7526 = vpop.f32.mrb[0].mxu0
        %v7527 = vpop.f32.mrb[0].mxu0
        %v7528 = vadd.f32 0.0, %v7527
        %v7529 = vpop.f32.mrb[0].mxu0
        %7530 = vmatprep.mubr.bf16.mxu0 %v7284
        %7531 = vmatmul.mubr.bf16.gmra.mrb[0].mxu0 %v7220
        %v7532 = vpop.f32.mrb[0].mxu0
        %v7533 = vadd.f32 0.0, %v7532
        %v7534 = vpop.f32.mrb[0].mxu0
        %v7535 = vpop.f32.mrb[0].mxu0
        %v7536 = vadd.f32 0.0, %v7535
        %v7537 = vpop.f32.mrb[0].mxu0
        %7538 = vmatprep.mubr.bf16.mxu0 %v7288
        %7539 = vmatmul.mubr.bf16.gmra.mrb[0].mxu0 %v7224
        %v7540 = vpop.f32.mrb[0].mxu0
        %v7541 = vadd.f32 0.0, %v7540
        %v7542 = vpop.f32.mrb[0].mxu0
        %v7543 = vpop.f32.mrb[0].mxu0
        %v7544 = vadd.f32 0.0, %v7543
        %v7545 = vpop.f32.mrb[0].mxu0
        %7546 = vmatprep.mubr.bf16.mxu0 %v7292
        %7547 = vmatmul.mubr.bf16.gmra.mrb[0].mxu0 %v7228
        %v7548 = vpop.f32.mrb[0].mxu0
        %v7549 = vadd.f32 0.0, %v7548
        %v7550 = vpop.f32.mrb[0].mxu0
        %v7551 = vpop.f32.mrb[0].mxu0
        %v7552 = vadd.f32 0.0, %v7551
        %v7553 = vpop.f32.mrb[0].mxu0
        %7554 = vmatprep.mubr.bf16.mxu0 %v7296
        %7555 = vmatmul.mubr.bf16.gmra.mrb[0].mxu0 %v7232
        %v7556 = vpop.f32.mrb[0].mxu0
        %v7557 = vadd.f32 0.0, %v7556
        %v7558 = vpop.f32.mrb[0].mxu0
        %v7559 = vpop.f32.mrb[0].mxu0
        %v7560 = vadd.f32 0.0, %v7559
        %v7561 = vpop.f32.mrb[0].mxu0
        %7562 = vmatprep.mubr.bf16.mxu0 %v7300
        %7563 = vmatmul.mubr.bf16.gmra.mrb[0].mxu0 %v7236
        %v7564 = vpop.f32.mrb[0].mxu0
        %v7565 = vadd.f32 0.0, %v7564
        %v7566 = vpop.f32.mrb[0].mxu0
        %v7567 = vpop.f32.mrb[0].mxu0
        %v7568 = vadd.f32 0.0, %v7567
        %v7569 = vpop.f32.mrb[0].mxu0
        %7570 = vmatprep.mubr.bf16.mxu0 %v7304
        %7571 = vmatmul.mubr.bf16.gmra.mrb[0].mxu0 %v7240
        %v7572 = vpop.f32.mrb[0].mxu0
        %v7573 = vadd.f32 0.0, %v7572
        %v7574 = vpop.f32.mrb[0].mxu0
        %v7575 = vpop.f32.mrb[0].mxu0
        %v7576 = vadd.f32 0.0, %v7575
        %v7577 = vpop.f32.mrb[0].mxu0
        %7578 = vmatprep.mubr.bf16.mxu0 %v7308
        %7579 = vmatmul.mubr.bf16.gmra.mrb[0].mxu0 %v7244
        %v7580 = vpop.f32.mrb[0].mxu0
        %v7581 = vadd.f32 0.0, %v7580
        %v7582 = vpop.f32.mrb[0].mxu0
        %v7583 = vpop.f32.mrb[0].mxu0
        %v7584 = vadd.f32 0.0, %v7583
        %v7585 = vpop.f32.mrb[0].mxu0
        %7586 = vmatprep.mubr.bf16.mxu0 %v7312
        %7587 = vmatmul.mubr.bf16.gmra.mrb[0].mxu0 %v7248
        %v7588 = vpop.f32.mrb[0].mxu0
        %v7589 = vadd.f32 0.0, %v7588
        %v7590 = vpop.f32.mrb[0].mxu0
        %v7591 = vpop.f32.mrb[0].mxu0
        %v7592 = vadd.f32 0.0, %v7591
        %v7593 = vpop.f32.mrb[0].mxu0
        %7594 = vmatprep.mubr.bf16.mxu0 %v7316
        %7595 = vmatmul.mubr.bf16.gmra.mrb[0].mxu0 %v7252
        %v7596 = vpop.f32.mrb[0].mxu0
        %v7597 = vadd.f32 0.0, %v7596
        %v7598 = vpop.f32.mrb[0].mxu0
        %v7599 = vpop.f32.mrb[0].mxu0
        %v7600 = vadd.f32 0.0, %v7599
        %v7601 = vpop.f32.mrb[0].mxu0
        %7602 = vmatprep.mubr.bf16.mxu0 %v7320
        %7603 = vmatmul.mubr.bf16.gmra.mrb[0].mxu0 %v7256
        %v7604 = vpop.f32.mrb[0].mxu0
        %v7605 = vadd.f32 0.0, %v7604
        %v7606 = vpop.f32.mrb[0].mxu0
        %v7607 = vpop.f32.mrb[0].mxu0
        %v7608 = vadd.f32 0.0, %v7607
        %v7609 = vpop.f32.mrb[0].mxu0
        %7610 = vdwg.mxu0
        %v7611 = vadd.f32 %v6137, %v7485
        %v7612 = vadd.f32 %v6138, %v7488
        %v7613 = vadd.f32 %v6139, %v7493
        %v7614 = vadd.f32 %v6140, %v7496
        %v7615 = vadd.f32 %v6141, %v7501
        %v7616 = vadd.f32 %v6142, %v7504
        %v7617 = vadd.f32 %v6143, %v7509
        %v7618 = vadd.f32 %v6144, %v7512
        %v7619 = vadd.f32 %v6145, %v7517
        %v7620 = vadd.f32 %v6146, %v7520
        %v7621 = vadd.f32 %v6147, %v7525
        %v7622 = vadd.f32 %v6148, %v7528
        %v7623 = vadd.f32 %v6149, %v7533
        %v7624 = vadd.f32 %v6150, %v7536
        %v7625 = vadd.f32 %v6151, %v7541
        %v7626 = vadd.f32 %v6152, %v7544
        %v7627 = vadd.f32 %v6153, %v7549
        %v7628 = vadd.f32 %v6154, %v7552
        %v7629 = vadd.f32 %v6155, %v7557
        %v7630 = vadd.f32 %v6156, %v7560
        %v7631 = vadd.f32 %v6157, %v7565
        %v7632 = vadd.f32 %v6158, %v7568
        %v7633 = vadd.f32 %v6159, %v7573
        %v7634 = vadd.f32 %v6160, %v7576
        %v7635 = vadd.f32 %v6161, %v7581
        %v7636 = vadd.f32 %v6162, %v7584
        %v7637 = vadd.f32 %v6163, %v7589
        %v7638 = vadd.f32 %v6164, %v7592
        %v7639 = vadd.f32 %v6165, %v7597
        %v7640 = vadd.f32 %v6166, %v7600
        %v7641 = vadd.f32 %v6167, %v7605
        %v7642 = vadd.f32 %v6168, %v7608
        %v7643 = vld [vmem:[%s6873] sm:$0xf]
        %v7644 = vld [vmem:[%s6873 + $0x4] sm:$0xf]
        %v7645 = vld [vmem:[%s6873 + $0x8] sm:$0x1]
        %v7646 = vld [vmem:[%s6873 + $0xc] sm:$0xf]
        %v7647 = vld [vmem:[%s6873 + $0x10] sm:$0xf]
        %v7648 = vld [vmem:[%s6873 + $0x14] sm:$0x1]
        %v7649 = vld [vmem:[%s6873 + $0x18] sm:$0xf]
        %v7650 = vld [vmem:[%s6873 + $0x1c] sm:$0xf]
        %v7651 = vld [vmem:[%s6873 + $0x20] sm:$0x1]
        %v7652 = vld [vmem:[%s6873 + $0x24] sm:$0xf]
        %v7653 = vld [vmem:[%s6873 + $0x28] sm:$0xf]
        %v7654 = vld [vmem:[%s6873 + $0x2c] sm:$0x1]
        %v7655 = vld [vmem:[%s6873 + $0x30] sm:$0xf]
        %v7656 = vld [vmem:[%s6873 + $0x34] sm:$0xf]
        %v7657 = vld [vmem:[%s6873 + $0x38] sm:$0x1]
        %v7658 = vld [vmem:[%s6873 + $0x3c] sm:$0xf]
        %v7659 = vld [vmem:[%s6873 + $0x40] sm:$0xf]
        %v7660 = vld [vmem:[%s6873 + $0x44] sm:$0x1]
        %v7661 = vld [vmem:[%s6873 + $0x48] sm:$0xf]
        %v7662 = vld [vmem:[%s6873 + $0x4c] sm:$0xf]
        %v7663 = vld [vmem:[%s6873 + $0x50] sm:$0x1]
        %v7664 = vld [vmem:[%s6873 + $0x54] sm:$0xf]
        %v7665 = vld [vmem:[%s6873 + $0x58] sm:$0xf]
        %v7666 = vld [vmem:[%s6873 + $0x5c] sm:$0x1]
        %v7667 = vld [vmem:[%s6873 + $0x60] sm:$0xf]
        %v7668 = vld [vmem:[%s6873 + $0x64] sm:$0xf]
        %v7669 = vld [vmem:[%s6873 + $0x68] sm:$0x1]
        %v7670 = vld [vmem:[%s6873 + $0x6c] sm:$0xf]
        %v7671 = vld [vmem:[%s6873 + $0x70] sm:$0xf]
        %v7672 = vld [vmem:[%s6873 + $0x74] sm:$0x1]
        %v7673 = vld [vmem:[%s6873 + $0x78] sm:$0xf]
        %v7674 = vld [vmem:[%s6873 + $0x7c] sm:$0xf]
        %v7675 = vld [vmem:[%s6873 + $0x80] sm:$0x1]
        %v7676 = vld [vmem:[%s6873 + $0x84] sm:$0xf]
        %v7677 = vld [vmem:[%s6873 + $0x88] sm:$0xf]
        %v7678 = vld [vmem:[%s6873 + $0x8c] sm:$0x1]
        %v7679 = vld [vmem:[%s6873 + $0x90] sm:$0xf]
        %v7680 = vld [vmem:[%s6873 + $0x94] sm:$0xf]
        %v7681 = vld [vmem:[%s6873 + $0x98] sm:$0x1]
        %v7682 = vld [vmem:[%s6873 + $0x9c] sm:$0xf]
        %v7683 = vld [vmem:[%s6873 + $0xa0] sm:$0xf]
        %v7684 = vld [vmem:[%s6873 + $0xa4] sm:$0x1]
        %v7685 = vld [vmem:[%s6873 + $0xa8] sm:$0xf]
        %v7686 = vld [vmem:[%s6873 + $0xac] sm:$0xf]
        %v7687 = vld [vmem:[%s6873 + $0xb0] sm:$0x1]
        %v7688 = vld [vmem:[%s6873 + $0xb4] sm:$0xf]
        %v7689 = vld [vmem:[%s6873 + $0xb8] sm:$0xf]
        %v7690 = vld [vmem:[%s6873 + $0xbc] sm:$0x1]
        %v7692 = vshrl.u32 %v7643, 16
        %v7694 = vrot.slane %v7692, 4
        %v7695 = vshll.u32 %v7643, 16
        %v7697 = vrot.slane %v7695, 5
        %v7698 = vor.u32 %v7694, %v7697
        %v7699 = vrot.slane %v7698, 4
        %v7701 = vshll.u32 %v7644, 16
        %v7703 = vrot.slane %v7701, 5
        %v7704 = vsel %vm1354, %v7699, %v7703
        %v7705 = vshrl.u32 %v7644, 16
        %v7707 = vrot.slane %v7705, 4
        %v7708 = vor.u32 %v7707, %v7703
        %v7709 = vrot.slane %v7708, 4
        %v7711 = vshll.u32 %v7645, 16
        %v7713 = vrot.slane %v7711, 5
        %v7714 = vsel %vm1354, %v7709, %v7713
        %v7716 = vshrl.u32 %v7646, 16
        %v7718 = vrot.slane %v7716, 4
        %v7719 = vshll.u32 %v7646, 16
        %v7721 = vrot.slane %v7719, 5
        %v7722 = vor.u32 %v7718, %v7721
        %v7723 = vrot.slane %v7722, 4
        %v7725 = vshll.u32 %v7647, 16
        %v7727 = vrot.slane %v7725, 5
        %v7728 = vsel %vm1354, %v7723, %v7727
        %v7729 = vshrl.u32 %v7647, 16
        %v7731 = vrot.slane %v7729, 4
        %v7732 = vor.u32 %v7731, %v7727
        %v7733 = vrot.slane %v7732, 4
        %v7735 = vshll.u32 %v7648, 16
        %v7737 = vrot.slane %v7735, 5
        %v7738 = vsel %vm1354, %v7733, %v7737
        %v7740 = vshrl.u32 %v7649, 16
        %v7742 = vrot.slane %v7740, 4
        %v7743 = vshll.u32 %v7649, 16
        %v7745 = vrot.slane %v7743, 5
        %v7746 = vor.u32 %v7742, %v7745
        %v7747 = vrot.slane %v7746, 4
        %v7749 = vshll.u32 %v7650, 16
        %v7751 = vrot.slane %v7749, 5
        %v7752 = vsel %vm1354, %v7747, %v7751
        %v7753 = vshrl.u32 %v7650, 16
        %v7755 = vrot.slane %v7753, 4
        %v7756 = vor.u32 %v7755, %v7751
        %v7757 = vrot.slane %v7756, 4
        %v7759 = vshll.u32 %v7651, 16
        %v7761 = vrot.slane %v7759, 5
        %v7762 = vsel %vm1354, %v7757, %v7761
        %v7764 = vshrl.u32 %v7652, 16
        %v7766 = vrot.slane %v7764, 4
        %v7767 = vshll.u32 %v7652, 16
        %v7769 = vrot.slane %v7767, 5
        %v7770 = vor.u32 %v7766, %v7769
        %v7771 = vrot.slane %v7770, 4
        %v7773 = vshll.u32 %v7653, 16
        %v7775 = vrot.slane %v7773, 5
        %v7776 = vsel %vm1354, %v7771, %v7775
        %v7777 = vshrl.u32 %v7653, 16
        %v7779 = vrot.slane %v7777, 4
        %v7780 = vor.u32 %v7779, %v7775
        %v7781 = vrot.slane %v7780, 4
        %v7783 = vshll.u32 %v7654, 16
        %v7785 = vrot.slane %v7783, 5
        %v7786 = vsel %vm1354, %v7781, %v7785
        %v7788 = vshrl.u32 %v7655, 16
        %v7790 = vrot.slane %v7788, 4
        %v7791 = vshll.u32 %v7655, 16
        %v7793 = vrot.slane %v7791, 5
        %v7794 = vor.u32 %v7790, %v7793
        %v7795 = vrot.slane %v7794, 4
        %v7797 = vshll.u32 %v7656, 16
        %v7799 = vrot.slane %v7797, 5
        %v7800 = vsel %vm1354, %v7795, %v7799
        %v7801 = vshrl.u32 %v7656, 16
        %v7803 = vrot.slane %v7801, 4
        %v7804 = vor.u32 %v7803, %v7799
        %v7805 = vrot.slane %v7804, 4
        %v7807 = vshll.u32 %v7657, 16
        %v7809 = vrot.slane %v7807, 5
        %v7810 = vsel %vm1354, %v7805, %v7809
        %v7812 = vshrl.u32 %v7658, 16
        %v7814 = vrot.slane %v7812, 4
        %v7815 = vshll.u32 %v7658, 16
        %v7817 = vrot.slane %v7815, 5
        %v7818 = vor.u32 %v7814, %v7817
        %v7819 = vrot.slane %v7818, 4
        %v7821 = vshll.u32 %v7659, 16
        %v7823 = vrot.slane %v7821, 5
        %v7824 = vsel %vm1354, %v7819, %v7823
        %v7825 = vshrl.u32 %v7659, 16
        %v7827 = vrot.slane %v7825, 4
        %v7828 = vor.u32 %v7827, %v7823
        %v7829 = vrot.slane %v7828, 4
        %v7831 = vshll.u32 %v7660, 16
        %v7833 = vrot.slane %v7831, 5
        %v7834 = vsel %vm1354, %v7829, %v7833
        %v7836 = vshrl.u32 %v7661, 16
        %v7838 = vrot.slane %v7836, 4
        %v7839 = vshll.u32 %v7661, 16
        %v7841 = vrot.slane %v7839, 5
        %v7842 = vor.u32 %v7838, %v7841
        %v7843 = vrot.slane %v7842, 4
        %v7845 = vshll.u32 %v7662, 16
        %v7847 = vrot.slane %v7845, 5
        %v7848 = vsel %vm1354, %v7843, %v7847
        %v7849 = vshrl.u32 %v7662, 16
        %v7851 = vrot.slane %v7849, 4
        %v7852 = vor.u32 %v7851, %v7847
        %v7853 = vrot.slane %v7852, 4
        %v7855 = vshll.u32 %v7663, 16
        %v7857 = vrot.slane %v7855, 5
        %v7858 = vsel %vm1354, %v7853, %v7857
        %v7860 = vshrl.u32 %v7664, 16
        %v7862 = vrot.slane %v7860, 4
        %v7863 = vshll.u32 %v7664, 16
        %v7865 = vrot.slane %v7863, 5
        %v7866 = vor.u32 %v7862, %v7865
        %v7867 = vrot.slane %v7866, 4
        %v7869 = vshll.u32 %v7665, 16
        %v7871 = vrot.slane %v7869, 5
        %v7872 = vsel %vm1354, %v7867, %v7871
        %v7873 = vshrl.u32 %v7665, 16
        %v7875 = vrot.slane %v7873, 4
        %v7876 = vor.u32 %v7875, %v7871
        %v7877 = vrot.slane %v7876, 4
        %v7879 = vshll.u32 %v7666, 16
        %v7881 = vrot.slane %v7879, 5
        %v7882 = vsel %vm1354, %v7877, %v7881
        %v7884 = vshrl.u32 %v7667, 16
        %v7886 = vrot.slane %v7884, 4
        %v7887 = vshll.u32 %v7667, 16
        %v7889 = vrot.slane %v7887, 5
        %v7890 = vor.u32 %v7886, %v7889
        %v7891 = vrot.slane %v7890, 4
        %v7893 = vshll.u32 %v7668, 16
        %v7895 = vrot.slane %v7893, 5
        %v7896 = vsel %vm1354, %v7891, %v7895
        %v7897 = vshrl.u32 %v7668, 16
        %v7899 = vrot.slane %v7897, 4
        %v7900 = vor.u32 %v7899, %v7895
        %v7901 = vrot.slane %v7900, 4
        %v7903 = vshll.u32 %v7669, 16
        %v7905 = vrot.slane %v7903, 5
        %v7906 = vsel %vm1354, %v7901, %v7905
        %v7908 = vshrl.u32 %v7670, 16
        %v7910 = vrot.slane %v7908, 4
        %v7911 = vshll.u32 %v7670, 16
        %v7913 = vrot.slane %v7911, 5
        %v7914 = vor.u32 %v7910, %v7913
        %v7915 = vrot.slane %v7914, 4
        %v7917 = vshll.u32 %v7671, 16
        %v7919 = vrot.slane %v7917, 5
        %v7920 = vsel %vm1354, %v7915, %v7919
        %v7921 = vshrl.u32 %v7671, 16
        %v7923 = vrot.slane %v7921, 4
        %v7924 = vor.u32 %v7923, %v7919
        %v7925 = vrot.slane %v7924, 4
        %v7927 = vshll.u32 %v7672, 16
        %v7929 = vrot.slane %v7927, 5
        %v7930 = vsel %vm1354, %v7925, %v7929
        %v7932 = vshrl.u32 %v7673, 16
        %v7934 = vrot.slane %v7932, 4
        %v7935 = vshll.u32 %v7673, 16
        %v7937 = vrot.slane %v7935, 5
        %v7938 = vor.u32 %v7934, %v7937
        %v7939 = vrot.slane %v7938, 4
        %v7941 = vshll.u32 %v7674, 16
        %v7943 = vrot.slane %v7941, 5
        %v7944 = vsel %vm1354, %v7939, %v7943
        %v7945 = vshrl.u32 %v7674, 16
        %v7947 = vrot.slane %v7945, 4
        %v7948 = vor.u32 %v7947, %v7943
        %v7949 = vrot.slane %v7948, 4
        %v7951 = vshll.u32 %v7675, 16
        %v7953 = vrot.slane %v7951, 5
        %v7954 = vsel %vm1354, %v7949, %v7953
        %v7956 = vshrl.u32 %v7676, 16
        %v7958 = vrot.slane %v7956, 4
        %v7959 = vshll.u32 %v7676, 16
        %v7961 = vrot.slane %v7959, 5
        %v7962 = vor.u32 %v7958, %v7961
        %v7963 = vrot.slane %v7962, 4
        %v7965 = vshll.u32 %v7677, 16
        %v7967 = vrot.slane %v7965, 5
        %v7968 = vsel %vm1354, %v7963, %v7967
        %v7969 = vshrl.u32 %v7677, 16
        %v7971 = vrot.slane %v7969, 4
        %v7972 = vor.u32 %v7971, %v7967
        %v7973 = vrot.slane %v7972, 4
        %v7975 = vshll.u32 %v7678, 16
        %v7977 = vrot.slane %v7975, 5
        %v7978 = vsel %vm1354, %v7973, %v7977
        %v7980 = vshrl.u32 %v7679, 16
        %v7982 = vrot.slane %v7980, 4
        %v7983 = vshll.u32 %v7679, 16
        %v7985 = vrot.slane %v7983, 5
        %v7986 = vor.u32 %v7982, %v7985
        %v7987 = vrot.slane %v7986, 4
        %v7989 = vshll.u32 %v7680, 16
        %v7991 = vrot.slane %v7989, 5
        %v7992 = vsel %vm1354, %v7987, %v7991
        %v7993 = vshrl.u32 %v7680, 16
        %v7995 = vrot.slane %v7993, 4
        %v7996 = vor.u32 %v7995, %v7991
        %v7997 = vrot.slane %v7996, 4
        %v7999 = vshll.u32 %v7681, 16
        %v8001 = vrot.slane %v7999, 5
        %v8002 = vsel %vm1354, %v7997, %v8001
        %v8004 = vshrl.u32 %v7682, 16
        %v8006 = vrot.slane %v8004, 4
        %v8007 = vshll.u32 %v7682, 16
        %v8009 = vrot.slane %v8007, 5
        %v8010 = vor.u32 %v8006, %v8009
        %v8011 = vrot.slane %v8010, 4
        %v8013 = vshll.u32 %v7683, 16
        %v8015 = vrot.slane %v8013, 5
        %v8016 = vsel %vm1354, %v8011, %v8015
        %v8017 = vshrl.u32 %v7683, 16
        %v8019 = vrot.slane %v8017, 4
        %v8020 = vor.u32 %v8019, %v8015
        %v8021 = vrot.slane %v8020, 4
        %v8023 = vshll.u32 %v7684, 16
        %v8025 = vrot.slane %v8023, 5
        %v8026 = vsel %vm1354, %v8021, %v8025
        %v8028 = vshrl.u32 %v7685, 16
        %v8030 = vrot.slane %v8028, 4
        %v8031 = vshll.u32 %v7685, 16
        %v8033 = vrot.slane %v8031, 5
        %v8034 = vor.u32 %v8030, %v8033
        %v8035 = vrot.slane %v8034, 4
        %v8037 = vshll.u32 %v7686, 16
        %v8039 = vrot.slane %v8037, 5
        %v8040 = vsel %vm1354, %v8035, %v8039
        %v8041 = vshrl.u32 %v7686, 16
        %v8043 = vrot.slane %v8041, 4
        %v8044 = vor.u32 %v8043, %v8039
        %v8045 = vrot.slane %v8044, 4
        %v8047 = vshll.u32 %v7687, 16
        %v8049 = vrot.slane %v8047, 5
        %v8050 = vsel %vm1354, %v8045, %v8049
        %v8052 = vshrl.u32 %v7688, 16
        %v8054 = vrot.slane %v8052, 4
        %v8055 = vshll.u32 %v7688, 16
        %v8057 = vrot.slane %v8055, 5
        %v8058 = vor.u32 %v8054, %v8057
        %v8059 = vrot.slane %v8058, 4
        %v8061 = vshll.u32 %v7689, 16
        %v8063 = vrot.slane %v8061, 5
        %v8064 = vsel %vm1354, %v8059, %v8063
        %v8065 = vshrl.u32 %v7689, 16
        %v8067 = vrot.slane %v8065, 4
        %v8068 = vor.u32 %v8067, %v8063
        %v8069 = vrot.slane %v8068, 4
        %v8071 = vshll.u32 %v7690, 16
        %v8073 = vrot.slane %v8071, 5
        %v8074 = vsel %vm1354, %v8069, %v8073
        %v8075 = vld [vmem:[%s6873] sm:$0xe]
        %v8076 = vld [vmem:[%s6873 + $0xc] sm:$0xe]
        %v8077 = vld [vmem:[%s6873 + $0x18] sm:$0xe]
        %v8078 = vld [vmem:[%s6873 + $0x24] sm:$0xe]
        %v8079 = vld [vmem:[%s6873 + $0x30] sm:$0xe]
        %v8080 = vld [vmem:[%s6873 + $0x3c] sm:$0xe]
        %v8081 = vld [vmem:[%s6873 + $0x48] sm:$0xe]
        %v8082 = vld [vmem:[%s6873 + $0x54] sm:$0xe]
        %v8083 = vld [vmem:[%s6873 + $0x60] sm:$0xe]
        %v8084 = vld [vmem:[%s6873 + $0x6c] sm:$0xe]
        %v8085 = vld [vmem:[%s6873 + $0x78] sm:$0xe]
        %v8086 = vld [vmem:[%s6873 + $0x84] sm:$0xe]
        %v8087 = vld [vmem:[%s6873 + $0x90] sm:$0xe]
        %v8088 = vld [vmem:[%s6873 + $0x9c] sm:$0xe]
        %v8089 = vld [vmem:[%s6873 + $0xa8] sm:$0xe]
        %v8090 = vld [vmem:[%s6873 + $0xb4] sm:$0xe]
        %v8139 = vrot.slane %v8075, 5
        %v8140 = vrot.slane %v8139, 4
        %v8141 = vrot.slane %v7644, 5
        %v8142 = vsel %vm1805, %v8140, %v8141
        %v8143 = vrot.slane %v8141, 4
        %v8144 = vrot.slane %v7645, 5
        %v8145 = vsel %vm1805, %v8143, %v8144
        %v8146 = vrot.slane %v8076, 5
        %v8147 = vrot.slane %v8146, 4
        %v8148 = vrot.slane %v7647, 5
        %v8149 = vsel %vm1805, %v8147, %v8148
        %v8150 = vrot.slane %v8148, 4
        %v8151 = vrot.slane %v7648, 5
        %v8152 = vsel %vm1805, %v8150, %v8151
        %v8153 = vrot.slane %v8077, 5
        %v8154 = vrot.slane %v8153, 4
        %v8155 = vrot.slane %v7650, 5
        %v8156 = vsel %vm1805, %v8154, %v8155
        %v8157 = vrot.slane %v8155, 4
        %v8158 = vrot.slane %v7651, 5
        %v8159 = vsel %vm1805, %v8157, %v8158
        %v8160 = vrot.slane %v8078, 5
        %v8161 = vrot.slane %v8160, 4
        %v8162 = vrot.slane %v7653, 5
        %v8163 = vsel %vm1805, %v8161, %v8162
        %v8164 = vrot.slane %v8162, 4
        %v8165 = vrot.slane %v7654, 5
        %v8166 = vsel %vm1805, %v8164, %v8165
        %v8167 = vrot.slane %v8079, 5
        %v8168 = vrot.slane %v8167, 4
        %v8169 = vrot.slane %v7656, 5
        %v8170 = vsel %vm1805, %v8168, %v8169
        %v8171 = vrot.slane %v8169, 4
        %v8172 = vrot.slane %v7657, 5
        %v8173 = vsel %vm1805, %v8171, %v8172
        %v8174 = vrot.slane %v8080, 5
        %v8175 = vrot.slane %v8174, 4
        %v8176 = vrot.slane %v7659, 5
        %v8177 = vsel %vm1805, %v8175, %v8176
        %v8178 = vrot.slane %v8176, 4
        %v8179 = vrot.slane %v7660, 5
        %v8180 = vsel %vm1805, %v8178, %v8179
        %v8181 = vrot.slane %v8081, 5
        %v8182 = vrot.slane %v8181, 4
        %v8183 = vrot.slane %v7662, 5
        %v8184 = vsel %vm1805, %v8182, %v8183
        %v8185 = vrot.slane %v8183, 4
        %v8186 = vrot.slane %v7663, 5
        %v8187 = vsel %vm1805, %v8185, %v8186
        %v8188 = vrot.slane %v8082, 5
        %v8189 = vrot.slane %v8188, 4
        %v8190 = vrot.slane %v7665, 5
        %v8191 = vsel %vm1805, %v8189, %v8190
        %v8192 = vrot.slane %v8190, 4
        %v8193 = vrot.slane %v7666, 5
        %v8194 = vsel %vm1805, %v8192, %v8193
        %v8195 = vrot.slane %v8083, 5
        %v8196 = vrot.slane %v8195, 4
        %v8197 = vrot.slane %v7668, 5
        %v8198 = vsel %vm1805, %v8196, %v8197
        %v8199 = vrot.slane %v8197, 4
        %v8200 = vrot.slane %v7669, 5
        %v8201 = vsel %vm1805, %v8199, %v8200
        %v8202 = vrot.slane %v8084, 5
        %v8203 = vrot.slane %v8202, 4
        %v8204 = vrot.slane %v7671, 5
        %v8205 = vsel %vm1805, %v8203, %v8204
        %v8206 = vrot.slane %v8204, 4
        %v8207 = vrot.slane %v7672, 5
        %v8208 = vsel %vm1805, %v8206, %v8207
        %v8209 = vrot.slane %v8085, 5
        %v8210 = vrot.slane %v8209, 4
        %v8211 = vrot.slane %v7674, 5
        %v8212 = vsel %vm1805, %v8210, %v8211
        %v8213 = vrot.slane %v8211, 4
        %v8214 = vrot.slane %v7675, 5
        %v8215 = vsel %vm1805, %v8213, %v8214
        %v8216 = vrot.slane %v8086, 5
        %v8217 = vrot.slane %v8216, 4
        %v8218 = vrot.slane %v7677, 5
        %v8219 = vsel %vm1805, %v8217, %v8218
        %v8220 = vrot.slane %v8218, 4
        %v8221 = vrot.slane %v7678, 5
        %v8222 = vsel %vm1805, %v8220, %v8221
        %v8223 = vrot.slane %v8087, 5
        %v8224 = vrot.slane %v8223, 4
        %v8225 = vrot.slane %v7680, 5
        %v8226 = vsel %vm1805, %v8224, %v8225
        %v8227 = vrot.slane %v8225, 4
        %v8228 = vrot.slane %v7681, 5
        %v8229 = vsel %vm1805, %v8227, %v8228
        %v8230 = vrot.slane %v8088, 5
        %v8231 = vrot.slane %v8230, 4
        %v8232 = vrot.slane %v7683, 5
        %v8233 = vsel %vm1805, %v8231, %v8232
        %v8234 = vrot.slane %v8232, 4
        %v8235 = vrot.slane %v7684, 5
        %v8236 = vsel %vm1805, %v8234, %v8235
        %v8237 = vrot.slane %v8089, 5
        %v8238 = vrot.slane %v8237, 4
        %v8239 = vrot.slane %v7686, 5
        %v8240 = vsel %vm1805, %v8238, %v8239
        %v8241 = vrot.slane %v8239, 4
        %v8242 = vrot.slane %v7687, 5
        %v8243 = vsel %vm1805, %v8241, %v8242
        %v8244 = vrot.slane %v8090, 5
        %v8245 = vrot.slane %v8244, 4
        %v8246 = vrot.slane %v7689, 5
        %v8247 = vsel %vm1805, %v8245, %v8246
        %v8248 = vrot.slane %v8246, 4
        %v8249 = vrot.slane %v7690, 5
        %v8250 = vsel %vm1805, %v8248, %v8249
        %v8251 = vld [vmem:[%s6873 + $0x8] sm:$0x3]
        %v8252 = vld [vmem:[%s6873 + $0x14] sm:$0x3]
        %v8253 = vld [vmem:[%s6873 + $0x20] sm:$0x3]
        %v8254 = vld [vmem:[%s6873 + $0x2c] sm:$0x3]
        %v8255 = vld [vmem:[%s6873 + $0x38] sm:$0x3]
        %v8256 = vld [vmem:[%s6873 + $0x44] sm:$0x3]
        %v8257 = vld [vmem:[%s6873 + $0x50] sm:$0x3]
        %v8258 = vld [vmem:[%s6873 + $0x5c] sm:$0x3]
        %v8259 = vld [vmem:[%s6873 + $0x68] sm:$0x3]
        %v8260 = vld [vmem:[%s6873 + $0x74] sm:$0x3]
        %v8261 = vld [vmem:[%s6873 + $0x80] sm:$0x3]
        %v8262 = vld [vmem:[%s6873 + $0x8c] sm:$0x3]
        %v8263 = vld [vmem:[%s6873 + $0x98] sm:$0x3]
        %v8264 = vld [vmem:[%s6873 + $0xa4] sm:$0x3]
        %v8265 = vld [vmem:[%s6873 + $0xb0] sm:$0x3]
        %v8266 = vld [vmem:[%s6873 + $0xbc] sm:$0x3]
        %v8268 = vshrl.u32 %v8075, 16
        %v8270 = vrot.slane %v8268, 5
        %v8271 = vshll.u32 %v8075, 16
        %v8273 = vrot.slane %v8271, 6
        %v8274 = vor.u32 %v8270, %v8273
        %v8275 = vrot.slane %v8274, 4
        %v8276 = vrot.slane %v7705, 5
        %v8277 = vrot.slane %v7701, 6
        %v8278 = vor.u32 %v8276, %v8277
        %v8279 = vsel %vm1936, %v8275, %v8278
        %v8280 = vrot.slane %v8278, 4
        %v8282 = vshrl.u32 %v8251, 16
        %v8284 = vrot.slane %v8282, 5
        %v8285 = vshll.u32 %v8251, 16
        %v8287 = vrot.slane %v8285, 6
        %v8288 = vor.u32 %v8284, %v8287
        %v8289 = vsel %vm1936, %v8280, %v8288
        %v8291 = vshrl.u32 %v8076, 16
        %v8293 = vrot.slane %v8291, 5
        %v8294 = vshll.u32 %v8076, 16
        %v8296 = vrot.slane %v8294, 6
        %v8297 = vor.u32 %v8293, %v8296
        %v8298 = vrot.slane %v8297, 4
        %v8299 = vrot.slane %v7729, 5
        %v8300 = vrot.slane %v7725, 6
        %v8301 = vor.u32 %v8299, %v8300
        %v8302 = vsel %vm1936, %v8298, %v8301
        %v8303 = vrot.slane %v8301, 4
        %v8305 = vshrl.u32 %v8252, 16
        %v8307 = vrot.slane %v8305, 5
        %v8308 = vshll.u32 %v8252, 16
        %v8310 = vrot.slane %v8308, 6
        %v8311 = vor.u32 %v8307, %v8310
        %v8312 = vsel %vm1936, %v8303, %v8311
        %v8314 = vshrl.u32 %v8077, 16
        %v8316 = vrot.slane %v8314, 5
        %v8317 = vshll.u32 %v8077, 16
        %v8319 = vrot.slane %v8317, 6
        %v8320 = vor.u32 %v8316, %v8319
        %v8321 = vrot.slane %v8320, 4
        %v8322 = vrot.slane %v7753, 5
        %v8323 = vrot.slane %v7749, 6
        %v8324 = vor.u32 %v8322, %v8323
        %v8325 = vsel %vm1936, %v8321, %v8324
        %v8326 = vrot.slane %v8324, 4
        %v8328 = vshrl.u32 %v8253, 16
        %v8330 = vrot.slane %v8328, 5
        %v8331 = vshll.u32 %v8253, 16
        %v8333 = vrot.slane %v8331, 6
        %v8334 = vor.u32 %v8330, %v8333
        %v8335 = vsel %vm1936, %v8326, %v8334
        %v8337 = vshrl.u32 %v8078, 16
        %v8339 = vrot.slane %v8337, 5
        %v8340 = vshll.u32 %v8078, 16
        %v8342 = vrot.slane %v8340, 6
        %v8343 = vor.u32 %v8339, %v8342
        %v8344 = vrot.slane %v8343, 4
        %v8345 = vrot.slane %v7777, 5
        %v8346 = vrot.slane %v7773, 6
        %v8347 = vor.u32 %v8345, %v8346
        %v8348 = vsel %vm1936, %v8344, %v8347
        %v8349 = vrot.slane %v8347, 4
        %v8351 = vshrl.u32 %v8254, 16
        %v8353 = vrot.slane %v8351, 5
        %v8354 = vshll.u32 %v8254, 16
        %v8356 = vrot.slane %v8354, 6
        %v8357 = vor.u32 %v8353, %v8356
        %v8358 = vsel %vm1936, %v8349, %v8357
        %v8360 = vshrl.u32 %v8079, 16
        %v8362 = vrot.slane %v8360, 5
        %v8363 = vshll.u32 %v8079, 16
        %v8365 = vrot.slane %v8363, 6
        %v8366 = vor.u32 %v8362, %v8365
        %v8367 = vrot.slane %v8366, 4
        %v8368 = vrot.slane %v7801, 5
        %v8369 = vrot.slane %v7797, 6
        %v8370 = vor.u32 %v8368, %v8369
        %v8371 = vsel %vm1936, %v8367, %v8370
        %v8372 = vrot.slane %v8370, 4
        %v8374 = vshrl.u32 %v8255, 16
        %v8376 = vrot.slane %v8374, 5
        %v8377 = vshll.u32 %v8255, 16
        %v8379 = vrot.slane %v8377, 6
        %v8380 = vor.u32 %v8376, %v8379
        %v8381 = vsel %vm1936, %v8372, %v8380
        %v8383 = vshrl.u32 %v8080, 16
        %v8385 = vrot.slane %v8383, 5
        %v8386 = vshll.u32 %v8080, 16
        %v8388 = vrot.slane %v8386, 6
        %v8389 = vor.u32 %v8385, %v8388
        %v8390 = vrot.slane %v8389, 4
        %v8391 = vrot.slane %v7825, 5
        %v8392 = vrot.slane %v7821, 6
        %v8393 = vor.u32 %v8391, %v8392
        %v8394 = vsel %vm1936, %v8390, %v8393
        %v8395 = vrot.slane %v8393, 4
        %v8397 = vshrl.u32 %v8256, 16
        %v8399 = vrot.slane %v8397, 5
        %v8400 = vshll.u32 %v8256, 16
        %v8402 = vrot.slane %v8400, 6
        %v8403 = vor.u32 %v8399, %v8402
        %v8404 = vsel %vm1936, %v8395, %v8403
        %v8406 = vshrl.u32 %v8081, 16
        %v8408 = vrot.slane %v8406, 5
        %v8409 = vshll.u32 %v8081, 16
        %v8411 = vrot.slane %v8409, 6
        %v8412 = vor.u32 %v8408, %v8411
        %v8413 = vrot.slane %v8412, 4
        %v8414 = vrot.slane %v7849, 5
        %v8415 = vrot.slane %v7845, 6
        %v8416 = vor.u32 %v8414, %v8415
        %v8417 = vsel %vm1936, %v8413, %v8416
        %v8418 = vrot.slane %v8416, 4
        %v8420 = vshrl.u32 %v8257, 16
        %v8422 = vrot.slane %v8420, 5
        %v8423 = vshll.u32 %v8257, 16
        %v8425 = vrot.slane %v8423, 6
        %v8426 = vor.u32 %v8422, %v8425
        %v8427 = vsel %vm1936, %v8418, %v8426
        %v8429 = vshrl.u32 %v8082, 16
        %v8431 = vrot.slane %v8429, 5
        %v8432 = vshll.u32 %v8082, 16
        %v8434 = vrot.slane %v8432, 6
        %v8435 = vor.u32 %v8431, %v8434
        %v8436 = vrot.slane %v8435, 4
        %v8437 = vrot.slane %v7873, 5
        %v8438 = vrot.slane %v7869, 6
        %v8439 = vor.u32 %v8437, %v8438
        %v8440 = vsel %vm1936, %v8436, %v8439
        %v8441 = vrot.slane %v8439, 4
        %v8443 = vshrl.u32 %v8258, 16
        %v8445 = vrot.slane %v8443, 5
        %v8446 = vshll.u32 %v8258, 16
        %v8448 = vrot.slane %v8446, 6
        %v8449 = vor.u32 %v8445, %v8448
        %v8450 = vsel %vm1936, %v8441, %v8449
        %v8452 = vshrl.u32 %v8083, 16
        %v8454 = vrot.slane %v8452, 5
        %v8455 = vshll.u32 %v8083, 16
        %v8457 = vrot.slane %v8455, 6
        %v8458 = vor.u32 %v8454, %v8457
        %v8459 = vrot.slane %v8458, 4
        %v8460 = vrot.slane %v7897, 5
        %v8461 = vrot.slane %v7893, 6
        %v8462 = vor.u32 %v8460, %v8461
        %v8463 = vsel %vm1936, %v8459, %v8462
        %v8464 = vrot.slane %v8462, 4
        %v8466 = vshrl.u32 %v8259, 16
        %v8468 = vrot.slane %v8466, 5
        %v8469 = vshll.u32 %v8259, 16
        %v8471 = vrot.slane %v8469, 6
        %v8472 = vor.u32 %v8468, %v8471
        %v8473 = vsel %vm1936, %v8464, %v8472
        %v8475 = vshrl.u32 %v8084, 16
        %v8477 = vrot.slane %v8475, 5
        %v8478 = vshll.u32 %v8084, 16
        %v8480 = vrot.slane %v8478, 6
        %v8481 = vor.u32 %v8477, %v8480
        %v8482 = vrot.slane %v8481, 4
        %v8483 = vrot.slane %v7921, 5
        %v8484 = vrot.slane %v7917, 6
        %v8485 = vor.u32 %v8483, %v8484
        %v8486 = vsel %vm1936, %v8482, %v8485
        %v8487 = vrot.slane %v8485, 4
        %v8489 = vshrl.u32 %v8260, 16
        %v8491 = vrot.slane %v8489, 5
        %v8492 = vshll.u32 %v8260, 16
        %v8494 = vrot.slane %v8492, 6
        %v8495 = vor.u32 %v8491, %v8494
        %v8496 = vsel %vm1936, %v8487, %v8495
        %v8498 = vshrl.u32 %v8085, 16
        %v8500 = vrot.slane %v8498, 5
        %v8501 = vshll.u32 %v8085, 16
        %v8503 = vrot.slane %v8501, 6
        %v8504 = vor.u32 %v8500, %v8503
        %v8505 = vrot.slane %v8504, 4
        %v8506 = vrot.slane %v7945, 5
        %v8507 = vrot.slane %v7941, 6
        %v8508 = vor.u32 %v8506, %v8507
        %v8509 = vsel %vm1936, %v8505, %v8508
        %v8510 = vrot.slane %v8508, 4
        %v8512 = vshrl.u32 %v8261, 16
        %v8514 = vrot.slane %v8512, 5
        %v8515 = vshll.u32 %v8261, 16
        %v8517 = vrot.slane %v8515, 6
        %v8518 = vor.u32 %v8514, %v8517
        %v8519 = vsel %vm1936, %v8510, %v8518
        %v8521 = vshrl.u32 %v8086, 16
        %v8523 = vrot.slane %v8521, 5
        %v8524 = vshll.u32 %v8086, 16
        %v8526 = vrot.slane %v8524, 6
        %v8527 = vor.u32 %v8523, %v8526
        %v8528 = vrot.slane %v8527, 4
        %v8529 = vrot.slane %v7969, 5
        %v8530 = vrot.slane %v7965, 6
        %v8531 = vor.u32 %v8529, %v8530
        %v8532 = vsel %vm1936, %v8528, %v8531
        %v8533 = vrot.slane %v8531, 4
        %v8535 = vshrl.u32 %v8262, 16
        %v8537 = vrot.slane %v8535, 5
        %v8538 = vshll.u32 %v8262, 16
        %v8540 = vrot.slane %v8538, 6
        %v8541 = vor.u32 %v8537, %v8540
        %v8542 = vsel %vm1936, %v8533, %v8541
        %v8544 = vshrl.u32 %v8087, 16
        %v8546 = vrot.slane %v8544, 5
        %v8547 = vshll.u32 %v8087, 16
        %v8549 = vrot.slane %v8547, 6
        %v8550 = vor.u32 %v8546, %v8549
        %v8551 = vrot.slane %v8550, 4
        %v8552 = vrot.slane %v7993, 5
        %v8553 = vrot.slane %v7989, 6
        %v8554 = vor.u32 %v8552, %v8553
        %v8555 = vsel %vm1936, %v8551, %v8554
        %v8556 = vrot.slane %v8554, 4
        %v8558 = vshrl.u32 %v8263, 16
        %v8560 = vrot.slane %v8558, 5
        %v8561 = vshll.u32 %v8263, 16
        %v8563 = vrot.slane %v8561, 6
        %v8564 = vor.u32 %v8560, %v8563
        %v8565 = vsel %vm1936, %v8556, %v8564
        %v8567 = vshrl.u32 %v8088, 16
        %v8569 = vrot.slane %v8567, 5
        %v8570 = vshll.u32 %v8088, 16
        %v8572 = vrot.slane %v8570, 6
        %v8573 = vor.u32 %v8569, %v8572
        %v8574 = vrot.slane %v8573, 4
        %v8575 = vrot.slane %v8017, 5
        %v8576 = vrot.slane %v8013, 6
        %v8577 = vor.u32 %v8575, %v8576
        %v8578 = vsel %vm1936, %v8574, %v8577
        %v8579 = vrot.slane %v8577, 4
        %v8581 = vshrl.u32 %v8264, 16
        %v8583 = vrot.slane %v8581, 5
        %v8584 = vshll.u32 %v8264, 16
        %v8586 = vrot.slane %v8584, 6
        %v8587 = vor.u32 %v8583, %v8586
        %v8588 = vsel %vm1936, %v8579, %v8587
        %v8590 = vshrl.u32 %v8089, 16
        %v8592 = vrot.slane %v8590, 5
        %v8593 = vshll.u32 %v8089, 16
        %v8595 = vrot.slane %v8593, 6
        %v8596 = vor.u32 %v8592, %v8595
        %v8597 = vrot.slane %v8596, 4
        %v8598 = vrot.slane %v8041, 5
        %v8599 = vrot.slane %v8037, 6
        %v8600 = vor.u32 %v8598, %v8599
        %v8601 = vsel %vm1936, %v8597, %v8600
        %v8602 = vrot.slane %v8600, 4
        %v8604 = vshrl.u32 %v8265, 16
        %v8606 = vrot.slane %v8604, 5
        %v8607 = vshll.u32 %v8265, 16
        %v8609 = vrot.slane %v8607, 6
        %v8610 = vor.u32 %v8606, %v8609
        %v8611 = vsel %vm1936, %v8602, %v8610
        %v8613 = vshrl.u32 %v8090, 16
        %v8615 = vrot.slane %v8613, 5
        %v8616 = vshll.u32 %v8090, 16
        %v8618 = vrot.slane %v8616, 6
        %v8619 = vor.u32 %v8615, %v8618
        %v8620 = vrot.slane %v8619, 4
        %v8621 = vrot.slane %v8065, 5
        %v8622 = vrot.slane %v8061, 6
        %v8623 = vor.u32 %v8621, %v8622
        %v8624 = vsel %vm1936, %v8620, %v8623
        %v8625 = vrot.slane %v8623, 4
        %v8627 = vshrl.u32 %v8266, 16
        %v8629 = vrot.slane %v8627, 5
        %v8630 = vshll.u32 %v8266, 16
        %v8632 = vrot.slane %v8630, 6
        %v8633 = vor.u32 %v8629, %v8632
        %v8634 = vsel %vm1936, %v8625, %v8633
        %v8635 = vld [vmem:[%s6873] sm:$0xc]
        %v8636 = vld [vmem:[%s6873 + $0xc] sm:$0xc]
        %v8637 = vld [vmem:[%s6873 + $0x18] sm:$0xc]
        %v8638 = vld [vmem:[%s6873 + $0x24] sm:$0xc]
        %v8639 = vld [vmem:[%s6873 + $0x30] sm:$0xc]
        %v8640 = vld [vmem:[%s6873 + $0x3c] sm:$0xc]
        %v8641 = vld [vmem:[%s6873 + $0x48] sm:$0xc]
        %v8642 = vld [vmem:[%s6873 + $0x54] sm:$0xc]
        %v8643 = vld [vmem:[%s6873 + $0x60] sm:$0xc]
        %v8644 = vld [vmem:[%s6873 + $0x6c] sm:$0xc]
        %v8645 = vld [vmem:[%s6873 + $0x78] sm:$0xc]
        %v8646 = vld [vmem:[%s6873 + $0x84] sm:$0xc]
        %v8647 = vld [vmem:[%s6873 + $0x90] sm:$0xc]
        %v8648 = vld [vmem:[%s6873 + $0x9c] sm:$0xc]
        %v8649 = vld [vmem:[%s6873 + $0xa8] sm:$0xc]
        %v8650 = vld [vmem:[%s6873 + $0xb4] sm:$0xc]
        %v8683 = vrot.slane %v8635, 6
        %v8684 = vrot.slane %v8683, 4
        %v8685 = vrot.slane %v7644, 6
        %v8686 = vsel %vm2788, %v8684, %v8685
        %v8687 = vrot.slane %v8685, 4
        %v8688 = vrot.slane %v8251, 6
        %v8689 = vsel %vm2788, %v8687, %v8688
        %v8690 = vrot.slane %v8636, 6
        %v8691 = vrot.slane %v8690, 4
        %v8692 = vrot.slane %v7647, 6
        %v8693 = vsel %vm2788, %v8691, %v8692
        %v8694 = vrot.slane %v8692, 4
        %v8695 = vrot.slane %v8252, 6
        %v8696 = vsel %vm2788, %v8694, %v8695
        %v8697 = vrot.slane %v8637, 6
        %v8698 = vrot.slane %v8697, 4
        %v8699 = vrot.slane %v7650, 6
        %v8700 = vsel %vm2788, %v8698, %v8699
        %v8701 = vrot.slane %v8699, 4
        %v8702 = vrot.slane %v8253, 6
        %v8703 = vsel %vm2788, %v8701, %v8702
        %v8704 = vrot.slane %v8638, 6
        %v8705 = vrot.slane %v8704, 4
        %v8706 = vrot.slane %v7653, 6
        %v8707 = vsel %vm2788, %v8705, %v8706
        %v8708 = vrot.slane %v8706, 4
        %v8709 = vrot.slane %v8254, 6
        %v8710 = vsel %vm2788, %v8708, %v8709
        %v8711 = vrot.slane %v8639, 6
        %v8712 = vrot.slane %v8711, 4
        %v8713 = vrot.slane %v7656, 6
        %v8714 = vsel %vm2788, %v8712, %v8713
        %v8715 = vrot.slane %v8713, 4
        %v8716 = vrot.slane %v8255, 6
        %v8717 = vsel %vm2788, %v8715, %v8716
        %v8718 = vrot.slane %v8640, 6
        %v8719 = vrot.slane %v8718, 4
        %v8720 = vrot.slane %v7659, 6
        %v8721 = vsel %vm2788, %v8719, %v8720
        %v8722 = vrot.slane %v8720, 4
        %v8723 = vrot.slane %v8256, 6
        %v8724 = vsel %vm2788, %v8722, %v8723
        %v8725 = vrot.slane %v8641, 6
        %v8726 = vrot.slane %v8725, 4
        %v8727 = vrot.slane %v7662, 6
        %v8728 = vsel %vm2788, %v8726, %v8727
        %v8729 = vrot.slane %v8727, 4
        %v8730 = vrot.slane %v8257, 6
        %v8731 = vsel %vm2788, %v8729, %v8730
        %v8732 = vrot.slane %v8642, 6
        %v8733 = vrot.slane %v8732, 4
        %v8734 = vrot.slane %v7665, 6
        %v8735 = vsel %vm2788, %v8733, %v8734
        %v8736 = vrot.slane %v8734, 4
        %v8737 = vrot.slane %v8258, 6
        %v8738 = vsel %vm2788, %v8736, %v8737
        %v8739 = vrot.slane %v8643, 6
        %v8740 = vrot.slane %v8739, 4
        %v8741 = vrot.slane %v7668, 6
        %v8742 = vsel %vm2788, %v8740, %v8741
        %v8743 = vrot.slane %v8741, 4
        %v8744 = vrot.slane %v8259, 6
        %v8745 = vsel %vm2788, %v8743, %v8744
        %v8746 = vrot.slane %v8644, 6
        %v8747 = vrot.slane %v8746, 4
        %v8748 = vrot.slane %v7671, 6
        %v8749 = vsel %vm2788, %v8747, %v8748
        %v8750 = vrot.slane %v8748, 4
        %v8751 = vrot.slane %v8260, 6
        %v8752 = vsel %vm2788, %v8750, %v8751
        %v8753 = vrot.slane %v8645, 6
        %v8754 = vrot.slane %v8753, 4
        %v8755 = vrot.slane %v7674, 6
        %v8756 = vsel %vm2788, %v8754, %v8755
        %v8757 = vrot.slane %v8755, 4
        %v8758 = vrot.slane %v8261, 6
        %v8759 = vsel %vm2788, %v8757, %v8758
        %v8760 = vrot.slane %v8646, 6
        %v8761 = vrot.slane %v8760, 4
        %v8762 = vrot.slane %v7677, 6
        %v8763 = vsel %vm2788, %v8761, %v8762
        %v8764 = vrot.slane %v8762, 4
        %v8765 = vrot.slane %v8262, 6
        %v8766 = vsel %vm2788, %v8764, %v8765
        %v8767 = vrot.slane %v8647, 6
        %v8768 = vrot.slane %v8767, 4
        %v8769 = vrot.slane %v7680, 6
        %v8770 = vsel %vm2788, %v8768, %v8769
        %v8771 = vrot.slane %v8769, 4
        %v8772 = vrot.slane %v8263, 6
        %v8773 = vsel %vm2788, %v8771, %v8772
        %v8774 = vrot.slane %v8648, 6
        %v8775 = vrot.slane %v8774, 4
        %v8776 = vrot.slane %v7683, 6
        %v8777 = vsel %vm2788, %v8775, %v8776
        %v8778 = vrot.slane %v8776, 4
        %v8779 = vrot.slane %v8264, 6
        %v8780 = vsel %vm2788, %v8778, %v8779
        %v8781 = vrot.slane %v8649, 6
        %v8782 = vrot.slane %v8781, 4
        %v8783 = vrot.slane %v7686, 6
        %v8784 = vsel %vm2788, %v8782, %v8783
        %v8785 = vrot.slane %v8783, 4
        %v8786 = vrot.slane %v8265, 6
        %v8787 = vsel %vm2788, %v8785, %v8786
        %v8788 = vrot.slane %v8650, 6
        %v8789 = vrot.slane %v8788, 4
        %v8790 = vrot.slane %v7689, 6
        %v8791 = vsel %vm2788, %v8789, %v8790
        %v8792 = vrot.slane %v8790, 4
        %v8793 = vrot.slane %v8266, 6
        %v8794 = vsel %vm2788, %v8792, %v8793
        %v8795 = vunpack.c.l.b16 %v7704
        %v8796 = vunpack.c.l.b16 %v7714
        %v8797 = vunpack.c.l.b16 %v7728
        %v8798 = vunpack.c.l.b16 %v7738
        %v8799 = vunpack.c.l.b16 %v7752
        %v8800 = vunpack.c.l.b16 %v7762
        %v8801 = vunpack.c.l.b16 %v7776
        %v8802 = vunpack.c.l.b16 %v7786
        %v8803 = vunpack.c.l.b16 %v7800
        %v8804 = vunpack.c.l.b16 %v7810
        %v8805 = vunpack.c.l.b16 %v7824
        %v8806 = vunpack.c.l.b16 %v7834
        %v8807 = vunpack.c.l.b16 %v7848
        %v8808 = vunpack.c.l.b16 %v7858
        %v8809 = vunpack.c.l.b16 %v7872
        %v8810 = vunpack.c.l.b16 %v7882
        %v8811 = vunpack.c.l.b16 %v7896
        %v8812 = vunpack.c.l.b16 %v7906
        %v8813 = vunpack.c.l.b16 %v7920
        %v8814 = vunpack.c.l.b16 %v7930
        %v8815 = vunpack.c.l.b16 %v7944
        %v8816 = vunpack.c.l.b16 %v7954
        %v8817 = vunpack.c.l.b16 %v7968
        %v8818 = vunpack.c.l.b16 %v7978
        %v8819 = vunpack.c.l.b16 %v7992
        %v8820 = vunpack.c.l.b16 %v8002
        %v8821 = vunpack.c.l.b16 %v8016
        %v8822 = vunpack.c.l.b16 %v8026
        %v8823 = vunpack.c.l.b16 %v8040
        %v8824 = vunpack.c.l.b16 %v8050
        %v8825 = vunpack.c.l.b16 %v8064
        %v8826 = vunpack.c.l.b16 %v8074
        %v8827 = vpack.c.b16 %v8796, %v8795
        %v8828 = vpack.c.b16 %v8798, %v8797
        %v8829 = vpack.c.b16 %v8800, %v8799
        %v8830 = vpack.c.b16 %v8802, %v8801
        %v8831 = vpack.c.b16 %v8804, %v8803
        %v8832 = vpack.c.b16 %v8806, %v8805
        %v8833 = vpack.c.b16 %v8808, %v8807
        %v8834 = vpack.c.b16 %v8810, %v8809
        %v8835 = vpack.c.b16 %v8812, %v8811
        %v8836 = vpack.c.b16 %v8814, %v8813
        %v8837 = vpack.c.b16 %v8816, %v8815
        %v8838 = vpack.c.b16 %v8818, %v8817
        %v8839 = vpack.c.b16 %v8820, %v8819
        %v8840 = vpack.c.b16 %v8822, %v8821
        %v8841 = vpack.c.b16 %v8824, %v8823
        %v8842 = vpack.c.b16 %v8826, %v8825
        %v8843 = vunpack.c.l.b16 %v8142
        %v8844 = vunpack.c.l.b16 %v8145
        %v8845 = vunpack.c.l.b16 %v8149
        %v8846 = vunpack.c.l.b16 %v8152
        %v8847 = vunpack.c.l.b16 %v8156
        %v8848 = vunpack.c.l.b16 %v8159
        %v8849 = vunpack.c.l.b16 %v8163
        %v8850 = vunpack.c.l.b16 %v8166
        %v8851 = vunpack.c.l.b16 %v8170
        %v8852 = vunpack.c.l.b16 %v8173
        %v8853 = vunpack.c.l.b16 %v8177
        %v8854 = vunpack.c.l.b16 %v8180
        %v8855 = vunpack.c.l.b16 %v8184
        %v8856 = vunpack.c.l.b16 %v8187
        %v8857 = vunpack.c.l.b16 %v8191
        %v8858 = vunpack.c.l.b16 %v8194
        %v8859 = vunpack.c.l.b16 %v8198
        %v8860 = vunpack.c.l.b16 %v8201
        %v8861 = vunpack.c.l.b16 %v8205
        %v8862 = vunpack.c.l.b16 %v8208
        %v8863 = vunpack.c.l.b16 %v8212
        %v8864 = vunpack.c.l.b16 %v8215
        %v8865 = vunpack.c.l.b16 %v8219
        %v8866 = vunpack.c.l.b16 %v8222
        %v8867 = vunpack.c.l.b16 %v8226
        %v8868 = vunpack.c.l.b16 %v8229
        %v8869 = vunpack.c.l.b16 %v8233
        %v8870 = vunpack.c.l.b16 %v8236
        %v8871 = vunpack.c.l.b16 %v8240
        %v8872 = vunpack.c.l.b16 %v8243
        %v8873 = vunpack.c.l.b16 %v8247
        %v8874 = vunpack.c.l.b16 %v8250
        %v8875 = vpack.c.b16 %v8844, %v8843
        %v8876 = vpack.c.b16 %v8846, %v8845
        %v8877 = vpack.c.b16 %v8848, %v8847
        %v8878 = vpack.c.b16 %v8850, %v8849
        %v8879 = vpack.c.b16 %v8852, %v8851
        %v8880 = vpack.c.b16 %v8854, %v8853
        %v8881 = vpack.c.b16 %v8856, %v8855
        %v8882 = vpack.c.b16 %v8858, %v8857
        %v8883 = vpack.c.b16 %v8860, %v8859
        %v8884 = vpack.c.b16 %v8862, %v8861
        %v8885 = vpack.c.b16 %v8864, %v8863
        %v8886 = vpack.c.b16 %v8866, %v8865
        %v8887 = vpack.c.b16 %v8868, %v8867
        %v8888 = vpack.c.b16 %v8870, %v8869
        %v8889 = vpack.c.b16 %v8872, %v8871
        %v8890 = vpack.c.b16 %v8874, %v8873
        %8891 = vrot.lane.b32.xlu0 %v8875, 64
        %v8892 = vpop.permute.xlu0 %8891
        %8893 = vrot.lane.b32.xlu0 %v8876, 64
        %v8894 = vpop.permute.xlu0 %8893
        %8895 = vrot.lane.b32.xlu0 %v8877, 64
        %v8896 = vpop.permute.xlu0 %8895
        %8897 = vrot.lane.b32.xlu0 %v8878, 64
        %v8898 = vpop.permute.xlu0 %8897
        %8899 = vrot.lane.b32.xlu0 %v8879, 64
        %v8900 = vpop.permute.xlu0 %8899
        %8901 = vrot.lane.b32.xlu0 %v8880, 64
        %v8902 = vpop.permute.xlu0 %8901
        %8903 = vrot.lane.b32.xlu0 %v8881, 64
        %v8904 = vpop.permute.xlu0 %8903
        %8905 = vrot.lane.b32.xlu0 %v8882, 64
        %v8906 = vpop.permute.xlu0 %8905
        %8907 = vrot.lane.b32.xlu0 %v8883, 64
        %v8908 = vpop.permute.xlu0 %8907
        %8909 = vrot.lane.b32.xlu0 %v8884, 64
        %v8910 = vpop.permute.xlu0 %8909
        %8911 = vrot.lane.b32.xlu0 %v8885, 64
        %v8912 = vpop.permute.xlu0 %8911
        %8913 = vrot.lane.b32.xlu0 %v8886, 64
        %v8914 = vpop.permute.xlu0 %8913
        %8915 = vrot.lane.b32.xlu0 %v8887, 64
        %v8916 = vpop.permute.xlu0 %8915
        %8917 = vrot.lane.b32.xlu0 %v8888, 64
        %v8918 = vpop.permute.xlu0 %8917
        %8919 = vrot.lane.b32.xlu0 %v8889, 64
        %v8920 = vpop.permute.xlu0 %8919
        %8921 = vrot.lane.b32.xlu0 %v8890, 64
        %v8922 = vpop.permute.xlu0 %8921
        %v8923 = vunpack.c.l.b16 %v8279
        %v8924 = vunpack.c.l.b16 %v8289
        %v8925 = vunpack.c.l.b16 %v8302
        %v8926 = vunpack.c.l.b16 %v8312
        %v8927 = vunpack.c.l.b16 %v8325
        %v8928 = vunpack.c.l.b16 %v8335
        %v8929 = vunpack.c.l.b16 %v8348
        %v8930 = vunpack.c.l.b16 %v8358
        %v8931 = vunpack.c.l.b16 %v8371
        %v8932 = vunpack.c.l.b16 %v8381
        %v8933 = vunpack.c.l.b16 %v8394
        %v8934 = vunpack.c.l.b16 %v8404
        %v8935 = vunpack.c.l.b16 %v8417
        %v8936 = vunpack.c.l.b16 %v8427
        %v8937 = vunpack.c.l.b16 %v8440
        %v8938 = vunpack.c.l.b16 %v8450
        %v8939 = vunpack.c.l.b16 %v8463
        %v8940 = vunpack.c.l.b16 %v8473
        %v8941 = vunpack.c.l.b16 %v8486
        %v8942 = vunpack.c.l.b16 %v8496
        %v8943 = vunpack.c.l.b16 %v8509
        %v8944 = vunpack.c.l.b16 %v8519
        %v8945 = vunpack.c.l.b16 %v8532
        %v8946 = vunpack.c.l.b16 %v8542
        %v8947 = vunpack.c.l.b16 %v8555
        %v8948 = vunpack.c.l.b16 %v8565
        %v8949 = vunpack.c.l.b16 %v8578
        %v8950 = vunpack.c.l.b16 %v8588
        %v8951 = vunpack.c.l.b16 %v8601
        %v8952 = vunpack.c.l.b16 %v8611
        %v8953 = vunpack.c.l.b16 %v8624
        %v8954 = vunpack.c.l.b16 %v8634
        %v8955 = vpack.c.b16 %v8924, %v8923
        %v8956 = vpack.c.b16 %v8926, %v8925
        %v8957 = vpack.c.b16 %v8928, %v8927
        %v8958 = vpack.c.b16 %v8930, %v8929
        %v8959 = vpack.c.b16 %v8932, %v8931
        %v8960 = vpack.c.b16 %v8934, %v8933
        %v8961 = vpack.c.b16 %v8936, %v8935
        %v8962 = vpack.c.b16 %v8938, %v8937
        %v8963 = vpack.c.b16 %v8940, %v8939
        %v8964 = vpack.c.b16 %v8942, %v8941
        %v8965 = vpack.c.b16 %v8944, %v8943
        %v8966 = vpack.c.b16 %v8946, %v8945
        %v8967 = vpack.c.b16 %v8948, %v8947
        %v8968 = vpack.c.b16 %v8950, %v8949
        %v8969 = vpack.c.b16 %v8952, %v8951
        %v8970 = vpack.c.b16 %v8954, %v8953
        %v8971 = vunpack.c.l.b16 %v8686
        %v8972 = vunpack.c.l.b16 %v8689
        %v8973 = vunpack.c.l.b16 %v8693
        %v8974 = vunpack.c.l.b16 %v8696
        %v8975 = vunpack.c.l.b16 %v8700
        %v8976 = vunpack.c.l.b16 %v8703
        %v8977 = vunpack.c.l.b16 %v8707
        %v8978 = vunpack.c.l.b16 %v8710
        %v8979 = vunpack.c.l.b16 %v8714
        %v8980 = vunpack.c.l.b16 %v8717
        %v8981 = vunpack.c.l.b16 %v8721
        %v8982 = vunpack.c.l.b16 %v8724
        %v8983 = vunpack.c.l.b16 %v8728
        %v8984 = vunpack.c.l.b16 %v8731
        %v8985 = vunpack.c.l.b16 %v8735
        %v8986 = vunpack.c.l.b16 %v8738
        %v8987 = vunpack.c.l.b16 %v8742
        %v8988 = vunpack.c.l.b16 %v8745
        %v8989 = vunpack.c.l.b16 %v8749
        %v8990 = vunpack.c.l.b16 %v8752
        %v8991 = vunpack.c.l.b16 %v8756
        %v8992 = vunpack.c.l.b16 %v8759
        %v8993 = vunpack.c.l.b16 %v8763
        %v8994 = vunpack.c.l.b16 %v8766
        %v8995 = vunpack.c.l.b16 %v8770
        %v8996 = vunpack.c.l.b16 %v8773
        %v8997 = vunpack.c.l.b16 %v8777
        %v8998 = vunpack.c.l.b16 %v8780
        %v8999 = vunpack.c.l.b16 %v8784
        %v9000 = vunpack.c.l.b16 %v8787
        %v9001 = vunpack.c.l.b16 %v8791
        %v9002 = vunpack.c.l.b16 %v8794
        %v9003 = vpack.c.b16 %v8972, %v8971
        %v9004 = vpack.c.b16 %v8974, %v8973
        %v9005 = vpack.c.b16 %v8976, %v8975
        %v9006 = vpack.c.b16 %v8978, %v8977
        %v9007 = vpack.c.b16 %v8980, %v8979
        %v9008 = vpack.c.b16 %v8982, %v8981
        %v9009 = vpack.c.b16 %v8984, %v8983
        %v9010 = vpack.c.b16 %v8986, %v8985
        %v9011 = vpack.c.b16 %v8988, %v8987
        %v9012 = vpack.c.b16 %v8990, %v8989
        %v9013 = vpack.c.b16 %v8992, %v8991
        %v9014 = vpack.c.b16 %v8994, %v8993
        %v9015 = vpack.c.b16 %v8996, %v8995
        %v9016 = vpack.c.b16 %v8998, %v8997
        %v9017 = vpack.c.b16 %v9000, %v8999
        %v9018 = vpack.c.b16 %v9002, %v9001
        %9019 = vrot.lane.b32.xlu0 %v9003, 64
        %v9020 = vpop.permute.xlu0 %9019
        %9021 = vrot.lane.b32.xlu0 %v9004, 64
        %v9022 = vpop.permute.xlu0 %9021
        %9023 = vrot.lane.b32.xlu0 %v9005, 64
        %v9024 = vpop.permute.xlu0 %9023
        %9025 = vrot.lane.b32.xlu0 %v9006, 64
        %v9026 = vpop.permute.xlu0 %9025
        %9027 = vrot.lane.b32.xlu0 %v9007, 64
        %v9028 = vpop.permute.xlu0 %9027
        %9029 = vrot.lane.b32.xlu0 %v9008, 64
        %v9030 = vpop.permute.xlu0 %9029
        %9031 = vrot.lane.b32.xlu0 %v9009, 64
        %v9032 = vpop.permute.xlu0 %9031
        %9033 = vrot.lane.b32.xlu0 %v9010, 64
        %v9034 = vpop.permute.xlu0 %9033
        %9035 = vrot.lane.b32.xlu0 %v9011, 64
        %v9036 = vpop.permute.xlu0 %9035
        %9037 = vrot.lane.b32.xlu0 %v9012, 64
        %v9038 = vpop.permute.xlu0 %9037
        %9039 = vrot.lane.b32.xlu0 %v9013, 64
        %v9040 = vpop.permute.xlu0 %9039
        %9041 = vrot.lane.b32.xlu0 %v9014, 64
        %v9042 = vpop.permute.xlu0 %9041
        %9043 = vrot.lane.b32.xlu0 %v9015, 64
        %v9044 = vpop.permute.xlu0 %9043
        %9045 = vrot.lane.b32.xlu0 %v9016, 64
        %v9046 = vpop.permute.xlu0 %9045
        %9047 = vrot.lane.b32.xlu0 %v9017, 64
        %v9048 = vpop.permute.xlu0 %9047
        %9049 = vrot.lane.b32.xlu0 %v9018, 64
        %v9050 = vpop.permute.xlu0 %9049
        %v9053 = vsel %vm2577, %v8827, %v8892
        %v9057 = vsel %vm2577, %v8828, %v8894
        %v9061 = vsel %vm2577, %v8829, %v8896
        %v9065 = vsel %vm2577, %v8830, %v8898
        %v9069 = vsel %vm2577, %v8831, %v8900
        %v9073 = vsel %vm2577, %v8832, %v8902
        %v9077 = vsel %vm2577, %v8833, %v8904
        %v9081 = vsel %vm2577, %v8834, %v8906
        %v9085 = vsel %vm2577, %v8835, %v8908
        %v9089 = vsel %vm2577, %v8836, %v8910
        %v9093 = vsel %vm2577, %v8837, %v8912
        %v9097 = vsel %vm2577, %v8838, %v8914
        %v9101 = vsel %vm2577, %v8839, %v8916
        %v9105 = vsel %vm2577, %v8840, %v8918
        %v9109 = vsel %vm2577, %v8841, %v8920
        %v9113 = vsel %vm2577, %v8842, %v8922
        %v9117 = vsel %vm2577, %v8955, %v9020
        %v9121 = vsel %vm2577, %v8956, %v9022
        %v9125 = vsel %vm2577, %v8957, %v9024
        %v9129 = vsel %vm2577, %v8958, %v9026
        %v9133 = vsel %vm2577, %v8959, %v9028
        %v9137 = vsel %vm2577, %v8960, %v9030
        %v9141 = vsel %vm2577, %v8961, %v9032
        %v9145 = vsel %vm2577, %v8962, %v9034
        %v9149 = vsel %vm2577, %v8963, %v9036
        %v9153 = vsel %vm2577, %v8964, %v9038
        %v9157 = vsel %vm2577, %v8965, %v9040
        %v9161 = vsel %vm2577, %v8966, %v9042
        %v9165 = vsel %vm2577, %v8967, %v9044
        %v9169 = vsel %vm2577, %v8968, %v9046
        %v9173 = vsel %vm2577, %v8969, %v9048
        %v9177 = vsel %vm2577, %v8970, %v9050
        %v9179 = vld [vmem:[%s4 + $0x200] sm:$0xf]
        %v9180 = vld [vmem:[%s4 + $0x204] sm:$0xf]
        %v9181 = vld [vmem:[%s4 + $0x208] sm:$0xf]
        %v9182 = vld [vmem:[%s4 + $0x20c] sm:$0xf]
        %v9183 = vld [vmem:[%s4 + $0x210] sm:$0xf]
        %v9184 = vld [vmem:[%s4 + $0x214] sm:$0xf]
        %v9185 = vld [vmem:[%s4 + $0x218] sm:$0xf]
        %v9186 = vld [vmem:[%s4 + $0x21c] sm:$0xf]
        %v9187 = vld [vmem:[%s4 + $0x220] sm:$0xf]
        %v9188 = vld [vmem:[%s4 + $0x224] sm:$0xf]
        %v9189 = vld [vmem:[%s4 + $0x228] sm:$0xf]
        %v9190 = vld [vmem:[%s4 + $0x22c] sm:$0xf]
        %v9191 = vld [vmem:[%s4 + $0x230] sm:$0xf]
        %v9192 = vld [vmem:[%s4 + $0x234] sm:$0xf]
        %v9193 = vld [vmem:[%s4 + $0x238] sm:$0xf]
        %v9194 = vld [vmem:[%s4 + $0x23c] sm:$0xf]
        %v9195 = vld [vmem:[%s4 + $0x240] sm:$0xf]
        %v9196 = vld [vmem:[%s4 + $0x244] sm:$0xf]
        %v9197 = vld [vmem:[%s4 + $0x248] sm:$0xf]
        %v9198 = vld [vmem:[%s4 + $0x24c] sm:$0xf]
        %v9199 = vld [vmem:[%s4 + $0x250] sm:$0xf]
        %v9200 = vld [vmem:[%s4 + $0x254] sm:$0xf]
        %v9201 = vld [vmem:[%s4 + $0x258] sm:$0xf]
        %v9202 = vld [vmem:[%s4 + $0x25c] sm:$0xf]
        %v9203 = vld [vmem:[%s4 + $0x260] sm:$0xf]
        %v9204 = vld [vmem:[%s4 + $0x264] sm:$0xf]
        %v9205 = vld [vmem:[%s4 + $0x268] sm:$0xf]
        %v9206 = vld [vmem:[%s4 + $0x26c] sm:$0xf]
        %v9207 = vld [vmem:[%s4 + $0x270] sm:$0xf]
        %v9208 = vld [vmem:[%s4 + $0x274] sm:$0xf]
        %v9209 = vld [vmem:[%s4 + $0x278] sm:$0xf]
        %v9210 = vld [vmem:[%s4 + $0x27c] sm:$0xf]
        %v9243 = vunpack.c.l.b16 %v9179
        %v9244 = vunpack.c.l.b16 %v9180
        %v9245 = vunpack.c.l.b16 %v9181
        %v9246 = vunpack.c.l.b16 %v9182
        %v9247 = vunpack.c.l.b16 %v9183
        %v9248 = vunpack.c.l.b16 %v9184
        %v9249 = vunpack.c.l.b16 %v9185
        %v9250 = vunpack.c.l.b16 %v9186
        %v9251 = vunpack.c.l.b16 %v9187
        %v9252 = vunpack.c.l.b16 %v9188
        %v9253 = vunpack.c.l.b16 %v9189
        %v9254 = vunpack.c.l.b16 %v9190
        %v9255 = vunpack.c.l.b16 %v9191
        %v9256 = vunpack.c.l.b16 %v9192
        %v9257 = vunpack.c.l.b16 %v9193
        %v9258 = vunpack.c.l.b16 %v9194
        %v9259 = vunpack.c.l.b16 %v9195
        %v9260 = vunpack.c.l.b16 %v9196
        %v9261 = vunpack.c.l.b16 %v9197
        %v9262 = vunpack.c.l.b16 %v9198
        %v9263 = vunpack.c.l.b16 %v9199
        %v9264 = vunpack.c.l.b16 %v9200
        %v9265 = vunpack.c.l.b16 %v9201
        %v9266 = vunpack.c.l.b16 %v9202
        %v9267 = vunpack.c.l.b16 %v9203
        %v9268 = vunpack.c.l.b16 %v9204
        %v9269 = vunpack.c.l.b16 %v9205
        %v9270 = vunpack.c.l.b16 %v9206
        %v9271 = vunpack.c.l.b16 %v9207
        %v9272 = vunpack.c.l.b16 %v9208
        %v9273 = vunpack.c.l.b16 %v9209
        %v9274 = vunpack.c.l.b16 %v9210
        %v9275 = vpack.c.b16 %v9244, %v9243
        %v9276 = vpack.c.b16 %v9246, %v9245
        %v9277 = vpack.c.b16 %v9248, %v9247
        %v9278 = vpack.c.b16 %v9250, %v9249
        %v9279 = vpack.c.b16 %v9252, %v9251
        %v9280 = vpack.c.b16 %v9254, %v9253
        %v9281 = vpack.c.b16 %v9256, %v9255
        %v9282 = vpack.c.b16 %v9258, %v9257
        %v9283 = vpack.c.b16 %v9260, %v9259
        %v9284 = vpack.c.b16 %v9262, %v9261
        %v9285 = vpack.c.b16 %v9264, %v9263
        %v9286 = vpack.c.b16 %v9266, %v9265
        %v9287 = vpack.c.b16 %v9268, %v9267
        %v9288 = vpack.c.b16 %v9270, %v9269
        %v9289 = vpack.c.b16 %v9272, %v9271
        %v9290 = vpack.c.b16 %v9274, %v9273
        %9307 = vmatprep.subr.bf16.mxu0 0
        %9308 = vmatpush1.bf16.msra.mxu0 %v9275
        %9309 = vmatprep.subr.bf16.mxu0 0
        %9310 = vmatpush1.bf16.msra.mxu0 %v9276
        %9311 = vmatprep.subr.bf16.mxu0 0
        %9312 = vmatpush1.bf16.msra.mxu0 %v9277
        %9313 = vmatprep.subr.bf16.mxu0 0
        %9314 = vmatpush1.bf16.msra.mxu0 %v9278
        %9315 = vmatprep.subr.bf16.mxu0 0
        %9316 = vmatpush1.bf16.msra.mxu0 %v9279
        %9317 = vmatprep.subr.bf16.mxu0 0
        %9318 = vmatpush1.bf16.msra.mxu0 %v9280
        %9319 = vmatprep.subr.bf16.mxu0 0
        %9320 = vmatpush1.bf16.msra.mxu0 %v9281
        %9321 = vmatprep.subr.bf16.mxu0 0
        %9322 = vmatpush1.bf16.msra.mxu0 %v9282
        %9323 = vmatprep.subr.bf16.mxu0 0
        %9324 = vmatpush1.bf16.msra.mxu0 %v9283
        %9325 = vmatprep.subr.bf16.mxu0 0
        %9326 = vmatpush1.bf16.msra.mxu0 %v9284
        %9327 = vmatprep.subr.bf16.mxu0 0
        %9328 = vmatpush1.bf16.msra.mxu0 %v9285
        %9329 = vmatprep.subr.bf16.mxu0 0
        %9330 = vmatpush1.bf16.msra.mxu0 %v9286
        %9331 = vmatprep.subr.bf16.mxu0 0
        %9332 = vmatpush1.bf16.msra.mxu0 %v9287
        %9333 = vmatprep.subr.bf16.mxu0 0
        %9334 = vmatpush1.bf16.msra.mxu0 %v9288
        %9335 = vmatprep.subr.bf16.mxu0 0
        %9336 = vmatpush1.bf16.msra.mxu0 %v9289
        %9337 = vmatprep.subr.bf16.mxu0 0
        %9338 = vmatpush1.bf16.msra.mxu0 %v9290
        %9339 = vmatprep.mubr.bf16.mxu0 %v9117
        %9340 = vmatmul.mubr.bf16.gmra.mrb[0].mxu0 %v9053
        %v9341 = vpop.f32.mrb[0].mxu0
        %v9342 = vadd.f32 0.0, %v9341
        %v9343 = vpop.f32.mrb[0].mxu0
        %v9344 = vpop.f32.mrb[0].mxu0
        %v9345 = vadd.f32 0.0, %v9344
        %v9346 = vpop.f32.mrb[0].mxu0
        %9347 = vmatprep.mubr.bf16.mxu0 %v9121
        %9348 = vmatmul.mubr.bf16.gmra.mrb[0].mxu0 %v9057
        %v9349 = vpop.f32.mrb[0].mxu0
        %v9350 = vadd.f32 0.0, %v9349
        %v9351 = vpop.f32.mrb[0].mxu0
        %v9352 = vpop.f32.mrb[0].mxu0
        %v9353 = vadd.f32 0.0, %v9352
        %v9354 = vpop.f32.mrb[0].mxu0
        %9355 = vmatprep.mubr.bf16.mxu0 %v9125
        %9356 = vmatmul.mubr.bf16.gmra.mrb[0].mxu0 %v9061
        %v9357 = vpop.f32.mrb[0].mxu0
        %v9358 = vadd.f32 0.0, %v9357
        %v9359 = vpop.f32.mrb[0].mxu0
        %v9360 = vpop.f32.mrb[0].mxu0
        %v9361 = vadd.f32 0.0, %v9360
        %v9362 = vpop.f32.mrb[0].mxu0
        %9363 = vmatprep.mubr.bf16.mxu0 %v9129
        %9364 = vmatmul.mubr.bf16.gmra.mrb[0].mxu0 %v9065
        %v9365 = vpop.f32.mrb[0].mxu0
        %v9366 = vadd.f32 0.0, %v9365
        %v9367 = vpop.f32.mrb[0].mxu0
        %v9368 = vpop.f32.mrb[0].mxu0
        %v9369 = vadd.f32 0.0, %v9368
        %v9370 = vpop.f32.mrb[0].mxu0
        %9371 = vmatprep.mubr.bf16.mxu0 %v9133
        %9372 = vmatmul.mubr.bf16.gmra.mrb[0].mxu0 %v9069
        %v9373 = vpop.f32.mrb[0].mxu0
        %v9374 = vadd.f32 0.0, %v9373
        %v9375 = vpop.f32.mrb[0].mxu0
        %v9376 = vpop.f32.mrb[0].mxu0
        %v9377 = vadd.f32 0.0, %v9376
        %v9378 = vpop.f32.mrb[0].mxu0
        %9379 = vmatprep.mubr.bf16.mxu0 %v9137
        %9380 = vmatmul.mubr.bf16.gmra.mrb[0].mxu0 %v9073
        %v9381 = vpop.f32.mrb[0].mxu0
        %v9382 = vadd.f32 0.0, %v9381
        %v9383 = vpop.f32.mrb[0].mxu0
        %v9384 = vpop.f32.mrb[0].mxu0
        %v9385 = vadd.f32 0.0, %v9384
        %v9386 = vpop.f32.mrb[0].mxu0
        %9387 = vmatprep.mubr.bf16.mxu0 %v9141
        %9388 = vmatmul.mubr.bf16.gmra.mrb[0].mxu0 %v9077
        %v9389 = vpop.f32.mrb[0].mxu0
        %v9390 = vadd.f32 0.0, %v9389
        %v9391 = vpop.f32.mrb[0].mxu0
        %v9392 = vpop.f32.mrb[0].mxu0
        %v9393 = vadd.f32 0.0, %v9392
        %v9394 = vpop.f32.mrb[0].mxu0
        %9395 = vmatprep.mubr.bf16.mxu0 %v9145
        %9396 = vmatmul.mubr.bf16.gmra.mrb[0].mxu0 %v9081
        %v9397 = vpop.f32.mrb[0].mxu0
        %v9398 = vadd.f32 0.0, %v9397
        %v9399 = vpop.f32.mrb[0].mxu0
        %v9400 = vpop.f32.mrb[0].mxu0
        %v9401 = vadd.f32 0.0, %v9400
        %v9402 = vpop.f32.mrb[0].mxu0
        %9403 = vmatprep.mubr.bf16.mxu0 %v9149
        %9404 = vmatmul.mubr.bf16.gmra.mrb[0].mxu0 %v9085
        %v9405 = vpop.f32.mrb[0].mxu0
        %v9406 = vadd.f32 0.0, %v9405
        %v9407 = vpop.f32.mrb[0].mxu0
        %v9408 = vpop.f32.mrb[0].mxu0
        %v9409 = vadd.f32 0.0, %v9408
        %v9410 = vpop.f32.mrb[0].mxu0
        %9411 = vmatprep.mubr.bf16.mxu0 %v9153
        %9412 = vmatmul.mubr.bf16.gmra.mrb[0].mxu0 %v9089
        %v9413 = vpop.f32.mrb[0].mxu0
        %v9414 = vadd.f32 0.0, %v9413
        %v9415 = vpop.f32.mrb[0].mxu0
        %v9416 = vpop.f32.mrb[0].mxu0
        %v9417 = vadd.f32 0.0, %v9416
        %v9418 = vpop.f32.mrb[0].mxu0
        %9419 = vmatprep.mubr.bf16.mxu0 %v9157
        %9420 = vmatmul.mubr.bf16.gmra.mrb[0].mxu0 %v9093
        %v9421 = vpop.f32.mrb[0].mxu0
        %v9422 = vadd.f32 0.0, %v9421
        %v9423 = vpop.f32.mrb[0].mxu0
        %v9424 = vpop.f32.mrb[0].mxu0
        %v9425 = vadd.f32 0.0, %v9424
        %v9426 = vpop.f32.mrb[0].mxu0
        %9427 = vmatprep.mubr.bf16.mxu0 %v9161
        %9428 = vmatmul.mubr.bf16.gmra.mrb[0].mxu0 %v9097
        %v9429 = vpop.f32.mrb[0].mxu0
        %v9430 = vadd.f32 0.0, %v9429
        %v9431 = vpop.f32.mrb[0].mxu0
        %v9432 = vpop.f32.mrb[0].mxu0
        %v9433 = vadd.f32 0.0, %v9432
        %v9434 = vpop.f32.mrb[0].mxu0
        %9435 = vmatprep.mubr.bf16.mxu0 %v9165
        %9436 = vmatmul.mubr.bf16.gmra.mrb[0].mxu0 %v9101
        %v9437 = vpop.f32.mrb[0].mxu0
        %v9438 = vadd.f32 0.0, %v9437
        %v9439 = vpop.f32.mrb[0].mxu0
        %v9440 = vpop.f32.mrb[0].mxu0
        %v9441 = vadd.f32 0.0, %v9440
        %v9442 = vpop.f32.mrb[0].mxu0
        %9443 = vmatprep.mubr.bf16.mxu0 %v9169
        %9444 = vmatmul.mubr.bf16.gmra.mrb[0].mxu0 %v9105
        %v9445 = vpop.f32.mrb[0].mxu0
        %v9446 = vadd.f32 0.0, %v9445
        %v9447 = vpop.f32.mrb[0].mxu0
        %v9448 = vpop.f32.mrb[0].mxu0
        %v9449 = vadd.f32 0.0, %v9448
        %v9450 = vpop.f32.mrb[0].mxu0
        %9451 = vmatprep.mubr.bf16.mxu0 %v9173
        %9452 = vmatmul.mubr.bf16.gmra.mrb[0].mxu0 %v9109
        %v9453 = vpop.f32.mrb[0].mxu0
        %v9454 = vadd.f32 0.0, %v9453
        %v9455 = vpop.f32.mrb[0].mxu0
        %v9456 = vpop.f32.mrb[0].mxu0
        %v9457 = vadd.f32 0.0, %v9456
        %v9458 = vpop.f32.mrb[0].mxu0
        %9459 = vmatprep.mubr.bf16.mxu0 %v9177
        %9460 = vmatmul.mubr.bf16.gmra.mrb[0].mxu0 %v9113
        %v9461 = vpop.f32.mrb[0].mxu0
        %v9462 = vadd.f32 0.0, %v9461
        %v9463 = vpop.f32.mrb[0].mxu0
        %v9464 = vpop.f32.mrb[0].mxu0
        %v9465 = vadd.f32 0.0, %v9464
        %v9466 = vpop.f32.mrb[0].mxu0
        %9467 = vdwg.mxu0
        %v9468 = vadd.f32 %v7611, %v9342
        %v9469 = vadd.f32 %v7612, %v9345
        %v9470 = vadd.f32 %v7613, %v9350
        %v9471 = vadd.f32 %v7614, %v9353
        %v9472 = vadd.f32 %v7615, %v9358
        %v9473 = vadd.f32 %v7616, %v9361
        %v9474 = vadd.f32 %v7617, %v9366
        %v9475 = vadd.f32 %v7618, %v9369
        %v9476 = vadd.f32 %v7619, %v9374
        %v9477 = vadd.f32 %v7620, %v9377
        %v9478 = vadd.f32 %v7621, %v9382
        %v9479 = vadd.f32 %v7622, %v9385
        %v9480 = vadd.f32 %v7623, %v9390
        %v9481 = vadd.f32 %v7624, %v9393
        %v9482 = vadd.f32 %v7625, %v9398
        %v9483 = vadd.f32 %v7626, %v9401
        %v9484 = vadd.f32 %v7627, %v9406
        %v9485 = vadd.f32 %v7628, %v9409
        %v9486 = vadd.f32 %v7629, %v9414
        %v9487 = vadd.f32 %v7630, %v9417
        %v9488 = vadd.f32 %v7631, %v9422
        %v9489 = vadd.f32 %v7632, %v9425
        %v9490 = vadd.f32 %v7633, %v9430
        %v9491 = vadd.f32 %v7634, %v9433
        %v9492 = vadd.f32 %v7635, %v9438
        %v9493 = vadd.f32 %v7636, %v9441
        %v9494 = vadd.f32 %v7637, %v9446
        %v9495 = vadd.f32 %v7638, %v9449
        %v9496 = vadd.f32 %v7639, %v9454
        %v9497 = vadd.f32 %v7640, %v9457
        %v9498 = vadd.f32 %v7641, %v9462
        %v9499 = vadd.f32 %v7642, %v9465
        %s9500 = scalar_lea.vmem [#allocation2], 48
        %v9501 = vld [vmem:[%s9500] sm:$0xf]
        %v9502 = vld [vmem:[%s9500 + $0x4] sm:$0xf]
        %v9503 = vld [vmem:[%s9500 + $0xc] sm:$0xf]
        %v9504 = vld [vmem:[%s9500 + $0x10] sm:$0xf]
        %v9505 = vld [vmem:[%s9500 + $0x18] sm:$0xf]
        %v9506 = vld [vmem:[%s9500 + $0x1c] sm:$0xf]
        %v9507 = vld [vmem:[%s9500 + $0x24] sm:$0xf]
        %v9508 = vld [vmem:[%s9500 + $0x28] sm:$0xf]
        %v9509 = vld [vmem:[%s9500 + $0x30] sm:$0xf]
        %v9510 = vld [vmem:[%s9500 + $0x34] sm:$0xf]
        %v9511 = vld [vmem:[%s9500 + $0x3c] sm:$0xf]
        %v9512 = vld [vmem:[%s9500 + $0x40] sm:$0xf]
        %v9513 = vld [vmem:[%s9500 + $0x48] sm:$0xf]
        %v9514 = vld [vmem:[%s9500 + $0x4c] sm:$0xf]
        %v9515 = vld [vmem:[%s9500 + $0x54] sm:$0xf]
        %v9516 = vld [vmem:[%s9500 + $0x58] sm:$0xf]
        %v9517 = vld [vmem:[%s9500 + $0x60] sm:$0xf]
        %v9518 = vld [vmem:[%s9500 + $0x64] sm:$0xf]
        %v9519 = vld [vmem:[%s9500 + $0x6c] sm:$0xf]
        %v9520 = vld [vmem:[%s9500 + $0x70] sm:$0xf]
        %v9521 = vld [vmem:[%s9500 + $0x78] sm:$0xf]
        %v9522 = vld [vmem:[%s9500 + $0x7c] sm:$0xf]
        %v9523 = vld [vmem:[%s9500 + $0x84] sm:$0xf]
        %v9524 = vld [vmem:[%s9500 + $0x88] sm:$0xf]
        %v9525 = vld [vmem:[%s9500 + $0x90] sm:$0xf]
        %v9526 = vld [vmem:[%s9500 + $0x94] sm:$0xf]
        %v9527 = vld [vmem:[%s9500 + $0x9c] sm:$0xf]
        %v9528 = vld [vmem:[%s9500 + $0xa0] sm:$0xf]
        %v9529 = vld [vmem:[%s9500 + $0xa8] sm:$0xf]
        %v9530 = vld [vmem:[%s9500 + $0xac] sm:$0xf]
        %v9531 = vld [vmem:[%s9500 + $0xb4] sm:$0xf]
        %v9532 = vld [vmem:[%s9500 + $0xb8] sm:$0xf]
        %v9533 = vld [vmem:[%s9500 + $0x8] sm:$0x1]
        %v9534 = vld [vmem:[%s9500 + $0x14] sm:$0x1]
        %v9535 = vld [vmem:[%s9500 + $0x20] sm:$0x1]
        %v9536 = vld [vmem:[%s9500 + $0x2c] sm:$0x1]
        %v9537 = vld [vmem:[%s9500 + $0x38] sm:$0x1]
        %v9538 = vld [vmem:[%s9500 + $0x44] sm:$0x1]
        %v9539 = vld [vmem:[%s9500 + $0x50] sm:$0x1]
        %v9540 = vld [vmem:[%s9500 + $0x5c] sm:$0x1]
        %v9541 = vld [vmem:[%s9500 + $0x68] sm:$0x1]
        %v9542 = vld [vmem:[%s9500 + $0x74] sm:$0x1]
        %v9543 = vld [vmem:[%s9500 + $0x80] sm:$0x1]
        %v9544 = vld [vmem:[%s9500 + $0x8c] sm:$0x1]
        %v9545 = vld [vmem:[%s9500 + $0x98] sm:$0x1]
        %v9546 = vld [vmem:[%s9500 + $0xa4] sm:$0x1]
        %v9547 = vld [vmem:[%s9500 + $0xb0] sm:$0x1]
        %v9548 = vld [vmem:[%s9500 + $0xbc] sm:$0x1]
        %v9550 = vshrl.u32 %v9501, 16
        %v9552 = vrot.slane %v9550, 4
        %v9553 = vshll.u32 %v9501, 16
        %v9555 = vrot.slane %v9553, 5
        %v9556 = vor.u32 %v9552, %v9555
        %v9557 = vrot.slane %v9556, 4
        %v9559 = vshll.u32 %v9502, 16
        %v9561 = vrot.slane %v9559, 5
        %v9562 = vsel %vm1354, %v9557, %v9561
        %v9563 = vshrl.u32 %v9502, 16
        %v9565 = vrot.slane %v9563, 4
        %v9566 = vor.u32 %v9565, %v9561
        %v9567 = vrot.slane %v9566, 4
        %v9569 = vshll.u32 %v9533, 16
        %v9571 = vrot.slane %v9569, 5
        %v9572 = vsel %vm1354, %v9567, %v9571
        %v9574 = vshrl.u32 %v9503, 16
        %v9576 = vrot.slane %v9574, 4
        %v9577 = vshll.u32 %v9503, 16
        %v9579 = vrot.slane %v9577, 5
        %v9580 = vor.u32 %v9576, %v9579
        %v9581 = vrot.slane %v9580, 4
        %v9583 = vshll.u32 %v9504, 16
        %v9585 = vrot.slane %v9583, 5
        %v9586 = vsel %vm1354, %v9581, %v9585
        %v9587 = vshrl.u32 %v9504, 16
        %v9589 = vrot.slane %v9587, 4
        %v9590 = vor.u32 %v9589, %v9585
        %v9591 = vrot.slane %v9590, 4
        %v9593 = vshll.u32 %v9534, 16
        %v9595 = vrot.slane %v9593, 5
        %v9596 = vsel %vm1354, %v9591, %v9595
        %v9598 = vshrl.u32 %v9505, 16
        %v9600 = vrot.slane %v9598, 4
        %v9601 = vshll.u32 %v9505, 16
        %v9603 = vrot.slane %v9601, 5
        %v9604 = vor.u32 %v9600, %v9603
        %v9605 = vrot.slane %v9604, 4
        %v9607 = vshll.u32 %v9506, 16
        %v9609 = vrot.slane %v9607, 5
        %v9610 = vsel %vm1354, %v9605, %v9609
        %v9611 = vshrl.u32 %v9506, 16
        %v9613 = vrot.slane %v9611, 4
        %v9614 = vor.u32 %v9613, %v9609
        %v9615 = vrot.slane %v9614, 4
        %v9617 = vshll.u32 %v9535, 16
        %v9619 = vrot.slane %v9617, 5
        %v9620 = vsel %vm1354, %v9615, %v9619
        %v9622 = vshrl.u32 %v9507, 16
        %v9624 = vrot.slane %v9622, 4
        %v9625 = vshll.u32 %v9507, 16
        %v9627 = vrot.slane %v9625, 5
        %v9628 = vor.u32 %v9624, %v9627
        %v9629 = vrot.slane %v9628, 4
        %v9631 = vshll.u32 %v9508, 16
        %v9633 = vrot.slane %v9631, 5
        %v9634 = vsel %vm1354, %v9629, %v9633
        %v9635 = vshrl.u32 %v9508, 16
        %v9637 = vrot.slane %v9635, 4
        %v9638 = vor.u32 %v9637, %v9633
        %v9639 = vrot.slane %v9638, 4
        %v9641 = vshll.u32 %v9536, 16
        %v9643 = vrot.slane %v9641, 5
        %v9644 = vsel %vm1354, %v9639, %v9643
        %v9646 = vshrl.u32 %v9509, 16
        %v9648 = vrot.slane %v9646, 4
        %v9649 = vshll.u32 %v9509, 16
        %v9651 = vrot.slane %v9649, 5
        %v9652 = vor.u32 %v9648, %v9651
        %v9653 = vrot.slane %v9652, 4
        %v9655 = vshll.u32 %v9510, 16
        %v9657 = vrot.slane %v9655, 5
        %v9658 = vsel %vm1354, %v9653, %v9657
        %v9659 = vshrl.u32 %v9510, 16
        %v9661 = vrot.slane %v9659, 4
        %v9662 = vor.u32 %v9661, %v9657
        %v9663 = vrot.slane %v9662, 4
        %v9665 = vshll.u32 %v9537, 16
        %v9667 = vrot.slane %v9665, 5
        %v9668 = vsel %vm1354, %v9663, %v9667
        %v9670 = vshrl.u32 %v9511, 16
        %v9672 = vrot.slane %v9670, 4
        %v9673 = vshll.u32 %v9511, 16
        %v9675 = vrot.slane %v9673, 5
        %v9676 = vor.u32 %v9672, %v9675
        %v9677 = vrot.slane %v9676, 4
        %v9679 = vshll.u32 %v9512, 16
        %v9681 = vrot.slane %v9679, 5
        %v9682 = vsel %vm1354, %v9677, %v9681
        %v9683 = vshrl.u32 %v9512, 16
        %v9685 = vrot.slane %v9683, 4
        %v9686 = vor.u32 %v9685, %v9681
        %v9687 = vrot.slane %v9686, 4
        %v9689 = vshll.u32 %v9538, 16
        %v9691 = vrot.slane %v9689, 5
        %v9692 = vsel %vm1354, %v9687, %v9691
        %v9694 = vshrl.u32 %v9513, 16
        %v9696 = vrot.slane %v9694, 4
        %v9697 = vshll.u32 %v9513, 16
        %v9699 = vrot.slane %v9697, 5
        %v9700 = vor.u32 %v9696, %v9699
        %v9701 = vrot.slane %v9700, 4
        %v9703 = vshll.u32 %v9514, 16
        %v9705 = vrot.slane %v9703, 5
        %v9706 = vsel %vm1354, %v9701, %v9705
        %v9707 = vshrl.u32 %v9514, 16
        %v9709 = vrot.slane %v9707, 4
        %v9710 = vor.u32 %v9709, %v9705
        %v9711 = vrot.slane %v9710, 4
        %v9713 = vshll.u32 %v9539, 16
        %v9715 = vrot.slane %v9713, 5
        %v9716 = vsel %vm1354, %v9711, %v9715
        %v9718 = vshrl.u32 %v9515, 16
        %v9720 = vrot.slane %v9718, 4
        %v9721 = vshll.u32 %v9515, 16
        %v9723 = vrot.slane %v9721, 5
        %v9724 = vor.u32 %v9720, %v9723
        %v9725 = vrot.slane %v9724, 4
        %v9727 = vshll.u32 %v9516, 16
        %v9729 = vrot.slane %v9727, 5
        %v9730 = vsel %vm1354, %v9725, %v9729
        %v9731 = vshrl.u32 %v9516, 16
        %v9733 = vrot.slane %v9731, 4
        %v9734 = vor.u32 %v9733, %v9729
        %v9735 = vrot.slane %v9734, 4
        %v9737 = vshll.u32 %v9540, 16
        %v9739 = vrot.slane %v9737, 5
        %v9740 = vsel %vm1354, %v9735, %v9739
        %v9742 = vshrl.u32 %v9517, 16
        %v9744 = vrot.slane %v9742, 4
        %v9745 = vshll.u32 %v9517, 16
        %v9747 = vrot.slane %v9745, 5
        %v9748 = vor.u32 %v9744, %v9747
        %v9749 = vrot.slane %v9748, 4
        %v9751 = vshll.u32 %v9518, 16
        %v9753 = vrot.slane %v9751, 5
        %v9754 = vsel %vm1354, %v9749, %v9753
        %v9755 = vshrl.u32 %v9518, 16
        %v9757 = vrot.slane %v9755, 4
        %v9758 = vor.u32 %v9757, %v9753
        %v9759 = vrot.slane %v9758, 4
        %v9761 = vshll.u32 %v9541, 16
        %v9763 = vrot.slane %v9761, 5
        %v9764 = vsel %vm1354, %v9759, %v9763
        %v9766 = vshrl.u32 %v9519, 16
        %v9768 = vrot.slane %v9766, 4
        %v9769 = vshll.u32 %v9519, 16
        %v9771 = vrot.slane %v9769, 5
        %v9772 = vor.u32 %v9768, %v9771
        %v9773 = vrot.slane %v9772, 4
        %v9775 = vshll.u32 %v9520, 16
        %v9777 = vrot.slane %v9775, 5
        %v9778 = vsel %vm1354, %v9773, %v9777
        %v9779 = vshrl.u32 %v9520, 16
        %v9781 = vrot.slane %v9779, 4
        %v9782 = vor.u32 %v9781, %v9777
        %v9783 = vrot.slane %v9782, 4
        %v9785 = vshll.u32 %v9542, 16
        %v9787 = vrot.slane %v9785, 5
        %v9788 = vsel %vm1354, %v9783, %v9787
        %v9790 = vshrl.u32 %v9521, 16
        %v9792 = vrot.slane %v9790, 4
        %v9793 = vshll.u32 %v9521, 16
        %v9795 = vrot.slane %v9793, 5
        %v9796 = vor.u32 %v9792, %v9795
        %v9797 = vrot.slane %v9796, 4
        %v9799 = vshll.u32 %v9522, 16
        %v9801 = vrot.slane %v9799, 5
        %v9802 = vsel %vm1354, %v9797, %v9801
        %v9803 = vshrl.u32 %v9522, 16
        %v9805 = vrot.slane %v9803, 4
        %v9806 = vor.u32 %v9805, %v9801
        %v9807 = vrot.slane %v9806, 4
        %v9809 = vshll.u32 %v9543, 16
        %v9811 = vrot.slane %v9809, 5
        %v9812 = vsel %vm1354, %v9807, %v9811
        %v9814 = vshrl.u32 %v9523, 16
        %v9816 = vrot.slane %v9814, 4
        %v9817 = vshll.u32 %v9523, 16
        %v9819 = vrot.slane %v9817, 5
        %v9820 = vor.u32 %v9816, %v9819
        %v9821 = vrot.slane %v9820, 4
        %v9823 = vshll.u32 %v9524, 16
        %v9825 = vrot.slane %v9823, 5
        %v9826 = vsel %vm1354, %v9821, %v9825
        %v9827 = vshrl.u32 %v9524, 16
        %v9829 = vrot.slane %v9827, 4
        %v9830 = vor.u32 %v9829, %v9825
        %v9831 = vrot.slane %v9830, 4
        %v9833 = vshll.u32 %v9544, 16
        %v9835 = vrot.slane %v9833, 5
        %v9836 = vsel %vm1354, %v9831, %v9835
        %v9838 = vshrl.u32 %v9525, 16
        %v9840 = vrot.slane %v9838, 4
        %v9841 = vshll.u32 %v9525, 16
        %v9843 = vrot.slane %v9841, 5
        %v9844 = vor.u32 %v9840, %v9843
        %v9845 = vrot.slane %v9844, 4
        %v9847 = vshll.u32 %v9526, 16
        %v9849 = vrot.slane %v9847, 5
        %v9850 = vsel %vm1354, %v9845, %v9849
        %v9851 = vshrl.u32 %v9526, 16
        %v9853 = vrot.slane %v9851, 4
        %v9854 = vor.u32 %v9853, %v9849
        %v9855 = vrot.slane %v9854, 4
        %v9857 = vshll.u32 %v9545, 16
        %v9859 = vrot.slane %v9857, 5
        %v9860 = vsel %vm1354, %v9855, %v9859
        %v9862 = vshrl.u32 %v9527, 16
        %v9864 = vrot.slane %v9862, 4
        %v9865 = vshll.u32 %v9527, 16
        %v9867 = vrot.slane %v9865, 5
        %v9868 = vor.u32 %v9864, %v9867
        %v9869 = vrot.slane %v9868, 4
        %v9871 = vshll.u32 %v9528, 16
        %v9873 = vrot.slane %v9871, 5
        %v9874 = vsel %vm1354, %v9869, %v9873
        %v9875 = vshrl.u32 %v9528, 16
        %v9877 = vrot.slane %v9875, 4
        %v9878 = vor.u32 %v9877, %v9873
        %v9879 = vrot.slane %v9878, 4
        %v9881 = vshll.u32 %v9546, 16
        %v9883 = vrot.slane %v9881, 5
        %v9884 = vsel %vm1354, %v9879, %v9883
        %v9886 = vshrl.u32 %v9529, 16
        %v9888 = vrot.slane %v9886, 4
        %v9889 = vshll.u32 %v9529, 16
        %v9891 = vrot.slane %v9889, 5
        %v9892 = vor.u32 %v9888, %v9891
        %v9893 = vrot.slane %v9892, 4
        %v9895 = vshll.u32 %v9530, 16
        %v9897 = vrot.slane %v9895, 5
        %v9898 = vsel %vm1354, %v9893, %v9897
        %v9899 = vshrl.u32 %v9530, 16
        %v9901 = vrot.slane %v9899, 4
        %v9902 = vor.u32 %v9901, %v9897
        %v9903 = vrot.slane %v9902, 4
        %v9905 = vshll.u32 %v9547, 16
        %v9907 = vrot.slane %v9905, 5
        %v9908 = vsel %vm1354, %v9903, %v9907
        %v9910 = vshrl.u32 %v9531, 16
        %v9912 = vrot.slane %v9910, 4
        %v9913 = vshll.u32 %v9531, 16
        %v9915 = vrot.slane %v9913, 5
        %v9916 = vor.u32 %v9912, %v9915
        %v9917 = vrot.slane %v9916, 4
        %v9919 = vshll.u32 %v9532, 16
        %v9921 = vrot.slane %v9919, 5
        %v9922 = vsel %vm1354, %v9917, %v9921
        %v9923 = vshrl.u32 %v9532, 16
        %v9925 = vrot.slane %v9923, 4
        %v9926 = vor.u32 %v9925, %v9921
        %v9927 = vrot.slane %v9926, 4
        %v9929 = vshll.u32 %v9548, 16
        %v9931 = vrot.slane %v9929, 5
        %v9932 = vsel %vm1354, %v9927, %v9931
        %v9933 = vld [vmem:[%s9500] sm:$0xe]
        %v9934 = vld [vmem:[%s9500 + $0xc] sm:$0xe]
        %v9935 = vld [vmem:[%s9500 + $0x18] sm:$0xe]
        %v9936 = vld [vmem:[%s9500 + $0x24] sm:$0xe]
        %v9937 = vld [vmem:[%s9500 + $0x30] sm:$0xe]
        %v9938 = vld [vmem:[%s9500 + $0x3c] sm:$0xe]
        %v9939 = vld [vmem:[%s9500 + $0x48] sm:$0xe]
        %v9940 = vld [vmem:[%s9500 + $0x54] sm:$0xe]
        %v9941 = vld [vmem:[%s9500 + $0x60] sm:$0xe]
        %v9942 = vld [vmem:[%s9500 + $0x6c] sm:$0xe]
        %v9943 = vld [vmem:[%s9500 + $0x78] sm:$0xe]
        %v9944 = vld [vmem:[%s9500 + $0x84] sm:$0xe]
        %v9945 = vld [vmem:[%s9500 + $0x90] sm:$0xe]
        %v9946 = vld [vmem:[%s9500 + $0x9c] sm:$0xe]
        %v9947 = vld [vmem:[%s9500 + $0xa8] sm:$0xe]
        %v9948 = vld [vmem:[%s9500 + $0xb4] sm:$0xe]
        %v9997 = vrot.slane %v9933, 5
        %v9998 = vrot.slane %v9997, 4
        %v9999 = vrot.slane %v9502, 5
        %v10000 = vsel %vm1805, %v9998, %v9999
        %v10001 = vrot.slane %v9999, 4
        %v10002 = vrot.slane %v9533, 5
        %v10003 = vsel %vm1805, %v10001, %v10002
        %v10004 = vrot.slane %v9934, 5
        %v10005 = vrot.slane %v10004, 4
        %v10006 = vrot.slane %v9504, 5
        %v10007 = vsel %vm1805, %v10005, %v10006
        %v10008 = vrot.slane %v10006, 4
        %v10009 = vrot.slane %v9534, 5
        %v10010 = vsel %vm1805, %v10008, %v10009
        %v10011 = vrot.slane %v9935, 5
        %v10012 = vrot.slane %v10011, 4
        %v10013 = vrot.slane %v9506, 5
        %v10014 = vsel %vm1805, %v10012, %v10013
        %v10015 = vrot.slane %v10013, 4
        %v10016 = vrot.slane %v9535, 5
        %v10017 = vsel %vm1805, %v10015, %v10016
        %v10018 = vrot.slane %v9936, 5
        %v10019 = vrot.slane %v10018, 4
        %v10020 = vrot.slane %v9508, 5
        %v10021 = vsel %vm1805, %v10019, %v10020
        %v10022 = vrot.slane %v10020, 4
        %v10023 = vrot.slane %v9536, 5
        %v10024 = vsel %vm1805, %v10022, %v10023
        %v10025 = vrot.slane %v9937, 5
        %v10026 = vrot.slane %v10025, 4
        %v10027 = vrot.slane %v9510, 5
        %v10028 = vsel %vm1805, %v10026, %v10027
        %v10029 = vrot.slane %v10027, 4
        %v10030 = vrot.slane %v9537, 5
        %v10031 = vsel %vm1805, %v10029, %v10030
        %v10032 = vrot.slane %v9938, 5
        %v10033 = vrot.slane %v10032, 4
        %v10034 = vrot.slane %v9512, 5
        %v10035 = vsel %vm1805, %v10033, %v10034
        %v10036 = vrot.slane %v10034, 4
        %v10037 = vrot.slane %v9538, 5
        %v10038 = vsel %vm1805, %v10036, %v10037
        %v10039 = vrot.slane %v9939, 5
        %v10040 = vrot.slane %v10039, 4
        %v10041 = vrot.slane %v9514, 5
        %v10042 = vsel %vm1805, %v10040, %v10041
        %v10043 = vrot.slane %v10041, 4
        %v10044 = vrot.slane %v9539, 5
        %v10045 = vsel %vm1805, %v10043, %v10044
        %v10046 = vrot.slane %v9940, 5
        %v10047 = vrot.slane %v10046, 4
        %v10048 = vrot.slane %v9516, 5
        %v10049 = vsel %vm1805, %v10047, %v10048
        %v10050 = vrot.slane %v10048, 4
        %v10051 = vrot.slane %v9540, 5
        %v10052 = vsel %vm1805, %v10050, %v10051
        %v10053 = vrot.slane %v9941, 5
        %v10054 = vrot.slane %v10053, 4
        %v10055 = vrot.slane %v9518, 5
        %v10056 = vsel %vm1805, %v10054, %v10055
        %v10057 = vrot.slane %v10055, 4
        %v10058 = vrot.slane %v9541, 5
        %v10059 = vsel %vm1805, %v10057, %v10058
        %v10060 = vrot.slane %v9942, 5
        %v10061 = vrot.slane %v10060, 4
        %v10062 = vrot.slane %v9520, 5
        %v10063 = vsel %vm1805, %v10061, %v10062
        %v10064 = vrot.slane %v10062, 4
        %v10065 = vrot.slane %v9542, 5
        %v10066 = vsel %vm1805, %v10064, %v10065
        %v10067 = vrot.slane %v9943, 5
        %v10068 = vrot.slane %v10067, 4
        %v10069 = vrot.slane %v9522, 5
        %v10070 = vsel %vm1805, %v10068, %v10069
        %v10071 = vrot.slane %v10069, 4
        %v10072 = vrot.slane %v9543, 5
        %v10073 = vsel %vm1805, %v10071, %v10072
        %v10074 = vrot.slane %v9944, 5
        %v10075 = vrot.slane %v10074, 4
        %v10076 = vrot.slane %v9524, 5
        %v10077 = vsel %vm1805, %v10075, %v10076
        %v10078 = vrot.slane %v10076, 4
        %v10079 = vrot.slane %v9544, 5
        %v10080 = vsel %vm1805, %v10078, %v10079
        %v10081 = vrot.slane %v9945, 5
        %v10082 = vrot.slane %v10081, 4
        %v10083 = vrot.slane %v9526, 5
        %v10084 = vsel %vm1805, %v10082, %v10083
        %v10085 = vrot.slane %v10083, 4
        %v10086 = vrot.slane %v9545, 5
        %v10087 = vsel %vm1805, %v10085, %v10086
        %v10088 = vrot.slane %v9946, 5
        %v10089 = vrot.slane %v10088, 4
        %v10090 = vrot.slane %v9528, 5
        %v10091 = vsel %vm1805, %v10089, %v10090
        %v10092 = vrot.slane %v10090, 4
        %v10093 = vrot.slane %v9546, 5
        %v10094 = vsel %vm1805, %v10092, %v10093
        %v10095 = vrot.slane %v9947, 5
        %v10096 = vrot.slane %v10095, 4
        %v10097 = vrot.slane %v9530, 5
        %v10098 = vsel %vm1805, %v10096, %v10097
        %v10099 = vrot.slane %v10097, 4
        %v10100 = vrot.slane %v9547, 5
        %v10101 = vsel %vm1805, %v10099, %v10100
        %v10102 = vrot.slane %v9948, 5
        %v10103 = vrot.slane %v10102, 4
        %v10104 = vrot.slane %v9532, 5
        %v10105 = vsel %vm1805, %v10103, %v10104
        %v10106 = vrot.slane %v10104, 4
        %v10107 = vrot.slane %v9548, 5
        %v10108 = vsel %vm1805, %v10106, %v10107
        %v10109 = vld [vmem:[%s9500 + $0x8] sm:$0x3]
        %v10110 = vld [vmem:[%s9500 + $0x14] sm:$0x3]
        %v10111 = vld [vmem:[%s9500 + $0x20] sm:$0x3]
        %v10112 = vld [vmem:[%s9500 + $0x2c] sm:$0x3]
        %v10113 = vld [vmem:[%s9500 + $0x38] sm:$0x3]
        %v10114 = vld [vmem:[%s9500 + $0x44] sm:$0x3]
        %v10115 = vld [vmem:[%s9500 + $0x50] sm:$0x3]
        %v10116 = vld [vmem:[%s9500 + $0x5c] sm:$0x3]
        %v10117 = vld [vmem:[%s9500 + $0x68] sm:$0x3]
        %v10118 = vld [vmem:[%s9500 + $0x74] sm:$0x3]
        %v10119 = vld [vmem:[%s9500 + $0x80] sm:$0x3]
        %v10120 = vld [vmem:[%s9500 + $0x8c] sm:$0x3]
        %v10121 = vld [vmem:[%s9500 + $0x98] sm:$0x3]
        %v10122 = vld [vmem:[%s9500 + $0xa4] sm:$0x3]
        %v10123 = vld [vmem:[%s9500 + $0xb0] sm:$0x3]
        %v10124 = vld [vmem:[%s9500 + $0xbc] sm:$0x3]
        %v10126 = vshrl.u32 %v9933, 16
        %v10128 = vrot.slane %v10126, 5
        %v10129 = vshll.u32 %v9933, 16
        %v10131 = vrot.slane %v10129, 6
        %v10132 = vor.u32 %v10128, %v10131
        %v10133 = vrot.slane %v10132, 4
        %v10134 = vrot.slane %v9563, 5
        %v10135 = vrot.slane %v9559, 6
        %v10136 = vor.u32 %v10134, %v10135
        %v10137 = vsel %vm1936, %v10133, %v10136
        %v10138 = vrot.slane %v10136, 4
        %v10140 = vshrl.u32 %v10109, 16
        %v10142 = vrot.slane %v10140, 5
        %v10143 = vshll.u32 %v10109, 16
        %v10145 = vrot.slane %v10143, 6
        %v10146 = vor.u32 %v10142, %v10145
        %v10147 = vsel %vm1936, %v10138, %v10146
        %v10149 = vshrl.u32 %v9934, 16
        %v10151 = vrot.slane %v10149, 5
        %v10152 = vshll.u32 %v9934, 16
        %v10154 = vrot.slane %v10152, 6
        %v10155 = vor.u32 %v10151, %v10154
        %v10156 = vrot.slane %v10155, 4
        %v10157 = vrot.slane %v9587, 5
        %v10158 = vrot.slane %v9583, 6
        %v10159 = vor.u32 %v10157, %v10158
        %v10160 = vsel %vm1936, %v10156, %v10159
        %v10161 = vrot.slane %v10159, 4
        %v10163 = vshrl.u32 %v10110, 16
        %v10165 = vrot.slane %v10163, 5
        %v10166 = vshll.u32 %v10110, 16
        %v10168 = vrot.slane %v10166, 6
        %v10169 = vor.u32 %v10165, %v10168
        %v10170 = vsel %vm1936, %v10161, %v10169
        %v10172 = vshrl.u32 %v9935, 16
        %v10174 = vrot.slane %v10172, 5
        %v10175 = vshll.u32 %v9935, 16
        %v10177 = vrot.slane %v10175, 6
        %v10178 = vor.u32 %v10174, %v10177
        %v10179 = vrot.slane %v10178, 4
        %v10180 = vrot.slane %v9611, 5
        %v10181 = vrot.slane %v9607, 6
        %v10182 = vor.u32 %v10180, %v10181
        %v10183 = vsel %vm1936, %v10179, %v10182
        %v10184 = vrot.slane %v10182, 4
        %v10186 = vshrl.u32 %v10111, 16
        %v10188 = vrot.slane %v10186, 5
        %v10189 = vshll.u32 %v10111, 16
        %v10191 = vrot.slane %v10189, 6
        %v10192 = vor.u32 %v10188, %v10191
        %v10193 = vsel %vm1936, %v10184, %v10192
        %v10195 = vshrl.u32 %v9936, 16
        %v10197 = vrot.slane %v10195, 5
        %v10198 = vshll.u32 %v9936, 16
        %v10200 = vrot.slane %v10198, 6
        %v10201 = vor.u32 %v10197, %v10200
        %v10202 = vrot.slane %v10201, 4
        %v10203 = vrot.slane %v9635, 5
        %v10204 = vrot.slane %v9631, 6
        %v10205 = vor.u32 %v10203, %v10204
        %v10206 = vsel %vm1936, %v10202, %v10205
        %v10207 = vrot.slane %v10205, 4
        %v10209 = vshrl.u32 %v10112, 16
        %v10211 = vrot.slane %v10209, 5
        %v10212 = vshll.u32 %v10112, 16
        %v10214 = vrot.slane %v10212, 6
        %v10215 = vor.u32 %v10211, %v10214
        %v10216 = vsel %vm1936, %v10207, %v10215
        %v10218 = vshrl.u32 %v9937, 16
        %v10220 = vrot.slane %v10218, 5
        %v10221 = vshll.u32 %v9937, 16
        %v10223 = vrot.slane %v10221, 6
        %v10224 = vor.u32 %v10220, %v10223
        %v10225 = vrot.slane %v10224, 4
        %v10226 = vrot.slane %v9659, 5
        %v10227 = vrot.slane %v9655, 6
        %v10228 = vor.u32 %v10226, %v10227
        %v10229 = vsel %vm1936, %v10225, %v10228
        %v10230 = vrot.slane %v10228, 4
        %v10232 = vshrl.u32 %v10113, 16
        %v10234 = vrot.slane %v10232, 5
        %v10235 = vshll.u32 %v10113, 16
        %v10237 = vrot.slane %v10235, 6
        %v10238 = vor.u32 %v10234, %v10237
        %v10239 = vsel %vm1936, %v10230, %v10238
        %v10241 = vshrl.u32 %v9938, 16
        %v10243 = vrot.slane %v10241, 5
        %v10244 = vshll.u32 %v9938, 16
        %v10246 = vrot.slane %v10244, 6
        %v10247 = vor.u32 %v10243, %v10246
        %v10248 = vrot.slane %v10247, 4
        %v10249 = vrot.slane %v9683, 5
        %v10250 = vrot.slane %v9679, 6
        %v10251 = vor.u32 %v10249, %v10250
        %v10252 = vsel %vm1936, %v10248, %v10251
        %v10253 = vrot.slane %v10251, 4
        %v10255 = vshrl.u32 %v10114, 16
        %v10257 = vrot.slane %v10255, 5
        %v10258 = vshll.u32 %v10114, 16
        %v10260 = vrot.slane %v10258, 6
        %v10261 = vor.u32 %v10257, %v10260
        %v10262 = vsel %vm1936, %v10253, %v10261
        %v10264 = vshrl.u32 %v9939, 16
        %v10266 = vrot.slane %v10264, 5
        %v10267 = vshll.u32 %v9939, 16
        %v10269 = vrot.slane %v10267, 6
        %v10270 = vor.u32 %v10266, %v10269
        %v10271 = vrot.slane %v10270, 4
        %v10272 = vrot.slane %v9707, 5
        %v10273 = vrot.slane %v9703, 6
        %v10274 = vor.u32 %v10272, %v10273
        %v10275 = vsel %vm1936, %v10271, %v10274
        %v10276 = vrot.slane %v10274, 4
        %v10278 = vshrl.u32 %v10115, 16
        %v10280 = vrot.slane %v10278, 5
        %v10281 = vshll.u32 %v10115, 16
        %v10283 = vrot.slane %v10281, 6
        %v10284 = vor.u32 %v10280, %v10283
        %v10285 = vsel %vm1936, %v10276, %v10284
        %v10287 = vshrl.u32 %v9940, 16
        %v10289 = vrot.slane %v10287, 5
        %v10290 = vshll.u32 %v9940, 16
        %v10292 = vrot.slane %v10290, 6
        %v10293 = vor.u32 %v10289, %v10292
        %v10294 = vrot.slane %v10293, 4
        %v10295 = vrot.slane %v9731, 5
        %v10296 = vrot.slane %v9727, 6
        %v10297 = vor.u32 %v10295, %v10296
        %v10298 = vsel %vm1936, %v10294, %v10297
        %v10299 = vrot.slane %v10297, 4
        %v10301 = vshrl.u32 %v10116, 16
        %v10303 = vrot.slane %v10301, 5
        %v10304 = vshll.u32 %v10116, 16
        %v10306 = vrot.slane %v10304, 6
        %v10307 = vor.u32 %v10303, %v10306
        %v10308 = vsel %vm1936, %v10299, %v10307
        %v10310 = vshrl.u32 %v9941, 16
        %v10312 = vrot.slane %v10310, 5
        %v10313 = vshll.u32 %v9941, 16
        %v10315 = vrot.slane %v10313, 6
        %v10316 = vor.u32 %v10312, %v10315
        %v10317 = vrot.slane %v10316, 4
        %v10318 = vrot.slane %v9755, 5
        %v10319 = vrot.slane %v9751, 6
        %v10320 = vor.u32 %v10318, %v10319
        %v10321 = vsel %vm1936, %v10317, %v10320
        %v10322 = vrot.slane %v10320, 4
        %v10324 = vshrl.u32 %v10117, 16
        %v10326 = vrot.slane %v10324, 5
        %v10327 = vshll.u32 %v10117, 16
        %v10329 = vrot.slane %v10327, 6
        %v10330 = vor.u32 %v10326, %v10329
        %v10331 = vsel %vm1936, %v10322, %v10330
        %v10333 = vshrl.u32 %v9942, 16
        %v10335 = vrot.slane %v10333, 5
        %v10336 = vshll.u32 %v9942, 16
        %v10338 = vrot.slane %v10336, 6
        %v10339 = vor.u32 %v10335, %v10338
        %v10340 = vrot.slane %v10339, 4
        %v10341 = vrot.slane %v9779, 5
        %v10342 = vrot.slane %v9775, 6
        %v10343 = vor.u32 %v10341, %v10342
        %v10344 = vsel %vm1936, %v10340, %v10343
        %v10345 = vrot.slane %v10343, 4
        %v10347 = vshrl.u32 %v10118, 16
        %v10349 = vrot.slane %v10347, 5
        %v10350 = vshll.u32 %v10118, 16
        %v10352 = vrot.slane %v10350, 6
        %v10353 = vor.u32 %v10349, %v10352
        %v10354 = vsel %vm1936, %v10345, %v10353
        %v10356 = vshrl.u32 %v9943, 16
        %v10358 = vrot.slane %v10356, 5
        %v10359 = vshll.u32 %v9943, 16
        %v10361 = vrot.slane %v10359, 6
        %v10362 = vor.u32 %v10358, %v10361
        %v10363 = vrot.slane %v10362, 4
        %v10364 = vrot.slane %v9803, 5
        %v10365 = vrot.slane %v9799, 6
        %v10366 = vor.u32 %v10364, %v10365
        %v10367 = vsel %vm1936, %v10363, %v10366
        %v10368 = vrot.slane %v10366, 4
        %v10370 = vshrl.u32 %v10119, 16
        %v10372 = vrot.slane %v10370, 5
        %v10373 = vshll.u32 %v10119, 16
        %v10375 = vrot.slane %v10373, 6
        %v10376 = vor.u32 %v10372, %v10375
        %v10377 = vsel %vm1936, %v10368, %v10376
        %v10379 = vshrl.u32 %v9944, 16
        %v10381 = vrot.slane %v10379, 5
        %v10382 = vshll.u32 %v9944, 16
        %v10384 = vrot.slane %v10382, 6
        %v10385 = vor.u32 %v10381, %v10384
        %v10386 = vrot.slane %v10385, 4
        %v10387 = vrot.slane %v9827, 5
        %v10388 = vrot.slane %v9823, 6
        %v10389 = vor.u32 %v10387, %v10388
        %v10390 = vsel %vm1936, %v10386, %v10389
        %v10391 = vrot.slane %v10389, 4
        %v10393 = vshrl.u32 %v10120, 16
        %v10395 = vrot.slane %v10393, 5
        %v10396 = vshll.u32 %v10120, 16
        %v10398 = vrot.slane %v10396, 6
        %v10399 = vor.u32 %v10395, %v10398
        %v10400 = vsel %vm1936, %v10391, %v10399
        %v10402 = vshrl.u32 %v9945, 16
        %v10404 = vrot.slane %v10402, 5
        %v10405 = vshll.u32 %v9945, 16
        %v10407 = vrot.slane %v10405, 6
        %v10408 = vor.u32 %v10404, %v10407
        %v10409 = vrot.slane %v10408, 4
        %v10410 = vrot.slane %v9851, 5
        %v10411 = vrot.slane %v9847, 6
        %v10412 = vor.u32 %v10410, %v10411
        %v10413 = vsel %vm1936, %v10409, %v10412
        %v10414 = vrot.slane %v10412, 4
        %v10416 = vshrl.u32 %v10121, 16
        %v10418 = vrot.slane %v10416, 5
        %v10419 = vshll.u32 %v10121, 16
        %v10421 = vrot.slane %v10419, 6
        %v10422 = vor.u32 %v10418, %v10421
        %v10423 = vsel %vm1936, %v10414, %v10422
        %v10425 = vshrl.u32 %v9946, 16
        %v10427 = vrot.slane %v10425, 5
        %v10428 = vshll.u32 %v9946, 16
        %v10430 = vrot.slane %v10428, 6
        %v10431 = vor.u32 %v10427, %v10430
        %v10432 = vrot.slane %v10431, 4
        %v10433 = vrot.slane %v9875, 5
        %v10434 = vrot.slane %v9871, 6
        %v10435 = vor.u32 %v10433, %v10434
        %v10436 = vsel %vm1936, %v10432, %v10435
        %v10437 = vrot.slane %v10435, 4
        %v10439 = vshrl.u32 %v10122, 16
        %v10441 = vrot.slane %v10439, 5
        %v10442 = vshll.u32 %v10122, 16
        %v10444 = vrot.slane %v10442, 6
        %v10445 = vor.u32 %v10441, %v10444
        %v10446 = vsel %vm1936, %v10437, %v10445
        %v10448 = vshrl.u32 %v9947, 16
        %v10450 = vrot.slane %v10448, 5
        %v10451 = vshll.u32 %v9947, 16
        %v10453 = vrot.slane %v10451, 6
        %v10454 = vor.u32 %v10450, %v10453
        %v10455 = vrot.slane %v10454, 4
        %v10456 = vrot.slane %v9899, 5
        %v10457 = vrot.slane %v9895, 6
        %v10458 = vor.u32 %v10456, %v10457
        %v10459 = vsel %vm1936, %v10455, %v10458
        %v10460 = vrot.slane %v10458, 4
        %v10462 = vshrl.u32 %v10123, 16
        %v10464 = vrot.slane %v10462, 5
        %v10465 = vshll.u32 %v10123, 16
        %v10467 = vrot.slane %v10465, 6
        %v10468 = vor.u32 %v10464, %v10467
        %v10469 = vsel %vm1936, %v10460, %v10468
        %v10471 = vshrl.u32 %v9948, 16
        %v10473 = vrot.slane %v10471, 5
        %v10474 = vshll.u32 %v9948, 16
        %v10476 = vrot.slane %v10474, 6
        %v10477 = vor.u32 %v10473, %v10476
        %v10478 = vrot.slane %v10477, 4
        %v10479 = vrot.slane %v9923, 5
        %v10480 = vrot.slane %v9919, 6
        %v10481 = vor.u32 %v10479, %v10480
        %v10482 = vsel %vm1936, %v10478, %v10481
        %v10483 = vrot.slane %v10481, 4
        %v10485 = vshrl.u32 %v10124, 16
        %v10487 = vrot.slane %v10485, 5
        %v10488 = vshll.u32 %v10124, 16
        %v10490 = vrot.slane %v10488, 6
        %v10491 = vor.u32 %v10487, %v10490
        %v10492 = vsel %vm1936, %v10483, %v10491
        %v10509 = vunpack.c.l.b16 %v9501
        %v10510 = vunpack.c.l.b16 %v9502
        %v10511 = vunpack.c.l.b16 %v9503
        %v10512 = vunpack.c.l.b16 %v9504
        %v10513 = vunpack.c.l.b16 %v9505
        %v10514 = vunpack.c.l.b16 %v9506
        %v10515 = vunpack.c.l.b16 %v9507
        %v10516 = vunpack.c.l.b16 %v9508
        %v10517 = vunpack.c.l.b16 %v9509
        %v10518 = vunpack.c.l.b16 %v9510
        %v10519 = vunpack.c.l.b16 %v9511
        %v10520 = vunpack.c.l.b16 %v9512
        %v10521 = vunpack.c.l.b16 %v9513
        %v10522 = vunpack.c.l.b16 %v9514
        %v10523 = vunpack.c.l.b16 %v9515
        %v10524 = vunpack.c.l.b16 %v9516
        %v10525 = vunpack.c.l.b16 %v9517
        %v10526 = vunpack.c.l.b16 %v9518
        %v10527 = vunpack.c.l.b16 %v9519
        %v10528 = vunpack.c.l.b16 %v9520
        %v10529 = vunpack.c.l.b16 %v9521
        %v10530 = vunpack.c.l.b16 %v9522
        %v10531 = vunpack.c.l.b16 %v9523
        %v10532 = vunpack.c.l.b16 %v9524
        %v10533 = vunpack.c.l.b16 %v9525
        %v10534 = vunpack.c.l.b16 %v9526
        %v10535 = vunpack.c.l.b16 %v9527
        %v10536 = vunpack.c.l.b16 %v9528
        %v10537 = vunpack.c.l.b16 %v9529
        %v10538 = vunpack.c.l.b16 %v9530
        %v10539 = vunpack.c.l.b16 %v9531
        %v10540 = vunpack.c.l.b16 %v9532
        %v10541 = vpack.c.b16 %v10510, %v10509
        %v10542 = vpack.c.b16 %v10512, %v10511
        %v10543 = vpack.c.b16 %v10514, %v10513
        %v10544 = vpack.c.b16 %v10516, %v10515
        %v10545 = vpack.c.b16 %v10518, %v10517
        %v10546 = vpack.c.b16 %v10520, %v10519
        %v10547 = vpack.c.b16 %v10522, %v10521
        %v10548 = vpack.c.b16 %v10524, %v10523
        %v10549 = vpack.c.b16 %v10526, %v10525
        %v10550 = vpack.c.b16 %v10528, %v10527
        %v10551 = vpack.c.b16 %v10530, %v10529
        %v10552 = vpack.c.b16 %v10532, %v10531
        %v10553 = vpack.c.b16 %v10534, %v10533
        %v10554 = vpack.c.b16 %v10536, %v10535
        %v10555 = vpack.c.b16 %v10538, %v10537
        %v10556 = vpack.c.b16 %v10540, %v10539
        %v10557 = vunpack.c.l.b16 %v9562
        %v10558 = vunpack.c.l.b16 %v9572
        %v10559 = vunpack.c.l.b16 %v9586
        %v10560 = vunpack.c.l.b16 %v9596
        %v10561 = vunpack.c.l.b16 %v9610
        %v10562 = vunpack.c.l.b16 %v9620
        %v10563 = vunpack.c.l.b16 %v9634
        %v10564 = vunpack.c.l.b16 %v9644
        %v10565 = vunpack.c.l.b16 %v9658
        %v10566 = vunpack.c.l.b16 %v9668
        %v10567 = vunpack.c.l.b16 %v9682
        %v10568 = vunpack.c.l.b16 %v9692
        %v10569 = vunpack.c.l.b16 %v9706
        %v10570 = vunpack.c.l.b16 %v9716
        %v10571 = vunpack.c.l.b16 %v9730
        %v10572 = vunpack.c.l.b16 %v9740
        %v10573 = vunpack.c.l.b16 %v9754
        %v10574 = vunpack.c.l.b16 %v9764
        %v10575 = vunpack.c.l.b16 %v9778
        %v10576 = vunpack.c.l.b16 %v9788
        %v10577 = vunpack.c.l.b16 %v9802
        %v10578 = vunpack.c.l.b16 %v9812
        %v10579 = vunpack.c.l.b16 %v9826
        %v10580 = vunpack.c.l.b16 %v9836
        %v10581 = vunpack.c.l.b16 %v9850
        %v10582 = vunpack.c.l.b16 %v9860
        %v10583 = vunpack.c.l.b16 %v9874
        %v10584 = vunpack.c.l.b16 %v9884
        %v10585 = vunpack.c.l.b16 %v9898
        %v10586 = vunpack.c.l.b16 %v9908
        %v10587 = vunpack.c.l.b16 %v9922
        %v10588 = vunpack.c.l.b16 %v9932
        %v10589 = vpack.c.b16 %v10558, %v10557
        %v10590 = vpack.c.b16 %v10560, %v10559
        %v10591 = vpack.c.b16 %v10562, %v10561
        %v10592 = vpack.c.b16 %v10564, %v10563
        %v10593 = vpack.c.b16 %v10566, %v10565
        %v10594 = vpack.c.b16 %v10568, %v10567
        %v10595 = vpack.c.b16 %v10570, %v10569
        %v10596 = vpack.c.b16 %v10572, %v10571
        %v10597 = vpack.c.b16 %v10574, %v10573
        %v10598 = vpack.c.b16 %v10576, %v10575
        %v10599 = vpack.c.b16 %v10578, %v10577
        %v10600 = vpack.c.b16 %v10580, %v10579
        %v10601 = vpack.c.b16 %v10582, %v10581
        %v10602 = vpack.c.b16 %v10584, %v10583
        %v10603 = vpack.c.b16 %v10586, %v10585
        %v10604 = vpack.c.b16 %v10588, %v10587
        %10605 = vrot.lane.b32.xlu0 %v10589, 64
        %v10606 = vpop.permute.xlu0 %10605
        %10607 = vrot.lane.b32.xlu0 %v10590, 64
        %v10608 = vpop.permute.xlu0 %10607
        %10609 = vrot.lane.b32.xlu0 %v10591, 64
        %v10610 = vpop.permute.xlu0 %10609
        %10611 = vrot.lane.b32.xlu0 %v10592, 64
        %v10612 = vpop.permute.xlu0 %10611
        %10613 = vrot.lane.b32.xlu0 %v10593, 64
        %v10614 = vpop.permute.xlu0 %10613
        %10615 = vrot.lane.b32.xlu0 %v10594, 64
        %v10616 = vpop.permute.xlu0 %10615
        %10617 = vrot.lane.b32.xlu0 %v10595, 64
        %v10618 = vpop.permute.xlu0 %10617
        %10619 = vrot.lane.b32.xlu0 %v10596, 64
        %v10620 = vpop.permute.xlu0 %10619
        %10621 = vrot.lane.b32.xlu0 %v10597, 64
        %v10622 = vpop.permute.xlu0 %10621
        %10623 = vrot.lane.b32.xlu0 %v10598, 64
        %v10624 = vpop.permute.xlu0 %10623
        %10625 = vrot.lane.b32.xlu0 %v10599, 64
        %v10626 = vpop.permute.xlu0 %10625
        %10627 = vrot.lane.b32.xlu0 %v10600, 64
        %v10628 = vpop.permute.xlu0 %10627
        %10629 = vrot.lane.b32.xlu0 %v10601, 64
        %v10630 = vpop.permute.xlu0 %10629
        %10631 = vrot.lane.b32.xlu0 %v10602, 64
        %v10632 = vpop.permute.xlu0 %10631
        %10633 = vrot.lane.b32.xlu0 %v10603, 64
        %v10634 = vpop.permute.xlu0 %10633
        %10635 = vrot.lane.b32.xlu0 %v10604, 64
        %v10636 = vpop.permute.xlu0 %10635
        %v10637 = vunpack.c.l.b16 %v10000
        %v10638 = vunpack.c.l.b16 %v10003
        %v10639 = vunpack.c.l.b16 %v10007
        %v10640 = vunpack.c.l.b16 %v10010
        %v10641 = vunpack.c.l.b16 %v10014
        %v10642 = vunpack.c.l.b16 %v10017
        %v10643 = vunpack.c.l.b16 %v10021
        %v10644 = vunpack.c.l.b16 %v10024
        %v10645 = vunpack.c.l.b16 %v10028
        %v10646 = vunpack.c.l.b16 %v10031
        %v10647 = vunpack.c.l.b16 %v10035
        %v10648 = vunpack.c.l.b16 %v10038
        %v10649 = vunpack.c.l.b16 %v10042
        %v10650 = vunpack.c.l.b16 %v10045
        %v10651 = vunpack.c.l.b16 %v10049
        %v10652 = vunpack.c.l.b16 %v10052
        %v10653 = vunpack.c.l.b16 %v10056
        %v10654 = vunpack.c.l.b16 %v10059
        %v10655 = vunpack.c.l.b16 %v10063
        %v10656 = vunpack.c.l.b16 %v10066
        %v10657 = vunpack.c.l.b16 %v10070
        %v10658 = vunpack.c.l.b16 %v10073
        %v10659 = vunpack.c.l.b16 %v10077
        %v10660 = vunpack.c.l.b16 %v10080
        %v10661 = vunpack.c.l.b16 %v10084
        %v10662 = vunpack.c.l.b16 %v10087
        %v10663 = vunpack.c.l.b16 %v10091
        %v10664 = vunpack.c.l.b16 %v10094
        %v10665 = vunpack.c.l.b16 %v10098
        %v10666 = vunpack.c.l.b16 %v10101
        %v10667 = vunpack.c.l.b16 %v10105
        %v10668 = vunpack.c.l.b16 %v10108
        %v10669 = vpack.c.b16 %v10638, %v10637
        %v10670 = vpack.c.b16 %v10640, %v10639
        %v10671 = vpack.c.b16 %v10642, %v10641
        %v10672 = vpack.c.b16 %v10644, %v10643
        %v10673 = vpack.c.b16 %v10646, %v10645
        %v10674 = vpack.c.b16 %v10648, %v10647
        %v10675 = vpack.c.b16 %v10650, %v10649
        %v10676 = vpack.c.b16 %v10652, %v10651
        %v10677 = vpack.c.b16 %v10654, %v10653
        %v10678 = vpack.c.b16 %v10656, %v10655
        %v10679 = vpack.c.b16 %v10658, %v10657
        %v10680 = vpack.c.b16 %v10660, %v10659
        %v10681 = vpack.c.b16 %v10662, %v10661
        %v10682 = vpack.c.b16 %v10664, %v10663
        %v10683 = vpack.c.b16 %v10666, %v10665
        %v10684 = vpack.c.b16 %v10668, %v10667
        %v10685 = vunpack.c.l.b16 %v10137
        %v10686 = vunpack.c.l.b16 %v10147
        %v10687 = vunpack.c.l.b16 %v10160
        %v10688 = vunpack.c.l.b16 %v10170
        %v10689 = vunpack.c.l.b16 %v10183
        %v10690 = vunpack.c.l.b16 %v10193
        %v10691 = vunpack.c.l.b16 %v10206
        %v10692 = vunpack.c.l.b16 %v10216
        %v10693 = vunpack.c.l.b16 %v10229
        %v10694 = vunpack.c.l.b16 %v10239
        %v10695 = vunpack.c.l.b16 %v10252
        %v10696 = vunpack.c.l.b16 %v10262
        %v10697 = vunpack.c.l.b16 %v10275
        %v10698 = vunpack.c.l.b16 %v10285
        %v10699 = vunpack.c.l.b16 %v10298
        %v10700 = vunpack.c.l.b16 %v10308
        %v10701 = vunpack.c.l.b16 %v10321
        %v10702 = vunpack.c.l.b16 %v10331
        %v10703 = vunpack.c.l.b16 %v10344
        %v10704 = vunpack.c.l.b16 %v10354
        %v10705 = vunpack.c.l.b16 %v10367
        %v10706 = vunpack.c.l.b16 %v10377
        %v10707 = vunpack.c.l.b16 %v10390
        %v10708 = vunpack.c.l.b16 %v10400
        %v10709 = vunpack.c.l.b16 %v10413
        %v10710 = vunpack.c.l.b16 %v10423
        %v10711 = vunpack.c.l.b16 %v10436
        %v10712 = vunpack.c.l.b16 %v10446
        %v10713 = vunpack.c.l.b16 %v10459
        %v10714 = vunpack.c.l.b16 %v10469
        %v10715 = vunpack.c.l.b16 %v10482
        %v10716 = vunpack.c.l.b16 %v10492
        %v10717 = vpack.c.b16 %v10686, %v10685
        %v10718 = vpack.c.b16 %v10688, %v10687
        %v10719 = vpack.c.b16 %v10690, %v10689
        %v10720 = vpack.c.b16 %v10692, %v10691
        %v10721 = vpack.c.b16 %v10694, %v10693
        %v10722 = vpack.c.b16 %v10696, %v10695
        %v10723 = vpack.c.b16 %v10698, %v10697
        %v10724 = vpack.c.b16 %v10700, %v10699
        %v10725 = vpack.c.b16 %v10702, %v10701
        %v10726 = vpack.c.b16 %v10704, %v10703
        %v10727 = vpack.c.b16 %v10706, %v10705
        %v10728 = vpack.c.b16 %v10708, %v10707
        %v10729 = vpack.c.b16 %v10710, %v10709
        %v10730 = vpack.c.b16 %v10712, %v10711
        %v10731 = vpack.c.b16 %v10714, %v10713
        %v10732 = vpack.c.b16 %v10716, %v10715
        %10733 = vrot.lane.b32.xlu0 %v10717, 64
        %v10734 = vpop.permute.xlu0 %10733
        %10735 = vrot.lane.b32.xlu0 %v10718, 64
        %v10736 = vpop.permute.xlu0 %10735
        %10737 = vrot.lane.b32.xlu0 %v10719, 64
        %v10738 = vpop.permute.xlu0 %10737
        %10739 = vrot.lane.b32.xlu0 %v10720, 64
        %v10740 = vpop.permute.xlu0 %10739
        %10741 = vrot.lane.b32.xlu0 %v10721, 64
        %v10742 = vpop.permute.xlu0 %10741
        %10743 = vrot.lane.b32.xlu0 %v10722, 64
        %v10744 = vpop.permute.xlu0 %10743
        %10745 = vrot.lane.b32.xlu0 %v10723, 64
        %v10746 = vpop.permute.xlu0 %10745
        %10747 = vrot.lane.b32.xlu0 %v10724, 64
        %v10748 = vpop.permute.xlu0 %10747
        %10749 = vrot.lane.b32.xlu0 %v10725, 64
        %v10750 = vpop.permute.xlu0 %10749
        %10751 = vrot.lane.b32.xlu0 %v10726, 64
        %v10752 = vpop.permute.xlu0 %10751
        %10753 = vrot.lane.b32.xlu0 %v10727, 64
        %v10754 = vpop.permute.xlu0 %10753
        %10755 = vrot.lane.b32.xlu0 %v10728, 64
        %v10756 = vpop.permute.xlu0 %10755
        %10757 = vrot.lane.b32.xlu0 %v10729, 64
        %v10758 = vpop.permute.xlu0 %10757
        %10759 = vrot.lane.b32.xlu0 %v10730, 64
        %v10760 = vpop.permute.xlu0 %10759
        %10761 = vrot.lane.b32.xlu0 %v10731, 64
        %v10762 = vpop.permute.xlu0 %10761
        %10763 = vrot.lane.b32.xlu0 %v10732, 64
        %v10764 = vpop.permute.xlu0 %10763
        %v10767 = vsel %vm2577, %v10541, %v10606
        %v10771 = vsel %vm2577, %v10542, %v10608
        %v10775 = vsel %vm2577, %v10543, %v10610
        %v10779 = vsel %vm2577, %v10544, %v10612
        %v10783 = vsel %vm2577, %v10545, %v10614
        %v10787 = vsel %vm2577, %v10546, %v10616
        %v10791 = vsel %vm2577, %v10547, %v10618
        %v10795 = vsel %vm2577, %v10548, %v10620
        %v10799 = vsel %vm2577, %v10549, %v10622
        %v10803 = vsel %vm2577, %v10550, %v10624
        %v10807 = vsel %vm2577, %v10551, %v10626
        %v10811 = vsel %vm2577, %v10552, %v10628
        %v10815 = vsel %vm2577, %v10553, %v10630
        %v10819 = vsel %vm2577, %v10554, %v10632
        %v10823 = vsel %vm2577, %v10555, %v10634
        %v10827 = vsel %vm2577, %v10556, %v10636
        %v10831 = vsel %vm2577, %v10669, %v10734
        %v10835 = vsel %vm2577, %v10670, %v10736
        %v10839 = vsel %vm2577, %v10671, %v10738
        %v10843 = vsel %vm2577, %v10672, %v10740
        %v10847 = vsel %vm2577, %v10673, %v10742
        %v10851 = vsel %vm2577, %v10674, %v10744
        %v10855 = vsel %vm2577, %v10675, %v10746
        %v10859 = vsel %vm2577, %v10676, %v10748
        %v10863 = vsel %vm2577, %v10677, %v10750
        %v10867 = vsel %vm2577, %v10678, %v10752
        %v10871 = vsel %vm2577, %v10679, %v10754
        %v10875 = vsel %vm2577, %v10680, %v10756
        %v10879 = vsel %vm2577, %v10681, %v10758
        %v10883 = vsel %vm2577, %v10682, %v10760
        %v10887 = vsel %vm2577, %v10683, %v10762
        %v10891 = vsel %vm2577, %v10684, %v10764
        %v10893 = vld [vmem:[%s4 + $0x280] sm:$0xf]
        %v10894 = vld [vmem:[%s4 + $0x284] sm:$0xf]
        %v10895 = vld [vmem:[%s4 + $0x288] sm:$0xf]
        %v10896 = vld [vmem:[%s4 + $0x28c] sm:$0xf]
        %v10897 = vld [vmem:[%s4 + $0x290] sm:$0xf]
        %v10898 = vld [vmem:[%s4 + $0x294] sm:$0xf]
        %v10899 = vld [vmem:[%s4 + $0x298] sm:$0xf]
        %v10900 = vld [vmem:[%s4 + $0x29c] sm:$0xf]
        %v10901 = vld [vmem:[%s4 + $0x2a0] sm:$0xf]
        %v10902 = vld [vmem:[%s4 + $0x2a4] sm:$0xf]
        %v10903 = vld [vmem:[%s4 + $0x2a8] sm:$0xf]
        %v10904 = vld [vmem:[%s4 + $0x2ac] sm:$0xf]
        %v10905 = vld [vmem:[%s4 + $0x2b0] sm:$0xf]
        %v10906 = vld [vmem:[%s4 + $0x2b4] sm:$0xf]
        %v10907 = vld [vmem:[%s4 + $0x2b8] sm:$0xf]
        %v10908 = vld [vmem:[%s4 + $0x2bc] sm:$0xf]
        %v10909 = vld [vmem:[%s4 + $0x2c0] sm:$0xf]
        %v10910 = vld [vmem:[%s4 + $0x2c4] sm:$0xf]
        %v10911 = vld [vmem:[%s4 + $0x2c8] sm:$0xf]
        %v10912 = vld [vmem:[%s4 + $0x2cc] sm:$0xf]
        %v10913 = vld [vmem:[%s4 + $0x2d0] sm:$0xf]
        %v10914 = vld [vmem:[%s4 + $0x2d4] sm:$0xf]
        %v10915 = vld [vmem:[%s4 + $0x2d8] sm:$0xf]
        %v10916 = vld [vmem:[%s4 + $0x2dc] sm:$0xf]
        %v10917 = vld [vmem:[%s4 + $0x2e0] sm:$0xf]
        %v10918 = vld [vmem:[%s4 + $0x2e4] sm:$0xf]
        %v10919 = vld [vmem:[%s4 + $0x2e8] sm:$0xf]
        %v10920 = vld [vmem:[%s4 + $0x2ec] sm:$0xf]
        %v10921 = vld [vmem:[%s4 + $0x2f0] sm:$0xf]
        %v10922 = vld [vmem:[%s4 + $0x2f4] sm:$0xf]
        %v10923 = vld [vmem:[%s4 + $0x2f8] sm:$0xf]
        %v10924 = vld [vmem:[%s4 + $0x2fc] sm:$0xf]
        %v10957 = vunpack.c.l.b16 %v10893
        %v10958 = vunpack.c.l.b16 %v10894
        %v10959 = vunpack.c.l.b16 %v10895
        %v10960 = vunpack.c.l.b16 %v10896
        %v10961 = vunpack.c.l.b16 %v10897
        %v10962 = vunpack.c.l.b16 %v10898
        %v10963 = vunpack.c.l.b16 %v10899
        %v10964 = vunpack.c.l.b16 %v10900
        %v10965 = vunpack.c.l.b16 %v10901
        %v10966 = vunpack.c.l.b16 %v10902
        %v10967 = vunpack.c.l.b16 %v10903
        %v10968 = vunpack.c.l.b16 %v10904
        %v10969 = vunpack.c.l.b16 %v10905
        %v10970 = vunpack.c.l.b16 %v10906
        %v10971 = vunpack.c.l.b16 %v10907
        %v10972 = vunpack.c.l.b16 %v10908
        %v10973 = vunpack.c.l.b16 %v10909
        %v10974 = vunpack.c.l.b16 %v10910
        %v10975 = vunpack.c.l.b16 %v10911
        %v10976 = vunpack.c.l.b16 %v10912
        %v10977 = vunpack.c.l.b16 %v10913
        %v10978 = vunpack.c.l.b16 %v10914
        %v10979 = vunpack.c.l.b16 %v10915
        %v10980 = vunpack.c.l.b16 %v10916
        %v10981 = vunpack.c.l.b16 %v10917
        %v10982 = vunpack.c.l.b16 %v10918
        %v10983 = vunpack.c.l.b16 %v10919
        %v10984 = vunpack.c.l.b16 %v10920
        %v10985 = vunpack.c.l.b16 %v10921
        %v10986 = vunpack.c.l.b16 %v10922
        %v10987 = vunpack.c.l.b16 %v10923
        %v10988 = vunpack.c.l.b16 %v10924
        %v10989 = vpack.c.b16 %v10958, %v10957
        %v10990 = vpack.c.b16 %v10960, %v10959
        %v10991 = vpack.c.b16 %v10962, %v10961
        %v10992 = vpack.c.b16 %v10964, %v10963
        %v10993 = vpack.c.b16 %v10966, %v10965
        %v10994 = vpack.c.b16 %v10968, %v10967
        %v10995 = vpack.c.b16 %v10970, %v10969
        %v10996 = vpack.c.b16 %v10972, %v10971
        %v10997 = vpack.c.b16 %v10974, %v10973
        %v10998 = vpack.c.b16 %v10976, %v10975
        %v10999 = vpack.c.b16 %v10978, %v10977
        %v11000 = vpack.c.b16 %v10980, %v10979
        %v11001 = vpack.c.b16 %v10982, %v10981
        %v11002 = vpack.c.b16 %v10984, %v10983
        %v11003 = vpack.c.b16 %v10986, %v10985
        %v11004 = vpack.c.b16 %v10988, %v10987
        %11021 = vmatprep.subr.bf16.mxu0 0
        %11022 = vmatpush1.bf16.msra.mxu0 %v10989
        %11023 = vmatprep.subr.bf16.mxu0 0
        %11024 = vmatpush1.bf16.msra.mxu0 %v10990
        %11025 = vmatprep.subr.bf16.mxu0 0
        %11026 = vmatpush1.bf16.msra.mxu0 %v10991
        %11027 = vmatprep.subr.bf16.mxu0 0
        %11028 = vmatpush1.bf16.msra.mxu0 %v10992
        %11029 = vmatprep.subr.bf16.mxu0 0
        %11030 = vmatpush1.bf16.msra.mxu0 %v10993
        %11031 = vmatprep.subr.bf16.mxu0 0
        %11032 = vmatpush1.bf16.msra.mxu0 %v10994
        %11033 = vmatprep.subr.bf16.mxu0 0
        %11034 = vmatpush1.bf16.msra.mxu0 %v10995
        %11035 = vmatprep.subr.bf16.mxu0 0
        %11036 = vmatpush1.bf16.msra.mxu0 %v10996
        %11037 = vmatprep.subr.bf16.mxu0 0
        %11038 = vmatpush1.bf16.msra.mxu0 %v10997
        %11039 = vmatprep.subr.bf16.mxu0 0
        %11040 = vmatpush1.bf16.msra.mxu0 %v10998
        %11041 = vmatprep.subr.bf16.mxu0 0
        %11042 = vmatpush1.bf16.msra.mxu0 %v10999
        %11043 = vmatprep.subr.bf16.mxu0 0
        %11044 = vmatpush1.bf16.msra.mxu0 %v11000
        %11045 = vmatprep.subr.bf16.mxu0 0
        %11046 = vmatpush1.bf16.msra.mxu0 %v11001
        %11047 = vmatprep.subr.bf16.mxu0 0
        %11048 = vmatpush1.bf16.msra.mxu0 %v11002
        %11049 = vmatprep.subr.bf16.mxu0 0
        %11050 = vmatpush1.bf16.msra.mxu0 %v11003
        %11051 = vmatprep.subr.bf16.mxu0 0
        %11052 = vmatpush1.bf16.msra.mxu0 %v11004
        %11053 = vmatprep.mubr.bf16.mxu0 %v10831
        %11054 = vmatmul.mubr.bf16.gmra.mrb[0].mxu0 %v10767
        %v11055 = vpop.f32.mrb[0].mxu0
        %v11056 = vadd.f32 0.0, %v11055
        %v11057 = vpop.f32.mrb[0].mxu0
        %v11058 = vpop.f32.mrb[0].mxu0
        %v11059 = vadd.f32 0.0, %v11058
        %v11060 = vpop.f32.mrb[0].mxu0
        %11061 = vmatprep.mubr.bf16.mxu0 %v10835
        %11062 = vmatmul.mubr.bf16.gmra.mrb[0].mxu0 %v10771
        %v11063 = vpop.f32.mrb[0].mxu0
        %v11064 = vadd.f32 0.0, %v11063
        %v11065 = vpop.f32.mrb[0].mxu0
        %v11066 = vpop.f32.mrb[0].mxu0
        %v11067 = vadd.f32 0.0, %v11066
        %v11068 = vpop.f32.mrb[0].mxu0
        %11069 = vmatprep.mubr.bf16.mxu0 %v10839
        %11070 = vmatmul.mubr.bf16.gmra.mrb[0].mxu0 %v10775
        %v11071 = vpop.f32.mrb[0].mxu0
        %v11072 = vadd.f32 0.0, %v11071
        %v11073 = vpop.f32.mrb[0].mxu0
        %v11074 = vpop.f32.mrb[0].mxu0
        %v11075 = vadd.f32 0.0, %v11074
        %v11076 = vpop.f32.mrb[0].mxu0
        %11077 = vmatprep.mubr.bf16.mxu0 %v10843
        %11078 = vmatmul.mubr.bf16.gmra.mrb[0].mxu0 %v10779
        %v11079 = vpop.f32.mrb[0].mxu0
        %v11080 = vadd.f32 0.0, %v11079
        %v11081 = vpop.f32.mrb[0].mxu0
        %v11082 = vpop.f32.mrb[0].mxu0
        %v11083 = vadd.f32 0.0, %v11082
        %v11084 = vpop.f32.mrb[0].mxu0
        %11085 = vmatprep.mubr.bf16.mxu0 %v10847
        %11086 = vmatmul.mubr.bf16.gmra.mrb[0].mxu0 %v10783
        %v11087 = vpop.f32.mrb[0].mxu0
        %v11088 = vadd.f32 0.0, %v11087
        %v11089 = vpop.f32.mrb[0].mxu0
        %v11090 = vpop.f32.mrb[0].mxu0
        %v11091 = vadd.f32 0.0, %v11090
        %v11092 = vpop.f32.mrb[0].mxu0
        %11093 = vmatprep.mubr.bf16.mxu0 %v10851
        %11094 = vmatmul.mubr.bf16.gmra.mrb[0].mxu0 %v10787
        %v11095 = vpop.f32.mrb[0].mxu0
        %v11096 = vadd.f32 0.0, %v11095
        %v11097 = vpop.f32.mrb[0].mxu0
        %v11098 = vpop.f32.mrb[0].mxu0
        %v11099 = vadd.f32 0.0, %v11098
        %v11100 = vpop.f32.mrb[0].mxu0
        %11101 = vmatprep.mubr.bf16.mxu0 %v10855
        %11102 = vmatmul.mubr.bf16.gmra.mrb[0].mxu0 %v10791
        %v11103 = vpop.f32.mrb[0].mxu0
        %v11104 = vadd.f32 0.0, %v11103
        %v11105 = vpop.f32.mrb[0].mxu0
        %v11106 = vpop.f32.mrb[0].mxu0
        %v11107 = vadd.f32 0.0, %v11106
        %v11108 = vpop.f32.mrb[0].mxu0
        %11109 = vmatprep.mubr.bf16.mxu0 %v10859
        %11110 = vmatmul.mubr.bf16.gmra.mrb[0].mxu0 %v10795
        %v11111 = vpop.f32.mrb[0].mxu0
        %v11112 = vadd.f32 0.0, %v11111
        %v11113 = vpop.f32.mrb[0].mxu0
        %v11114 = vpop.f32.mrb[0].mxu0
        %v11115 = vadd.f32 0.0, %v11114
        %v11116 = vpop.f32.mrb[0].mxu0
        %11117 = vmatprep.mubr.bf16.mxu0 %v10863
        %11118 = vmatmul.mubr.bf16.gmra.mrb[0].mxu0 %v10799
        %v11119 = vpop.f32.mrb[0].mxu0
        %v11120 = vadd.f32 0.0, %v11119
        %v11121 = vpop.f32.mrb[0].mxu0
        %v11122 = vpop.f32.mrb[0].mxu0
        %v11123 = vadd.f32 0.0, %v11122
        %v11124 = vpop.f32.mrb[0].mxu0
        %11125 = vmatprep.mubr.bf16.mxu0 %v10867
        %11126 = vmatmul.mubr.bf16.gmra.mrb[0].mxu0 %v10803
        %v11127 = vpop.f32.mrb[0].mxu0
        %v11128 = vadd.f32 0.0, %v11127
        %v11129 = vpop.f32.mrb[0].mxu0
        %v11130 = vpop.f32.mrb[0].mxu0
        %v11131 = vadd.f32 0.0, %v11130
        %v11132 = vpop.f32.mrb[0].mxu0
        %11133 = vmatprep.mubr.bf16.mxu0 %v10871
        %11134 = vmatmul.mubr.bf16.gmra.mrb[0].mxu0 %v10807
        %v11135 = vpop.f32.mrb[0].mxu0
        %v11136 = vadd.f32 0.0, %v11135
        %v11137 = vpop.f32.mrb[0].mxu0
        %v11138 = vpop.f32.mrb[0].mxu0
        %v11139 = vadd.f32 0.0, %v11138
        %v11140 = vpop.f32.mrb[0].mxu0
        %11141 = vmatprep.mubr.bf16.mxu0 %v10875
        %11142 = vmatmul.mubr.bf16.gmra.mrb[0].mxu0 %v10811
        %v11143 = vpop.f32.mrb[0].mxu0
        %v11144 = vadd.f32 0.0, %v11143
        %v11145 = vpop.f32.mrb[0].mxu0
        %v11146 = vpop.f32.mrb[0].mxu0
        %v11147 = vadd.f32 0.0, %v11146
        %v11148 = vpop.f32.mrb[0].mxu0
        %11149 = vmatprep.mubr.bf16.mxu0 %v10879
        %11150 = vmatmul.mubr.bf16.gmra.mrb[0].mxu0 %v10815
        %v11151 = vpop.f32.mrb[0].mxu0
        %v11152 = vadd.f32 0.0, %v11151
        %v11153 = vpop.f32.mrb[0].mxu0
        %v11154 = vpop.f32.mrb[0].mxu0
        %v11155 = vadd.f32 0.0, %v11154
        %v11156 = vpop.f32.mrb[0].mxu0
        %11157 = vmatprep.mubr.bf16.mxu0 %v10883
        %11158 = vmatmul.mubr.bf16.gmra.mrb[0].mxu0 %v10819
        %v11159 = vpop.f32.mrb[0].mxu0
        %v11160 = vadd.f32 0.0, %v11159
        %v11161 = vpop.f32.mrb[0].mxu0
        %v11162 = vpop.f32.mrb[0].mxu0
        %v11163 = vadd.f32 0.0, %v11162
        %v11164 = vpop.f32.mrb[0].mxu0
        %11165 = vmatprep.mubr.bf16.mxu0 %v10887
        %11166 = vmatmul.mubr.bf16.gmra.mrb[0].mxu0 %v10823
        %v11167 = vpop.f32.mrb[0].mxu0
        %v11168 = vadd.f32 0.0, %v11167
        %v11169 = vpop.f32.mrb[0].mxu0
        %v11170 = vpop.f32.mrb[0].mxu0
        %v11171 = vadd.f32 0.0, %v11170
        %v11172 = vpop.f32.mrb[0].mxu0
        %11173 = vmatprep.mubr.bf16.mxu0 %v10891
        %11174 = vmatmul.mubr.bf16.gmra.mrb[0].mxu0 %v10827
        %v11175 = vpop.f32.mrb[0].mxu0
        %v11176 = vadd.f32 0.0, %v11175
        %v11177 = vpop.f32.mrb[0].mxu0
        %v11178 = vpop.f32.mrb[0].mxu0
        %v11179 = vadd.f32 0.0, %v11178
        %v11180 = vpop.f32.mrb[0].mxu0
        %11181 = vdwg.mxu0
        %v11182 = vadd.f32 %v9468, %v11056
        %v11183 = vadd.f32 %v9469, %v11059
        %v11184 = vadd.f32 %v9470, %v11064
        %v11185 = vadd.f32 %v9471, %v11067
        %v11186 = vadd.f32 %v9472, %v11072
        %v11187 = vadd.f32 %v9473, %v11075
        %v11188 = vadd.f32 %v9474, %v11080
        %v11189 = vadd.f32 %v9475, %v11083
        %v11190 = vadd.f32 %v9476, %v11088
        %v11191 = vadd.f32 %v9477, %v11091
        %v11192 = vadd.f32 %v9478, %v11096
        %v11193 = vadd.f32 %v9479, %v11099
        %v11194 = vadd.f32 %v9480, %v11104
        %v11195 = vadd.f32 %v9481, %v11107
        %v11196 = vadd.f32 %v9482, %v11112
        %v11197 = vadd.f32 %v9483, %v11115
        %v11198 = vadd.f32 %v9484, %v11120
        %v11199 = vadd.f32 %v9485, %v11123
        %v11200 = vadd.f32 %v9486, %v11128
        %v11201 = vadd.f32 %v9487, %v11131
        %v11202 = vadd.f32 %v9488, %v11136
        %v11203 = vadd.f32 %v9489, %v11139
        %v11204 = vadd.f32 %v9490, %v11144
        %v11205 = vadd.f32 %v9491, %v11147
        %v11206 = vadd.f32 %v9492, %v11152
        %v11207 = vadd.f32 %v9493, %v11155
        %v11208 = vadd.f32 %v9494, %v11160
        %v11209 = vadd.f32 %v9495, %v11163
        %v11210 = vadd.f32 %v9496, %v11168
        %v11211 = vadd.f32 %v9497, %v11171
        %v11212 = vadd.f32 %v9498, %v11176
        %v11213 = vadd.f32 %v9499, %v11179
        %v11214 = vld [vmem:[%s9500] sm:$0xc]
        %v11215 = vld [vmem:[%s9500 + $0xc] sm:$0xc]
        %v11216 = vld [vmem:[%s9500 + $0x18] sm:$0xc]
        %v11217 = vld [vmem:[%s9500 + $0x24] sm:$0xc]
        %v11218 = vld [vmem:[%s9500 + $0x30] sm:$0xc]
        %v11219 = vld [vmem:[%s9500 + $0x3c] sm:$0xc]
        %v11220 = vld [vmem:[%s9500 + $0x48] sm:$0xc]
        %v11221 = vld [vmem:[%s9500 + $0x54] sm:$0xc]
        %v11222 = vld [vmem:[%s9500 + $0x60] sm:$0xc]
        %v11223 = vld [vmem:[%s9500 + $0x6c] sm:$0xc]
        %v11224 = vld [vmem:[%s9500 + $0x78] sm:$0xc]
        %v11225 = vld [vmem:[%s9500 + $0x84] sm:$0xc]
        %v11226 = vld [vmem:[%s9500 + $0x90] sm:$0xc]
        %v11227 = vld [vmem:[%s9500 + $0x9c] sm:$0xc]
        %v11228 = vld [vmem:[%s9500 + $0xa8] sm:$0xc]
        %v11229 = vld [vmem:[%s9500 + $0xb4] sm:$0xc]
        %v11262 = vrot.slane %v11214, 6
        %v11263 = vrot.slane %v11262, 4
        %v11264 = vrot.slane %v9502, 6
        %v11265 = vsel %vm2788, %v11263, %v11264
        %v11266 = vrot.slane %v11264, 4
        %v11267 = vrot.slane %v10109, 6
        %v11268 = vsel %vm2788, %v11266, %v11267
        %v11269 = vrot.slane %v11215, 6
        %v11270 = vrot.slane %v11269, 4
        %v11271 = vrot.slane %v9504, 6
        %v11272 = vsel %vm2788, %v11270, %v11271
        %v11273 = vrot.slane %v11271, 4
        %v11274 = vrot.slane %v10110, 6
        %v11275 = vsel %vm2788, %v11273, %v11274
        %v11276 = vrot.slane %v11216, 6
        %v11277 = vrot.slane %v11276, 4
        %v11278 = vrot.slane %v9506, 6
        %v11279 = vsel %vm2788, %v11277, %v11278
        %v11280 = vrot.slane %v11278, 4
        %v11281 = vrot.slane %v10111, 6
        %v11282 = vsel %vm2788, %v11280, %v11281
        %v11283 = vrot.slane %v11217, 6
        %v11284 = vrot.slane %v11283, 4
        %v11285 = vrot.slane %v9508, 6
        %v11286 = vsel %vm2788, %v11284, %v11285
        %v11287 = vrot.slane %v11285, 4
        %v11288 = vrot.slane %v10112, 6
        %v11289 = vsel %vm2788, %v11287, %v11288
        %v11290 = vrot.slane %v11218, 6
        %v11291 = vrot.slane %v11290, 4
        %v11292 = vrot.slane %v9510, 6
        %v11293 = vsel %vm2788, %v11291, %v11292
        %v11294 = vrot.slane %v11292, 4
        %v11295 = vrot.slane %v10113, 6
        %v11296 = vsel %vm2788, %v11294, %v11295
        %v11297 = vrot.slane %v11219, 6
        %v11298 = vrot.slane %v11297, 4
        %v11299 = vrot.slane %v9512, 6
        %v11300 = vsel %vm2788, %v11298, %v11299
        %v11301 = vrot.slane %v11299, 4
        %v11302 = vrot.slane %v10114, 6
        %v11303 = vsel %vm2788, %v11301, %v11302
        %v11304 = vrot.slane %v11220, 6
        %v11305 = vrot.slane %v11304, 4
        %v11306 = vrot.slane %v9514, 6
        %v11307 = vsel %vm2788, %v11305, %v11306
        %v11308 = vrot.slane %v11306, 4
        %v11309 = vrot.slane %v10115, 6
        %v11310 = vsel %vm2788, %v11308, %v11309
        %v11311 = vrot.slane %v11221, 6
        %v11312 = vrot.slane %v11311, 4
        %v11313 = vrot.slane %v9516, 6
        %v11314 = vsel %vm2788, %v11312, %v11313
        %v11315 = vrot.slane %v11313, 4
        %v11316 = vrot.slane %v10116, 6
        %v11317 = vsel %vm2788, %v11315, %v11316
        %v11318 = vrot.slane %v11222, 6
        %v11319 = vrot.slane %v11318, 4
        %v11320 = vrot.slane %v9518, 6
        %v11321 = vsel %vm2788, %v11319, %v11320
        %v11322 = vrot.slane %v11320, 4
        %v11323 = vrot.slane %v10117, 6
        %v11324 = vsel %vm2788, %v11322, %v11323
        %v11325 = vrot.slane %v11223, 6
        %v11326 = vrot.slane %v11325, 4
        %v11327 = vrot.slane %v9520, 6
        %v11328 = vsel %vm2788, %v11326, %v11327
        %v11329 = vrot.slane %v11327, 4
        %v11330 = vrot.slane %v10118, 6
        %v11331 = vsel %vm2788, %v11329, %v11330
        %v11332 = vrot.slane %v11224, 6
        %v11333 = vrot.slane %v11332, 4
        %v11334 = vrot.slane %v9522, 6
        %v11335 = vsel %vm2788, %v11333, %v11334
        %v11336 = vrot.slane %v11334, 4
        %v11337 = vrot.slane %v10119, 6
        %v11338 = vsel %vm2788, %v11336, %v11337
        %v11339 = vrot.slane %v11225, 6
        %v11340 = vrot.slane %v11339, 4
        %v11341 = vrot.slane %v9524, 6
        %v11342 = vsel %vm2788, %v11340, %v11341
        %v11343 = vrot.slane %v11341, 4
        %v11344 = vrot.slane %v10120, 6
        %v11345 = vsel %vm2788, %v11343, %v11344
        %v11346 = vrot.slane %v11226, 6
        %v11347 = vrot.slane %v11346, 4
        %v11348 = vrot.slane %v9526, 6
        %v11349 = vsel %vm2788, %v11347, %v11348
        %v11350 = vrot.slane %v11348, 4
        %v11351 = vrot.slane %v10121, 6
        %v11352 = vsel %vm2788, %v11350, %v11351
        %v11353 = vrot.slane %v11227, 6
        %v11354 = vrot.slane %v11353, 4
        %v11355 = vrot.slane %v9528, 6
        %v11356 = vsel %vm2788, %v11354, %v11355
        %v11357 = vrot.slane %v11355, 4
        %v11358 = vrot.slane %v10122, 6
        %v11359 = vsel %vm2788, %v11357, %v11358
        %v11360 = vrot.slane %v11228, 6
        %v11361 = vrot.slane %v11360, 4
        %v11362 = vrot.slane %v9530, 6
        %v11363 = vsel %vm2788, %v11361, %v11362
        %v11364 = vrot.slane %v11362, 4
        %v11365 = vrot.slane %v10123, 6
        %v11366 = vsel %vm2788, %v11364, %v11365
        %v11367 = vrot.slane %v11229, 6
        %v11368 = vrot.slane %v11367, 4
        %v11369 = vrot.slane %v9532, 6
        %v11370 = vsel %vm2788, %v11368, %v11369
        %v11371 = vrot.slane %v11369, 4
        %v11372 = vrot.slane %v10124, 6
        %v11373 = vsel %vm2788, %v11371, %v11372
        %v11374 = vld [vmem:[%s4 + $0x300] sm:$0xf]
        %v11375 = vld [vmem:[%s4 + $0x304] sm:$0xf]
        %v11376 = vld [vmem:[%s4 + $0x308] sm:$0xf]
        %v11377 = vld [vmem:[%s4 + $0x30c] sm:$0xf]
        %v11378 = vld [vmem:[%s4 + $0x310] sm:$0xf]
        %v11379 = vld [vmem:[%s4 + $0x314] sm:$0xf]
        %v11380 = vld [vmem:[%s4 + $0x318] sm:$0xf]
        %v11381 = vld [vmem:[%s4 + $0x31c] sm:$0xf]
        %v11382 = vunpack.c.l.b16 %v11265
        %v11383 = vunpack.c.l.b16 %v11268
        %v11384 = vunpack.c.l.b16 %v11272
        %v11385 = vunpack.c.l.b16 %v11275
        %v11386 = vunpack.c.l.b16 %v11279
        %v11387 = vunpack.c.l.b16 %v11282
        %v11388 = vunpack.c.l.b16 %v11286
        %v11389 = vunpack.c.l.b16 %v11289
        %v11390 = vunpack.c.l.b16 %v11293
        %v11391 = vunpack.c.l.b16 %v11296
        %v11392 = vunpack.c.l.b16 %v11300
        %v11393 = vunpack.c.l.b16 %v11303
        %v11394 = vunpack.c.l.b16 %v11307
        %v11395 = vunpack.c.l.b16 %v11310
        %v11396 = vunpack.c.l.b16 %v11314
        %v11397 = vunpack.c.l.b16 %v11317
        %v11398 = vunpack.c.l.b16 %v11321
        %v11399 = vunpack.c.l.b16 %v11324
        %v11400 = vunpack.c.l.b16 %v11328
        %v11401 = vunpack.c.l.b16 %v11331
        %v11402 = vunpack.c.l.b16 %v11335
        %v11403 = vunpack.c.l.b16 %v11338
        %v11404 = vunpack.c.l.b16 %v11342
        %v11405 = vunpack.c.l.b16 %v11345
        %v11406 = vunpack.c.l.b16 %v11349
        %v11407 = vunpack.c.l.b16 %v11352
        %v11408 = vunpack.c.l.b16 %v11356
        %v11409 = vunpack.c.l.b16 %v11359
        %v11410 = vunpack.c.l.b16 %v11363
        %v11411 = vunpack.c.l.b16 %v11366
        %v11412 = vunpack.c.l.b16 %v11370
        %v11413 = vunpack.c.l.b16 %v11373
        %v11414 = vpack.c.b16 %v11383, %v11382
        %v11415 = vpack.c.b16 %v11385, %v11384
        %v11416 = vpack.c.b16 %v11387, %v11386
        %v11417 = vpack.c.b16 %v11389, %v11388
        %v11418 = vpack.c.b16 %v11391, %v11390
        %v11419 = vpack.c.b16 %v11393, %v11392
        %v11420 = vpack.c.b16 %v11395, %v11394
        %v11421 = vpack.c.b16 %v11397, %v11396
        %v11422 = vpack.c.b16 %v11399, %v11398
        %v11423 = vpack.c.b16 %v11401, %v11400
        %v11424 = vpack.c.b16 %v11403, %v11402
        %v11425 = vpack.c.b16 %v11405, %v11404
        %v11426 = vpack.c.b16 %v11407, %v11406
        %v11427 = vpack.c.b16 %v11409, %v11408
        %v11428 = vpack.c.b16 %v11411, %v11410
        %v11429 = vpack.c.b16 %v11413, %v11412
        %v11438 = vunpack.c.l.b16 %v11374
        %v11439 = vunpack.c.l.b16 %v11375
        %v11440 = vunpack.c.l.b16 %v11376
        %v11441 = vunpack.c.l.b16 %v11377
        %v11442 = vunpack.c.l.b16 %v11378
        %v11443 = vunpack.c.l.b16 %v11379
        %v11444 = vunpack.c.l.b16 %v11380
        %v11445 = vunpack.c.l.b16 %v11381
        %v11446 = vpack.c.b16 %v11439, %v11438
        %v11447 = vpack.c.b16 %v11441, %v11440
        %v11448 = vpack.c.b16 %v11443, %v11442
        %v11449 = vpack.c.b16 %v11445, %v11444
        %v11455 = vsel %vm2577, %v11414, 0
        %v11458 = vsel %vm2577, %v11415, 0
        %v11461 = vsel %vm2577, %v11416, 0
        %v11464 = vsel %vm2577, %v11417, 0
        %v11467 = vsel %vm2577, %v11418, 0
        %v11470 = vsel %vm2577, %v11419, 0
        %v11473 = vsel %vm2577, %v11420, 0
        %v11476 = vsel %vm2577, %v11421, 0
        %v11479 = vsel %vm2577, %v11422, 0
        %v11482 = vsel %vm2577, %v11423, 0
        %v11485 = vsel %vm2577, %v11424, 0
        %v11488 = vsel %vm2577, %v11425, 0
        %v11491 = vsel %vm2577, %v11426, 0
        %v11494 = vsel %vm2577, %v11427, 0
        %v11497 = vsel %vm2577, %v11428, 0
        %v11500 = vsel %vm2577, %v11429, 0
        %11502 = vmatprep.subr.bf16.mxu0 0
        %11503 = vmatpush1.bf16.msra.mxu0 %v11446
        %11504 = vmatprep.subr.bf16.mxu0 0
        %11505 = vmatpush1.bf16.msra.mxu0 %v11447
        %11506 = vmatprep.subr.bf16.mxu0 0
        %11507 = vmatpush1.bf16.msra.mxu0 %v11448
        %11508 = vmatprep.subr.bf16.mxu0 0
        %11509 = vmatpush1.bf16.msra.mxu0 %v11449
        %11510 = vmatprep.subr.bf16.mxu0 0
        %11511 = vmatpush1.bf16.msra.mxu0 0
        %11512 = vmatprep.subr.bf16.mxu0 0
        %11513 = vmatpush1.bf16.msra.mxu0 0
        %11514 = vmatprep.subr.bf16.mxu0 0
        %11515 = vmatpush1.bf16.msra.mxu0 0
        %11516 = vmatprep.subr.bf16.mxu0 0
        %11517 = vmatpush1.bf16.msra.mxu0 0
        %11518 = vmatprep.subr.bf16.mxu0 0
        %11519 = vmatpush1.bf16.msra.mxu0 0
        %11520 = vmatprep.subr.bf16.mxu0 0
        %11521 = vmatpush1.bf16.msra.mxu0 0
        %11522 = vmatprep.subr.bf16.mxu0 0
        %11523 = vmatpush1.bf16.msra.mxu0 0
        %11524 = vmatprep.subr.bf16.mxu0 0
        %11525 = vmatpush1.bf16.msra.mxu0 0
        %11526 = vmatprep.subr.bf16.mxu0 0
        %11527 = vmatpush1.bf16.msra.mxu0 0
        %11528 = vmatprep.subr.bf16.mxu0 0
        %11529 = vmatpush1.bf16.msra.mxu0 0
        %11530 = vmatprep.subr.bf16.mxu0 0
        %11531 = vmatpush1.bf16.msra.mxu0 0
        %11532 = vmatprep.subr.bf16.mxu0 0
        %11533 = vmatpush1.bf16.msra.mxu0 0
        %11534 = vmatprep.mubr.bf16.mxu0 0
        %11535 = vmatmul.mubr.bf16.gmra.mrb[0].mxu0 %v11455
        %v11536 = vpop.f32.mrb[0].mxu0
        %v11537 = vadd.f32 0.0, %v11536
        %v11538 = vpop.f32.mrb[0].mxu0
        %v11539 = vpop.f32.mrb[0].mxu0
        %v11540 = vadd.f32 0.0, %v11539
        %v11541 = vpop.f32.mrb[0].mxu0
        %11542 = vmatprep.mubr.bf16.mxu0 0
        %11543 = vmatmul.mubr.bf16.gmra.mrb[0].mxu0 %v11458
        %v11544 = vpop.f32.mrb[0].mxu0
        %v11545 = vadd.f32 0.0, %v11544
        %v11546 = vpop.f32.mrb[0].mxu0
        %v11547 = vpop.f32.mrb[0].mxu0
        %v11548 = vadd.f32 0.0, %v11547
        %v11549 = vpop.f32.mrb[0].mxu0
        %11550 = vmatprep.mubr.bf16.mxu0 0
        %11551 = vmatmul.mubr.bf16.gmra.mrb[0].mxu0 %v11461
        %v11552 = vpop.f32.mrb[0].mxu0
        %v11553 = vadd.f32 0.0, %v11552
        %v11554 = vpop.f32.mrb[0].mxu0
        %v11555 = vpop.f32.mrb[0].mxu0
        %v11556 = vadd.f32 0.0, %v11555
        %v11557 = vpop.f32.mrb[0].mxu0
        %11558 = vmatprep.mubr.bf16.mxu0 0
        %11559 = vmatmul.mubr.bf16.gmra.mrb[0].mxu0 %v11464
        %v11560 = vpop.f32.mrb[0].mxu0
        %v11561 = vadd.f32 0.0, %v11560
        %v11562 = vpop.f32.mrb[0].mxu0
        %v11563 = vpop.f32.mrb[0].mxu0
        %v11564 = vadd.f32 0.0, %v11563
        %v11565 = vpop.f32.mrb[0].mxu0
        %11566 = vmatprep.mubr.bf16.mxu0 0
        %11567 = vmatmul.mubr.bf16.gmra.mrb[0].mxu0 %v11467
        %v11568 = vpop.f32.mrb[0].mxu0
        %v11569 = vadd.f32 0.0, %v11568
        %v11570 = vpop.f32.mrb[0].mxu0
        %v11571 = vpop.f32.mrb[0].mxu0
        %v11572 = vadd.f32 0.0, %v11571
        %v11573 = vpop.f32.mrb[0].mxu0
        %11574 = vmatprep.mubr.bf16.mxu0 0
        %11575 = vmatmul.mubr.bf16.gmra.mrb[0].mxu0 %v11470
        %v11576 = vpop.f32.mrb[0].mxu0
        %v11577 = vadd.f32 0.0, %v11576
        %v11578 = vpop.f32.mrb[0].mxu0
        %v11579 = vpop.f32.mrb[0].mxu0
        %v11580 = vadd.f32 0.0, %v11579
        %v11581 = vpop.f32.mrb[0].mxu0
        %11582 = vmatprep.mubr.bf16.mxu0 0
        %11583 = vmatmul.mubr.bf16.gmra.mrb[0].mxu0 %v11473
        %v11584 = vpop.f32.mrb[0].mxu0
        %v11585 = vadd.f32 0.0, %v11584
        %v11586 = vpop.f32.mrb[0].mxu0
        %v11587 = vpop.f32.mrb[0].mxu0
        %v11588 = vadd.f32 0.0, %v11587
        %v11589 = vpop.f32.mrb[0].mxu0
        %11590 = vmatprep.mubr.bf16.mxu0 0
        %11591 = vmatmul.mubr.bf16.gmra.mrb[0].mxu0 %v11476
        %v11592 = vpop.f32.mrb[0].mxu0
        %v11593 = vadd.f32 0.0, %v11592
        %v11594 = vpop.f32.mrb[0].mxu0
        %v11595 = vpop.f32.mrb[0].mxu0
        %v11596 = vadd.f32 0.0, %v11595
        %v11597 = vpop.f32.mrb[0].mxu0
        %11598 = vmatprep.mubr.bf16.mxu0 0
        %11599 = vmatmul.mubr.bf16.gmra.mrb[0].mxu0 %v11479
        %v11600 = vpop.f32.mrb[0].mxu0
        %v11601 = vadd.f32 0.0, %v11600
        %v11602 = vpop.f32.mrb[0].mxu0
        %v11603 = vpop.f32.mrb[0].mxu0
        %v11604 = vadd.f32 0.0, %v11603
        %v11605 = vpop.f32.mrb[0].mxu0
        %11606 = vmatprep.mubr.bf16.mxu0 0
        %11607 = vmatmul.mubr.bf16.gmra.mrb[0].mxu0 %v11482
        %v11608 = vpop.f32.mrb[0].mxu0
        %v11609 = vadd.f32 0.0, %v11608
        %v11610 = vpop.f32.mrb[0].mxu0
        %v11611 = vpop.f32.mrb[0].mxu0
        %v11612 = vadd.f32 0.0, %v11611
        %v11613 = vpop.f32.mrb[0].mxu0
        %11614 = vmatprep.mubr.bf16.mxu0 0
        %11615 = vmatmul.mubr.bf16.gmra.mrb[0].mxu0 %v11485
        %v11616 = vpop.f32.mrb[0].mxu0
        %v11617 = vadd.f32 0.0, %v11616
        %v11618 = vpop.f32.mrb[0].mxu0
        %v11619 = vpop.f32.mrb[0].mxu0
        %v11620 = vadd.f32 0.0, %v11619
        %v11621 = vpop.f32.mrb[0].mxu0
        %11622 = vmatprep.mubr.bf16.mxu0 0
        %11623 = vmatmul.mubr.bf16.gmra.mrb[0].mxu0 %v11488
        %v11624 = vpop.f32.mrb[0].mxu0
        %v11625 = vadd.f32 0.0, %v11624
        %v11626 = vpop.f32.mrb[0].mxu0
        %v11627 = vpop.f32.mrb[0].mxu0
        %v11628 = vadd.f32 0.0, %v11627
        %v11629 = vpop.f32.mrb[0].mxu0
        %11630 = vmatprep.mubr.bf16.mxu0 0
        %11631 = vmatmul.mubr.bf16.gmra.mrb[0].mxu0 %v11491
        %v11632 = vpop.f32.mrb[0].mxu0
        %v11633 = vadd.f32 0.0, %v11632
        %v11634 = vpop.f32.mrb[0].mxu0
        %v11635 = vpop.f32.mrb[0].mxu0
        %v11636 = vadd.f32 0.0, %v11635
        %v11637 = vpop.f32.mrb[0].mxu0
        %11638 = vmatprep.mubr.bf16.mxu0 0
        %11639 = vmatmul.mubr.bf16.gmra.mrb[0].mxu0 %v11494
        %v11640 = vpop.f32.mrb[0].mxu0
        %v11641 = vadd.f32 0.0, %v11640
        %v11642 = vpop.f32.mrb[0].mxu0
        %v11643 = vpop.f32.mrb[0].mxu0
        %v11644 = vadd.f32 0.0, %v11643
        %v11645 = vpop.f32.mrb[0].mxu0
        %11646 = vmatprep.mubr.bf16.mxu0 0
        %11647 = vmatmul.mubr.bf16.gmra.mrb[0].mxu0 %v11497
        %v11648 = vpop.f32.mrb[0].mxu0
        %v11649 = vadd.f32 0.0, %v11648
        %v11650 = vpop.f32.mrb[0].mxu0
        %v11651 = vpop.f32.mrb[0].mxu0
        %v11652 = vadd.f32 0.0, %v11651
        %v11653 = vpop.f32.mrb[0].mxu0
        %11654 = vmatprep.mubr.bf16.mxu0 0
        %11655 = vmatmul.mubr.bf16.gmra.mrb[0].mxu0 %v11500
        %v11656 = vpop.f32.mrb[0].mxu0
        %v11657 = vadd.f32 0.0, %v11656
        %v11658 = vpop.f32.mrb[0].mxu0
        %v11659 = vpop.f32.mrb[0].mxu0
        %v11660 = vadd.f32 0.0, %v11659
        %v11661 = vpop.f32.mrb[0].mxu0
        %11662 = vdwg.mxu0
        %v11663 = vadd.f32 %v11182, %v11537
        %v11664 = vadd.f32 %v11183, %v11540
        %v11665 = vadd.f32 %v11184, %v11545
        %v11666 = vadd.f32 %v11185, %v11548
        %v11667 = vadd.f32 %v11186, %v11553
        %v11668 = vadd.f32 %v11187, %v11556
        %v11669 = vadd.f32 %v11188, %v11561
        %v11670 = vadd.f32 %v11189, %v11564
        %v11671 = vadd.f32 %v11190, %v11569
        %v11672 = vadd.f32 %v11191, %v11572
        %v11673 = vadd.f32 %v11192, %v11577
        %v11674 = vadd.f32 %v11193, %v11580
        %v11675 = vadd.f32 %v11194, %v11585
        %v11676 = vadd.f32 %v11195, %v11588
        %v11677 = vadd.f32 %v11196, %v11593
        %v11678 = vadd.f32 %v11197, %v11596
        %v11679 = vadd.f32 %v11198, %v11601
        %v11680 = vadd.f32 %v11199, %v11604
        %v11681 = vadd.f32 %v11200, %v11609
        %v11682 = vadd.f32 %v11201, %v11612
        %v11683 = vadd.f32 %v11202, %v11617
        %v11684 = vadd.f32 %v11203, %v11620
        %v11685 = vadd.f32 %v11204, %v11625
        %v11686 = vadd.f32 %v11205, %v11628
        %v11687 = vadd.f32 %v11206, %v11633
        %v11688 = vadd.f32 %v11207, %v11636
        %v11689 = vadd.f32 %v11208, %v11641
        %v11690 = vadd.f32 %v11209, %v11644
        %v11691 = vadd.f32 %v11210, %v11649
        %v11692 = vadd.f32 %v11211, %v11652
        %v11693 = vadd.f32 %v11212, %v11657
        %v11694 = vadd.f32 %v11213, %v11660
        %v11695 = vld [vmem:[%s5] sm:$0x1]
        %v11697 = vlaneseq
        %v11698 = vshrl.u32 %v11697, 7
        %v11699 = vsub.s32 0, %v11698
        %v11700 = vrot.slane %v11695, %v11699
        %v11702 = vmul.f32 %v11663, %v11700
        %v11703 = vmul.f32 %v11664, %v11700
        %v11704 = vmul.f32 %v11665, %v11700
        %v11705 = vmul.f32 %v11666, %v11700
        %v11706 = vmul.f32 %v11667, %v11700
        %v11707 = vmul.f32 %v11668, %v11700
        %v11708 = vmul.f32 %v11669, %v11700
        %v11709 = vmul.f32 %v11670, %v11700
        %v11710 = vmul.f32 %v11671, %v11700
        %v11711 = vmul.f32 %v11672, %v11700
        %v11712 = vmul.f32 %v11673, %v11700
        %v11713 = vmul.f32 %v11674, %v11700
        %v11714 = vmul.f32 %v11675, %v11700
        %v11715 = vmul.f32 %v11676, %v11700
        %v11716 = vmul.f32 %v11677, %v11700
        %v11717 = vmul.f32 %v11678, %v11700
        %v11718 = vmul.f32 %v11679, %v11700
        %v11719 = vmul.f32 %v11680, %v11700
        %v11720 = vmul.f32 %v11681, %v11700
        %v11721 = vmul.f32 %v11682, %v11700
        %v11722 = vmul.f32 %v11683, %v11700
        %v11723 = vmul.f32 %v11684, %v11700
        %v11724 = vmul.f32 %v11685, %v11700
        %v11725 = vmul.f32 %v11686, %v11700
        %v11726 = vmul.f32 %v11687, %v11700
        %v11727 = vmul.f32 %v11688, %v11700
        %v11728 = vmul.f32 %v11689, %v11700
        %v11729 = vmul.f32 %v11690, %v11700
        %v11730 = vmul.f32 %v11691, %v11700
        %v11731 = vmul.f32 %v11692, %v11700
        %v11732 = vmul.f32 %v11693, %v11700
        %v11733 = vmul.f32 %v11694, %v11700
        %v11734 = vld [vmem:[%s6] sm:$0x1]
        %v11736 = vlaneseq
        %v11737 = vshrl.u32 %v11736, 7
        %v11738 = vsub.s32 0, %v11737
        %v11739 = vrot.slane %v11734, %v11738
        %v11741 = vadd.f32 %v11702, %v11739
        %v11742 = vadd.f32 %v11703, %v11739
        %v11743 = vadd.f32 %v11704, %v11739
        %v11744 = vadd.f32 %v11705, %v11739
        %v11745 = vadd.f32 %v11706, %v11739
        %v11746 = vadd.f32 %v11707, %v11739
        %v11747 = vadd.f32 %v11708, %v11739
        %v11748 = vadd.f32 %v11709, %v11739
        %v11749 = vadd.f32 %v11710, %v11739
        %v11750 = vadd.f32 %v11711, %v11739
        %v11751 = vadd.f32 %v11712, %v11739
        %v11752 = vadd.f32 %v11713, %v11739
        %v11753 = vadd.f32 %v11714, %v11739
        %v11754 = vadd.f32 %v11715, %v11739
        %v11755 = vadd.f32 %v11716, %v11739
        %v11756 = vadd.f32 %v11717, %v11739
        %v11757 = vadd.f32 %v11718, %v11739
        %v11758 = vadd.f32 %v11719, %v11739
        %v11759 = vadd.f32 %v11720, %v11739
        %v11760 = vadd.f32 %v11721, %v11739
        %v11761 = vadd.f32 %v11722, %v11739
        %v11762 = vadd.f32 %v11723, %v11739
        %v11763 = vadd.f32 %v11724, %v11739
        %v11764 = vadd.f32 %v11725, %v11739
        %v11765 = vadd.f32 %v11726, %v11739
        %v11766 = vadd.f32 %v11727, %v11739
        %v11767 = vadd.f32 %v11728, %v11739
        %v11768 = vadd.f32 %v11729, %v11739
        %v11769 = vadd.f32 %v11730, %v11739
        %v11770 = vadd.f32 %v11731, %v11739
        %v11771 = vadd.f32 %v11732, %v11739
        %v11772 = vadd.f32 %v11733, %v11739
        %vm11773 = vcmp.gt.f32.partialorder %v11741, 0.0
        %vm11774 = vcmp.gt.f32.partialorder %v11742, 0.0
        %vm11775 = vcmp.gt.f32.partialorder %v11743, 0.0
        %vm11776 = vcmp.gt.f32.partialorder %v11744, 0.0
        %vm11777 = vcmp.gt.f32.partialorder %v11745, 0.0
        %vm11778 = vcmp.gt.f32.partialorder %v11746, 0.0
        %vm11779 = vcmp.gt.f32.partialorder %v11747, 0.0
        %vm11780 = vcmp.gt.f32.partialorder %v11748, 0.0
        %vm11781 = vcmp.gt.f32.partialorder %v11749, 0.0
        %vm11782 = vcmp.gt.f32.partialorder %v11750, 0.0
        %vm11783 = vcmp.gt.f32.partialorder %v11751, 0.0
        %vm11784 = vcmp.gt.f32.partialorder %v11752, 0.0
        %vm11785 = vcmp.gt.f32.partialorder %v11753, 0.0
        %vm11786 = vcmp.gt.f32.partialorder %v11754, 0.0
        %vm11787 = vcmp.gt.f32.partialorder %v11755, 0.0
        %vm11788 = vcmp.gt.f32.partialorder %v11756, 0.0
        %vm11789 = vcmp.gt.f32.partialorder %v11757, 0.0
        %vm11790 = vcmp.gt.f32.partialorder %v11758, 0.0
        %vm11791 = vcmp.gt.f32.partialorder %v11759, 0.0
        %vm11792 = vcmp.gt.f32.partialorder %v11760, 0.0
        %vm11793 = vcmp.gt.f32.partialorder %v11761, 0.0
        %vm11794 = vcmp.gt.f32.partialorder %v11762, 0.0
        %vm11795 = vcmp.gt.f32.partialorder %v11763, 0.0
        %vm11796 = vcmp.gt.f32.partialorder %v11764, 0.0
        %vm11797 = vcmp.gt.f32.partialorder %v11765, 0.0
        %vm11798 = vcmp.gt.f32.partialorder %v11766, 0.0
        %vm11799 = vcmp.gt.f32.partialorder %v11767, 0.0
        %vm11800 = vcmp.gt.f32.partialorder %v11768, 0.0
        %vm11801 = vcmp.gt.f32.partialorder %v11769, 0.0
        %vm11802 = vcmp.gt.f32.partialorder %v11770, 0.0
        %vm11803 = vcmp.gt.f32.partialorder %v11771, 0.0
        %vm11804 = vcmp.gt.f32.partialorder %v11772, 0.0
        %v11805 = vmin.f32 %v11741, 0.0
        %v11806 = vmin.f32 %v11742, 0.0
        %v11807 = vmin.f32 %v11743, 0.0
        %v11808 = vmin.f32 %v11744, 0.0
        %v11809 = vmin.f32 %v11745, 0.0
        %v11810 = vmin.f32 %v11746, 0.0
        %v11811 = vmin.f32 %v11747, 0.0
        %v11812 = vmin.f32 %v11748, 0.0
        %v11813 = vmin.f32 %v11749, 0.0
        %v11814 = vmin.f32 %v11750, 0.0
        %v11815 = vmin.f32 %v11751, 0.0
        %v11816 = vmin.f32 %v11752, 0.0
        %v11817 = vmin.f32 %v11753, 0.0
        %v11818 = vmin.f32 %v11754, 0.0
        %v11819 = vmin.f32 %v11755, 0.0
        %v11820 = vmin.f32 %v11756, 0.0
        %v11821 = vmin.f32 %v11757, 0.0
        %v11822 = vmin.f32 %v11758, 0.0
        %v11823 = vmin.f32 %v11759, 0.0
        %v11824 = vmin.f32 %v11760, 0.0
        %v11825 = vmin.f32 %v11761, 0.0
        %v11826 = vmin.f32 %v11762, 0.0
        %v11827 = vmin.f32 %v11763, 0.0
        %v11828 = vmin.f32 %v11764, 0.0
        %v11829 = vmin.f32 %v11765, 0.0
        %v11830 = vmin.f32 %v11766, 0.0
        %v11831 = vmin.f32 %v11767, 0.0
        %v11832 = vmin.f32 %v11768, 0.0
        %v11833 = vmin.f32 %v11769, 0.0
        %v11834 = vmin.f32 %v11770, 0.0
        %v11835 = vmin.f32 %v11771, 0.0
        %v11836 = vmin.f32 %v11772, 0.0
        %v11837 = vmul.f32 %v11805, 1.442695
        %v11838 = vpow.pop %v11837
        %v11839 = vmul.f32 %v11806, 1.442695
        %v11840 = vpow.pop %v11839
        %v11841 = vmul.f32 %v11807, 1.442695
        %v11842 = vpow.pop %v11841
        %v11843 = vmul.f32 %v11808, 1.442695
        %v11844 = vpow.pop %v11843
        %v11845 = vmul.f32 %v11809, 1.442695
        %v11846 = vpow.pop %v11845
        %v11847 = vmul.f32 %v11810, 1.442695
        %v11848 = vpow.pop %v11847
        %v11849 = vmul.f32 %v11811, 1.442695
        %v11850 = vpow.pop %v11849
        %v11851 = vmul.f32 %v11812, 1.442695
        %v11852 = vpow.pop %v11851
        %v11853 = vmul.f32 %v11813, 1.442695
        %v11854 = vpow.pop %v11853
        %v11855 = vmul.f32 %v11814, 1.442695
        %v11856 = vpow.pop %v11855
        %v11857 = vmul.f32 %v11815, 1.442695
        %v11858 = vpow.pop %v11857
        %v11859 = vmul.f32 %v11816, 1.442695
        %v11860 = vpow.pop %v11859
        %v11861 = vmul.f32 %v11817, 1.442695
        %v11862 = vpow.pop %v11861
        %v11863 = vmul.f32 %v11818, 1.442695
        %v11864 = vpow.pop %v11863
        %v11865 = vmul.f32 %v11819, 1.442695
        %v11866 = vpow.pop %v11865
        %v11867 = vmul.f32 %v11820, 1.442695
        %v11868 = vpow.pop %v11867
        %v11869 = vmul.f32 %v11821, 1.442695
        %v11870 = vpow.pop %v11869
        %v11871 = vmul.f32 %v11822, 1.442695
        %v11872 = vpow.pop %v11871
        %v11873 = vmul.f32 %v11823, 1.442695
        %v11874 = vpow.pop %v11873
        %v11875 = vmul.f32 %v11824, 1.442695
        %v11876 = vpow.pop %v11875
        %v11877 = vmul.f32 %v11825, 1.442695
        %v11878 = vpow.pop %v11877
        %v11879 = vmul.f32 %v11826, 1.442695
        %v11880 = vpow.pop %v11879
        %v11881 = vmul.f32 %v11827, 1.442695
        %v11882 = vpow.pop %v11881
        %v11883 = vmul.f32 %v11828, 1.442695
        %v11884 = vpow.pop %v11883
        %v11885 = vmul.f32 %v11829, 1.442695
        %v11886 = vpow.pop %v11885
        %v11887 = vmul.f32 %v11830, 1.442695
        %v11888 = vpow.pop %v11887
        %v11889 = vmul.f32 %v11831, 1.442695
        %v11890 = vpow.pop %v11889
        %v11891 = vmul.f32 %v11832, 1.442695
        %v11892 = vpow.pop %v11891
        %v11893 = vmul.f32 %v11833, 1.442695
        %v11894 = vpow.pop %v11893
        %v11895 = vmul.f32 %v11834, 1.442695
        %v11896 = vpow.pop %v11895
        %v11897 = vmul.f32 %v11835, 1.442695
        %v11898 = vpow.pop %v11897
        %v11899 = vmul.f32 %v11836, 1.442695
        %v11900 = vpow.pop %v11899
        %v11901 = vsub.f32 %v11838, 1.0
        %v11902 = vsub.f32 %v11840, 1.0
        %v11903 = vsub.f32 %v11842, 1.0
        %v11904 = vsub.f32 %v11844, 1.0
        %v11905 = vsub.f32 %v11846, 1.0
        %v11906 = vsub.f32 %v11848, 1.0
        %v11907 = vsub.f32 %v11850, 1.0
        %v11908 = vsub.f32 %v11852, 1.0
        %v11909 = vsub.f32 %v11854, 1.0
        %v11910 = vsub.f32 %v11856, 1.0
        %v11911 = vsub.f32 %v11858, 1.0
        %v11912 = vsub.f32 %v11860, 1.0
        %v11913 = vsub.f32 %v11862, 1.0
        %v11914 = vsub.f32 %v11864, 1.0
        %v11915 = vsub.f32 %v11866, 1.0
        %v11916 = vsub.f32 %v11868, 1.0
        %v11917 = vsub.f32 %v11870, 1.0
        %v11918 = vsub.f32 %v11872, 1.0
        %v11919 = vsub.f32 %v11874, 1.0
        %v11920 = vsub.f32 %v11876, 1.0
        %v11921 = vsub.f32 %v11878, 1.0
        %v11922 = vsub.f32 %v11880, 1.0
        %v11923 = vsub.f32 %v11882, 1.0
        %v11924 = vsub.f32 %v11884, 1.0
        %v11925 = vsub.f32 %v11886, 1.0
        %v11926 = vsub.f32 %v11888, 1.0
        %v11927 = vsub.f32 %v11890, 1.0
        %v11928 = vsub.f32 %v11892, 1.0
        %v11929 = vsub.f32 %v11894, 1.0
        %v11930 = vsub.f32 %v11896, 1.0
        %v11931 = vsub.f32 %v11898, 1.0
        %v11932 = vsub.f32 %v11900, 1.0
        %v11933 = vsel %vm11773, %v11741, %v11901
        %v11934 = vsel %vm11774, %v11742, %v11902
        %v11935 = vsel %vm11775, %v11743, %v11903
        %v11936 = vsel %vm11776, %v11744, %v11904
        %v11937 = vsel %vm11777, %v11745, %v11905
        %v11938 = vsel %vm11778, %v11746, %v11906
        %v11939 = vsel %vm11779, %v11747, %v11907
        %v11940 = vsel %vm11780, %v11748, %v11908
        %v11941 = vsel %vm11781, %v11749, %v11909
        %v11942 = vsel %vm11782, %v11750, %v11910
        %v11943 = vsel %vm11783, %v11751, %v11911
        %v11944 = vsel %vm11784, %v11752, %v11912
        %v11945 = vsel %vm11785, %v11753, %v11913
        %v11946 = vsel %vm11786, %v11754, %v11914
        %v11947 = vsel %vm11787, %v11755, %v11915
        %v11948 = vsel %vm11788, %v11756, %v11916
        %v11949 = vsel %vm11789, %v11757, %v11917
        %v11950 = vsel %vm11790, %v11758, %v11918
        %v11951 = vsel %vm11791, %v11759, %v11919
        %v11952 = vsel %vm11792, %v11760, %v11920
        %v11953 = vsel %vm11793, %v11761, %v11921
        %v11954 = vsel %vm11794, %v11762, %v11922
        %v11955 = vsel %vm11795, %v11763, %v11923
        %v11956 = vsel %vm11796, %v11764, %v11924
        %v11957 = vsel %vm11797, %v11765, %v11925
        %v11958 = vsel %vm11798, %v11766, %v11926
        %v11959 = vsel %vm11799, %v11767, %v11927
        %v11960 = vsel %vm11800, %v11768, %v11928
        %v11961 = vsel %vm11801, %v11769, %v11929
        %v11962 = vsel %vm11802, %v11770, %v11930
        %v11963 = vsel %vm11803, %v11771, %v11931
        %v11964 = vsel %vm11804, %v11772, %v11932
        %v11965 = vsel %vm2577, %v11933, -inf
        %11966 = vmax.xlane.f32.xlu0 %v11965
        %v11967 = vpop.xlane.xlu0 %11966
        %v11968 = vsel %vm2577, %v11934, -inf
        %11969 = vmax.xlane.f32.xlu0 %v11968
        %v11970 = vpop.xlane.xlu0 %11969
        %v11971 = vsel %vm2577, %v11935, -inf
        %11972 = vmax.xlane.f32.xlu0 %v11971
        %v11973 = vpop.xlane.xlu0 %11972
        %v11974 = vsel %vm2577, %v11936, -inf
        %11975 = vmax.xlane.f32.xlu0 %v11974
        %v11976 = vpop.xlane.xlu0 %11975
        %v11977 = vsel %vm2577, %v11937, -inf
        %11978 = vmax.xlane.f32.xlu0 %v11977
        %v11979 = vpop.xlane.xlu0 %11978
        %v11980 = vsel %vm2577, %v11938, -inf
        %11981 = vmax.xlane.f32.xlu0 %v11980
        %v11982 = vpop.xlane.xlu0 %11981
        %v11983 = vsel %vm2577, %v11939, -inf
        %11984 = vmax.xlane.f32.xlu0 %v11983
        %v11985 = vpop.xlane.xlu0 %11984
        %v11986 = vsel %vm2577, %v11940, -inf
        %11987 = vmax.xlane.f32.xlu0 %v11986
        %v11988 = vpop.xlane.xlu0 %11987
        %v11989 = vsel %vm2577, %v11941, -inf
        %11990 = vmax.xlane.f32.xlu0 %v11989
        %v11991 = vpop.xlane.xlu0 %11990
        %v11992 = vsel %vm2577, %v11942, -inf
        %11993 = vmax.xlane.f32.xlu0 %v11992
        %v11994 = vpop.xlane.xlu0 %11993
        %v11995 = vsel %vm2577, %v11943, -inf
        %11996 = vmax.xlane.f32.xlu0 %v11995
        %v11997 = vpop.xlane.xlu0 %11996
        %v11998 = vsel %vm2577, %v11944, -inf
        %11999 = vmax.xlane.f32.xlu0 %v11998
        %v12000 = vpop.xlane.xlu0 %11999
        %v12001 = vsel %vm2577, %v11945, -inf
        %12002 = vmax.xlane.f32.xlu0 %v12001
        %v12003 = vpop.xlane.xlu0 %12002
        %v12004 = vsel %vm2577, %v11946, -inf
        %12005 = vmax.xlane.f32.xlu0 %v12004
        %v12006 = vpop.xlane.xlu0 %12005
        %v12007 = vsel %vm2577, %v11947, -inf
        %12008 = vmax.xlane.f32.xlu0 %v12007
        %v12009 = vpop.xlane.xlu0 %12008
        %v12010 = vsel %vm2577, %v11948, -inf
        %12011 = vmax.xlane.f32.xlu0 %v12010
        %v12012 = vpop.xlane.xlu0 %12011
        %v12013 = vsel %vm2577, %v11949, -inf
        %12014 = vmax.xlane.f32.xlu0 %v12013
        %v12015 = vpop.xlane.xlu0 %12014
        %v12016 = vsel %vm2577, %v11950, -inf
        %12017 = vmax.xlane.f32.xlu0 %v12016
        %v12018 = vpop.xlane.xlu0 %12017
        %v12019 = vsel %vm2577, %v11951, -inf
        %12020 = vmax.xlane.f32.xlu0 %v12019
        %v12021 = vpop.xlane.xlu0 %12020
        %v12022 = vsel %vm2577, %v11952, -inf
        %12023 = vmax.xlane.f32.xlu0 %v12022
        %v12024 = vpop.xlane.xlu0 %12023
        %v12025 = vsel %vm2577, %v11953, -inf
        %12026 = vmax.xlane.f32.xlu0 %v12025
        %v12027 = vpop.xlane.xlu0 %12026
        %v12028 = vsel %vm2577, %v11954, -inf
        %12029 = vmax.xlane.f32.xlu0 %v12028
        %v12030 = vpop.xlane.xlu0 %12029
        %v12031 = vsel %vm2577, %v11955, -inf
        %12032 = vmax.xlane.f32.xlu0 %v12031
        %v12033 = vpop.xlane.xlu0 %12032
        %v12034 = vsel %vm2577, %v11956, -inf
        %12035 = vmax.xlane.f32.xlu0 %v12034
        %v12036 = vpop.xlane.xlu0 %12035
        %v12037 = vsel %vm2577, %v11957, -inf
        %12038 = vmax.xlane.f32.xlu0 %v12037
        %v12039 = vpop.xlane.xlu0 %12038
        %v12040 = vsel %vm2577, %v11958, -inf
        %12041 = vmax.xlane.f32.xlu0 %v12040
        %v12042 = vpop.xlane.xlu0 %12041
        %v12043 = vsel %vm2577, %v11959, -inf
        %12044 = vmax.xlane.f32.xlu0 %v12043
        %v12045 = vpop.xlane.xlu0 %12044
        %v12046 = vsel %vm2577, %v11960, -inf
        %12047 = vmax.xlane.f32.xlu0 %v12046
        %v12048 = vpop.xlane.xlu0 %12047
        %v12049 = vsel %vm2577, %v11961, -inf
        %12050 = vmax.xlane.f32.xlu0 %v12049
        %v12051 = vpop.xlane.xlu0 %12050
        %v12052 = vsel %vm2577, %v11962, -inf
        %12053 = vmax.xlane.f32.xlu0 %v12052
        %v12054 = vpop.xlane.xlu0 %12053
        %v12055 = vsel %vm2577, %v11963, -inf
        %12056 = vmax.xlane.f32.xlu0 %v12055
        %v12057 = vpop.xlane.xlu0 %12056
        %v12058 = vsel %vm2577, %v11964, -inf
        %12059 = vmax.xlane.f32.xlu0 %v12058
        %v12060 = vpop.xlane.xlu0 %12059
        %v12061 = vlaneseq
        %v12062 = vand.u32 %v12061, 127
        %vm12063 = vcmp.eq.f32.partialorder %v11933, %v11967
        %vm12064 = vcmp.eq.f32.partialorder %v11934, %v11970
        %vm12065 = vcmp.eq.f32.partialorder %v11935, %v11973
        %vm12066 = vcmp.eq.f32.partialorder %v11936, %v11976
        %vm12067 = vcmp.eq.f32.partialorder %v11937, %v11979
        %vm12068 = vcmp.eq.f32.partialorder %v11938, %v11982
        %vm12069 = vcmp.eq.f32.partialorder %v11939, %v11985
        %vm12070 = vcmp.eq.f32.partialorder %v11940, %v11988
        %vm12071 = vcmp.eq.f32.partialorder %v11941, %v11991
        %vm12072 = vcmp.eq.f32.partialorder %v11942, %v11994
        %vm12073 = vcmp.eq.f32.partialorder %v11943, %v11997
        %vm12074 = vcmp.eq.f32.partialorder %v11944, %v12000
        %vm12075 = vcmp.eq.f32.partialorder %v11945, %v12003
        %vm12076 = vcmp.eq.f32.partialorder %v11946, %v12006
        %vm12077 = vcmp.eq.f32.partialorder %v11947, %v12009
        %vm12078 = vcmp.eq.f32.partialorder %v11948, %v12012
        %vm12079 = vcmp.eq.f32.partialorder %v11949, %v12015
        %vm12080 = vcmp.eq.f32.partialorder %v11950, %v12018
        %vm12081 = vcmp.eq.f32.partialorder %v11951, %v12021
        %vm12082 = vcmp.eq.f32.partialorder %v11952, %v12024
        %vm12083 = vcmp.eq.f32.partialorder %v11953, %v12027
        %vm12084 = vcmp.eq.f32.partialorder %v11954, %v12030
        %vm12085 = vcmp.eq.f32.partialorder %v11955, %v12033
        %vm12086 = vcmp.eq.f32.partialorder %v11956, %v12036
        %vm12087 = vcmp.eq.f32.partialorder %v11957, %v12039
        %vm12088 = vcmp.eq.f32.partialorder %v11958, %v12042
        %vm12089 = vcmp.eq.f32.partialorder %v11959, %v12045
        %vm12090 = vcmp.eq.f32.partialorder %v11960, %v12048
        %vm12091 = vcmp.eq.f32.partialorder %v11961, %v12051
        %vm12092 = vcmp.eq.f32.partialorder %v11962, %v12054
        %vm12093 = vcmp.eq.f32.partialorder %v11963, %v12057
        %vm12094 = vcmp.eq.f32.partialorder %v11964, %v12060
        %v12095 = vsel %vm12063, %v12062, 64
        %v12096 = vsel %vm12064, %v12062, 64
        %v12097 = vsel %vm12065, %v12062, 64
        %v12098 = vsel %vm12066, %v12062, 64
        %v12099 = vsel %vm12067, %v12062, 64
        %v12100 = vsel %vm12068, %v12062, 64
        %v12101 = vsel %vm12069, %v12062, 64
        %v12102 = vsel %vm12070, %v12062, 64
        %v12103 = vsel %vm12071, %v12062, 64
        %v12104 = vsel %vm12072, %v12062, 64
        %v12105 = vsel %vm12073, %v12062, 64
        %v12106 = vsel %vm12074, %v12062, 64
        %v12107 = vsel %vm12075, %v12062, 64
        %v12108 = vsel %vm12076, %v12062, 64
        %v12109 = vsel %vm12077, %v12062, 64
        %v12110 = vsel %vm12078, %v12062, 64
        %v12111 = vsel %vm12079, %v12062, 64
        %v12112 = vsel %vm12080, %v12062, 64
        %v12113 = vsel %vm12081, %v12062, 64
        %v12114 = vsel %vm12082, %v12062, 64
        %v12115 = vsel %vm12083, %v12062, 64
        %v12116 = vsel %vm12084, %v12062, 64
        %v12117 = vsel %vm12085, %v12062, 64
        %v12118 = vsel %vm12086, %v12062, 64
        %v12119 = vsel %vm12087, %v12062, 64
        %v12120 = vsel %vm12088, %v12062, 64
        %v12121 = vsel %vm12089, %v12062, 64
        %v12122 = vsel %vm12090, %v12062, 64
        %v12123 = vsel %vm12091, %v12062, 64
        %v12124 = vsel %vm12092, %v12062, 64
        %v12125 = vsel %vm12093, %v12062, 64
        %v12126 = vsel %vm12094, %v12062, 64
        %v12127 = vsel %vm2577, %v12095, 2147483647
        %v12128 = vand.u32 %v12127, 65535
        %v12129 = vshra.s32 %v12127, 16
        %v12130 = vcvt.s32.f32 %v12128
        %v12131 = vcvt.s32.f32 %v12129
        %12132 = vmin.xlane.f32.xlu0 %v12131
        %v12133 = vpop.xlane.xlu0 %12132
        %vm12134 = vcmp.eq.f32.partialorder %v12131, %v12133
        %v12135 = vsel %vm12134, %v12130, inf
        %12136 = vmin.xlane.f32.xlu0 %v12135
        %v12137 = vpop.xlane.xlu0 %12136
        %v12138 = vcvt.f32.s32 %v12137
        %v12139 = vcvt.f32.s32 %v12133
        %v12140 = vshll.u32 %v12139, 16
        %v12141 = vadd.s32 %v12140, %v12138
        %v12142 = vsel %vm2577, %v12096, 2147483647
        %v12143 = vand.u32 %v12142, 65535
        %v12144 = vshra.s32 %v12142, 16
        %v12145 = vcvt.s32.f32 %v12143
        %v12146 = vcvt.s32.f32 %v12144
        %12147 = vmin.xlane.f32.xlu0 %v12146
        %v12148 = vpop.xlane.xlu0 %12147
        %vm12149 = vcmp.eq.f32.partialorder %v12146, %v12148
        %v12150 = vsel %vm12149, %v12145, inf
        %12151 = vmin.xlane.f32.xlu0 %v12150
        %v12152 = vpop.xlane.xlu0 %12151
        %v12153 = vcvt.f32.s32 %v12152
        %v12154 = vcvt.f32.s32 %v12148
        %v12155 = vshll.u32 %v12154, 16
        %v12156 = vadd.s32 %v12155, %v12153
        %v12157 = vsel %vm2577, %v12097, 2147483647
        %v12158 = vand.u32 %v12157, 65535
        %v12159 = vshra.s32 %v12157, 16
        %v12160 = vcvt.s32.f32 %v12158
        %v12161 = vcvt.s32.f32 %v12159
        %12162 = vmin.xlane.f32.xlu0 %v12161
        %v12163 = vpop.xlane.xlu0 %12162
        %vm12164 = vcmp.eq.f32.partialorder %v12161, %v12163
        %v12165 = vsel %vm12164, %v12160, inf
        %12166 = vmin.xlane.f32.xlu0 %v12165
        %v12167 = vpop.xlane.xlu0 %12166
        %v12168 = vcvt.f32.s32 %v12167
        %v12169 = vcvt.f32.s32 %v12163
        %v12170 = vshll.u32 %v12169, 16
        %v12171 = vadd.s32 %v12170, %v12168
        %v12172 = vsel %vm2577, %v12098, 2147483647
        %v12173 = vand.u32 %v12172, 65535
        %v12174 = vshra.s32 %v12172, 16
        %v12175 = vcvt.s32.f32 %v12173
        %v12176 = vcvt.s32.f32 %v12174
        %12177 = vmin.xlane.f32.xlu0 %v12176
        %v12178 = vpop.xlane.xlu0 %12177
        %vm12179 = vcmp.eq.f32.partialorder %v12176, %v12178
        %v12180 = vsel %vm12179, %v12175, inf
        %12181 = vmin.xlane.f32.xlu0 %v12180
        %v12182 = vpop.xlane.xlu0 %12181
        %v12183 = vcvt.f32.s32 %v12182
        %v12184 = vcvt.f32.s32 %v12178
        %v12185 = vshll.u32 %v12184, 16
        %v12186 = vadd.s32 %v12185, %v12183
        %v12187 = vsel %vm2577, %v12099, 2147483647
        %v12188 = vand.u32 %v12187, 65535
        %v12189 = vshra.s32 %v12187, 16
        %v12190 = vcvt.s32.f32 %v12188
        %v12191 = vcvt.s32.f32 %v12189
        %12192 = vmin.xlane.f32.xlu0 %v12191
        %v12193 = vpop.xlane.xlu0 %12192
        %vm12194 = vcmp.eq.f32.partialorder %v12191, %v12193
        %v12195 = vsel %vm12194, %v12190, inf
        %12196 = vmin.xlane.f32.xlu0 %v12195
        %v12197 = vpop.xlane.xlu0 %12196
        %v12198 = vcvt.f32.s32 %v12197
        %v12199 = vcvt.f32.s32 %v12193
        %v12200 = vshll.u32 %v12199, 16
        %v12201 = vadd.s32 %v12200, %v12198
        %v12202 = vsel %vm2577, %v12100, 2147483647
        %v12203 = vand.u32 %v12202, 65535
        %v12204 = vshra.s32 %v12202, 16
        %v12205 = vcvt.s32.f32 %v12203
        %v12206 = vcvt.s32.f32 %v12204
        %12207 = vmin.xlane.f32.xlu0 %v12206
        %v12208 = vpop.xlane.xlu0 %12207
        %vm12209 = vcmp.eq.f32.partialorder %v12206, %v12208
        %v12210 = vsel %vm12209, %v12205, inf
        %12211 = vmin.xlane.f32.xlu0 %v12210
        %v12212 = vpop.xlane.xlu0 %12211
        %v12213 = vcvt.f32.s32 %v12212
        %v12214 = vcvt.f32.s32 %v12208
        %v12215 = vshll.u32 %v12214, 16
        %v12216 = vadd.s32 %v12215, %v12213
        %v12217 = vsel %vm2577, %v12101, 2147483647
        %v12218 = vand.u32 %v12217, 65535
        %v12219 = vshra.s32 %v12217, 16
        %v12220 = vcvt.s32.f32 %v12218
        %v12221 = vcvt.s32.f32 %v12219
        %12222 = vmin.xlane.f32.xlu0 %v12221
        %v12223 = vpop.xlane.xlu0 %12222
        %vm12224 = vcmp.eq.f32.partialorder %v12221, %v12223
        %v12225 = vsel %vm12224, %v12220, inf
        %12226 = vmin.xlane.f32.xlu0 %v12225
        %v12227 = vpop.xlane.xlu0 %12226
        %v12228 = vcvt.f32.s32 %v12227
        %v12229 = vcvt.f32.s32 %v12223
        %v12230 = vshll.u32 %v12229, 16
        %v12231 = vadd.s32 %v12230, %v12228
        %v12232 = vsel %vm2577, %v12102, 2147483647
        %v12233 = vand.u32 %v12232, 65535
        %v12234 = vshra.s32 %v12232, 16
        %v12235 = vcvt.s32.f32 %v12233
        %v12236 = vcvt.s32.f32 %v12234
        %12237 = vmin.xlane.f32.xlu0 %v12236
        %v12238 = vpop.xlane.xlu0 %12237
        %vm12239 = vcmp.eq.f32.partialorder %v12236, %v12238
        %v12240 = vsel %vm12239, %v12235, inf
        %12241 = vmin.xlane.f32.xlu0 %v12240
        %v12242 = vpop.xlane.xlu0 %12241
        %v12243 = vcvt.f32.s32 %v12242
        %v12244 = vcvt.f32.s32 %v12238
        %v12245 = vshll.u32 %v12244, 16
        %v12246 = vadd.s32 %v12245, %v12243
        %v12247 = vsel %vm2577, %v12103, 2147483647
        %v12248 = vand.u32 %v12247, 65535
        %v12249 = vshra.s32 %v12247, 16
        %v12250 = vcvt.s32.f32 %v12248
        %v12251 = vcvt.s32.f32 %v12249
        %12252 = vmin.xlane.f32.xlu0 %v12251
        %v12253 = vpop.xlane.xlu0 %12252
        %vm12254 = vcmp.eq.f32.partialorder %v12251, %v12253
        %v12255 = vsel %vm12254, %v12250, inf
        %12256 = vmin.xlane.f32.xlu0 %v12255
        %v12257 = vpop.xlane.xlu0 %12256
        %v12258 = vcvt.f32.s32 %v12257
        %v12259 = vcvt.f32.s32 %v12253
        %v12260 = vshll.u32 %v12259, 16
        %v12261 = vadd.s32 %v12260, %v12258
        %v12262 = vsel %vm2577, %v12104, 2147483647
        %v12263 = vand.u32 %v12262, 65535
        %v12264 = vshra.s32 %v12262, 16
        %v12265 = vcvt.s32.f32 %v12263
        %v12266 = vcvt.s32.f32 %v12264
        %12267 = vmin.xlane.f32.xlu0 %v12266
        %v12268 = vpop.xlane.xlu0 %12267
        %vm12269 = vcmp.eq.f32.partialorder %v12266, %v12268
        %v12270 = vsel %vm12269, %v12265, inf
        %12271 = vmin.xlane.f32.xlu0 %v12270
        %v12272 = vpop.xlane.xlu0 %12271
        %v12273 = vcvt.f32.s32 %v12272
        %v12274 = vcvt.f32.s32 %v12268
        %v12275 = vshll.u32 %v12274, 16
        %v12276 = vadd.s32 %v12275, %v12273
        %v12277 = vsel %vm2577, %v12105, 2147483647
        %v12278 = vand.u32 %v12277, 65535
        %v12279 = vshra.s32 %v12277, 16
        %v12280 = vcvt.s32.f32 %v12278
        %v12281 = vcvt.s32.f32 %v12279
        %12282 = vmin.xlane.f32.xlu0 %v12281
        %v12283 = vpop.xlane.xlu0 %12282
        %vm12284 = vcmp.eq.f32.partialorder %v12281, %v12283
        %v12285 = vsel %vm12284, %v12280, inf
        %12286 = vmin.xlane.f32.xlu0 %v12285
        %v12287 = vpop.xlane.xlu0 %12286
        %v12288 = vcvt.f32.s32 %v12287
        %v12289 = vcvt.f32.s32 %v12283
        %v12290 = vshll.u32 %v12289, 16
        %v12291 = vadd.s32 %v12290, %v12288
        %v12292 = vsel %vm2577, %v12106, 2147483647
        %v12293 = vand.u32 %v12292, 65535
        %v12294 = vshra.s32 %v12292, 16
        %v12295 = vcvt.s32.f32 %v12293
        %v12296 = vcvt.s32.f32 %v12294
        %12297 = vmin.xlane.f32.xlu0 %v12296
        %v12298 = vpop.xlane.xlu0 %12297
        %vm12299 = vcmp.eq.f32.partialorder %v12296, %v12298
        %v12300 = vsel %vm12299, %v12295, inf
        %12301 = vmin.xlane.f32.xlu0 %v12300
        %v12302 = vpop.xlane.xlu0 %12301
        %v12303 = vcvt.f32.s32 %v12302
        %v12304 = vcvt.f32.s32 %v12298
        %v12305 = vshll.u32 %v12304, 16
        %v12306 = vadd.s32 %v12305, %v12303
        %v12307 = vsel %vm2577, %v12107, 2147483647
        %v12308 = vand.u32 %v12307, 65535
        %v12309 = vshra.s32 %v12307, 16
        %v12310 = vcvt.s32.f32 %v12308
        %v12311 = vcvt.s32.f32 %v12309
        %12312 = vmin.xlane.f32.xlu0 %v12311
        %v12313 = vpop.xlane.xlu0 %12312
        %vm12314 = vcmp.eq.f32.partialorder %v12311, %v12313
        %v12315 = vsel %vm12314, %v12310, inf
        %12316 = vmin.xlane.f32.xlu0 %v12315
        %v12317 = vpop.xlane.xlu0 %12316
        %v12318 = vcvt.f32.s32 %v12317
        %v12319 = vcvt.f32.s32 %v12313
        %v12320 = vshll.u32 %v12319, 16
        %v12321 = vadd.s32 %v12320, %v12318
        %v12322 = vsel %vm2577, %v12108, 2147483647
        %v12323 = vand.u32 %v12322, 65535
        %v12324 = vshra.s32 %v12322, 16
        %v12325 = vcvt.s32.f32 %v12323
        %v12326 = vcvt.s32.f32 %v12324
        %12327 = vmin.xlane.f32.xlu0 %v12326
        %v12328 = vpop.xlane.xlu0 %12327
        %vm12329 = vcmp.eq.f32.partialorder %v12326, %v12328
        %v12330 = vsel %vm12329, %v12325, inf
        %12331 = vmin.xlane.f32.xlu0 %v12330
        %v12332 = vpop.xlane.xlu0 %12331
        %v12333 = vcvt.f32.s32 %v12332
        %v12334 = vcvt.f32.s32 %v12328
        %v12335 = vshll.u32 %v12334, 16
        %v12336 = vadd.s32 %v12335, %v12333
        %v12337 = vsel %vm2577, %v12109, 2147483647
        %v12338 = vand.u32 %v12337, 65535
        %v12339 = vshra.s32 %v12337, 16
        %v12340 = vcvt.s32.f32 %v12338
        %v12341 = vcvt.s32.f32 %v12339
        %12342 = vmin.xlane.f32.xlu0 %v12341
        %v12343 = vpop.xlane.xlu0 %12342
        %vm12344 = vcmp.eq.f32.partialorder %v12341, %v12343
        %v12345 = vsel %vm12344, %v12340, inf
        %12346 = vmin.xlane.f32.xlu0 %v12345
        %v12347 = vpop.xlane.xlu0 %12346
        %v12348 = vcvt.f32.s32 %v12347
        %v12349 = vcvt.f32.s32 %v12343
        %v12350 = vshll.u32 %v12349, 16
        %v12351 = vadd.s32 %v12350, %v12348
        %v12352 = vsel %vm2577, %v12110, 2147483647
        %v12353 = vand.u32 %v12352, 65535
        %v12354 = vshra.s32 %v12352, 16
        %v12355 = vcvt.s32.f32 %v12353
        %v12356 = vcvt.s32.f32 %v12354
        %12357 = vmin.xlane.f32.xlu0 %v12356
        %v12358 = vpop.xlane.xlu0 %12357
        %vm12359 = vcmp.eq.f32.partialorder %v12356, %v12358
        %v12360 = vsel %vm12359, %v12355, inf
        %12361 = vmin.xlane.f32.xlu0 %v12360
        %v12362 = vpop.xlane.xlu0 %12361
        %v12363 = vcvt.f32.s32 %v12362
        %v12364 = vcvt.f32.s32 %v12358
        %v12365 = vshll.u32 %v12364, 16
        %v12366 = vadd.s32 %v12365, %v12363
        %v12367 = vsel %vm2577, %v12111, 2147483647
        %v12368 = vand.u32 %v12367, 65535
        %v12369 = vshra.s32 %v12367, 16
        %v12370 = vcvt.s32.f32 %v12368
        %v12371 = vcvt.s32.f32 %v12369
        %12372 = vmin.xlane.f32.xlu0 %v12371
        %v12373 = vpop.xlane.xlu0 %12372
        %vm12374 = vcmp.eq.f32.partialorder %v12371, %v12373
        %v12375 = vsel %vm12374, %v12370, inf
        %12376 = vmin.xlane.f32.xlu0 %v12375
        %v12377 = vpop.xlane.xlu0 %12376
        %v12378 = vcvt.f32.s32 %v12377
        %v12379 = vcvt.f32.s32 %v12373
        %v12380 = vshll.u32 %v12379, 16
        %v12381 = vadd.s32 %v12380, %v12378
        %v12382 = vsel %vm2577, %v12112, 2147483647
        %v12383 = vand.u32 %v12382, 65535
        %v12384 = vshra.s32 %v12382, 16
        %v12385 = vcvt.s32.f32 %v12383
        %v12386 = vcvt.s32.f32 %v12384
        %12387 = vmin.xlane.f32.xlu0 %v12386
        %v12388 = vpop.xlane.xlu0 %12387
        %vm12389 = vcmp.eq.f32.partialorder %v12386, %v12388
        %v12390 = vsel %vm12389, %v12385, inf
        %12391 = vmin.xlane.f32.xlu0 %v12390
        %v12392 = vpop.xlane.xlu0 %12391
        %v12393 = vcvt.f32.s32 %v12392
        %v12394 = vcvt.f32.s32 %v12388
        %v12395 = vshll.u32 %v12394, 16
        %v12396 = vadd.s32 %v12395, %v12393
        %v12397 = vsel %vm2577, %v12113, 2147483647
        %v12398 = vand.u32 %v12397, 65535
        %v12399 = vshra.s32 %v12397, 16
        %v12400 = vcvt.s32.f32 %v12398
        %v12401 = vcvt.s32.f32 %v12399
        %12402 = vmin.xlane.f32.xlu0 %v12401
        %v12403 = vpop.xlane.xlu0 %12402
        %vm12404 = vcmp.eq.f32.partialorder %v12401, %v12403
        %v12405 = vsel %vm12404, %v12400, inf
        %12406 = vmin.xlane.f32.xlu0 %v12405
        %v12407 = vpop.xlane.xlu0 %12406
        %v12408 = vcvt.f32.s32 %v12407
        %v12409 = vcvt.f32.s32 %v12403
        %v12410 = vshll.u32 %v12409, 16
        %v12411 = vadd.s32 %v12410, %v12408
        %v12412 = vsel %vm2577, %v12114, 2147483647
        %v12413 = vand.u32 %v12412, 65535
        %v12414 = vshra.s32 %v12412, 16
        %v12415 = vcvt.s32.f32 %v12413
        %v12416 = vcvt.s32.f32 %v12414
        %12417 = vmin.xlane.f32.xlu0 %v12416
        %v12418 = vpop.xlane.xlu0 %12417
        %vm12419 = vcmp.eq.f32.partialorder %v12416, %v12418
        %v12420 = vsel %vm12419, %v12415, inf
        %12421 = vmin.xlane.f32.xlu0 %v12420
        %v12422 = vpop.xlane.xlu0 %12421
        %v12423 = vcvt.f32.s32 %v12422
        %v12424 = vcvt.f32.s32 %v12418
        %v12425 = vshll.u32 %v12424, 16
        %v12426 = vadd.s32 %v12425, %v12423
        %v12427 = vsel %vm2577, %v12115, 2147483647
        %v12428 = vand.u32 %v12427, 65535
        %v12429 = vshra.s32 %v12427, 16
        %v12430 = vcvt.s32.f32 %v12428
        %v12431 = vcvt.s32.f32 %v12429
        %12432 = vmin.xlane.f32.xlu0 %v12431
        %v12433 = vpop.xlane.xlu0 %12432
        %vm12434 = vcmp.eq.f32.partialorder %v12431, %v12433
        %v12435 = vsel %vm12434, %v12430, inf
        %12436 = vmin.xlane.f32.xlu0 %v12435
        %v12437 = vpop.xlane.xlu0 %12436
        %v12438 = vcvt.f32.s32 %v12437
        %v12439 = vcvt.f32.s32 %v12433
        %v12440 = vshll.u32 %v12439, 16
        %v12441 = vadd.s32 %v12440, %v12438
        %v12442 = vsel %vm2577, %v12116, 2147483647
        %v12443 = vand.u32 %v12442, 65535
        %v12444 = vshra.s32 %v12442, 16
        %v12445 = vcvt.s32.f32 %v12443
        %v12446 = vcvt.s32.f32 %v12444
        %12447 = vmin.xlane.f32.xlu0 %v12446
        %v12448 = vpop.xlane.xlu0 %12447
        %vm12449 = vcmp.eq.f32.partialorder %v12446, %v12448
        %v12450 = vsel %vm12449, %v12445, inf
        %12451 = vmin.xlane.f32.xlu0 %v12450
        %v12452 = vpop.xlane.xlu0 %12451
        %v12453 = vcvt.f32.s32 %v12452
        %v12454 = vcvt.f32.s32 %v12448
        %v12455 = vshll.u32 %v12454, 16
        %v12456 = vadd.s32 %v12455, %v12453
        %v12457 = vsel %vm2577, %v12117, 2147483647
        %v12458 = vand.u32 %v12457, 65535
        %v12459 = vshra.s32 %v12457, 16
        %v12460 = vcvt.s32.f32 %v12458
        %v12461 = vcvt.s32.f32 %v12459
        %12462 = vmin.xlane.f32.xlu0 %v12461
        %v12463 = vpop.xlane.xlu0 %12462
        %vm12464 = vcmp.eq.f32.partialorder %v12461, %v12463
        %v12465 = vsel %vm12464, %v12460, inf
        %12466 = vmin.xlane.f32.xlu0 %v12465
        %v12467 = vpop.xlane.xlu0 %12466
        %v12468 = vcvt.f32.s32 %v12467
        %v12469 = vcvt.f32.s32 %v12463
        %v12470 = vshll.u32 %v12469, 16
        %v12471 = vadd.s32 %v12470, %v12468
        %v12472 = vsel %vm2577, %v12118, 2147483647
        %v12473 = vand.u32 %v12472, 65535
        %v12474 = vshra.s32 %v12472, 16
        %v12475 = vcvt.s32.f32 %v12473
        %v12476 = vcvt.s32.f32 %v12474
        %12477 = vmin.xlane.f32.xlu0 %v12476
        %v12478 = vpop.xlane.xlu0 %12477
        %vm12479 = vcmp.eq.f32.partialorder %v12476, %v12478
        %v12480 = vsel %vm12479, %v12475, inf
        %12481 = vmin.xlane.f32.xlu0 %v12480
        %v12482 = vpop.xlane.xlu0 %12481
        %v12483 = vcvt.f32.s32 %v12482
        %v12484 = vcvt.f32.s32 %v12478
        %v12485 = vshll.u32 %v12484, 16
        %v12486 = vadd.s32 %v12485, %v12483
        %v12487 = vsel %vm2577, %v12119, 2147483647
        %v12488 = vand.u32 %v12487, 65535
        %v12489 = vshra.s32 %v12487, 16
        %v12490 = vcvt.s32.f32 %v12488
        %v12491 = vcvt.s32.f32 %v12489
        %12492 = vmin.xlane.f32.xlu0 %v12491
        %v12493 = vpop.xlane.xlu0 %12492
        %vm12494 = vcmp.eq.f32.partialorder %v12491, %v12493
        %v12495 = vsel %vm12494, %v12490, inf
        %12496 = vmin.xlane.f32.xlu0 %v12495
        %v12497 = vpop.xlane.xlu0 %12496
        %v12498 = vcvt.f32.s32 %v12497
        %v12499 = vcvt.f32.s32 %v12493
        %v12500 = vshll.u32 %v12499, 16
        %v12501 = vadd.s32 %v12500, %v12498
        %v12502 = vsel %vm2577, %v12120, 2147483647
        %v12503 = vand.u32 %v12502, 65535
        %v12504 = vshra.s32 %v12502, 16
        %v12505 = vcvt.s32.f32 %v12503
        %v12506 = vcvt.s32.f32 %v12504
        %12507 = vmin.xlane.f32.xlu0 %v12506
        %v12508 = vpop.xlane.xlu0 %12507
        %vm12509 = vcmp.eq.f32.partialorder %v12506, %v12508
        %v12510 = vsel %vm12509, %v12505, inf
        %12511 = vmin.xlane.f32.xlu0 %v12510
        %v12512 = vpop.xlane.xlu0 %12511
        %v12513 = vcvt.f32.s32 %v12512
        %v12514 = vcvt.f32.s32 %v12508
        %v12515 = vshll.u32 %v12514, 16
        %v12516 = vadd.s32 %v12515, %v12513
        %v12517 = vsel %vm2577, %v12121, 2147483647
        %v12518 = vand.u32 %v12517, 65535
        %v12519 = vshra.s32 %v12517, 16
        %v12520 = vcvt.s32.f32 %v12518
        %v12521 = vcvt.s32.f32 %v12519
        %12522 = vmin.xlane.f32.xlu0 %v12521
        %v12523 = vpop.xlane.xlu0 %12522
        %vm12524 = vcmp.eq.f32.partialorder %v12521, %v12523
        %v12525 = vsel %vm12524, %v12520, inf
        %12526 = vmin.xlane.f32.xlu0 %v12525
        %v12527 = vpop.xlane.xlu0 %12526
        %v12528 = vcvt.f32.s32 %v12527
        %v12529 = vcvt.f32.s32 %v12523
        %v12530 = vshll.u32 %v12529, 16
        %v12531 = vadd.s32 %v12530, %v12528
        %v12532 = vsel %vm2577, %v12122, 2147483647
        %v12533 = vand.u32 %v12532, 65535
        %v12534 = vshra.s32 %v12532, 16
        %v12535 = vcvt.s32.f32 %v12533
        %v12536 = vcvt.s32.f32 %v12534
        %12537 = vmin.xlane.f32.xlu0 %v12536
        %v12538 = vpop.xlane.xlu0 %12537
        %vm12539 = vcmp.eq.f32.partialorder %v12536, %v12538
        %v12540 = vsel %vm12539, %v12535, inf
        %12541 = vmin.xlane.f32.xlu0 %v12540
        %v12542 = vpop.xlane.xlu0 %12541
        %v12543 = vcvt.f32.s32 %v12542
        %v12544 = vcvt.f32.s32 %v12538
        %v12545 = vshll.u32 %v12544, 16
        %v12546 = vadd.s32 %v12545, %v12543
        %v12547 = vsel %vm2577, %v12123, 2147483647
        %v12548 = vand.u32 %v12547, 65535
        %v12549 = vshra.s32 %v12547, 16
        %v12550 = vcvt.s32.f32 %v12548
        %v12551 = vcvt.s32.f32 %v12549
        %12552 = vmin.xlane.f32.xlu0 %v12551
        %v12553 = vpop.xlane.xlu0 %12552
        %vm12554 = vcmp.eq.f32.partialorder %v12551, %v12553
        %v12555 = vsel %vm12554, %v12550, inf
        %12556 = vmin.xlane.f32.xlu0 %v12555
        %v12557 = vpop.xlane.xlu0 %12556
        %v12558 = vcvt.f32.s32 %v12557
        %v12559 = vcvt.f32.s32 %v12553
        %v12560 = vshll.u32 %v12559, 16
        %v12561 = vadd.s32 %v12560, %v12558
        %v12562 = vsel %vm2577, %v12124, 2147483647
        %v12563 = vand.u32 %v12562, 65535
        %v12564 = vshra.s32 %v12562, 16
        %v12565 = vcvt.s32.f32 %v12563
        %v12566 = vcvt.s32.f32 %v12564
        %12567 = vmin.xlane.f32.xlu0 %v12566
        %v12568 = vpop.xlane.xlu0 %12567
        %vm12569 = vcmp.eq.f32.partialorder %v12566, %v12568
        %v12570 = vsel %vm12569, %v12565, inf
        %12571 = vmin.xlane.f32.xlu0 %v12570
        %v12572 = vpop.xlane.xlu0 %12571
        %v12573 = vcvt.f32.s32 %v12572
        %v12574 = vcvt.f32.s32 %v12568
        %v12575 = vshll.u32 %v12574, 16
        %v12576 = vadd.s32 %v12575, %v12573
        %v12577 = vsel %vm2577, %v12125, 2147483647
        %v12578 = vand.u32 %v12577, 65535
        %v12579 = vshra.s32 %v12577, 16
        %v12580 = vcvt.s32.f32 %v12578
        %v12581 = vcvt.s32.f32 %v12579
        %12582 = vmin.xlane.f32.xlu0 %v12581
        %v12583 = vpop.xlane.xlu0 %12582
        %vm12584 = vcmp.eq.f32.partialorder %v12581, %v12583
        %v12585 = vsel %vm12584, %v12580, inf
        %12586 = vmin.xlane.f32.xlu0 %v12585
        %v12587 = vpop.xlane.xlu0 %12586
        %v12588 = vcvt.f32.s32 %v12587
        %v12589 = vcvt.f32.s32 %v12583
        %v12590 = vshll.u32 %v12589, 16
        %v12591 = vadd.s32 %v12590, %v12588
        %v12592 = vsel %vm2577, %v12126, 2147483647
        %v12593 = vand.u32 %v12592, 65535
        %v12594 = vshra.s32 %v12592, 16
        %v12595 = vcvt.s32.f32 %v12593
        %v12596 = vcvt.s32.f32 %v12594
        %12597 = vmin.xlane.f32.xlu0 %v12596
        %v12598 = vpop.xlane.xlu0 %12597
        %vm12599 = vcmp.eq.f32.partialorder %v12596, %v12598
        %v12600 = vsel %vm12599, %v12595, inf
        %12601 = vmin.xlane.f32.xlu0 %v12600
        %v12602 = vpop.xlane.xlu0 %12601
        %v12603 = vcvt.f32.s32 %v12602
        %v12604 = vcvt.f32.s32 %v12598
        %v12605 = vshll.u32 %v12604, 16
        %v12606 = vadd.s32 %v12605, %v12603
        %v12607 = vlaneseq
        %v12608 = vshrl.u32 %v12607, 7
        %v12609 = vmul.u32 %v12608, 128
        %v12610 = vadd.s32 %v12609, %v12062
        %v12643 = vlaneseq
        %v12644 = vshrl.u32 %v12643, 7
        %v12645 = vsub.s32 %v12062, %v12644
        %v12646 = vrot.slane %v11967, %v12645
        %v12647 = vadd.s32 %v12062, 4294967288
        %v12648 = vlaneseq
        %v12649 = vshrl.u32 %v12648, 7
        %v12650 = vsub.s32 %v12647, %v12649
        %v12651 = vrot.slane %v11970, %v12650
        %vm12652 = vcmask 130112
        %v12653 = vsel %vm12652, %v12651, %v12646
        %v12654 = vadd.s32 %v12062, 4294967280
        %v12655 = vlaneseq
        %v12656 = vshrl.u32 %v12655, 7
        %v12657 = vsub.s32 %v12654, %v12656
        %v12658 = vrot.slane %v11973, %v12657
        %vm12659 = vcmask 195712
        %v12660 = vsel %vm12659, %v12658, %v12653
        %v12661 = vadd.s32 %v12062, 4294967272
        %v12662 = vlaneseq
        %v12663 = vshrl.u32 %v12662, 7
        %v12664 = vsub.s32 %v12661, %v12663
        %v12665 = vrot.slane %v11976, %v12664
        %vm12666 = vcmask 261312
        %v12667 = vsel %vm12666, %v12665, %v12660
        %v12668 = vadd.s32 %v12062, 4294967264
        %v12669 = vlaneseq
        %v12670 = vshrl.u32 %v12669, 7
        %v12671 = vsub.s32 %v12668, %v12670
        %v12672 = vrot.slane %v11979, %v12671
        %vm12673 = vcmask 326912
        %v12674 = vsel %vm12673, %v12672, %v12667
        %v12675 = vadd.s32 %v12062, 4294967256
        %v12676 = vlaneseq
        %v12677 = vshrl.u32 %v12676, 7
        %v12678 = vsub.s32 %v12675, %v12677
        %v12679 = vrot.slane %v11982, %v12678
        %vm12680 = vcmask 392512
        %v12681 = vsel %vm12680, %v12679, %v12674
        %v12682 = vadd.s32 %v12062, 4294967248
        %v12683 = vlaneseq
        %v12684 = vshrl.u32 %v12683, 7
        %v12685 = vsub.s32 %v12682, %v12684
        %v12686 = vrot.slane %v11985, %v12685
        %vm12687 = vcmask 458112
        %v12688 = vsel %vm12687, %v12686, %v12681
        %v12689 = vadd.s32 %v12062, 4294967240
        %v12690 = vlaneseq
        %v12691 = vshrl.u32 %v12690, 7
        %v12692 = vsub.s32 %v12689, %v12691
        %v12693 = vrot.slane %v11988, %v12692
        %vm12694 = vcmask 523712
        %v12695 = vsel %vm12694, %v12693, %v12688
        %v12696 = vadd.s32 %v12062, 4294967232
        %v12697 = vlaneseq
        %v12698 = vshrl.u32 %v12697, 7
        %v12699 = vsub.s32 %v12696, %v12698
        %v12700 = vrot.slane %v11991, %v12699
        %vm12701 = vcmask 589312
        %v12702 = vsel %vm12701, %v12700, %v12695
        %v12703 = vadd.s32 %v12062, 4294967224
        %v12704 = vlaneseq
        %v12705 = vshrl.u32 %v12704, 7
        %v12706 = vsub.s32 %v12703, %v12705
        %v12707 = vrot.slane %v11994, %v12706
        %vm12708 = vcmask 654912
        %v12709 = vsel %vm12708, %v12707, %v12702
        %v12710 = vadd.s32 %v12062, 4294967216
        %v12711 = vlaneseq
        %v12712 = vshrl.u32 %v12711, 7
        %v12713 = vsub.s32 %v12710, %v12712
        %v12714 = vrot.slane %v11997, %v12713
        %vm12715 = vcmask 720512
        %v12716 = vsel %vm12715, %v12714, %v12709
        %v12717 = vadd.s32 %v12062, 4294967208
        %v12718 = vlaneseq
        %v12719 = vshrl.u32 %v12718, 7
        %v12720 = vsub.s32 %v12717, %v12719
        %v12721 = vrot.slane %v12000, %v12720
        %vm12722 = vcmask 786112
        %v12723 = vsel %vm12722, %v12721, %v12716
        %v12724 = vadd.s32 %v12062, 4294967200
        %v12725 = vlaneseq
        %v12726 = vshrl.u32 %v12725, 7
        %v12727 = vsub.s32 %v12724, %v12726
        %v12728 = vrot.slane %v12003, %v12727
        %vm12729 = vcmask 851712
        %v12730 = vsel %vm12729, %v12728, %v12723
        %v12731 = vadd.s32 %v12062, 4294967192
        %v12732 = vlaneseq
        %v12733 = vshrl.u32 %v12732, 7
        %v12734 = vsub.s32 %v12731, %v12733
        %v12735 = vrot.slane %v12006, %v12734
        %vm12736 = vcmask 917312
        %v12737 = vsel %vm12736, %v12735, %v12730
        %v12738 = vadd.s32 %v12062, 4294967184
        %v12739 = vlaneseq
        %v12740 = vshrl.u32 %v12739, 7
        %v12741 = vsub.s32 %v12738, %v12740
        %v12742 = vrot.slane %v12009, %v12741
        %vm12743 = vcmask 982912
        %v12744 = vsel %vm12743, %v12742, %v12737
        %v12745 = vadd.s32 %v12062, 4294967176
        %v12746 = vlaneseq
        %v12747 = vshrl.u32 %v12746, 7
        %v12748 = vsub.s32 %v12745, %v12747
        %v12749 = vrot.slane %v12012, %v12748
        %vm12750 = vcmask 1048512
        %v12751 = vsel %vm12750, %v12749, %v12744
        %v12752 = vlaneseq
        %v12753 = vshrl.u32 %v12752, 7
        %v12754 = vsub.s32 %v12062, %v12753
        %v12755 = vrot.slane %v12015, %v12754
        %v12756 = vlaneseq
        %v12757 = vshrl.u32 %v12756, 7
        %v12758 = vsub.s32 %v12647, %v12757
        %v12759 = vrot.slane %v12018, %v12758
        %v12760 = vsel %vm12652, %v12759, %v12755
        %v12761 = vlaneseq
        %v12762 = vshrl.u32 %v12761, 7
        %v12763 = vsub.s32 %v12654, %v12762
        %v12764 = vrot.slane %v12021, %v12763
        %v12765 = vsel %vm12659, %v12764, %v12760
        %v12766 = vlaneseq
        %v12767 = vshrl.u32 %v12766, 7
        %v12768 = vsub.s32 %v12661, %v12767
        %v12769 = vrot.slane %v12024, %v12768
        %v12770 = vsel %vm12666, %v12769, %v12765
        %v12771 = vlaneseq
        %v12772 = vshrl.u32 %v12771, 7
        %v12773 = vsub.s32 %v12668, %v12772
        %v12774 = vrot.slane %v12027, %v12773
        %v12775 = vsel %vm12673, %v12774, %v12770
        %v12776 = vlaneseq
        %v12777 = vshrl.u32 %v12776, 7
        %v12778 = vsub.s32 %v12675, %v12777
        %v12779 = vrot.slane %v12030, %v12778
        %v12780 = vsel %vm12680, %v12779, %v12775
        %v12781 = vlaneseq
        %v12782 = vshrl.u32 %v12781, 7
        %v12783 = vsub.s32 %v12682, %v12782
        %v12784 = vrot.slane %v12033, %v12783
        %v12785 = vsel %vm12687, %v12784, %v12780
        %v12786 = vlaneseq
        %v12787 = vshrl.u32 %v12786, 7
        %v12788 = vsub.s32 %v12689, %v12787
        %v12789 = vrot.slane %v12036, %v12788
        %v12790 = vsel %vm12694, %v12789, %v12785
        %v12791 = vlaneseq
        %v12792 = vshrl.u32 %v12791, 7
        %v12793 = vsub.s32 %v12696, %v12792
        %v12794 = vrot.slane %v12039, %v12793
        %v12795 = vsel %vm12701, %v12794, %v12790
        %v12796 = vlaneseq
        %v12797 = vshrl.u32 %v12796, 7
        %v12798 = vsub.s32 %v12703, %v12797
        %v12799 = vrot.slane %v12042, %v12798
        %v12800 = vsel %vm12708, %v12799, %v12795
        %v12801 = vlaneseq
        %v12802 = vshrl.u32 %v12801, 7
        %v12803 = vsub.s32 %v12710, %v12802
        %v12804 = vrot.slane %v12045, %v12803
        %v12805 = vsel %vm12715, %v12804, %v12800
        %v12806 = vlaneseq
        %v12807 = vshrl.u32 %v12806, 7
        %v12808 = vsub.s32 %v12717, %v12807
        %v12809 = vrot.slane %v12048, %v12808
        %v12810 = vsel %vm12722, %v12809, %v12805
        %v12811 = vlaneseq
        %v12812 = vshrl.u32 %v12811, 7
        %v12813 = vsub.s32 %v12724, %v12812
        %v12814 = vrot.slane %v12051, %v12813
        %v12815 = vsel %vm12729, %v12814, %v12810
        %v12816 = vlaneseq
        %v12817 = vshrl.u32 %v12816, 7
        %v12818 = vsub.s32 %v12731, %v12817
        %v12819 = vrot.slane %v12054, %v12818
        %v12820 = vsel %vm12736, %v12819, %v12815
        %v12821 = vlaneseq
        %v12822 = vshrl.u32 %v12821, 7
        %v12823 = vsub.s32 %v12738, %v12822
        %v12824 = vrot.slane %v12057, %v12823
        %v12825 = vsel %vm12743, %v12824, %v12820
        %v12826 = vlaneseq
        %v12827 = vshrl.u32 %v12826, 7
        %v12828 = vsub.s32 %v12745, %v12827
        %v12829 = vrot.slane %v12060, %v12828
        %v12830 = vsel %vm12750, %v12829, %v12825
        %vm12831 = vcmask 1041409
        %v12832 = vsel %vm12831, %v12830, %v12751
        loop: start=0, step=1, limit=128
        $region49: #{tpu_custom_call.1} parent=47 // loop_pre_header
          _
        $region50: #{tpu_custom_call.1} parent=47 // loop_header
          %s12835 = sphi 0, %s12839
          %p12836 = scmp.ge.s32.totalorder %s12835, 128
          %v12840 = vphi %v12832, %v13066
          %v12841 = vphi 0.0, %v13062
          %v12842 = vphi 0.0, %v13064
          %v12843 = vphi 0, %v13065
        $region51: #{tpu_custom_call.1} parent=47 // loop_header_branch
          %12838 = sbr.rel (%p12836) target = $region55
        $region52: #{tpu_custom_call.1} parent=47 // loop_body
          %vm12844 = vcmask 1041408
          %v12845 = vsel %vm12844, %v12840, -inf
          %v12846 = vrot.slane %v12845, 4
          %v12847 = vmax.f32 %v12845, %v12846
          %v12848 = vrot.slane %v12847, 2
          %v12849 = vmax.f32 %v12847, %v12848
          %v12850 = vrot.slane %v12849, 1
          %v12851 = vmax.f32 %v12849, %v12850
          %12852 = vmax.xlane.f32.xlu0 %v12851
          %v12853 = vpop.xlane.xlu0 %12852
          %vm12854 = vcmp.eq.f32.partialorder %v12840, %v12853
          %v12855 = vsel %vm12854, %v12610, 256
          %v12856 = vsel %vm12844, %v12855, 2147483647
          %v12857 = vrot.slane %v12856, 4
          %vm12858 = vcmp.lt.s32.totalorder %v12856, %v12857
          %v12859 = vsel %vm12858, %v12856, %v12857
          %v12860 = vrot.slane %v12859, 2
          %vm12861 = vcmp.lt.s32.totalorder %v12859, %v12860
          %v12862 = vsel %vm12861, %v12859, %v12860
          %v12863 = vrot.slane %v12862, 1
          %vm12864 = vcmp.lt.s32.totalorder %v12862, %v12863
          %v12865 = vsel %vm12864, %v12862, %v12863
          %v12866 = vand.u32 %v12865, 65535
          %v12867 = vshra.s32 %v12865, 16
          %v12868 = vcvt.s32.f32 %v12866
          %v12869 = vcvt.s32.f32 %v12867
          %12870 = vmin.xlane.f32.xlu0 %v12869
          %v12871 = vpop.xlane.xlu0 %12870
          %vm12872 = vcmp.eq.f32.partialorder %v12869, %v12871
          %v12873 = vsel %vm12872, %v12868, inf
          %12874 = vmin.xlane.f32.xlu0 %v12873
          %v12875 = vpop.xlane.xlu0 %12874
          %v12876 = vcvt.f32.s32 %v12875
          %v12877 = vcvt.f32.s32 %v12871
          %v12878 = vshll.u32 %v12877, 16
          %v12879 = vadd.s32 %v12878, %v12876
          %vm12880 = vcmp.eq.s32.totalorder %v12610, %v12879
          %v12881 = vlaneseq
          %v12882 = vshrl.u32 %v12881, 7
          %v12883 = vsub.s32 %v12062, %v12882
          %v12884 = vrot.slane %v12141, %v12883
          %v12885 = vlaneseq
          %v12886 = vshrl.u32 %v12885, 7
          %v12887 = vsub.s32 %v12647, %v12886
          %v12888 = vrot.slane %v12156, %v12887
          %v12889 = vsel %vm12652, %v12888, %v12884
          %v12890 = vlaneseq
          %v12891 = vshrl.u32 %v12890, 7
          %v12892 = vsub.s32 %v12654, %v12891
          %v12893 = vrot.slane %v12171, %v12892
          %v12894 = vsel %vm12659, %v12893, %v12889
          %v12895 = vlaneseq
          %v12896 = vshrl.u32 %v12895, 7
          %v12897 = vsub.s32 %v12661, %v12896
          %v12898 = vrot.slane %v12186, %v12897
          %v12899 = vsel %vm12666, %v12898, %v12894
          %v12900 = vlaneseq
          %v12901 = vshrl.u32 %v12900, 7
          %v12902 = vsub.s32 %v12668, %v12901
          %v12903 = vrot.slane %v12201, %v12902
          %v12904 = vsel %vm12673, %v12903, %v12899
          %v12905 = vlaneseq
          %v12906 = vshrl.u32 %v12905, 7
          %v12907 = vsub.s32 %v12675, %v12906
          %v12908 = vrot.slane %v12216, %v12907
          %v12909 = vsel %vm12680, %v12908, %v12904
          %v12910 = vlaneseq
          %v12911 = vshrl.u32 %v12910, 7
          %v12912 = vsub.s32 %v12682, %v12911
          %v12913 = vrot.slane %v12231, %v12912
          %v12914 = vsel %vm12687, %v12913, %v12909
          %v12915 = vlaneseq
          %v12916 = vshrl.u32 %v12915, 7
          %v12917 = vsub.s32 %v12689, %v12916
          %v12918 = vrot.slane %v12246, %v12917
          %v12919 = vsel %vm12694, %v12918, %v12914
          %v12920 = vlaneseq
          %v12921 = vshrl.u32 %v12920, 7
          %v12922 = vsub.s32 %v12696, %v12921
          %v12923 = vrot.slane %v12261, %v12922
          %v12924 = vsel %vm12701, %v12923, %v12919
          %v12925 = vlaneseq
          %v12926 = vshrl.u32 %v12925, 7
          %v12927 = vsub.s32 %v12703, %v12926
          %v12928 = vrot.slane %v12276, %v12927
          %v12929 = vsel %vm12708, %v12928, %v12924
          %v12930 = vlaneseq
          %v12931 = vshrl.u32 %v12930, 7
          %v12932 = vsub.s32 %v12710, %v12931
          %v12933 = vrot.slane %v12291, %v12932
          %v12934 = vsel %vm12715, %v12933, %v12929
          %v12935 = vlaneseq
          %v12936 = vshrl.u32 %v12935, 7
          %v12937 = vsub.s32 %v12717, %v12936
          %v12938 = vrot.slane %v12306, %v12937
          %v12939 = vsel %vm12722, %v12938, %v12934
          %v12940 = vlaneseq
          %v12941 = vshrl.u32 %v12940, 7
          %v12942 = vsub.s32 %v12724, %v12941
          %v12943 = vrot.slane %v12321, %v12942
          %v12944 = vsel %vm12729, %v12943, %v12939
          %v12945 = vlaneseq
          %v12946 = vshrl.u32 %v12945, 7
          %v12947 = vsub.s32 %v12731, %v12946
          %v12948 = vrot.slane %v12336, %v12947
          %v12949 = vsel %vm12736, %v12948, %v12944
          %v12950 = vlaneseq
          %v12951 = vshrl.u32 %v12950, 7
          %v12952 = vsub.s32 %v12738, %v12951
          %v12953 = vrot.slane %v12351, %v12952
          %v12954 = vsel %vm12743, %v12953, %v12949
          %v12955 = vlaneseq
          %v12956 = vshrl.u32 %v12955, 7
          %v12957 = vsub.s32 %v12745, %v12956
          %v12958 = vrot.slane %v12366, %v12957
          %v12959 = vsel %vm12750, %v12958, %v12954
          %v12960 = vlaneseq
          %v12961 = vshrl.u32 %v12960, 7
          %v12962 = vsub.s32 %v12062, %v12961
          %v12963 = vrot.slane %v12381, %v12962
          %v12964 = vlaneseq
          %v12965 = vshrl.u32 %v12964, 7
          %v12966 = vsub.s32 %v12647, %v12965
          %v12967 = vrot.slane %v12396, %v12966
          %v12968 = vsel %vm12652, %v12967, %v12963
          %v12969 = vlaneseq
          %v12970 = vshrl.u32 %v12969, 7
          %v12971 = vsub.s32 %v12654, %v12970
          %v12972 = vrot.slane %v12411, %v12971
          %v12973 = vsel %vm12659, %v12972, %v12968
          %v12974 = vlaneseq
          %v12975 = vshrl.u32 %v12974, 7
          %v12976 = vsub.s32 %v12661, %v12975
          %v12977 = vrot.slane %v12426, %v12976
          %v12978 = vsel %vm12666, %v12977, %v12973
          %v12979 = vlaneseq
          %v12980 = vshrl.u32 %v12979, 7
          %v12981 = vsub.s32 %v12668, %v12980
          %v12982 = vrot.slane %v12441, %v12981
          %v12983 = vsel %vm12673, %v12982, %v12978
          %v12984 = vlaneseq
          %v12985 = vshrl.u32 %v12984, 7
          %v12986 = vsub.s32 %v12675, %v12985
          %v12987 = vrot.slane %v12456, %v12986
          %v12988 = vsel %vm12680, %v12987, %v12983
          %v12989 = vlaneseq
          %v12990 = vshrl.u32 %v12989, 7
          %v12991 = vsub.s32 %v12682, %v12990
          %v12992 = vrot.slane %v12471, %v12991
          %v12993 = vsel %vm12687, %v12992, %v12988
          %v12994 = vlaneseq
          %v12995 = vshrl.u32 %v12994, 7
          %v12996 = vsub.s32 %v12689, %v12995
          %v12997 = vrot.slane %v12486, %v12996
          %v12998 = vsel %vm12694, %v12997, %v12993
          %v12999 = vlaneseq
          %v13000 = vshrl.u32 %v12999, 7
          %v13001 = vsub.s32 %v12696, %v13000
          %v13002 = vrot.slane %v12501, %v13001
          %v13003 = vsel %vm12701, %v13002, %v12998
          %v13004 = vlaneseq
          %v13005 = vshrl.u32 %v13004, 7
          %v13006 = vsub.s32 %v12703, %v13005
          %v13007 = vrot.slane %v12516, %v13006
          %v13008 = vsel %vm12708, %v13007, %v13003
          %v13009 = vlaneseq
          %v13010 = vshrl.u32 %v13009, 7
          %v13011 = vsub.s32 %v12710, %v13010
          %v13012 = vrot.slane %v12531, %v13011
          %v13013 = vsel %vm12715, %v13012, %v13008
          %v13014 = vlaneseq
          %v13015 = vshrl.u32 %v13014, 7
          %v13016 = vsub.s32 %v12717, %v13015
          %v13017 = vrot.slane %v12546, %v13016
          %v13018 = vsel %vm12722, %v13017, %v13013
          %v13019 = vlaneseq
          %v13020 = vshrl.u32 %v13019, 7
          %v13021 = vsub.s32 %v12724, %v13020
          %v13022 = vrot.slane %v12561, %v13021
          %v13023 = vsel %vm12729, %v13022, %v13018
          %v13024 = vlaneseq
          %v13025 = vshrl.u32 %v13024, 7
          %v13026 = vsub.s32 %v12731, %v13025
          %v13027 = vrot.slane %v12576, %v13026
          %v13028 = vsel %vm12736, %v13027, %v13023
          %v13029 = vlaneseq
          %v13030 = vshrl.u32 %v13029, 7
          %v13031 = vsub.s32 %v12738, %v13030
          %v13032 = vrot.slane %v12591, %v13031
          %v13033 = vsel %vm12743, %v13032, %v13028
          %v13034 = vlaneseq
          %v13035 = vshrl.u32 %v13034, 7
          %v13036 = vsub.s32 %v12745, %v13035
          %v13037 = vrot.slane %v12606, %v13036
          %v13038 = vsel %vm12750, %v13037, %v13033
          %v13039 = vsel %vm12831, %v13038, %v12959
          %v13040 = vsel %vm12880, %v13039, 0
          %v13041 = vsel %vm12844, %v13040, 0
          %v13042 = vrot.slane %v13041, 4
          %v13043 = vadd.s32 %v13041, %v13042
          %v13044 = vrot.slane %v13043, 2
          %v13045 = vadd.s32 %v13043, %v13044
          %v13046 = vrot.slane %v13045, 1
          %v13047 = vadd.s32 %v13045, %v13046
          %v13048 = vand.u32 %v13047, 65535
          %v13049 = vshrl.u32 %v13047, 16
          %v13050 = vcvt.s32.f32 %v13048
          %v13051 = vcvt.s32.f32 %v13049
          %13052 = vadd.xlane.f32.xlu0 %v13050
          %v13053 = vpop.xlane.xlu0 %13052
          %13054 = vadd.xlane.f32.xlu0 %v13051
          %v13055 = vpop.xlane.xlu0 %13054
          %v13056 = vcvt.f32.s32 %v13053
          %v13057 = vcvt.f32.s32 %v13055
          %v13058 = vshll.u32 %v13057, 16
          %v13059 = vadd.s32 %v13058, %v13056
          %v13060 = vstv %s12835
          %vm13061 = vcmp.eq.s32.totalorder %v12062, %v13060
          %v13062 = vsel %vm13061, %v12853, %v12841
          %v13063 = vcvt.s32.f32 %v13059
          %v13064 = vsel %vm13061, %v13063, %v12842
          %v13065 = vsel %vm13061, %v12879, %v12843
          %v13066 = vsel %vm12880, -1e+30, %v12840
        $region53: #{tpu_custom_call.1} parent=47 // loop_footer
          %s12839 = sadd.s32 1, %s12835
        $region54: #{tpu_custom_call.1} parent=47 // loop_footer_branch
          %12834 = sbr.rel target = $region50
        $region55: #{tpu_custom_call.1} parent=47 // loop_exit
          _
        %13067 = vst [vmem:[%s334] sm:$0x1] %v12841
        %13068 = vst [vmem:[%s328] sm:$0x1] %v12842
        %13069 = vst [vmem:[%s340] sm:$0x1] %v12843
        %s13070 = sand.u32 %s187, 1
        %s13071 = scalar_lea.sflag [#allocation4], %s13070
        %s13072 = sand.u32 %s187, 1
        %s13073 = scalar_lea.vmem [#allocation3], %s13072
        %s13074 = sand.u32 %s27, 1
        %s13075 = scalar_lea.sflag [#allocation6], %s13074
        %s13076 = sand.u32 %s213, 1
        %s13077 = scalar_lea.vmem [#allocation5], %s13076
        %s13078 = sand.u32 %s27, 1
        %s13079 = scalar_lea.sflag [#allocation6], %s13078
        %s13080 = sand.u32 %s239, 1
        %s13081 = scalar_lea.vmem [#allocation7], %s13080
        // Predicated region
        $region56: #{tpu_custom_call.1} parent=47 // pred_check
          %p13082 = pneg %p197
        $region57: #{tpu_custom_call.1} parent=47 // pred_check_branch
          %13084 = sbr.rel (%p13082) target = $region59
        $region58: #{tpu_custom_call.1} parent=47 // pred_region
          %s13086 = ssub.s32 16, 16
          %13087 = vsyncadd %s13071, %s13086
          %s13088 = smul.addr %s27, 16
          %s13089 = scalar_lea.hbm %s7, %s13088
          %s13091 = sshll.u32 %s13073, 4
          %s13092 = int_to_ptr.vmem [resolvable:$true] %s13091
          %13094 = dma.vmem_to_hbm [thread:$0]  %s13092, 16, %s13089, %s13071
        $region59: #{tpu_custom_call.1} parent=47 // pred_fallthru
          _
        // Predicated region
        $region60: #{tpu_custom_call.1} parent=47 // pred_check
          %p13095 = pneg %p223
        $region61: #{tpu_custom_call.1} parent=47 // pred_check_branch
          %13097 = sbr.rel (%p13095) target = $region63
        $region62: #{tpu_custom_call.1} parent=47 // pred_region
          %s13099 = ssub.s32 16, 16
          %13100 = vsyncadd %s13075, %s13099
          %s13101 = smul.addr %s27, 16
          %s13102 = scalar_lea.hbm %s8, %s13101
          %s13104 = sshll.u32 %s13077, 4
          %s13105 = int_to_ptr.vmem [resolvable:$true] %s13104
          %13107 = dma.vmem_to_hbm [thread:$0]  %s13105, 16, %s13102, %s13075
        $region63: #{tpu_custom_call.1} parent=47 // pred_fallthru
          _
        // Predicated region
        $region64: #{tpu_custom_call.1} parent=47 // pred_check
          %p13108 = pneg %p249
        $region65: #{tpu_custom_call.1} parent=47 // pred_check_branch
          %13110 = sbr.rel (%p13108) target = $region67
        $region66: #{tpu_custom_call.1} parent=47 // pred_region
          %s13112 = ssub.s32 16, 16
          %13113 = vsyncadd %s13079, %s13112
          %s13114 = smul.addr %s27, 16
          %s13115 = scalar_lea.hbm %s9, %s13114
          %s13117 = sshll.u32 %s13081, 4
          %s13118 = int_to_ptr.vmem [resolvable:$true] %s13117
          %13120 = dma.vmem_to_hbm [thread:$0]  %s13118, 16, %s13115, %s13079
        $region67: #{tpu_custom_call.1} parent=47 // pred_fallthru
          _
      $region48: #{tpu_custom_call.1} parent=5 // pred_fallthru
        _
      %p13121 = scmp.le.s32.totalorder 2, %s22
      // Predicated region
      $region68: #{tpu_custom_call.1} parent=5 // pred_check
        %p13122 = pneg %p13121
      $region69: #{tpu_custom_call.1} parent=5 // pred_check_branch
        %13124 = sbr.rel (%p13122) target = $region71
      $region70: #{tpu_custom_call.1} parent=5 // pred_region
        %s13125 = ssub.s32 %s22, 2
        // Predicated region
        $region72: #{tpu_custom_call.1} parent=70 // pred_check
          %p13126 = pneg %p203
        $region73: #{tpu_custom_call.1} parent=70 // pred_check_branch
          %13128 = sbr.rel (%p13126) target = $region75
        $region74: #{tpu_custom_call.1} parent=70 // pred_region
          %s13129 = sand.u32 %s188, 1
          %s13130 = scalar_lea.sflag [#allocation4], %s13129
          %s13131 = sand.u32 %s188, 1
          %s13132 = scalar_lea.vmem [#allocation3], %s13131
          %13133 = dma.done %s13130, 16
        $region75: #{tpu_custom_call.1} parent=70 // pred_fallthru
          _
        // Predicated region
        $region76: #{tpu_custom_call.1} parent=70 // pred_check
          %p13134 = pneg %p229
        $region77: #{tpu_custom_call.1} parent=70 // pred_check_branch
          %13136 = sbr.rel (%p13134) target = $region79
        $region78: #{tpu_custom_call.1} parent=70 // pred_region
          %s13137 = sand.u32 %s28, 1
          %s13138 = scalar_lea.sflag [#allocation6], %s13137
          %s13139 = sand.u32 %s214, 1
          %s13140 = scalar_lea.vmem [#allocation5], %s13139
          %13141 = dma.done %s13138, 16
        $region79: #{tpu_custom_call.1} parent=70 // pred_fallthru
          _
        // Predicated region
        $region80: #{tpu_custom_call.1} parent=70 // pred_check
          %p13142 = pneg %p255
        $region81: #{tpu_custom_call.1} parent=70 // pred_check_branch
          %13144 = sbr.rel (%p13142) target = $region83
        $region82: #{tpu_custom_call.1} parent=70 // pred_region
          %s13145 = sand.u32 %s28, 1
          %s13146 = scalar_lea.sflag [#allocation6], %s13145
          %s13147 = sand.u32 %s240, 1
          %s13148 = scalar_lea.vmem [#allocation7], %s13147
          %13149 = dma.done %s13146, 16
        $region83: #{tpu_custom_call.1} parent=70 // pred_fallthru
          _
      $region71: #{tpu_custom_call.1} parent=5 // pred_fallthru
        _
    $region6: #{tpu_custom_call.1} parent=1 // loop_footer
      %s26 = sadd.s32 1, %s22
    $region7: #{tpu_custom_call.1} parent=1 // loop_footer_branch
      %21 = sbr.rel target = $region3
    $region8: #{tpu_custom_call.1} parent=1 // loop_exit
      _
    %13150 = vsyncpa [#allocation4], 1
    %s13151 = scalar_lea.sflag [#allocation4], 1
    %13152 = vsyncpa %s13151, 1
    %13153 = vsyncpa [#allocation6], 1
    %s13154 = scalar_lea.sflag [#allocation6], 1
    %13155 = vsyncpa %s13154, 1

</llo_original>
